<compile_context>
chip_gen: v7x
topology: tpu7x:2x2x1
jax: 0.10.0
libtpu: 0.0.40
codegen_flags: <defaults>
</compile_context>

<pallas_src>
import jax
import jax.numpy as jnp
from jax.experimental import pallas as pl
from jax.experimental.pallas import tpu as pltpu

VOCAB = 79
INPUT_SIZE = 8
HIDDEN_SIZE = 256
OUTPUT_SIZE = 79
NUM_LAYER = 2
O_PAD = 128  # lane-dense padded output width for the final linear


# --------------------------- fused GRU+linear kernel --------------------------
def make_fused_kernel(S, N, E, H):
    """Kernel closure over the (static, tiny) problem sizes."""

    def kernel(x_ref,                                  # (S*N, E)
               wih0_ref, whh0_ref, b0rz_ref, b0in_ref, b0hn_ref,
               wih1_ref, whh1_ref, b1rz_ref, b1in_ref, b1hn_ref,
               linw_ref, linb_ref,                     # (H, O_PAD), (1, O_PAD)
               out_ref,                                # (S, O_PAD)
               seq_ref):                               # VMEM scratch (S, H)
        # Layer-0 input-to-hidden projection hoisted out of the recurrence:
        # one (S*N, E) x (E, 3H) matmul instead of S tiny ones.
        gi0_all = jnp.dot(x_ref[...], wih0_ref[...],
                          preferred_element_type=jnp.float32)      # (S*N, 3H)

        whh0 = whh0_ref[...]
        wih1 = wih1_ref[...]
        whh1 = whh1_ref[...]
        b0rz, b0in, b0hn = b0rz_ref[...], b0in_ref[...], b0hn_ref[...]
        b1rz, b1in, b1hn = b1rz_ref[...], b1in_ref[...], b1hn_ref[...]

        def cell(gi, h, whh, brz, bin_, bhn):
            # PyTorch GRU gate order: r, z, n.
            gh = jnp.dot(h, whh, preferred_element_type=jnp.float32)   # (N, 3H)
            rz = jax.nn.sigmoid(gi[:, :2 * H] + gh[:, :2 * H] + brz)
            r = rz[:, :H]
            z = rz[:, H:]
            n = jnp.tanh(gi[:, 2 * H:] + bin_ + r * (gh[:, 2 * H:] + bhn))
            return (1.0 - z) * n + z * h

        h0 = jnp.zeros((N, H), jnp.float32)
        h1 = jnp.zeros((N, H), jnp.float32)

        # Fully unrolled static time loop (S is tiny): gives the scheduler
        # visibility so step t+1's h@W_hh MXU push overlaps step t's gate math.
        for t in range(S):
            gi0 = gi0_all[t * N:(t + 1) * N, :]                    # (N, 3H)
            h0 = cell(gi0, h0, whh0, b0rz, b0in, b0hn)
            gi1 = jnp.dot(h0, wih1, preferred_element_type=jnp.float32)
            h1 = cell(gi1, h1, whh1, b1rz, b1in, b1hn)
            # Downstream consumes only batch column N-1 of every time step.
            seq_ref[pl.ds(t, 1), :] = h1[N - 1:N, :]

        # Fused final linear: (S, H) x (H, O_PAD), lane-dense padded output.
        out_ref[...] = (jnp.dot(seq_ref[...], linw_ref[...],
                                preferred_element_type=jnp.float32)
                        + linb_ref[...])

    return kernel


def fused_gru_linear(x_flat, p, S, N):
    """x_flat: (S*N, E) f32 -> (S, O_PAD) f32 (valid cols = OUTPUT_SIZE)."""
    E = x_flat.shape[1]
    H = HIDDEN_SIZE

    def full(shape):
        return pl.BlockSpec(shape, lambda: (0,) * len(shape))

    kernel = make_fused_kernel(S, N, E, H)
    return pl.pallas_call(
        kernel,
        out_shape=jax.ShapeDtypeStruct((S, O_PAD), jnp.float32),
        in_specs=[
            full((S * N, E)),
            full((E, 3 * H)), full((H, 3 * H)),
            full((1, 2 * H)), full((1, H)), full((1, H)),
            full((H, 3 * H)), full((H, 3 * H)),
            full((1, 2 * H)), full((1, H)), full((1, H)),
            full((H, O_PAD)), full((1, O_PAD)),
        ],
        out_specs=full((S, O_PAD)),
        scratch_shapes=[pltpu.VMEM((S, H), jnp.float32)],
    )(x_flat,
      p["wih0_t"], p["whh0_t"], p["b0_rz"], p["b0_ihn"], p["b0_hhn"],
      p["wih1_t"], p["whh1_t"], p["b1_rz"], p["b1_ihn"], p["b1_hhn"],
      p["lin_w_t"], p["lin_b_pad"])


# ------------------------------ model forward --------------------------------
def gru_forward(prepared, tokens):
    # tokens: (B, 1, T) int32
    emb = prepared["embedding"][tokens]          # (B, 1, T, E) gather (glue)
    x = jnp.squeeze(emb, axis=1)                 # (B, T, E): axis0=time, axis1=batch
    S, N, E = x.shape
    x_flat = x.reshape(S * N, E)                 # time-major flatten for hoisted matmul
    out_pad = fused_gru_linear(x_flat, prepared, S, N)   # (S, O_PAD)
    # TODO(synk): the PyTorch forward calls print(output); side effect omitted.
    return out_pad[:, :OUTPUT_SIZE]              # (B, 79)


# ------------------------------ param handling --------------------------------
def init_params(key):
    """PyTorch-shaped parameters."""
    ks = jax.random.split(key, 3 + NUM_LAYER)
    k = 1.0 / jnp.sqrt(HIDDEN_SIZE)
    params = {
        "embedding": jax.random.normal(ks[0], (VOCAB, INPUT_SIZE), jnp.float32),
        "lin_w": jax.random.uniform(ks[1], (OUTPUT_SIZE, HIDDEN_SIZE),
                                    jnp.float32, -k, k),
        "lin_b": jax.random.uniform(ks[2], (OUTPUT_SIZE,), jnp.float32, -k, k),
    }
    for l in range(NUM_LAYER):
        din = INPUT_SIZE if l == 0 else HIDDEN_SIZE
        kk = jax.random.split(ks[3 + l], 4)
        params[f"w_ih_l{l}"] = jax.random.uniform(
            kk[0], (3 * HIDDEN_SIZE, din), jnp.float32, -k, k)
        params[f"w_hh_l{l}"] = jax.random.uniform(
            kk[1], (3 * HIDDEN_SIZE, HIDDEN_SIZE), jnp.float32, -k, k)
        params[f"b_ih_l{l}"] = jax.random.uniform(
            kk[2], (3 * HIDDEN_SIZE,), jnp.float32, -k, k)
        params[f"b_hh_l{l}"] = jax.random.uniform(
            kk[3], (3 * HIDDEN_SIZE,), jnp.float32, -k, k)
    return params


def prepare_params(params):
    """One-time transforms: transposes, bias pre-combination, output padding."""
    H = HIDDEN_SIZE
    p = {"embedding": params["embedding"]}
    for l in range(NUM_LAYER):
        w_ih = params[f"w_ih_l{l}"]              # (3H, Din)
        w_hh = params[f"w_hh_l{l}"]              # (3H, H)
        b_ih = params[f"b_ih_l{l}"]              # (3H,)
        b_hh = params[f"b_hh_l{l}"]              # (3H,)
        p[f"wih{l}_t"] = jnp.transpose(w_ih)     # (Din, 3H)
        p[f"whh{l}_t"] = jnp.transpose(w_hh)     # (H, 3H)
        p[f"b{l}_rz"] = (b_ih[:2 * H] + b_hh[:2 * H]).reshape(1, 2 * H)
        p[f"b{l}_ihn"] = b_ih[2 * H:].reshape(1, H)
        p[f"b{l}_hhn"] = b_hh[2 * H:].reshape(1, H)
    lin_w = params["lin_w"]                      # (O, H)
    lin_b = params["lin_b"]                      # (O,)
    O = lin_w.shape[0]
    lin_w_pad = jnp.zeros((O_PAD, H), jnp.float32).at[:O].set(lin_w)
    lin_b_pad = jnp.zeros((1, O_PAD), jnp.float32).at[0, :O].set(lin_b)
    p["lin_w_t"] = jnp.transpose(lin_w_pad)      # (H, O_PAD)
    p["lin_b_pad"] = lin_b_pad                   # (1, O_PAD)
    return p


if __name__ == "__main__":
    key = jax.random.PRNGKey(0)
    pkey, dkey = jax.random.split(key)
    params = init_params(pkey)
    prepared = prepare_params(params)

    B, T = 6, 4   # B = GRU time axis, T = GRU batch axis (PyTorch seq-first)
    tokens = jax.random.randint(dkey, (B, 1, T), 0, VOCAB, dtype=jnp.int32)

    out = gru_forward(prepared, tokens)
    out = jax.block_until_ready(out)
    assert out.shape == (B, OUTPUT_SIZE) and out.dtype == jnp.float32
    print("KERNEL_OK")
</pallas_src>

<mosaic_0001>
module attributes {stable_mosaic.version = 11 : i64} {
  func.func @kernel(%arg0: memref<24x8xf32, #tpu.memory_space<vmem>>, %arg1: memref<8x768xf32, #tpu.memory_space<vmem>>, %arg2: memref<256x768xf32, #tpu.memory_space<vmem>>, %arg3: memref<1x512xf32, #tpu.memory_space<vmem>>, %arg4: memref<1x256xf32, #tpu.memory_space<vmem>>, %arg5: memref<1x256xf32, #tpu.memory_space<vmem>>, %arg6: memref<256x768xf32, #tpu.memory_space<vmem>>, %arg7: memref<256x768xf32, #tpu.memory_space<vmem>>, %arg8: memref<1x512xf32, #tpu.memory_space<vmem>>, %arg9: memref<1x256xf32, #tpu.memory_space<vmem>>, %arg10: memref<1x256xf32, #tpu.memory_space<vmem>>, %arg11: memref<256x128xf32, #tpu.memory_space<vmem>>, %arg12: memref<1x128xf32, #tpu.memory_space<vmem>>, %arg13: memref<6x128xf32, #tpu.memory_space<vmem>>, %arg14: memref<6x256xf32, #tpu.memory_space<vmem>>) attributes {dimension_semantics = [], scalar_prefetch = 0 : i64, scratch_operands = 1 : i64, tpu.core_type = #tpu.core_type<tc>} {
    %c0 = arith.constant 0 : index
    %c0_0 = arith.constant 0 : index
    %0 = vector.load %arg0[%c0, %c0_0] : memref<24x8xf32, #tpu.memory_space<vmem>>, vector<24x8xf32>
    %c0_1 = arith.constant 0 : index
    %c0_2 = arith.constant 0 : index
    %1 = vector.load %arg1[%c0_1, %c0_2] : memref<8x768xf32, #tpu.memory_space<vmem>>, vector<8x768xf32>
    %cst = arith.constant dense<0.000000e+00> : vector<24x768xf32>
    %2 = tpu.matmul %0, %1, %cst {dimension_numbers = #tpu.dot_dimension_numbers<[1], [0], [0], [1], [0, 0, 1, 1], [], []>} : vector<24x8xf32>, vector<8x768xf32>, vector<24x768xf32> -> vector<24x768xf32>
    %c0_3 = arith.constant 0 : index
    %c0_4 = arith.constant 0 : index
    %3 = vector.load %arg2[%c0_3, %c0_4] : memref<256x768xf32, #tpu.memory_space<vmem>>, vector<256x768xf32>
    %c0_5 = arith.constant 0 : index
    %c0_6 = arith.constant 0 : index
    %4 = vector.load %arg6[%c0_5, %c0_6] : memref<256x768xf32, #tpu.memory_space<vmem>>, vector<256x768xf32>
    %c0_7 = arith.constant 0 : index
    %c0_8 = arith.constant 0 : index
    %5 = vector.load %arg7[%c0_7, %c0_8] : memref<256x768xf32, #tpu.memory_space<vmem>>, vector<256x768xf32>
    %c0_9 = arith.constant 0 : index
    %c0_10 = arith.constant 0 : index
    %6 = vector.load %arg3[%c0_9, %c0_10] : memref<1x512xf32, #tpu.memory_space<vmem>>, vector<1x512xf32>
    %c0_11 = arith.constant 0 : index
    %c0_12 = arith.constant 0 : index
    %7 = vector.load %arg4[%c0_11, %c0_12] : memref<1x256xf32, #tpu.memory_space<vmem>>, vector<1x256xf32>
    %c0_13 = arith.constant 0 : index
    %c0_14 = arith.constant 0 : index
    %8 = vector.load %arg5[%c0_13, %c0_14] : memref<1x256xf32, #tpu.memory_space<vmem>>, vector<1x256xf32>
    %c0_15 = arith.constant 0 : index
    %c0_16 = arith.constant 0 : index
    %9 = vector.load %arg8[%c0_15, %c0_16] : memref<1x512xf32, #tpu.memory_space<vmem>>, vector<1x512xf32>
    %c0_17 = arith.constant 0 : index
    %c0_18 = arith.constant 0 : index
    %10 = vector.load %arg9[%c0_17, %c0_18] : memref<1x256xf32, #tpu.memory_space<vmem>>, vector<1x256xf32>
    %c0_19 = arith.constant 0 : index
    %c0_20 = arith.constant 0 : index
    %11 = vector.load %arg10[%c0_19, %c0_20] : memref<1x256xf32, #tpu.memory_space<vmem>>, vector<1x256xf32>
    %cst_21 = arith.constant 0.000000e+00 : f32
    %12 = vector.broadcast %cst_21 : f32 to vector<4x256xf32>
    %cst_22 = arith.constant 0.000000e+00 : f32
    %13 = vector.broadcast %cst_22 : f32 to vector<4x256xf32>
    %14 = vector.extract_strided_slice %2 {offsets = [0, 0], sizes = [4, 768], strides = [1, 1]} : vector<24x768xf32> to vector<4x768xf32>
    %cst_23 = arith.constant dense<0.000000e+00> : vector<4x768xf32>
    %15 = tpu.matmul %12, %3, %cst_23 {dimension_numbers = #tpu.dot_dimension_numbers<[1], [0], [0], [1], [0, 0, 1, 1], [], []>} : vector<4x256xf32>, vector<256x768xf32>, vector<4x768xf32> -> vector<4x768xf32>
    %16 = vector.extract_strided_slice %14 {offsets = [0, 0], sizes = [4, 512], strides = [1, 1]} : vector<4x768xf32> to vector<4x512xf32>
    %17 = vector.extract_strided_slice %15 {offsets = [0, 0], sizes = [4, 512], strides = [1, 1]} : vector<4x768xf32> to vector<4x512xf32>
    %18 = arith.addf %16, %17 : vector<4x512xf32>
    %19 = vector.broadcast %6 : vector<1x512xf32> to vector<4x512xf32>
    %20 = arith.addf %18, %19 : vector<4x512xf32>
    %21 = arith.negf %20 : vector<4x512xf32>
    %22 = math.exp %21 : vector<4x512xf32>
    %cst_24 = arith.constant 1.000000e+00 : f32
    %23 = vector.broadcast %cst_24 : f32 to vector<4x512xf32>
    %24 = arith.addf %23, %22 : vector<4x512xf32>
    %25 = arith.divf %23, %24 : vector<4x512xf32>
    %26 = vector.extract_strided_slice %25 {offsets = [0, 0], sizes = [4, 256], strides = [1, 1]} : vector<4x512xf32> to vector<4x256xf32>
    %27 = vector.extract_strided_slice %25 {offsets = [0, 256], sizes = [4, 256], strides = [1, 1]} : vector<4x512xf32> to vector<4x256xf32>
    %28 = vector.extract_strided_slice %14 {offsets = [0, 512], sizes = [4, 256], strides = [1, 1]} : vector<4x768xf32> to vector<4x256xf32>
    %29 = vector.broadcast %7 : vector<1x256xf32> to vector<4x256xf32>
    %30 = arith.addf %28, %29 : vector<4x256xf32>
    %31 = vector.extract_strided_slice %15 {offsets = [0, 512], sizes = [4, 256], strides = [1, 1]} : vector<4x768xf32> to vector<4x256xf32>
    %32 = vector.broadcast %8 : vector<1x256xf32> to vector<4x256xf32>
    %33 = arith.addf %31, %32 : vector<4x256xf32>
    %34 = arith.mulf %26, %33 : vector<4x256xf32>
    %35 = arith.addf %30, %34 : vector<4x256xf32>
    %36 = math.tanh %35 : vector<4x256xf32>
    %cst_25 = arith.constant 1.000000e+00 : f32
    %37 = vector.broadcast %cst_25 : f32 to vector<4x256xf32>
    %38 = arith.subf %37, %27 : vector<4x256xf32>
    %39 = arith.mulf %38, %36 : vector<4x256xf32>
    %40 = arith.mulf %27, %12 : vector<4x256xf32>
    %41 = arith.addf %39, %40 : vector<4x256xf32>
    %cst_26 = arith.constant dense<0.000000e+00> : vector<4x768xf32>
    %42 = tpu.matmul %41, %4, %cst_26 {dimension_numbers = #tpu.dot_dimension_numbers<[1], [0], [0], [1], [0, 0, 1, 1], [], []>} : vector<4x256xf32>, vector<256x768xf32>, vector<4x768xf32> -> vector<4x768xf32>
    %cst_27 = arith.constant dense<0.000000e+00> : vector<4x768xf32>
    %43 = tpu.matmul %13, %5, %cst_27 {dimension_numbers = #tpu.dot_dimension_numbers<[1], [0], [0], [1], [0, 0, 1, 1], [], []>} : vector<4x256xf32>, vector<256x768xf32>, vector<4x768xf32> -> vector<4x768xf32>
    %44 = vector.extract_strided_slice %42 {offsets = [0, 0], sizes = [4, 512], strides = [1, 1]} : vector<4x768xf32> to vector<4x512xf32>
    %45 = vector.extract_strided_slice %43 {offsets = [0, 0], sizes = [4, 512], strides = [1, 1]} : vector<4x768xf32> to vector<4x512xf32>
    %46 = arith.addf %44, %45 : vector<4x512xf32>
    %47 = vector.broadcast %9 : vector<1x512xf32> to vector<4x512xf32>
    %48 = arith.addf %46, %47 : vector<4x512xf32>
    %49 = arith.negf %48 : vector<4x512xf32>
    %50 = math.exp %49 : vector<4x512xf32>
    %cst_28 = arith.constant 1.000000e+00 : f32
    %51 = vector.broadcast %cst_28 : f32 to vector<4x512xf32>
    %52 = arith.addf %51, %50 : vector<4x512xf32>
    %53 = arith.divf %51, %52 : vector<4x512xf32>
    %54 = vector.extract_strided_slice %53 {offsets = [0, 0], sizes = [4, 256], strides = [1, 1]} : vector<4x512xf32> to vector<4x256xf32>
    %55 = vector.extract_strided_slice %53 {offsets = [0, 256], sizes = [4, 256], strides = [1, 1]} : vector<4x512xf32> to vector<4x256xf32>
    %56 = vector.extract_strided_slice %42 {offsets = [0, 512], sizes = [4, 256], strides = [1, 1]} : vector<4x768xf32> to vector<4x256xf32>
    %57 = vector.broadcast %10 : vector<1x256xf32> to vector<4x256xf32>
    %58 = arith.addf %56, %57 : vector<4x256xf32>
    %59 = vector.extract_strided_slice %43 {offsets = [0, 512], sizes = [4, 256], strides = [1, 1]} : vector<4x768xf32> to vector<4x256xf32>
    %60 = vector.broadcast %11 : vector<1x256xf32> to vector<4x256xf32>
    %61 = arith.addf %59, %60 : vector<4x256xf32>
    %62 = arith.mulf %54, %61 : vector<4x256xf32>
    %63 = arith.addf %58, %62 : vector<4x256xf32>
    %64 = math.tanh %63 : vector<4x256xf32>
    %cst_29 = arith.constant 1.000000e+00 : f32
    %65 = vector.broadcast %cst_29 : f32 to vector<4x256xf32>
    %66 = arith.subf %65, %55 : vector<4x256xf32>
    %67 = arith.mulf %66, %64 : vector<4x256xf32>
    %68 = arith.mulf %55, %13 : vector<4x256xf32>
    %69 = arith.addf %67, %68 : vector<4x256xf32>
    %70 = vector.extract_strided_slice %69 {offsets = [3, 0], sizes = [1, 256], strides = [1, 1]} : vector<4x256xf32> to vector<1x256xf32>
    %c0_30 = arith.constant 0 : index
    %c0_31 = arith.constant 0 : index
    %71 = vector.load %arg14[%c0_30, %c0_31] : memref<6x256xf32, #tpu.memory_space<vmem>>, vector<1x256xf32>
    tpu.vector_store %arg14[%c0_30, %c0_31], %70 {strides = array<i32>} : memref<6x256xf32, #tpu.memory_space<vmem>>, vector<1x256xf32>,
    %72 = vector.extract_strided_slice %2 {offsets = [4, 0], sizes = [4, 768], strides = [1, 1]} : vector<24x768xf32> to vector<4x768xf32>
    %cst_32 = arith.constant dense<0.000000e+00> : vector<4x768xf32>
    %73 = tpu.matmul %41, %3, %cst_32 {dimension_numbers = #tpu.dot_dimension_numbers<[1], [0], [0], [1], [0, 0, 1, 1], [], []>} : vector<4x256xf32>, vector<256x768xf32>, vector<4x768xf32> -> vector<4x768xf32>
    %74 = vector.extract_strided_slice %72 {offsets = [0, 0], sizes = [4, 512], strides = [1, 1]} : vector<4x768xf32> to vector<4x512xf32>
    %75 = vector.extract_strided_slice %73 {offsets = [0, 0], sizes = [4, 512], strides = [1, 1]} : vector<4x768xf32> to vector<4x512xf32>
    %76 = arith.addf %74, %75 : vector<4x512xf32>
    %77 = vector.broadcast %6 : vector<1x512xf32> to vector<4x512xf32>
    %78 = arith.addf %76, %77 : vector<4x512xf32>
    %79 = arith.negf %78 : vector<4x512xf32>
    %80 = math.exp %79 : vector<4x512xf32>
    %cst_33 = arith.constant 1.000000e+00 : f32
    %81 = vector.broadcast %cst_33 : f32 to vector<4x512xf32>
    %82 = arith.addf %81, %80 : vector<4x512xf32>
    %83 = arith.divf %81, %82 : vector<4x512xf32>
    %84 = vector.extract_strided_slice %83 {offsets = [0, 0], sizes = [4, 256], strides = [1, 1]} : vector<4x512xf32> to vector<4x256xf32>
    %85 = vector.extract_strided_slice %83 {offsets = [0, 256], sizes = [4, 256], strides = [1, 1]} : vector<4x512xf32> to vector<4x256xf32>
    %86 = vector.extract_strided_slice %72 {offsets = [0, 512], sizes = [4, 256], strides = [1, 1]} : vector<4x768xf32> to vector<4x256xf32>
    %87 = vector.broadcast %7 : vector<1x256xf32> to vector<4x256xf32>
    %88 = arith.addf %86, %87 : vector<4x256xf32>
    %89 = vector.extract_strided_slice %73 {offsets = [0, 512], sizes = [4, 256], strides = [1, 1]} : vector<4x768xf32> to vector<4x256xf32>
    %90 = vector.broadcast %8 : vector<1x256xf32> to vector<4x256xf32>
    %91 = arith.addf %89, %90 : vector<4x256xf32>
    %92 = arith.mulf %84, %91 : vector<4x256xf32>
    %93 = arith.addf %88, %92 : vector<4x256xf32>
    %94 = math.tanh %93 : vector<4x256xf32>
    %cst_34 = arith.constant 1.000000e+00 : f32
    %95 = vector.broadcast %cst_34 : f32 to vector<4x256xf32>
    %96 = arith.subf %95, %85 : vector<4x256xf32>
    %97 = arith.mulf %96, %94 : vector<4x256xf32>
    %98 = arith.mulf %85, %41 : vector<4x256xf32>
    %99 = arith.addf %97, %98 : vector<4x256xf32>
    %cst_35 = arith.constant dense<0.000000e+00> : vector<4x768xf32>
    %100 = tpu.matmul %99, %4, %cst_35 {dimension_numbers = #tpu.dot_dimension_numbers<[1], [0], [0], [1], [0, 0, 1, 1], [], []>} : vector<4x256xf32>, vector<256x768xf32>, vector<4x768xf32> -> vector<4x768xf32>
    %cst_36 = arith.constant dense<0.000000e+00> : vector<4x768xf32>
    %101 = tpu.matmul %69, %5, %cst_36 {dimension_numbers = #tpu.dot_dimension_numbers<[1], [0], [0], [1], [0, 0, 1, 1], [], []>} : vector<4x256xf32>, vector<256x768xf32>, vector<4x768xf32> -> vector<4x768xf32>
    %102 = vector.extract_strided_slice %100 {offsets = [0, 0], sizes = [4, 512], strides = [1, 1]} : vector<4x768xf32> to vector<4x512xf32>
    %103 = vector.extract_strided_slice %101 {offsets = [0, 0], sizes = [4, 512], strides = [1, 1]} : vector<4x768xf32> to vector<4x512xf32>
    %104 = arith.addf %102, %103 : vector<4x512xf32>
    %105 = vector.broadcast %9 : vector<1x512xf32> to vector<4x512xf32>
    %106 = arith.addf %104, %105 : vector<4x512xf32>
    %107 = arith.negf %106 : vector<4x512xf32>
    %108 = math.exp %107 : vector<4x512xf32>
    %cst_37 = arith.constant 1.000000e+00 : f32
    %109 = vector.broadcast %cst_37 : f32 to vector<4x512xf32>
    %110 = arith.addf %109, %108 : vector<4x512xf32>
    %111 = arith.divf %109, %110 : vector<4x512xf32>
    %112 = vector.extract_strided_slice %111 {offsets = [0, 0], sizes = [4, 256], strides = [1, 1]} : vector<4x512xf32> to vector<4x256xf32>
    %113 = vector.extract_strided_slice %111 {offsets = [0, 256], sizes = [4, 256], strides = [1, 1]} : vector<4x512xf32> to vector<4x256xf32>
    %114 = vector.extract_strided_slice %100 {offsets = [0, 512], sizes = [4, 256], strides = [1, 1]} : vector<4x768xf32> to vector<4x256xf32>
    %115 = vector.broadcast %10 : vector<1x256xf32> to vector<4x256xf32>
    %116 = arith.addf %114, %115 : vector<4x256xf32>
    %117 = vector.extract_strided_slice %101 {offsets = [0, 512], sizes = [4, 256], strides = [1, 1]} : vector<4x768xf32> to vector<4x256xf32>
    %118 = vector.broadcast %11 : vector<1x256xf32> to vector<4x256xf32>
    %119 = arith.addf %117, %118 : vector<4x256xf32>
    %120 = arith.mulf %112, %119 : vector<4x256xf32>
    %121 = arith.addf %116, %120 : vector<4x256xf32>
    %122 = math.tanh %121 : vector<4x256xf32>
    %cst_38 = arith.constant 1.000000e+00 : f32
    %123 = vector.broadcast %cst_38 : f32 to vector<4x256xf32>
    %124 = arith.subf %123, %113 : vector<4x256xf32>
    %125 = arith.mulf %124, %122 : vector<4x256xf32>
    %126 = arith.mulf %113, %69 : vector<4x256xf32>
    %127 = arith.addf %125, %126 : vector<4x256xf32>
    %128 = vector.extract_strided_slice %127 {offsets = [3, 0], sizes = [1, 256], strides = [1, 1]} : vector<4x256xf32> to vector<1x256xf32>
    %c1 = arith.constant 1 : index
    %c0_39 = arith.constant 0 : index
    %129 = vector.load %arg14[%c1, %c0_39] : memref<6x256xf32, #tpu.memory_space<vmem>>, vector<1x256xf32>
    tpu.vector_store %arg14[%c1, %c0_39], %128 {strides = array<i32>} : memref<6x256xf32, #tpu.memory_space<vmem>>, vector<1x256xf32>,
    %130 = vector.extract_strided_slice %2 {offsets = [8, 0], sizes = [4, 768], strides = [1, 1]} : vector<24x768xf32> to vector<4x768xf32>
    %cst_40 = arith.constant dense<0.000000e+00> : vector<4x768xf32>
    %131 = tpu.matmul %99, %3, %cst_40 {dimension_numbers = #tpu.dot_dimension_numbers<[1], [0], [0], [1], [0, 0, 1, 1], [], []>} : vector<4x256xf32>, vector<256x768xf32>, vector<4x768xf32> -> vector<4x768xf32>
    %132 = vector.extract_strided_slice %130 {offsets = [0, 0], sizes = [4, 512], strides = [1, 1]} : vector<4x768xf32> to vector<4x512xf32>
    %133 = vector.extract_strided_slice %131 {offsets = [0, 0], sizes = [4, 512], strides = [1, 1]} : vector<4x768xf32> to vector<4x512xf32>
    %134 = arith.addf %132, %133 : vector<4x512xf32>
    %135 = vector.broadcast %6 : vector<1x512xf32> to vector<4x512xf32>
    %136 = arith.addf %134, %135 : vector<4x512xf32>
    %137 = arith.negf %136 : vector<4x512xf32>
    %138 = math.exp %137 : vector<4x512xf32>
    %cst_41 = arith.constant 1.000000e+00 : f32
    %139 = vector.broadcast %cst_41 : f32 to vector<4x512xf32>
    %140 = arith.addf %139, %138 : vector<4x512xf32>
    %141 = arith.divf %139, %140 : vector<4x512xf32>
    %142 = vector.extract_strided_slice %141 {offsets = [0, 0], sizes = [4, 256], strides = [1, 1]} : vector<4x512xf32> to vector<4x256xf32>
    %143 = vector.extract_strided_slice %141 {offsets = [0, 256], sizes = [4, 256], strides = [1, 1]} : vector<4x512xf32> to vector<4x256xf32>
    %144 = vector.extract_strided_slice %130 {offsets = [0, 512], sizes = [4, 256], strides = [1, 1]} : vector<4x768xf32> to vector<4x256xf32>
    %145 = vector.broadcast %7 : vector<1x256xf32> to vector<4x256xf32>
    %146 = arith.addf %144, %145 : vector<4x256xf32>
    %147 = vector.extract_strided_slice %131 {offsets = [0, 512], sizes = [4, 256], strides = [1, 1]} : vector<4x768xf32> to vector<4x256xf32>
    %148 = vector.broadcast %8 : vector<1x256xf32> to vector<4x256xf32>
    %149 = arith.addf %147, %148 : vector<4x256xf32>
    %150 = arith.mulf %142, %149 : vector<4x256xf32>
    %151 = arith.addf %146, %150 : vector<4x256xf32>
    %152 = math.tanh %151 : vector<4x256xf32>
    %cst_42 = arith.constant 1.000000e+00 : f32
    %153 = vector.broadcast %cst_42 : f32 to vector<4x256xf32>
    %154 = arith.subf %153, %143 : vector<4x256xf32>
    %155 = arith.mulf %154, %152 : vector<4x256xf32>
    %156 = arith.mulf %143, %99 : vector<4x256xf32>
    %157 = arith.addf %155, %156 : vector<4x256xf32>
    %cst_43 = arith.constant dense<0.000000e+00> : vector<4x768xf32>
    %158 = tpu.matmul %157, %4, %cst_43 {dimension_numbers = #tpu.dot_dimension_numbers<[1], [0], [0], [1], [0, 0, 1, 1], [], []>} : vector<4x256xf32>, vector<256x768xf32>, vector<4x768xf32> -> vector<4x768xf32>
    %cst_44 = arith.constant dense<0.000000e+00> : vector<4x768xf32>
    %159 = tpu.matmul %127, %5, %cst_44 {dimension_numbers = #tpu.dot_dimension_numbers<[1], [0], [0], [1], [0, 0, 1, 1], [], []>} : vector<4x256xf32>, vector<256x768xf32>, vector<4x768xf32> -> vector<4x768xf32>
    %160 = vector.extract_strided_slice %158 {offsets = [0, 0], sizes = [4, 512], strides = [1, 1]} : vector<4x768xf32> to vector<4x512xf32>
    %161 = vector.extract_strided_slice %159 {offsets = [0, 0], sizes = [4, 512], strides = [1, 1]} : vector<4x768xf32> to vector<4x512xf32>
    %162 = arith.addf %160, %161 : vector<4x512xf32>
    %163 = vector.broadcast %9 : vector<1x512xf32> to vector<4x512xf32>
    %164 = arith.addf %162, %163 : vector<4x512xf32>
    %165 = arith.negf %164 : vector<4x512xf32>
    %166 = math.exp %165 : vector<4x512xf32>
    %cst_45 = arith.constant 1.000000e+00 : f32
    %167 = vector.broadcast %cst_45 : f32 to vector<4x512xf32>
    %168 = arith.addf %167, %166 : vector<4x512xf32>
    %169 = arith.divf %167, %168 : vector<4x512xf32>
    %170 = vector.extract_strided_slice %169 {offsets = [0, 0], sizes = [4, 256], strides = [1, 1]} : vector<4x512xf32> to vector<4x256xf32>
    %171 = vector.extract_strided_slice %169 {offsets = [0, 256], sizes = [4, 256], strides = [1, 1]} : vector<4x512xf32> to vector<4x256xf32>
    %172 = vector.extract_strided_slice %158 {offsets = [0, 512], sizes = [4, 256], strides = [1, 1]} : vector<4x768xf32> to vector<4x256xf32>
    %173 = vector.broadcast %10 : vector<1x256xf32> to vector<4x256xf32>
    %174 = arith.addf %172, %173 : vector<4x256xf32>
    %175 = vector.extract_strided_slice %159 {offsets = [0, 512], sizes = [4, 256], strides = [1, 1]} : vector<4x768xf32> to vector<4x256xf32>
    %176 = vector.broadcast %11 : vector<1x256xf32> to vector<4x256xf32>
    %177 = arith.addf %175, %176 : vector<4x256xf32>
    %178 = arith.mulf %170, %177 : vector<4x256xf32>
    %179 = arith.addf %174, %178 : vector<4x256xf32>
    %180 = math.tanh %179 : vector<4x256xf32>
    %cst_46 = arith.constant 1.000000e+00 : f32
    %181 = vector.broadcast %cst_46 : f32 to vector<4x256xf32>
    %182 = arith.subf %181, %171 : vector<4x256xf32>
    %183 = arith.mulf %182, %180 : vector<4x256xf32>
    %184 = arith.mulf %171, %127 : vector<4x256xf32>
    %185 = arith.addf %183, %184 : vector<4x256xf32>
    %186 = vector.extract_strided_slice %185 {offsets = [3, 0], sizes = [1, 256], strides = [1, 1]} : vector<4x256xf32> to vector<1x256xf32>
    %c2 = arith.constant 2 : index
    %c0_47 = arith.constant 0 : index
    %187 = vector.load %arg14[%c2, %c0_47] : memref<6x256xf32, #tpu.memory_space<vmem>>, vector<1x256xf32>
    tpu.vector_store %arg14[%c2, %c0_47], %186 {strides = array<i32>} : memref<6x256xf32, #tpu.memory_space<vmem>>, vector<1x256xf32>,
    %188 = vector.extract_strided_slice %2 {offsets = [12, 0], sizes = [4, 768], strides = [1, 1]} : vector<24x768xf32> to vector<4x768xf32>
    %cst_48 = arith.constant dense<0.000000e+00> : vector<4x768xf32>
    %189 = tpu.matmul %157, %3, %cst_48 {dimension_numbers = #tpu.dot_dimension_numbers<[1], [0], [0], [1], [0, 0, 1, 1], [], []>} : vector<4x256xf32>, vector<256x768xf32>, vector<4x768xf32> -> vector<4x768xf32>
    %190 = vector.extract_strided_slice %188 {offsets = [0, 0], sizes = [4, 512], strides = [1, 1]} : vector<4x768xf32> to vector<4x512xf32>
    %191 = vector.extract_strided_slice %189 {offsets = [0, 0], sizes = [4, 512], strides = [1, 1]} : vector<4x768xf32> to vector<4x512xf32>
    %192 = arith.addf %190, %191 : vector<4x512xf32>
    %193 = vector.broadcast %6 : vector<1x512xf32> to vector<4x512xf32>
    %194 = arith.addf %192, %193 : vector<4x512xf32>
    %195 = arith.negf %194 : vector<4x512xf32>
    %196 = math.exp %195 : vector<4x512xf32>
    %cst_49 = arith.constant 1.000000e+00 : f32
    %197 = vector.broadcast %cst_49 : f32 to vector<4x512xf32>
    %198 = arith.addf %197, %196 : vector<4x512xf32>
    %199 = arith.divf %197, %198 : vector<4x512xf32>
    %200 = vector.extract_strided_slice %199 {offsets = [0, 0], sizes = [4, 256], strides = [1, 1]} : vector<4x512xf32> to vector<4x256xf32>
    %201 = vector.extract_strided_slice %199 {offsets = [0, 256], sizes = [4, 256], strides = [1, 1]} : vector<4x512xf32> to vector<4x256xf32>
    %202 = vector.extract_strided_slice %188 {offsets = [0, 512], sizes = [4, 256], strides = [1, 1]} : vector<4x768xf32> to vector<4x256xf32>
    %203 = vector.broadcast %7 : vector<1x256xf32> to vector<4x256xf32>
    %204 = arith.addf %202, %203 : vector<4x256xf32>
    %205 = vector.extract_strided_slice %189 {offsets = [0, 512], sizes = [4, 256], strides = [1, 1]} : vector<4x768xf32> to vector<4x256xf32>
    %206 = vector.broadcast %8 : vector<1x256xf32> to vector<4x256xf32>
    %207 = arith.addf %205, %206 : vector<4x256xf32>
    %208 = arith.mulf %200, %207 : vector<4x256xf32>
    %209 = arith.addf %204, %208 : vector<4x256xf32>
    %210 = math.tanh %209 : vector<4x256xf32>
    %cst_50 = arith.constant 1.000000e+00 : f32
    %211 = vector.broadcast %cst_50 : f32 to vector<4x256xf32>
    %212 = arith.subf %211, %201 : vector<4x256xf32>
    %213 = arith.mulf %212, %210 : vector<4x256xf32>
    %214 = arith.mulf %201, %157 : vector<4x256xf32>
    %215 = arith.addf %213, %214 : vector<4x256xf32>
    %cst_51 = arith.constant dense<0.000000e+00> : vector<4x768xf32>
    %216 = tpu.matmul %215, %4, %cst_51 {dimension_numbers = #tpu.dot_dimension_numbers<[1], [0], [0], [1], [0, 0, 1, 1], [], []>} : vector<4x256xf32>, vector<256x768xf32>, vector<4x768xf32> -> vector<4x768xf32>
    %cst_52 = arith.constant dense<0.000000e+00> : vector<4x768xf32>
    %217 = tpu.matmul %185, %5, %cst_52 {dimension_numbers = #tpu.dot_dimension_numbers<[1], [0], [0], [1], [0, 0, 1, 1], [], []>} : vector<4x256xf32>, vector<256x768xf32>, vector<4x768xf32> -> vector<4x768xf32>
    %218 = vector.extract_strided_slice %216 {offsets = [0, 0], sizes = [4, 512], strides = [1, 1]} : vector<4x768xf32> to vector<4x512xf32>
    %219 = vector.extract_strided_slice %217 {offsets = [0, 0], sizes = [4, 512], strides = [1, 1]} : vector<4x768xf32> to vector<4x512xf32>
    %220 = arith.addf %218, %219 : vector<4x512xf32>
    %221 = vector.broadcast %9 : vector<1x512xf32> to vector<4x512xf32>
    %222 = arith.addf %220, %221 : vector<4x512xf32>
    %223 = arith.negf %222 : vector<4x512xf32>
    %224 = math.exp %223 : vector<4x512xf32>
    %cst_53 = arith.constant 1.000000e+00 : f32
    %225 = vector.broadcast %cst_53 : f32 to vector<4x512xf32>
    %226 = arith.addf %225, %224 : vector<4x512xf32>
    %227 = arith.divf %225, %226 : vector<4x512xf32>
    %228 = vector.extract_strided_slice %227 {offsets = [0, 0], sizes = [4, 256], strides = [1, 1]} : vector<4x512xf32> to vector<4x256xf32>
    %229 = vector.extract_strided_slice %227 {offsets = [0, 256], sizes = [4, 256], strides = [1, 1]} : vector<4x512xf32> to vector<4x256xf32>
    %230 = vector.extract_strided_slice %216 {offsets = [0, 512], sizes = [4, 256], strides = [1, 1]} : vector<4x768xf32> to vector<4x256xf32>
    %231 = vector.broadcast %10 : vector<1x256xf32> to vector<4x256xf32>
    %232 = arith.addf %230, %231 : vector<4x256xf32>
    %233 = vector.extract_strided_slice %217 {offsets = [0, 512], sizes = [4, 256], strides = [1, 1]} : vector<4x768xf32> to vector<4x256xf32>
    %234 = vector.broadcast %11 : vector<1x256xf32> to vector<4x256xf32>
    %235 = arith.addf %233, %234 : vector<4x256xf32>
    %236 = arith.mulf %228, %235 : vector<4x256xf32>
    %237 = arith.addf %232, %236 : vector<4x256xf32>
    %238 = math.tanh %237 : vector<4x256xf32>
    %cst_54 = arith.constant 1.000000e+00 : f32
    %239 = vector.broadcast %cst_54 : f32 to vector<4x256xf32>
    %240 = arith.subf %239, %229 : vector<4x256xf32>
    %241 = arith.mulf %240, %238 : vector<4x256xf32>
    %242 = arith.mulf %229, %185 : vector<4x256xf32>
    %243 = arith.addf %241, %242 : vector<4x256xf32>
    %244 = vector.extract_strided_slice %243 {offsets = [3, 0], sizes = [1, 256], strides = [1, 1]} : vector<4x256xf32> to vector<1x256xf32>
    %c3 = arith.constant 3 : index
    %c0_55 = arith.constant 0 : index
    %245 = vector.load %arg14[%c3, %c0_55] : memref<6x256xf32, #tpu.memory_space<vmem>>, vector<1x256xf32>
    tpu.vector_store %arg14[%c3, %c0_55], %244 {strides = array<i32>} : memref<6x256xf32, #tpu.memory_space<vmem>>, vector<1x256xf32>,
    %246 = vector.extract_strided_slice %2 {offsets = [16, 0], sizes = [4, 768], strides = [1, 1]} : vector<24x768xf32> to vector<4x768xf32>
    %cst_56 = arith.constant dense<0.000000e+00> : vector<4x768xf32>
    %247 = tpu.matmul %215, %3, %cst_56 {dimension_numbers = #tpu.dot_dimension_numbers<[1], [0], [0], [1], [0, 0, 1, 1], [], []>} : vector<4x256xf32>, vector<256x768xf32>, vector<4x768xf32> -> vector<4x768xf32>
    %248 = vector.extract_strided_slice %246 {offsets = [0, 0], sizes = [4, 512], strides = [1, 1]} : vector<4x768xf32> to vector<4x512xf32>
    %249 = vector.extract_strided_slice %247 {offsets = [0, 0], sizes = [4, 512], strides = [1, 1]} : vector<4x768xf32> to vector<4x512xf32>
    %250 = arith.addf %248, %249 : vector<4x512xf32>
    %251 = vector.broadcast %6 : vector<1x512xf32> to vector<4x512xf32>
    %252 = arith.addf %250, %251 : vector<4x512xf32>
    %253 = arith.negf %252 : vector<4x512xf32>
    %254 = math.exp %253 : vector<4x512xf32>
    %cst_57 = arith.constant 1.000000e+00 : f32
    %255 = vector.broadcast %cst_57 : f32 to vector<4x512xf32>
    %256 = arith.addf %255, %254 : vector<4x512xf32>
    %257 = arith.divf %255, %256 : vector<4x512xf32>
    %258 = vector.extract_strided_slice %257 {offsets = [0, 0], sizes = [4, 256], strides = [1, 1]} : vector<4x512xf32> to vector<4x256xf32>
    %259 = vector.extract_strided_slice %257 {offsets = [0, 256], sizes = [4, 256], strides = [1, 1]} : vector<4x512xf32> to vector<4x256xf32>
    %260 = vector.extract_strided_slice %246 {offsets = [0, 512], sizes = [4, 256], strides = [1, 1]} : vector<4x768xf32> to vector<4x256xf32>
    %261 = vector.broadcast %7 : vector<1x256xf32> to vector<4x256xf32>
    %262 = arith.addf %260, %261 : vector<4x256xf32>
    %263 = vector.extract_strided_slice %247 {offsets = [0, 512], sizes = [4, 256], strides = [1, 1]} : vector<4x768xf32> to vector<4x256xf32>
    %264 = vector.broadcast %8 : vector<1x256xf32> to vector<4x256xf32>
    %265 = arith.addf %263, %264 : vector<4x256xf32>
    %266 = arith.mulf %258, %265 : vector<4x256xf32>
    %267 = arith.addf %262, %266 : vector<4x256xf32>
    %268 = math.tanh %267 : vector<4x256xf32>
    %cst_58 = arith.constant 1.000000e+00 : f32
    %269 = vector.broadcast %cst_58 : f32 to vector<4x256xf32>
    %270 = arith.subf %269, %259 : vector<4x256xf32>
    %271 = arith.mulf %270, %268 : vector<4x256xf32>
    %272 = arith.mulf %259, %215 : vector<4x256xf32>
    %273 = arith.addf %271, %272 : vector<4x256xf32>
    %cst_59 = arith.constant dense<0.000000e+00> : vector<4x768xf32>
    %274 = tpu.matmul %273, %4, %cst_59 {dimension_numbers = #tpu.dot_dimension_numbers<[1], [0], [0], [1], [0, 0, 1, 1], [], []>} : vector<4x256xf32>, vector<256x768xf32>, vector<4x768xf32> -> vector<4x768xf32>
    %cst_60 = arith.constant dense<0.000000e+00> : vector<4x768xf32>
    %275 = tpu.matmul %243, %5, %cst_60 {dimension_numbers = #tpu.dot_dimension_numbers<[1], [0], [0], [1], [0, 0, 1, 1], [], []>} : vector<4x256xf32>, vector<256x768xf32>, vector<4x768xf32> -> vector<4x768xf32>
    %276 = vector.extract_strided_slice %274 {offsets = [0, 0], sizes = [4, 512], strides = [1, 1]} : vector<4x768xf32> to vector<4x512xf32>
    %277 = vector.extract_strided_slice %275 {offsets = [0, 0], sizes = [4, 512], strides = [1, 1]} : vector<4x768xf32> to vector<4x512xf32>
    %278 = arith.addf %276, %277 : vector<4x512xf32>
    %279 = vector.broadcast %9 : vector<1x512xf32> to vector<4x512xf32>
    %280 = arith.addf %278, %279 : vector<4x512xf32>
    %281 = arith.negf %280 : vector<4x512xf32>
    %282 = math.exp %281 : vector<4x512xf32>
    %cst_61 = arith.constant 1.000000e+00 : f32
    %283 = vector.broadcast %cst_61 : f32 to vector<4x512xf32>
    %284 = arith.addf %283, %282 : vector<4x512xf32>
    %285 = arith.divf %283, %284 : vector<4x512xf32>
    %286 = vector.extract_strided_slice %285 {offsets = [0, 0], sizes = [4, 256], strides = [1, 1]} : vector<4x512xf32> to vector<4x256xf32>
    %287 = vector.extract_strided_slice %285 {offsets = [0, 256], sizes = [4, 256], strides = [1, 1]} : vector<4x512xf32> to vector<4x256xf32>
    %288 = vector.extract_strided_slice %274 {offsets = [0, 512], sizes = [4, 256], strides = [1, 1]} : vector<4x768xf32> to vector<4x256xf32>
    %289 = vector.broadcast %10 : vector<1x256xf32> to vector<4x256xf32>
    %290 = arith.addf %288, %289 : vector<4x256xf32>
    %291 = vector.extract_strided_slice %275 {offsets = [0, 512], sizes = [4, 256], strides = [1, 1]} : vector<4x768xf32> to vector<4x256xf32>
    %292 = vector.broadcast %11 : vector<1x256xf32> to vector<4x256xf32>
    %293 = arith.addf %291, %292 : vector<4x256xf32>
    %294 = arith.mulf %286, %293 : vector<4x256xf32>
    %295 = arith.addf %290, %294 : vector<4x256xf32>
    %296 = math.tanh %295 : vector<4x256xf32>
    %cst_62 = arith.constant 1.000000e+00 : f32
    %297 = vector.broadcast %cst_62 : f32 to vector<4x256xf32>
    %298 = arith.subf %297, %287 : vector<4x256xf32>
    %299 = arith.mulf %298, %296 : vector<4x256xf32>
    %300 = arith.mulf %287, %243 : vector<4x256xf32>
    %301 = arith.addf %299, %300 : vector<4x256xf32>
    %302 = vector.extract_strided_slice %301 {offsets = [3, 0], sizes = [1, 256], strides = [1, 1]} : vector<4x256xf32> to vector<1x256xf32>
    %c4 = arith.constant 4 : index
    %c0_63 = arith.constant 0 : index
    %303 = vector.load %arg14[%c4, %c0_63] : memref<6x256xf32, #tpu.memory_space<vmem>>, vector<1x256xf32>
    tpu.vector_store %arg14[%c4, %c0_63], %302 {strides = array<i32>} : memref<6x256xf32, #tpu.memory_space<vmem>>, vector<1x256xf32>,
    %304 = vector.extract_strided_slice %2 {offsets = [20, 0], sizes = [4, 768], strides = [1, 1]} : vector<24x768xf32> to vector<4x768xf32>
    %cst_64 = arith.constant dense<0.000000e+00> : vector<4x768xf32>
    %305 = tpu.matmul %273, %3, %cst_64 {dimension_numbers = #tpu.dot_dimension_numbers<[1], [0], [0], [1], [0, 0, 1, 1], [], []>} : vector<4x256xf32>, vector<256x768xf32>, vector<4x768xf32> -> vector<4x768xf32>
    %306 = vector.extract_strided_slice %304 {offsets = [0, 0], sizes = [4, 512], strides = [1, 1]} : vector<4x768xf32> to vector<4x512xf32>
    %307 = vector.extract_strided_slice %305 {offsets = [0, 0], sizes = [4, 512], strides = [1, 1]} : vector<4x768xf32> to vector<4x512xf32>
    %308 = arith.addf %306, %307 : vector<4x512xf32>
    %309 = vector.broadcast %6 : vector<1x512xf32> to vector<4x512xf32>
    %310 = arith.addf %308, %309 : vector<4x512xf32>
    %311 = arith.negf %310 : vector<4x512xf32>
    %312 = math.exp %311 : vector<4x512xf32>
    %cst_65 = arith.constant 1.000000e+00 : f32
    %313 = vector.broadcast %cst_65 : f32 to vector<4x512xf32>
    %314 = arith.addf %313, %312 : vector<4x512xf32>
    %315 = arith.divf %313, %314 : vector<4x512xf32>
    %316 = vector.extract_strided_slice %315 {offsets = [0, 0], sizes = [4, 256], strides = [1, 1]} : vector<4x512xf32> to vector<4x256xf32>
    %317 = vector.extract_strided_slice %315 {offsets = [0, 256], sizes = [4, 256], strides = [1, 1]} : vector<4x512xf32> to vector<4x256xf32>
    %318 = vector.extract_strided_slice %304 {offsets = [0, 512], sizes = [4, 256], strides = [1, 1]} : vector<4x768xf32> to vector<4x256xf32>
    %319 = vector.broadcast %7 : vector<1x256xf32> to vector<4x256xf32>
    %320 = arith.addf %318, %319 : vector<4x256xf32>
    %321 = vector.extract_strided_slice %305 {offsets = [0, 512], sizes = [4, 256], strides = [1, 1]} : vector<4x768xf32> to vector<4x256xf32>
    %322 = vector.broadcast %8 : vector<1x256xf32> to vector<4x256xf32>
    %323 = arith.addf %321, %322 : vector<4x256xf32>
    %324 = arith.mulf %316, %323 : vector<4x256xf32>
    %325 = arith.addf %320, %324 : vector<4x256xf32>
    %326 = math.tanh %325 : vector<4x256xf32>
    %cst_66 = arith.constant 1.000000e+00 : f32
    %327 = vector.broadcast %cst_66 : f32 to vector<4x256xf32>
    %328 = arith.subf %327, %317 : vector<4x256xf32>
    %329 = arith.mulf %328, %326 : vector<4x256xf32>
    %330 = arith.mulf %317, %273 : vector<4x256xf32>
    %331 = arith.addf %329, %330 : vector<4x256xf32>
    %cst_67 = arith.constant dense<0.000000e+00> : vector<4x768xf32>
    %332 = tpu.matmul %331, %4, %cst_67 {dimension_numbers = #tpu.dot_dimension_numbers<[1], [0], [0], [1], [0, 0, 1, 1], [], []>} : vector<4x256xf32>, vector<256x768xf32>, vector<4x768xf32> -> vector<4x768xf32>
    %cst_68 = arith.constant dense<0.000000e+00> : vector<4x768xf32>
    %333 = tpu.matmul %301, %5, %cst_68 {dimension_numbers = #tpu.dot_dimension_numbers<[1], [0], [0], [1], [0, 0, 1, 1], [], []>} : vector<4x256xf32>, vector<256x768xf32>, vector<4x768xf32> -> vector<4x768xf32>
    %334 = vector.extract_strided_slice %332 {offsets = [0, 0], sizes = [4, 512], strides = [1, 1]} : vector<4x768xf32> to vector<4x512xf32>
    %335 = vector.extract_strided_slice %333 {offsets = [0, 0], sizes = [4, 512], strides = [1, 1]} : vector<4x768xf32> to vector<4x512xf32>
    %336 = arith.addf %334, %335 : vector<4x512xf32>
    %337 = vector.broadcast %9 : vector<1x512xf32> to vector<4x512xf32>
    %338 = arith.addf %336, %337 : vector<4x512xf32>
    %339 = arith.negf %338 : vector<4x512xf32>
    %340 = math.exp %339 : vector<4x512xf32>
    %cst_69 = arith.constant 1.000000e+00 : f32
    %341 = vector.broadcast %cst_69 : f32 to vector<4x512xf32>
    %342 = arith.addf %341, %340 : vector<4x512xf32>
    %343 = arith.divf %341, %342 : vector<4x512xf32>
    %344 = vector.extract_strided_slice %343 {offsets = [0, 0], sizes = [4, 256], strides = [1, 1]} : vector<4x512xf32> to vector<4x256xf32>
    %345 = vector.extract_strided_slice %343 {offsets = [0, 256], sizes = [4, 256], strides = [1, 1]} : vector<4x512xf32> to vector<4x256xf32>
    %346 = vector.extract_strided_slice %332 {offsets = [0, 512], sizes = [4, 256], strides = [1, 1]} : vector<4x768xf32> to vector<4x256xf32>
    %347 = vector.broadcast %10 : vector<1x256xf32> to vector<4x256xf32>
    %348 = arith.addf %346, %347 : vector<4x256xf32>
    %349 = vector.extract_strided_slice %333 {offsets = [0, 512], sizes = [4, 256], strides = [1, 1]} : vector<4x768xf32> to vector<4x256xf32>
    %350 = vector.broadcast %11 : vector<1x256xf32> to vector<4x256xf32>
    %351 = arith.addf %349, %350 : vector<4x256xf32>
    %352 = arith.mulf %344, %351 : vector<4x256xf32>
    %353 = arith.addf %348, %352 : vector<4x256xf32>
    %354 = math.tanh %353 : vector<4x256xf32>
    %cst_70 = arith.constant 1.000000e+00 : f32
    %355 = vector.broadcast %cst_70 : f32 to vector<4x256xf32>
    %356 = arith.subf %355, %345 : vector<4x256xf32>
    %357 = arith.mulf %356, %354 : vector<4x256xf32>
    %358 = arith.mulf %345, %301 : vector<4x256xf32>
    %359 = arith.addf %357, %358 : vector<4x256xf32>
    %360 = vector.extract_strided_slice %359 {offsets = [3, 0], sizes = [1, 256], strides = [1, 1]} : vector<4x256xf32> to vector<1x256xf32>
    %c5 = arith.constant 5 : index
    %c0_71 = arith.constant 0 : index
    %361 = vector.load %arg14[%c5, %c0_71] : memref<6x256xf32, #tpu.memory_space<vmem>>, vector<1x256xf32>
    tpu.vector_store %arg14[%c5, %c0_71], %360 {strides = array<i32>} : memref<6x256xf32, #tpu.memory_space<vmem>>, vector<1x256xf32>,
    %c0_72 = arith.constant 0 : index
    %c0_73 = arith.constant 0 : index
    %362 = vector.load %arg14[%c0_72, %c0_73] : memref<6x256xf32, #tpu.memory_space<vmem>>, vector<6x256xf32>
    %c0_74 = arith.constant 0 : index
    %c0_75 = arith.constant 0 : index
    %363 = vector.load %arg11[%c0_74, %c0_75] : memref<256x128xf32, #tpu.memory_space<vmem>>, vector<256x128xf32>
    %cst_76 = arith.constant dense<0.000000e+00> : vector<6x128xf32>
    %364 = tpu.matmul %362, %363, %cst_76 {dimension_numbers = #tpu.dot_dimension_numbers<[1], [0], [0], [1], [0, 0, 1, 1], [], []>} : vector<6x256xf32>, vector<256x128xf32>, vector<6x128xf32> -> vector<6x128xf32>
    %c0_77 = arith.constant 0 : index
    %c0_78 = arith.constant 0 : index
    %365 = vector.load %arg12[%c0_77, %c0_78] : memref<1x128xf32, #tpu.memory_space<vmem>>, vector<1x128xf32>
    %366 = vector.broadcast %365 : vector<1x128xf32> to vector<6x128xf32>
    %367 = arith.addf %364, %366 : vector<6x128xf32>
    %c0_79 = arith.constant 0 : index
    %c0_80 = arith.constant 0 : index
    %368 = vector.load %arg13[%c0_79, %c0_80] : memref<6x128xf32, #tpu.memory_space<vmem>>, vector<6x128xf32>
    tpu.vector_store %arg13[%c0_79, %c0_80], %367 {strides = array<i32>} : memref<6x128xf32, #tpu.memory_space<vmem>>, vector<6x128xf32>,
    return
  }
}

</mosaic_0001>

<llo_original>
// kernel: tpu_custom_call.1
$region0: #{tpu_custom_call.1}
  #allocation0 [shape = 'u32[]', space=smem, size = 0x4, offset = 0x4, fixed_abs, tag = 'smem constant byte address 0x4 - core index']
  #allocation1 [shape = 'u32[144,128]{1,0:T(1,128)}', space=vmem, size = 0x12000, scoped, tag = 'internal scratch']
  #allocation2 [shape = 'f32[6,256]{1,0:T(8,128)}', space=vmem, size = 0x2000, scoped, tag = 'scratch operand']
  %s0 = inlined_call_operand.vmem [shape: f32[24,8], index: 0, kind: input, shape index: {}]
  %s1 = inlined_call_operand.hbm [shape: f32[8,768], index: 1, kind: input, shape index: {}]
  %s2 = inlined_call_operand.hbm [shape: f32[256,768], index: 2, kind: input, shape index: {}]
  %s3 = inlined_call_operand.vmem [shape: f32[1,512], index: 3, kind: input, shape index: {}]
  %s4 = inlined_call_operand.vmem [shape: f32[1,256], index: 4, kind: input, shape index: {}]
  %s5 = inlined_call_operand.vmem [shape: f32[1,256], index: 5, kind: input, shape index: {}]
  %s6 = inlined_call_operand.hbm [shape: f32[256,768], index: 6, kind: input, shape index: {}]
  %s7 = inlined_call_operand.hbm [shape: f32[256,768], index: 7, kind: input, shape index: {}]
  %s8 = inlined_call_operand.vmem [shape: f32[1,512], index: 8, kind: input, shape index: {}]
  %s9 = inlined_call_operand.vmem [shape: f32[1,256], index: 9, kind: input, shape index: {}]
  %s10 = inlined_call_operand.vmem [shape: f32[1,256], index: 10, kind: input, shape index: {}]
  %s11 = inlined_call_operand.hbm [shape: f32[256,128], index: 11, kind: input, shape index: {}]
  %s12 = inlined_call_operand.vmem [shape: f32[1,128], index: 12, kind: input, shape index: {}]
  %s13 = inlined_call_operand.hbm [shape: f32[6,128], index: 13, kind: output, shape index: {}]
  %s14 = sld [smem:[#allocation0]]
  $region82: #{tpu_custom_call.1} parent=0
    _
  %s16 = ssub.s32 1, %s14
  %s17 = scalar_select 0, %s16, %s14
  $region1: #{tpu_custom_call.1} parent=0
    #allocation3 [shape = 'u8[24576]{0}', space=vmem, size = 0x6000, scoped, tag = 'input window, operand 1, single buffered']
    #allocation4 [shape = 's32[1]{0}', space=sflag, size = 0x4, scoped, tag = 'scoped memory for tpu_custom_call.1']
    #allocation5 [shape = 's32[1]{0}', space=sflag, size = 0x4, scoped, tag = 'scoped memory for tpu_custom_call.1']
    #allocation6 [shape = 'u8[786432]{0}', space=vmem, size = 0xc0000, scoped, tag = 'input window, operand 2, single buffered']
    #allocation7 [shape = 's32[1]{0}', space=sflag, size = 0x4, scoped, tag = 'scoped memory for tpu_custom_call.1']
    #allocation8 [shape = 'u8[786432]{0}', space=vmem, size = 0xc0000, scoped, tag = 'input window, operand 6, single buffered']
    #allocation9 [shape = 'u8[786432]{0}', space=vmem, size = 0xc0000, scoped, tag = 'input window, operand 7, single buffered']
    #allocation10 [shape = 's32[1]{0}', space=sflag, size = 0x4, scoped, tag = 'scoped memory for tpu_custom_call.1']
    #allocation11 [shape = 'u8[131072]{0}', space=vmem, size = 0x20000, scoped, tag = 'input window, operand 11, single buffered']
    #allocation12 [shape = 'u8[4096]{0}', space=vmem, size = 0x1000, scoped, tag = 'output window, operand 0, single buffered']
    %18 = vsyncpa [#allocation4], 0
    %19 = vsyncpa [#allocation7], 0
    %20 = vsyncpa [#allocation10], 0
    %21 = vsyncpa [#allocation5], 0
    // Predicated region
    $region2: #{tpu_custom_call.1} parent=1 // pred_check
      _
    $region3: #{tpu_custom_call.1} parent=1 // pred_check_branch
      %23 = sbr.rel (0) target = $region5
    $region4: #{tpu_custom_call.1} parent=1 // pred_region
      _
    $region5: #{tpu_custom_call.1} parent=1 // pred_fallthru
      _
    // Predicated region
    $region6: #{tpu_custom_call.1} parent=1 // pred_check
      _
    $region7: #{tpu_custom_call.1} parent=1 // pred_check_branch
      %25 = sbr.rel (0) target = $region9
    $region8: #{tpu_custom_call.1} parent=1 // pred_region
      %s27 = ssub.s32 768, 768
      %28 = vsyncadd [#allocation4], %s27
      %s30 = sshll.u32 [#allocation3], 4
      %s31 = int_to_ptr.vmem [resolvable:$true] %s30
      %33 = dma.hbm_to_vmem [thread:$0]  %s1, 768, %s31, [#allocation4]
    $region9: #{tpu_custom_call.1} parent=1 // pred_fallthru
      _
    // Predicated region
    $region10: #{tpu_custom_call.1} parent=1 // pred_check
      _
    $region11: #{tpu_custom_call.1} parent=1 // pred_check_branch
      %35 = sbr.rel (0) target = $region13
    $region12: #{tpu_custom_call.1} parent=1 // pred_region
      %s37 = ssub.s32 24576, 24576
      %38 = vsyncadd [#allocation7], %s37
      %s39 = sshll.u32 [#allocation6], 4
      %s40 = int_to_ptr.vmem [resolvable:$true] %s39
      %45 = dma.hbm_to_vmem [thread:$0]  %s2, 24576, %s40, [#allocation7], 768, 768, 48
    $region13: #{tpu_custom_call.1} parent=1 // pred_fallthru
      _
    // Predicated region
    $region14: #{tpu_custom_call.1} parent=1 // pred_check
      _
    $region15: #{tpu_custom_call.1} parent=1 // pred_check_branch
      %47 = sbr.rel (0) target = $region17
    $region16: #{tpu_custom_call.1} parent=1 // pred_region
      _
    $region17: #{tpu_custom_call.1} parent=1 // pred_fallthru
      _
    // Predicated region
    $region18: #{tpu_custom_call.1} parent=1 // pred_check
      _
    $region19: #{tpu_custom_call.1} parent=1 // pred_check_branch
      %49 = sbr.rel (0) target = $region21
    $region20: #{tpu_custom_call.1} parent=1 // pred_region
      _
    $region21: #{tpu_custom_call.1} parent=1 // pred_fallthru
      _
    // Predicated region
    $region22: #{tpu_custom_call.1} parent=1 // pred_check
      _
    $region23: #{tpu_custom_call.1} parent=1 // pred_check_branch
      %51 = sbr.rel (0) target = $region25
    $region24: #{tpu_custom_call.1} parent=1 // pred_region
      _
    $region25: #{tpu_custom_call.1} parent=1 // pred_fallthru
      _
    // Predicated region
    $region26: #{tpu_custom_call.1} parent=1 // pred_check
      _
    $region27: #{tpu_custom_call.1} parent=1 // pred_check_branch
      %53 = sbr.rel (0) target = $region29
    $region28: #{tpu_custom_call.1} parent=1 // pred_region
      %s55 = ssub.s32 24576, 24576
      %56 = vsyncadd [#allocation7], %s55
      %s57 = sshll.u32 [#allocation8], 4
      %s58 = int_to_ptr.vmem [resolvable:$true] %s57
      %63 = dma.hbm_to_vmem [thread:$0]  %s6, 24576, %s58, [#allocation7], 768, 768, 48
    $region29: #{tpu_custom_call.1} parent=1 // pred_fallthru
      _
    // Predicated region
    $region30: #{tpu_custom_call.1} parent=1 // pred_check
      _
    $region31: #{tpu_custom_call.1} parent=1 // pred_check_branch
      %65 = sbr.rel (0) target = $region33
    $region32: #{tpu_custom_call.1} parent=1 // pred_region
      %s67 = ssub.s32 24576, 24576
      %68 = vsyncadd [#allocation10], %s67
      %s69 = sshll.u32 [#allocation9], 4
      %s70 = int_to_ptr.vmem [resolvable:$true] %s69
      %75 = dma.hbm_to_vmem [thread:$0]  %s7, 24576, %s70, [#allocation10], 768, 768, 48
    $region33: #{tpu_custom_call.1} parent=1 // pred_fallthru
      _
    // Predicated region
    $region34: #{tpu_custom_call.1} parent=1 // pred_check
      _
    $region35: #{tpu_custom_call.1} parent=1 // pred_check_branch
      %77 = sbr.rel (0) target = $region37
    $region36: #{tpu_custom_call.1} parent=1 // pred_region
      _
    $region37: #{tpu_custom_call.1} parent=1 // pred_fallthru
      _
    // Predicated region
    $region38: #{tpu_custom_call.1} parent=1 // pred_check
      _
    $region39: #{tpu_custom_call.1} parent=1 // pred_check_branch
      %79 = sbr.rel (0) target = $region41
    $region40: #{tpu_custom_call.1} parent=1 // pred_region
      _
    $region41: #{tpu_custom_call.1} parent=1 // pred_fallthru
      _
    // Predicated region
    $region42: #{tpu_custom_call.1} parent=1 // pred_check
      _
    $region43: #{tpu_custom_call.1} parent=1 // pred_check_branch
      %81 = sbr.rel (0) target = $region45
    $region44: #{tpu_custom_call.1} parent=1 // pred_region
      _
    $region45: #{tpu_custom_call.1} parent=1 // pred_fallthru
      _
    // Predicated region
    $region46: #{tpu_custom_call.1} parent=1 // pred_check
      _
    $region47: #{tpu_custom_call.1} parent=1 // pred_check_branch
      %83 = sbr.rel (0) target = $region49
    $region48: #{tpu_custom_call.1} parent=1 // pred_region
      %s85 = ssub.s32 4096, 4096
      %86 = vsyncadd [#allocation10], %s85
      %s87 = sshll.u32 [#allocation11], 4
      %s88 = int_to_ptr.vmem [resolvable:$true] %s87
      %93 = dma.hbm_to_vmem [thread:$0]  %s11, 4096, %s88, [#allocation10], 128, 128, 8
    $region49: #{tpu_custom_call.1} parent=1 // pred_fallthru
      _
    // Predicated region
    $region50: #{tpu_custom_call.1} parent=1 // pred_check
      _
    $region51: #{tpu_custom_call.1} parent=1 // pred_check_branch
      %95 = sbr.rel (0) target = $region53
    $region52: #{tpu_custom_call.1} parent=1 // pred_region
      _
    $region53: #{tpu_custom_call.1} parent=1 // pred_fallthru
      _
    // Predicated region
    $region54: #{tpu_custom_call.1} parent=1 // pred_check
      _
    $region55: #{tpu_custom_call.1} parent=1 // pred_check_branch
      %97 = sbr.rel (0) target = $region57
    $region56: #{tpu_custom_call.1} parent=1 // pred_region
      %98 = dma.done [#allocation4], 768
    $region57: #{tpu_custom_call.1} parent=1 // pred_fallthru
      _
    // Predicated region
    $region58: #{tpu_custom_call.1} parent=1 // pred_check
      _
    $region59: #{tpu_custom_call.1} parent=1 // pred_check_branch
      %100 = sbr.rel (0) target = $region61
    $region60: #{tpu_custom_call.1} parent=1 // pred_region
      %101 = dma.done [#allocation7], 24576
    $region61: #{tpu_custom_call.1} parent=1 // pred_fallthru
      _
    // Predicated region
    $region62: #{tpu_custom_call.1} parent=1 // pred_check
      _
    $region63: #{tpu_custom_call.1} parent=1 // pred_check_branch
      %103 = sbr.rel (0) target = $region65
    $region64: #{tpu_custom_call.1} parent=1 // pred_region
      %104 = dma.done [#allocation7], 24576
    $region65: #{tpu_custom_call.1} parent=1 // pred_fallthru
      _
    // Predicated region
    $region66: #{tpu_custom_call.1} parent=1 // pred_check
      _
    $region67: #{tpu_custom_call.1} parent=1 // pred_check_branch
      %106 = sbr.rel (0) target = $region69
    $region68: #{tpu_custom_call.1} parent=1 // pred_region
      %107 = dma.done [#allocation10], 24576
    $region69: #{tpu_custom_call.1} parent=1 // pred_fallthru
      _
    // Predicated region
    $region70: #{tpu_custom_call.1} parent=1 // pred_check
      _
    $region71: #{tpu_custom_call.1} parent=1 // pred_check_branch
      %109 = sbr.rel (0) target = $region73
    $region72: #{tpu_custom_call.1} parent=1 // pred_region
      %110 = dma.done [#allocation10], 4096
    $region73: #{tpu_custom_call.1} parent=1 // pred_fallthru
      _
    %v111 = vld [vmem:[%s0] sm:$0xff]
    %v112 = vld [vmem:[%s0 + $0x8] sm:$0xff]
    %v113 = vld [vmem:[%s0 + $0x10] sm:$0xff]
    %v114 = vld [vmem:[#allocation3] sm:$0xff]
    %v115 = vld [vmem:[#allocation3 + $0x8] sm:$0xff]
    %v116 = vld [vmem:[#allocation3 + $0x10] sm:$0xff]
    %v117 = vld [vmem:[#allocation3 + $0x18] sm:$0xff]
    %v118 = vld [vmem:[#allocation3 + $0x20] sm:$0xff]
    %v119 = vld [vmem:[#allocation3 + $0x28] sm:$0xff]
    %vm120 = vcmask 64512
    %v122 = vsel %vm120, %v111, 0
    %v125 = vsel %vm120, %v112, 0
    %v128 = vsel %vm120, %v113, 0
    %130 = vmatprep.subr.mxu0 %v115
    %131 = vmatpush1.msra.mxu0 %v114
    %132 = vmatprep.subr.mxu0 0.0
    %133 = vmatpush1.msra.mxu0 0.0
    %134 = vmatprep.subr.mxu0 0.0
    %135 = vmatpush1.msra.mxu0 0.0
    %136 = vmatprep.subr.mxu0 0.0
    %137 = vmatpush1.msra.mxu0 0.0
    %138 = vmatprep.subr.mxu0 0.0
    %139 = vmatpush1.msra.mxu0 0.0
    %140 = vmatprep.subr.mxu0 0.0
    %141 = vmatpush1.msra.mxu0 0.0
    %142 = vmatprep.subr.mxu0 0.0
    %143 = vmatpush1.msra.mxu0 0.0
    %144 = vmatprep.subr.mxu0 0.0
    %145 = vmatpush1.msra.mxu0 0.0
    %146 = vmatprep.subr.mxu0 0.0
    %147 = vmatpush1.msra.mxu0 0.0
    %148 = vmatprep.subr.mxu0 0.0
    %149 = vmatpush1.msra.mxu0 0.0
    %150 = vmatprep.subr.mxu0 0.0
    %151 = vmatpush1.msra.mxu0 0.0
    %152 = vmatprep.subr.mxu0 0.0
    %153 = vmatpush1.msra.mxu0 0.0
    %154 = vmatprep.subr.mxu0 0.0
    %155 = vmatpush1.msra.mxu0 0.0
    %156 = vmatprep.subr.mxu0 0.0
    %157 = vmatpush1.msra.mxu0 0.0
    %158 = vmatprep.subr.mxu0 0.0
    %159 = vmatpush1.msra.mxu0 0.0
    %160 = vmatprep.subr.mxu0 0.0
    %161 = vmatpush1.msra.mxu0 0.0
    %162 = vmatprep.subr.mxu0 0.0
    %163 = vmatpush1.msra.mxu0 0.0
    %164 = vmatprep.subr.mxu0 0.0
    %165 = vmatpush1.msra.mxu0 0.0
    %166 = vmatprep.subr.mxu0 0.0
    %167 = vmatpush1.msra.mxu0 0.0
    %168 = vmatprep.subr.mxu0 0.0
    %169 = vmatpush1.msra.mxu0 0.0
    %170 = vmatprep.subr.mxu0 0.0
    %171 = vmatpush1.msra.mxu0 0.0
    %172 = vmatprep.subr.mxu0 0.0
    %173 = vmatpush1.msra.mxu0 0.0
    %174 = vmatprep.subr.mxu0 0.0
    %175 = vmatpush1.msra.mxu0 0.0
    %176 = vmatprep.subr.mxu0 0.0
    %177 = vmatpush1.msra.mxu0 0.0
    %178 = vmatprep.subr.mxu0 0.0
    %179 = vmatpush1.msra.mxu0 0.0
    %180 = vmatprep.subr.mxu0 0.0
    %181 = vmatpush1.msra.mxu0 0.0
    %182 = vmatprep.subr.mxu0 0.0
    %183 = vmatpush1.msra.mxu0 0.0
    %184 = vmatprep.subr.mxu0 0.0
    %185 = vmatpush1.msra.mxu0 0.0
    %186 = vmatprep.subr.mxu0 0.0
    %187 = vmatpush1.msra.mxu0 0.0
    %188 = vmatprep.subr.mxu0 0.0
    %189 = vmatpush1.msra.mxu0 0.0
    %190 = vmatprep.subr.mxu0 0.0
    %191 = vmatpush1.msra.mxu0 0.0
    %192 = vmatprep.subr.mxu0 0.0
    %193 = vmatpush1.msra.mxu0 0.0
    %194 = vmatprep.mubr.f32.mxu0 0.0
    %195 = vmatmul.mubr.f32.gmra.mrb[0].mxu0 %v122
    %v196 = vpop.f32.mrb[0].mxu0
    %v197 = vadd.f32 0.0, %v196
    %v198 = vpop.f32.mrb[0].mxu0
    %v199 = vadd.f32 0.0, %v198
    %200 = vmatprep.mubr.f32.mxu0 0.0
    %201 = vmatmul.mubr.f32.gmra.mrb[0].mxu0 %v125
    %v202 = vpop.f32.mrb[0].mxu0
    %v203 = vadd.f32 0.0, %v202
    %v204 = vpop.f32.mrb[0].mxu0
    %v205 = vadd.f32 0.0, %v204
    %206 = vmatprep.mubr.f32.mxu0 0.0
    %207 = vmatmul.mubr.f32.gmra.mrb[0].mxu0 %v128
    %v208 = vpop.f32.mrb[0].mxu0
    %v209 = vadd.f32 0.0, %v208
    %v210 = vpop.f32.mrb[0].mxu0
    %v211 = vadd.f32 0.0, %v210
    %212 = vdwg.mxu0
    %213 = vmatprep.subr.mxu0 %v117
    %214 = vmatpush1.msra.mxu0 %v116
    %215 = vmatprep.subr.mxu0 0.0
    %216 = vmatpush1.msra.mxu0 0.0
    %217 = vmatprep.subr.mxu0 0.0
    %218 = vmatpush1.msra.mxu0 0.0
    %219 = vmatprep.subr.mxu0 0.0
    %220 = vmatpush1.msra.mxu0 0.0
    %221 = vmatprep.subr.mxu0 0.0
    %222 = vmatpush1.msra.mxu0 0.0
    %223 = vmatprep.subr.mxu0 0.0
    %224 = vmatpush1.msra.mxu0 0.0
    %225 = vmatprep.subr.mxu0 0.0
    %226 = vmatpush1.msra.mxu0 0.0
    %227 = vmatprep.subr.mxu0 0.0
    %228 = vmatpush1.msra.mxu0 0.0
    %229 = vmatprep.subr.mxu0 0.0
    %230 = vmatpush1.msra.mxu0 0.0
    %231 = vmatprep.subr.mxu0 0.0
    %232 = vmatpush1.msra.mxu0 0.0
    %233 = vmatprep.subr.mxu0 0.0
    %234 = vmatpush1.msra.mxu0 0.0
    %235 = vmatprep.subr.mxu0 0.0
    %236 = vmatpush1.msra.mxu0 0.0
    %237 = vmatprep.subr.mxu0 0.0
    %238 = vmatpush1.msra.mxu0 0.0
    %239 = vmatprep.subr.mxu0 0.0
    %240 = vmatpush1.msra.mxu0 0.0
    %241 = vmatprep.subr.mxu0 0.0
    %242 = vmatpush1.msra.mxu0 0.0
    %243 = vmatprep.subr.mxu0 0.0
    %244 = vmatpush1.msra.mxu0 0.0
    %245 = vmatprep.subr.mxu0 0.0
    %246 = vmatpush1.msra.mxu0 0.0
    %247 = vmatprep.subr.mxu0 0.0
    %248 = vmatpush1.msra.mxu0 0.0
    %249 = vmatprep.subr.mxu0 0.0
    %250 = vmatpush1.msra.mxu0 0.0
    %251 = vmatprep.subr.mxu0 0.0
    %252 = vmatpush1.msra.mxu0 0.0
    %253 = vmatprep.subr.mxu0 0.0
    %254 = vmatpush1.msra.mxu0 0.0
    %255 = vmatprep.subr.mxu0 0.0
    %256 = vmatpush1.msra.mxu0 0.0
    %257 = vmatprep.subr.mxu0 0.0
    %258 = vmatpush1.msra.mxu0 0.0
    %259 = vmatprep.subr.mxu0 0.0
    %260 = vmatpush1.msra.mxu0 0.0
    %261 = vmatprep.subr.mxu0 0.0
    %262 = vmatpush1.msra.mxu0 0.0
    %263 = vmatprep.subr.mxu0 0.0
    %264 = vmatpush1.msra.mxu0 0.0
    %265 = vmatprep.subr.mxu0 0.0
    %266 = vmatpush1.msra.mxu0 0.0
    %267 = vmatprep.subr.mxu0 0.0
    %268 = vmatpush1.msra.mxu0 0.0
    %269 = vmatprep.subr.mxu0 0.0
    %270 = vmatpush1.msra.mxu0 0.0
    %271 = vmatprep.subr.mxu0 0.0
    %272 = vmatpush1.msra.mxu0 0.0
    %273 = vmatprep.subr.mxu0 0.0
    %274 = vmatpush1.msra.mxu0 0.0
    %275 = vmatprep.subr.mxu0 0.0
    %276 = vmatpush1.msra.mxu0 0.0
    %277 = vmatprep.mubr.f32.mxu0 0.0
    %278 = vmatmul.mubr.f32.gmra.mrb[0].mxu0 %v122
    %v279 = vpop.f32.mrb[0].mxu0
    %v280 = vadd.f32 0.0, %v279
    %v281 = vpop.f32.mrb[0].mxu0
    %v282 = vadd.f32 0.0, %v281
    %283 = vmatprep.mubr.f32.mxu0 0.0
    %284 = vmatmul.mubr.f32.gmra.mrb[0].mxu0 %v125
    %v285 = vpop.f32.mrb[0].mxu0
    %v286 = vadd.f32 0.0, %v285
    %v287 = vpop.f32.mrb[0].mxu0
    %v288 = vadd.f32 0.0, %v287
    %289 = vmatprep.mubr.f32.mxu0 0.0
    %290 = vmatmul.mubr.f32.gmra.mrb[0].mxu0 %v128
    %v291 = vpop.f32.mrb[0].mxu0
    %v292 = vadd.f32 0.0, %v291
    %v293 = vpop.f32.mrb[0].mxu0
    %v294 = vadd.f32 0.0, %v293
    %295 = vdwg.mxu0
    %296 = vmatprep.subr.mxu0 %v119
    %297 = vmatpush1.msra.mxu0 %v118
    %298 = vmatprep.subr.mxu0 0.0
    %299 = vmatpush1.msra.mxu0 0.0
    %300 = vmatprep.subr.mxu0 0.0
    %301 = vmatpush1.msra.mxu0 0.0
    %302 = vmatprep.subr.mxu0 0.0
    %303 = vmatpush1.msra.mxu0 0.0
    %304 = vmatprep.subr.mxu0 0.0
    %305 = vmatpush1.msra.mxu0 0.0
    %306 = vmatprep.subr.mxu0 0.0
    %307 = vmatpush1.msra.mxu0 0.0
    %308 = vmatprep.subr.mxu0 0.0
    %309 = vmatpush1.msra.mxu0 0.0
    %310 = vmatprep.subr.mxu0 0.0
    %311 = vmatpush1.msra.mxu0 0.0
    %312 = vmatprep.subr.mxu0 0.0
    %313 = vmatpush1.msra.mxu0 0.0
    %314 = vmatprep.subr.mxu0 0.0
    %315 = vmatpush1.msra.mxu0 0.0
    %316 = vmatprep.subr.mxu0 0.0
    %317 = vmatpush1.msra.mxu0 0.0
    %318 = vmatprep.subr.mxu0 0.0
    %319 = vmatpush1.msra.mxu0 0.0
    %320 = vmatprep.subr.mxu0 0.0
    %321 = vmatpush1.msra.mxu0 0.0
    %322 = vmatprep.subr.mxu0 0.0
    %323 = vmatpush1.msra.mxu0 0.0
    %324 = vmatprep.subr.mxu0 0.0
    %325 = vmatpush1.msra.mxu0 0.0
    %326 = vmatprep.subr.mxu0 0.0
    %327 = vmatpush1.msra.mxu0 0.0
    %328 = vmatprep.subr.mxu0 0.0
    %329 = vmatpush1.msra.mxu0 0.0
    %330 = vmatprep.subr.mxu0 0.0
    %331 = vmatpush1.msra.mxu0 0.0
    %332 = vmatprep.subr.mxu0 0.0
    %333 = vmatpush1.msra.mxu0 0.0
    %334 = vmatprep.subr.mxu0 0.0
    %335 = vmatpush1.msra.mxu0 0.0
    %336 = vmatprep.subr.mxu0 0.0
    %337 = vmatpush1.msra.mxu0 0.0
    %338 = vmatprep.subr.mxu0 0.0
    %339 = vmatpush1.msra.mxu0 0.0
    %340 = vmatprep.subr.mxu0 0.0
    %341 = vmatpush1.msra.mxu0 0.0
    %342 = vmatprep.subr.mxu0 0.0
    %343 = vmatpush1.msra.mxu0 0.0
    %344 = vmatprep.subr.mxu0 0.0
    %345 = vmatpush1.msra.mxu0 0.0
    %346 = vmatprep.subr.mxu0 0.0
    %347 = vmatpush1.msra.mxu0 0.0
    %348 = vmatprep.subr.mxu0 0.0
    %349 = vmatpush1.msra.mxu0 0.0
    %350 = vmatprep.subr.mxu0 0.0
    %351 = vmatpush1.msra.mxu0 0.0
    %352 = vmatprep.subr.mxu0 0.0
    %353 = vmatpush1.msra.mxu0 0.0
    %354 = vmatprep.subr.mxu0 0.0
    %355 = vmatpush1.msra.mxu0 0.0
    %356 = vmatprep.subr.mxu0 0.0
    %357 = vmatpush1.msra.mxu0 0.0
    %358 = vmatprep.subr.mxu0 0.0
    %359 = vmatpush1.msra.mxu0 0.0
    %360 = vmatprep.mubr.f32.mxu0 0.0
    %361 = vmatmul.mubr.f32.gmra.mrb[0].mxu0 %v122
    %v362 = vpop.f32.mrb[0].mxu0
    %v363 = vadd.f32 0.0, %v362
    %v364 = vpop.f32.mrb[0].mxu0
    %v365 = vadd.f32 0.0, %v364
    %366 = vmatprep.mubr.f32.mxu0 0.0
    %367 = vmatmul.mubr.f32.gmra.mrb[0].mxu0 %v125
    %v368 = vpop.f32.mrb[0].mxu0
    %v369 = vadd.f32 0.0, %v368
    %v370 = vpop.f32.mrb[0].mxu0
    %v371 = vadd.f32 0.0, %v370
    %372 = vmatprep.mubr.f32.mxu0 0.0
    %373 = vmatmul.mubr.f32.gmra.mrb[0].mxu0 %v128
    %v374 = vpop.f32.mrb[0].mxu0
    %v375 = vadd.f32 0.0, %v374
    %v376 = vpop.f32.mrb[0].mxu0
    %v377 = vadd.f32 0.0, %v376
    %378 = vdwg.mxu0
    %v379 = vld [vmem:[#allocation6] sm:$0xff]
    %v380 = vld [vmem:[#allocation6 + $0x8] sm:$0xff]
    %v381 = vld [vmem:[#allocation6 + $0x10] sm:$0xff]
    %v382 = vld [vmem:[#allocation6 + $0x18] sm:$0xff]
    %v383 = vld [vmem:[#allocation6 + $0x20] sm:$0xff]
    %v384 = vld [vmem:[#allocation6 + $0x28] sm:$0xff]
    %v385 = vld [vmem:[#allocation6 + $0x30] sm:$0xff]
    %v386 = vld [vmem:[#allocation6 + $0x38] sm:$0xff]
    %v387 = vld [vmem:[#allocation6 + $0x40] sm:$0xff]
    %v388 = vld [vmem:[#allocation6 + $0x48] sm:$0xff]
    %v389 = vld [vmem:[#allocation6 + $0x50] sm:$0xff]
    %v390 = vld [vmem:[#allocation6 + $0x58] sm:$0xff]
    %v391 = vld [vmem:[#allocation6 + $0x60] sm:$0xff]
    %v392 = vld [vmem:[#allocation6 + $0x68] sm:$0xff]
    %v393 = vld [vmem:[#allocation6 + $0x70] sm:$0xff]
    %v394 = vld [vmem:[#allocation6 + $0x78] sm:$0xff]
    %v395 = vld [vmem:[#allocation6 + $0x80] sm:$0xff]
    %v396 = vld [vmem:[#allocation6 + $0x88] sm:$0xff]
    %v397 = vld [vmem:[#allocation6 + $0x90] sm:$0xff]
    %v398 = vld [vmem:[#allocation6 + $0x98] sm:$0xff]
    %v399 = vld [vmem:[#allocation6 + $0xa0] sm:$0xff]
    %v400 = vld [vmem:[#allocation6 + $0xa8] sm:$0xff]
    %v401 = vld [vmem:[#allocation6 + $0xb0] sm:$0xff]
    %v402 = vld [vmem:[#allocation6 + $0xb8] sm:$0xff]
    %v403 = vld [vmem:[#allocation6 + $0xc0] sm:$0xff]
    %v404 = vld [vmem:[#allocation6 + $0xc8] sm:$0xff]
    %v405 = vld [vmem:[#allocation6 + $0xd0] sm:$0xff]
    %v406 = vld [vmem:[#allocation6 + $0xd8] sm:$0xff]
    %v407 = vld [vmem:[#allocation6 + $0xe0] sm:$0xff]
    %v408 = vld [vmem:[#allocation6 + $0xe8] sm:$0xff]
    %v409 = vld [vmem:[#allocation6 + $0xf0] sm:$0xff]
    %v410 = vld [vmem:[#allocation6 + $0xf8] sm:$0xff]
    %v411 = vld [vmem:[#allocation6 + $0x100] sm:$0xff]
    %v412 = vld [vmem:[#allocation6 + $0x108] sm:$0xff]
    %v413 = vld [vmem:[#allocation6 + $0x110] sm:$0xff]
    %v414 = vld [vmem:[#allocation6 + $0x118] sm:$0xff]
    %v415 = vld [vmem:[#allocation6 + $0x120] sm:$0xff]
    %v416 = vld [vmem:[#allocation6 + $0x128] sm:$0xff]
    %v417 = vld [vmem:[#allocation6 + $0x130] sm:$0xff]
    %v418 = vld [vmem:[#allocation6 + $0x138] sm:$0xff]
    %v419 = vld [vmem:[#allocation6 + $0x140] sm:$0xff]
    %v420 = vld [vmem:[#allocation6 + $0x148] sm:$0xff]
    %v421 = vld [vmem:[#allocation6 + $0x150] sm:$0xff]
    %v422 = vld [vmem:[#allocation6 + $0x158] sm:$0xff]
    %v423 = vld [vmem:[#allocation6 + $0x160] sm:$0xff]
    %v424 = vld [vmem:[#allocation6 + $0x168] sm:$0xff]
    %v425 = vld [vmem:[#allocation6 + $0x170] sm:$0xff]
    %v426 = vld [vmem:[#allocation6 + $0x178] sm:$0xff]
    %v427 = vld [vmem:[#allocation6 + $0x180] sm:$0xff]
    %v428 = vld [vmem:[#allocation6 + $0x188] sm:$0xff]
    %v429 = vld [vmem:[#allocation6 + $0x190] sm:$0xff]
    %v430 = vld [vmem:[#allocation6 + $0x198] sm:$0xff]
    %v431 = vld [vmem:[#allocation6 + $0x1a0] sm:$0xff]
    %v432 = vld [vmem:[#allocation6 + $0x1a8] sm:$0xff]
    %v433 = vld [vmem:[#allocation6 + $0x1b0] sm:$0xff]
    %v434 = vld [vmem:[#allocation6 + $0x1b8] sm:$0xff]
    %v435 = vld [vmem:[#allocation6 + $0x1c0] sm:$0xff]
    %v436 = vld [vmem:[#allocation6 + $0x1c8] sm:$0xff]
    %v437 = vld [vmem:[#allocation6 + $0x1d0] sm:$0xff]
    %v438 = vld [vmem:[#allocation6 + $0x1d8] sm:$0xff]
    %v439 = vld [vmem:[#allocation6 + $0x1e0] sm:$0xff]
    %v440 = vld [vmem:[#allocation6 + $0x1e8] sm:$0xff]
    %v441 = vld [vmem:[#allocation6 + $0x1f0] sm:$0xff]
    %v442 = vld [vmem:[#allocation6 + $0x1f8] sm:$0xff]
    %v443 = vld [vmem:[#allocation6 + $0x200] sm:$0xff]
    %v444 = vld [vmem:[#allocation6 + $0x208] sm:$0xff]
    %v445 = vld [vmem:[#allocation6 + $0x210] sm:$0xff]
    %v446 = vld [vmem:[#allocation6 + $0x218] sm:$0xff]
    %v447 = vld [vmem:[#allocation6 + $0x220] sm:$0xff]
    %v448 = vld [vmem:[#allocation6 + $0x228] sm:$0xff]
    %v449 = vld [vmem:[#allocation6 + $0x230] sm:$0xff]
    %v450 = vld [vmem:[#allocation6 + $0x238] sm:$0xff]
    %v451 = vld [vmem:[#allocation6 + $0x240] sm:$0xff]
    %v452 = vld [vmem:[#allocation6 + $0x248] sm:$0xff]
    %v453 = vld [vmem:[#allocation6 + $0x250] sm:$0xff]
    %v454 = vld [vmem:[#allocation6 + $0x258] sm:$0xff]
    %v455 = vld [vmem:[#allocation6 + $0x260] sm:$0xff]
    %v456 = vld [vmem:[#allocation6 + $0x268] sm:$0xff]
    %v457 = vld [vmem:[#allocation6 + $0x270] sm:$0xff]
    %v458 = vld [vmem:[#allocation6 + $0x278] sm:$0xff]
    %v459 = vld [vmem:[#allocation6 + $0x280] sm:$0xff]
    %v460 = vld [vmem:[#allocation6 + $0x288] sm:$0xff]
    %v461 = vld [vmem:[#allocation6 + $0x290] sm:$0xff]
    %v462 = vld [vmem:[#allocation6 + $0x298] sm:$0xff]
    %v463 = vld [vmem:[#allocation6 + $0x2a0] sm:$0xff]
    %v464 = vld [vmem:[#allocation6 + $0x2a8] sm:$0xff]
    %v465 = vld [vmem:[#allocation6 + $0x2b0] sm:$0xff]
    %v466 = vld [vmem:[#allocation6 + $0x2b8] sm:$0xff]
    %v467 = vld [vmem:[#allocation6 + $0x2c0] sm:$0xff]
    %v468 = vld [vmem:[#allocation6 + $0x2c8] sm:$0xff]
    %v469 = vld [vmem:[#allocation6 + $0x2d0] sm:$0xff]
    %v470 = vld [vmem:[#allocation6 + $0x2d8] sm:$0xff]
    %v471 = vld [vmem:[#allocation6 + $0x2e0] sm:$0xff]
    %v472 = vld [vmem:[#allocation6 + $0x2e8] sm:$0xff]
    %v473 = vld [vmem:[#allocation6 + $0x2f0] sm:$0xff]
    %v474 = vld [vmem:[#allocation6 + $0x2f8] sm:$0xff]
    %v475 = vld [vmem:[#allocation6 + $0x300] sm:$0xff]
    %v476 = vld [vmem:[#allocation6 + $0x308] sm:$0xff]
    %v477 = vld [vmem:[#allocation6 + $0x310] sm:$0xff]
    %v478 = vld [vmem:[#allocation6 + $0x318] sm:$0xff]
    %v479 = vld [vmem:[#allocation6 + $0x320] sm:$0xff]
    %v480 = vld [vmem:[#allocation6 + $0x328] sm:$0xff]
    %v481 = vld [vmem:[#allocation6 + $0x330] sm:$0xff]
    %v482 = vld [vmem:[#allocation6 + $0x338] sm:$0xff]
    %v483 = vld [vmem:[#allocation6 + $0x340] sm:$0xff]
    %v484 = vld [vmem:[#allocation6 + $0x348] sm:$0xff]
    %v485 = vld [vmem:[#allocation6 + $0x350] sm:$0xff]
    %v486 = vld [vmem:[#allocation6 + $0x358] sm:$0xff]
    %v487 = vld [vmem:[#allocation6 + $0x360] sm:$0xff]
    %v488 = vld [vmem:[#allocation6 + $0x368] sm:$0xff]
    %v489 = vld [vmem:[#allocation6 + $0x370] sm:$0xff]
    %v490 = vld [vmem:[#allocation6 + $0x378] sm:$0xff]
    %v491 = vld [vmem:[#allocation6 + $0x380] sm:$0xff]
    %v492 = vld [vmem:[#allocation6 + $0x388] sm:$0xff]
    %v493 = vld [vmem:[#allocation6 + $0x390] sm:$0xff]
    %v494 = vld [vmem:[#allocation6 + $0x398] sm:$0xff]
    %v495 = vld [vmem:[#allocation6 + $0x3a0] sm:$0xff]
    %v496 = vld [vmem:[#allocation6 + $0x3a8] sm:$0xff]
    %v497 = vld [vmem:[#allocation6 + $0x3b0] sm:$0xff]
    %v498 = vld [vmem:[#allocation6 + $0x3b8] sm:$0xff]
    %v499 = vld [vmem:[#allocation6 + $0x3c0] sm:$0xff]
    %v500 = vld [vmem:[#allocation6 + $0x3c8] sm:$0xff]
    %v501 = vld [vmem:[#allocation6 + $0x3d0] sm:$0xff]
    %v502 = vld [vmem:[#allocation6 + $0x3d8] sm:$0xff]
    %v503 = vld [vmem:[#allocation6 + $0x3e0] sm:$0xff]
    %v504 = vld [vmem:[#allocation6 + $0x3e8] sm:$0xff]
    %v505 = vld [vmem:[#allocation6 + $0x3f0] sm:$0xff]
    %v506 = vld [vmem:[#allocation6 + $0x3f8] sm:$0xff]
    %v507 = vld [vmem:[#allocation6 + $0x400] sm:$0xff]
    %v508 = vld [vmem:[#allocation6 + $0x408] sm:$0xff]
    %v509 = vld [vmem:[#allocation6 + $0x410] sm:$0xff]
    %v510 = vld [vmem:[#allocation6 + $0x418] sm:$0xff]
    %v511 = vld [vmem:[#allocation6 + $0x420] sm:$0xff]
    %v512 = vld [vmem:[#allocation6 + $0x428] sm:$0xff]
    %v513 = vld [vmem:[#allocation6 + $0x430] sm:$0xff]
    %v514 = vld [vmem:[#allocation6 + $0x438] sm:$0xff]
    %v515 = vld [vmem:[#allocation6 + $0x440] sm:$0xff]
    %v516 = vld [vmem:[#allocation6 + $0x448] sm:$0xff]
    %v517 = vld [vmem:[#allocation6 + $0x450] sm:$0xff]
    %v518 = vld [vmem:[#allocation6 + $0x458] sm:$0xff]
    %v519 = vld [vmem:[#allocation6 + $0x460] sm:$0xff]
    %v520 = vld [vmem:[#allocation6 + $0x468] sm:$0xff]
    %v521 = vld [vmem:[#allocation6 + $0x470] sm:$0xff]
    %v522 = vld [vmem:[#allocation6 + $0x478] sm:$0xff]
    %v523 = vld [vmem:[#allocation6 + $0x480] sm:$0xff]
    %v524 = vld [vmem:[#allocation6 + $0x488] sm:$0xff]
    %v525 = vld [vmem:[#allocation6 + $0x490] sm:$0xff]
    %v526 = vld [vmem:[#allocation6 + $0x498] sm:$0xff]
    %v527 = vld [vmem:[#allocation6 + $0x4a0] sm:$0xff]
    %v528 = vld [vmem:[#allocation6 + $0x4a8] sm:$0xff]
    %v529 = vld [vmem:[#allocation6 + $0x4b0] sm:$0xff]
    %v530 = vld [vmem:[#allocation6 + $0x4b8] sm:$0xff]
    %v531 = vld [vmem:[#allocation6 + $0x4c0] sm:$0xff]
    %v532 = vld [vmem:[#allocation6 + $0x4c8] sm:$0xff]
    %v533 = vld [vmem:[#allocation6 + $0x4d0] sm:$0xff]
    %v534 = vld [vmem:[#allocation6 + $0x4d8] sm:$0xff]
    %v535 = vld [vmem:[#allocation6 + $0x4e0] sm:$0xff]
    %v536 = vld [vmem:[#allocation6 + $0x4e8] sm:$0xff]
    %v537 = vld [vmem:[#allocation6 + $0x4f0] sm:$0xff]
    %v538 = vld [vmem:[#allocation6 + $0x4f8] sm:$0xff]
    %v539 = vld [vmem:[#allocation6 + $0x500] sm:$0xff]
    %v540 = vld [vmem:[#allocation6 + $0x508] sm:$0xff]
    %v541 = vld [vmem:[#allocation6 + $0x510] sm:$0xff]
    %v542 = vld [vmem:[#allocation6 + $0x518] sm:$0xff]
    %v543 = vld [vmem:[#allocation6 + $0x520] sm:$0xff]
    %v544 = vld [vmem:[#allocation6 + $0x528] sm:$0xff]
    %v545 = vld [vmem:[#allocation6 + $0x530] sm:$0xff]
    %v546 = vld [vmem:[#allocation6 + $0x538] sm:$0xff]
    %v547 = vld [vmem:[#allocation6 + $0x540] sm:$0xff]
    %v548 = vld [vmem:[#allocation6 + $0x548] sm:$0xff]
    %v549 = vld [vmem:[#allocation6 + $0x550] sm:$0xff]
    %v550 = vld [vmem:[#allocation6 + $0x558] sm:$0xff]
    %v551 = vld [vmem:[#allocation6 + $0x560] sm:$0xff]
    %v552 = vld [vmem:[#allocation6 + $0x568] sm:$0xff]
    %v553 = vld [vmem:[#allocation6 + $0x570] sm:$0xff]
    %v554 = vld [vmem:[#allocation6 + $0x578] sm:$0xff]
    %v555 = vld [vmem:[#allocation6 + $0x580] sm:$0xff]
    %v556 = vld [vmem:[#allocation6 + $0x588] sm:$0xff]
    %v557 = vld [vmem:[#allocation6 + $0x590] sm:$0xff]
    %v558 = vld [vmem:[#allocation6 + $0x598] sm:$0xff]
    %v559 = vld [vmem:[#allocation6 + $0x5a0] sm:$0xff]
    %v560 = vld [vmem:[#allocation6 + $0x5a8] sm:$0xff]
    %v561 = vld [vmem:[#allocation6 + $0x5b0] sm:$0xff]
    %v562 = vld [vmem:[#allocation6 + $0x5b8] sm:$0xff]
    %v563 = vld [vmem:[#allocation6 + $0x5c0] sm:$0xff]
    %v564 = vld [vmem:[#allocation6 + $0x5c8] sm:$0xff]
    %v565 = vld [vmem:[#allocation6 + $0x5d0] sm:$0xff]
    %v566 = vld [vmem:[#allocation6 + $0x5d8] sm:$0xff]
    %v567 = vld [vmem:[#allocation6 + $0x5e0] sm:$0xff]
    %v568 = vld [vmem:[#allocation6 + $0x5e8] sm:$0xff]
    %v569 = vld [vmem:[#allocation6 + $0x5f0] sm:$0xff]
    %v570 = vld [vmem:[#allocation6 + $0x5f8] sm:$0xff]
    %v571 = vld [vmem:[#allocation8] sm:$0xff]
    %v572 = vld [vmem:[#allocation8 + $0x8] sm:$0xff]
    %v573 = vld [vmem:[#allocation8 + $0x10] sm:$0xff]
    %v574 = vld [vmem:[#allocation8 + $0x18] sm:$0xff]
    %v575 = vld [vmem:[#allocation8 + $0x20] sm:$0xff]
    %v576 = vld [vmem:[#allocation8 + $0x28] sm:$0xff]
    %v577 = vld [vmem:[#allocation8 + $0x30] sm:$0xff]
    %v578 = vld [vmem:[#allocation8 + $0x38] sm:$0xff]
    %v579 = vld [vmem:[#allocation8 + $0x40] sm:$0xff]
    %v580 = vld [vmem:[#allocation8 + $0x48] sm:$0xff]
    %v581 = vld [vmem:[#allocation8 + $0x50] sm:$0xff]
    %v582 = vld [vmem:[#allocation8 + $0x58] sm:$0xff]
    %v583 = vld [vmem:[#allocation8 + $0x60] sm:$0xff]
    %v584 = vld [vmem:[#allocation8 + $0x68] sm:$0xff]
    %v585 = vld [vmem:[#allocation8 + $0x70] sm:$0xff]
    %v586 = vld [vmem:[#allocation8 + $0x78] sm:$0xff]
    %v587 = vld [vmem:[#allocation8 + $0x80] sm:$0xff]
    %v588 = vld [vmem:[#allocation8 + $0x88] sm:$0xff]
    %v589 = vld [vmem:[#allocation8 + $0x90] sm:$0xff]
    %v590 = vld [vmem:[#allocation8 + $0x98] sm:$0xff]
    %v591 = vld [vmem:[#allocation8 + $0xa0] sm:$0xff]
    %v592 = vld [vmem:[#allocation8 + $0xa8] sm:$0xff]
    %v593 = vld [vmem:[#allocation8 + $0xb0] sm:$0xff]
    %v594 = vld [vmem:[#allocation8 + $0xb8] sm:$0xff]
    %v595 = vld [vmem:[#allocation8 + $0xc0] sm:$0xff]
    %v596 = vld [vmem:[#allocation8 + $0xc8] sm:$0xff]
    %v597 = vld [vmem:[#allocation8 + $0xd0] sm:$0xff]
    %v598 = vld [vmem:[#allocation8 + $0xd8] sm:$0xff]
    %v599 = vld [vmem:[#allocation8 + $0xe0] sm:$0xff]
    %v600 = vld [vmem:[#allocation8 + $0xe8] sm:$0xff]
    %v601 = vld [vmem:[#allocation8 + $0xf0] sm:$0xff]
    %v602 = vld [vmem:[#allocation8 + $0xf8] sm:$0xff]
    %v603 = vld [vmem:[#allocation8 + $0x100] sm:$0xff]
    %v604 = vld [vmem:[#allocation8 + $0x108] sm:$0xff]
    %v605 = vld [vmem:[#allocation8 + $0x110] sm:$0xff]
    %v606 = vld [vmem:[#allocation8 + $0x118] sm:$0xff]
    %v607 = vld [vmem:[#allocation8 + $0x120] sm:$0xff]
    %v608 = vld [vmem:[#allocation8 + $0x128] sm:$0xff]
    %v609 = vld [vmem:[#allocation8 + $0x130] sm:$0xff]
    %v610 = vld [vmem:[#allocation8 + $0x138] sm:$0xff]
    %v611 = vld [vmem:[#allocation8 + $0x140] sm:$0xff]
    %v612 = vld [vmem:[#allocation8 + $0x148] sm:$0xff]
    %v613 = vld [vmem:[#allocation8 + $0x150] sm:$0xff]
    %v614 = vld [vmem:[#allocation8 + $0x158] sm:$0xff]
    %v615 = vld [vmem:[#allocation8 + $0x160] sm:$0xff]
    %v616 = vld [vmem:[#allocation8 + $0x168] sm:$0xff]
    %v617 = vld [vmem:[#allocation8 + $0x170] sm:$0xff]
    %v618 = vld [vmem:[#allocation8 + $0x178] sm:$0xff]
    %v619 = vld [vmem:[#allocation8 + $0x180] sm:$0xff]
    %v620 = vld [vmem:[#allocation8 + $0x188] sm:$0xff]
    %v621 = vld [vmem:[#allocation8 + $0x190] sm:$0xff]
    %v622 = vld [vmem:[#allocation8 + $0x198] sm:$0xff]
    %v623 = vld [vmem:[#allocation8 + $0x1a0] sm:$0xff]
    %v624 = vld [vmem:[#allocation8 + $0x1a8] sm:$0xff]
    %v625 = vld [vmem:[#allocation8 + $0x1b0] sm:$0xff]
    %v626 = vld [vmem:[#allocation8 + $0x1b8] sm:$0xff]
    %v627 = vld [vmem:[#allocation8 + $0x1c0] sm:$0xff]
    %v628 = vld [vmem:[#allocation8 + $0x1c8] sm:$0xff]
    %v629 = vld [vmem:[#allocation8 + $0x1d0] sm:$0xff]
    %v630 = vld [vmem:[#allocation8 + $0x1d8] sm:$0xff]
    %v631 = vld [vmem:[#allocation8 + $0x1e0] sm:$0xff]
    %v632 = vld [vmem:[#allocation8 + $0x1e8] sm:$0xff]
    %v633 = vld [vmem:[#allocation8 + $0x1f0] sm:$0xff]
    %v634 = vld [vmem:[#allocation8 + $0x1f8] sm:$0xff]
    %v635 = vld [vmem:[#allocation8 + $0x200] sm:$0xff]
    %v636 = vld [vmem:[#allocation8 + $0x208] sm:$0xff]
    %v637 = vld [vmem:[#allocation8 + $0x210] sm:$0xff]
    %v638 = vld [vmem:[#allocation8 + $0x218] sm:$0xff]
    %v639 = vld [vmem:[#allocation8 + $0x220] sm:$0xff]
    %v640 = vld [vmem:[#allocation8 + $0x228] sm:$0xff]
    %v641 = vld [vmem:[#allocation8 + $0x230] sm:$0xff]
    %v642 = vld [vmem:[#allocation8 + $0x238] sm:$0xff]
    %v643 = vld [vmem:[#allocation8 + $0x240] sm:$0xff]
    %v644 = vld [vmem:[#allocation8 + $0x248] sm:$0xff]
    %v645 = vld [vmem:[#allocation8 + $0x250] sm:$0xff]
    %v646 = vld [vmem:[#allocation8 + $0x258] sm:$0xff]
    %v647 = vld [vmem:[#allocation8 + $0x260] sm:$0xff]
    %v648 = vld [vmem:[#allocation8 + $0x268] sm:$0xff]
    %v649 = vld [vmem:[#allocation8 + $0x270] sm:$0xff]
    %v650 = vld [vmem:[#allocation8 + $0x278] sm:$0xff]
    %v651 = vld [vmem:[#allocation8 + $0x280] sm:$0xff]
    %v652 = vld [vmem:[#allocation8 + $0x288] sm:$0xff]
    %v653 = vld [vmem:[#allocation8 + $0x290] sm:$0xff]
    %v654 = vld [vmem:[#allocation8 + $0x298] sm:$0xff]
    %v655 = vld [vmem:[#allocation8 + $0x2a0] sm:$0xff]
    %v656 = vld [vmem:[#allocation8 + $0x2a8] sm:$0xff]
    %v657 = vld [vmem:[#allocation8 + $0x2b0] sm:$0xff]
    %v658 = vld [vmem:[#allocation8 + $0x2b8] sm:$0xff]
    %v659 = vld [vmem:[#allocation8 + $0x2c0] sm:$0xff]
    %v660 = vld [vmem:[#allocation8 + $0x2c8] sm:$0xff]
    %v661 = vld [vmem:[#allocation8 + $0x2d0] sm:$0xff]
    %v662 = vld [vmem:[#allocation8 + $0x2d8] sm:$0xff]
    %v663 = vld [vmem:[#allocation8 + $0x2e0] sm:$0xff]
    %v664 = vld [vmem:[#allocation8 + $0x2e8] sm:$0xff]
    %v665 = vld [vmem:[#allocation8 + $0x2f0] sm:$0xff]
    %v666 = vld [vmem:[#allocation8 + $0x2f8] sm:$0xff]
    %v667 = vld [vmem:[#allocation8 + $0x300] sm:$0xff]
    %v668 = vld [vmem:[#allocation8 + $0x308] sm:$0xff]
    %v669 = vld [vmem:[#allocation8 + $0x310] sm:$0xff]
    %v670 = vld [vmem:[#allocation8 + $0x318] sm:$0xff]
    %v671 = vld [vmem:[#allocation8 + $0x320] sm:$0xff]
    %v672 = vld [vmem:[#allocation8 + $0x328] sm:$0xff]
    %v673 = vld [vmem:[#allocation8 + $0x330] sm:$0xff]
    %v674 = vld [vmem:[#allocation8 + $0x338] sm:$0xff]
    %v675 = vld [vmem:[#allocation8 + $0x340] sm:$0xff]
    %v676 = vld [vmem:[#allocation8 + $0x348] sm:$0xff]
    %v677 = vld [vmem:[#allocation8 + $0x350] sm:$0xff]
    %v678 = vld [vmem:[#allocation8 + $0x358] sm:$0xff]
    %v679 = vld [vmem:[#allocation8 + $0x360] sm:$0xff]
    %v680 = vld [vmem:[#allocation8 + $0x368] sm:$0xff]
    %v681 = vld [vmem:[#allocation8 + $0x370] sm:$0xff]
    %v682 = vld [vmem:[#allocation8 + $0x378] sm:$0xff]
    %v683 = vld [vmem:[#allocation8 + $0x380] sm:$0xff]
    %v684 = vld [vmem:[#allocation8 + $0x388] sm:$0xff]
    %v685 = vld [vmem:[#allocation8 + $0x390] sm:$0xff]
    %v686 = vld [vmem:[#allocation8 + $0x398] sm:$0xff]
    %v687 = vld [vmem:[#allocation8 + $0x3a0] sm:$0xff]
    %v688 = vld [vmem:[#allocation8 + $0x3a8] sm:$0xff]
    %v689 = vld [vmem:[#allocation8 + $0x3b0] sm:$0xff]
    %v690 = vld [vmem:[#allocation8 + $0x3b8] sm:$0xff]
    %v691 = vld [vmem:[#allocation8 + $0x3c0] sm:$0xff]
    %v692 = vld [vmem:[#allocation8 + $0x3c8] sm:$0xff]
    %v693 = vld [vmem:[#allocation8 + $0x3d0] sm:$0xff]
    %v694 = vld [vmem:[#allocation8 + $0x3d8] sm:$0xff]
    %v695 = vld [vmem:[#allocation8 + $0x3e0] sm:$0xff]
    %v696 = vld [vmem:[#allocation8 + $0x3e8] sm:$0xff]
    %v697 = vld [vmem:[#allocation8 + $0x3f0] sm:$0xff]
    %v698 = vld [vmem:[#allocation8 + $0x3f8] sm:$0xff]
    %v699 = vld [vmem:[#allocation8 + $0x400] sm:$0xff]
    %v700 = vld [vmem:[#allocation8 + $0x408] sm:$0xff]
    %v701 = vld [vmem:[#allocation8 + $0x410] sm:$0xff]
    %v702 = vld [vmem:[#allocation8 + $0x418] sm:$0xff]
    %v703 = vld [vmem:[#allocation8 + $0x420] sm:$0xff]
    %v704 = vld [vmem:[#allocation8 + $0x428] sm:$0xff]
    %v705 = vld [vmem:[#allocation8 + $0x430] sm:$0xff]
    %v706 = vld [vmem:[#allocation8 + $0x438] sm:$0xff]
    %v707 = vld [vmem:[#allocation8 + $0x440] sm:$0xff]
    %v708 = vld [vmem:[#allocation8 + $0x448] sm:$0xff]
    %v709 = vld [vmem:[#allocation8 + $0x450] sm:$0xff]
    %v710 = vld [vmem:[#allocation8 + $0x458] sm:$0xff]
    %v711 = vld [vmem:[#allocation8 + $0x460] sm:$0xff]
    %v712 = vld [vmem:[#allocation8 + $0x468] sm:$0xff]
    %v713 = vld [vmem:[#allocation8 + $0x470] sm:$0xff]
    %v714 = vld [vmem:[#allocation8 + $0x478] sm:$0xff]
    %v715 = vld [vmem:[#allocation8 + $0x480] sm:$0xff]
    %v716 = vld [vmem:[#allocation8 + $0x488] sm:$0xff]
    %v717 = vld [vmem:[#allocation8 + $0x490] sm:$0xff]
    %v718 = vld [vmem:[#allocation8 + $0x498] sm:$0xff]
    %v719 = vld [vmem:[#allocation8 + $0x4a0] sm:$0xff]
    %v720 = vld [vmem:[#allocation8 + $0x4a8] sm:$0xff]
    %v721 = vld [vmem:[#allocation8 + $0x4b0] sm:$0xff]
    %v722 = vld [vmem:[#allocation8 + $0x4b8] sm:$0xff]
    %v723 = vld [vmem:[#allocation8 + $0x4c0] sm:$0xff]
    %v724 = vld [vmem:[#allocation8 + $0x4c8] sm:$0xff]
    %v725 = vld [vmem:[#allocation8 + $0x4d0] sm:$0xff]
    %v726 = vld [vmem:[#allocation8 + $0x4d8] sm:$0xff]
    %v727 = vld [vmem:[#allocation8 + $0x4e0] sm:$0xff]
    %v728 = vld [vmem:[#allocation8 + $0x4e8] sm:$0xff]
    %v729 = vld [vmem:[#allocation8 + $0x4f0] sm:$0xff]
    %v730 = vld [vmem:[#allocation8 + $0x4f8] sm:$0xff]
    %v731 = vld [vmem:[#allocation8 + $0x500] sm:$0xff]
    %v732 = vld [vmem:[#allocation8 + $0x508] sm:$0xff]
    %v733 = vld [vmem:[#allocation8 + $0x510] sm:$0xff]
    %v734 = vld [vmem:[#allocation8 + $0x518] sm:$0xff]
    %v735 = vld [vmem:[#allocation8 + $0x520] sm:$0xff]
    %v736 = vld [vmem:[#allocation8 + $0x528] sm:$0xff]
    %v737 = vld [vmem:[#allocation8 + $0x530] sm:$0xff]
    %v738 = vld [vmem:[#allocation8 + $0x538] sm:$0xff]
    %v739 = vld [vmem:[#allocation8 + $0x540] sm:$0xff]
    %v740 = vld [vmem:[#allocation8 + $0x548] sm:$0xff]
    %v741 = vld [vmem:[#allocation8 + $0x550] sm:$0xff]
    %v742 = vld [vmem:[#allocation8 + $0x558] sm:$0xff]
    %v743 = vld [vmem:[#allocation8 + $0x560] sm:$0xff]
    %v744 = vld [vmem:[#allocation8 + $0x568] sm:$0xff]
    %v745 = vld [vmem:[#allocation8 + $0x570] sm:$0xff]
    %v746 = vld [vmem:[#allocation8 + $0x578] sm:$0xff]
    %v747 = vld [vmem:[#allocation8 + $0x580] sm:$0xff]
    %v748 = vld [vmem:[#allocation8 + $0x588] sm:$0xff]
    %v749 = vld [vmem:[#allocation8 + $0x590] sm:$0xff]
    %v750 = vld [vmem:[#allocation8 + $0x598] sm:$0xff]
    %v751 = vld [vmem:[#allocation8 + $0x5a0] sm:$0xff]
    %v752 = vld [vmem:[#allocation8 + $0x5a8] sm:$0xff]
    %v753 = vld [vmem:[#allocation8 + $0x5b0] sm:$0xff]
    %v754 = vld [vmem:[#allocation8 + $0x5b8] sm:$0xff]
    %v755 = vld [vmem:[#allocation8 + $0x5c0] sm:$0xff]
    %v756 = vld [vmem:[#allocation8 + $0x5c8] sm:$0xff]
    %v757 = vld [vmem:[#allocation8 + $0x5d0] sm:$0xff]
    %v758 = vld [vmem:[#allocation8 + $0x5d8] sm:$0xff]
    %v759 = vld [vmem:[#allocation8 + $0x5e0] sm:$0xff]
    %v760 = vld [vmem:[#allocation8 + $0x5e8] sm:$0xff]
    %v761 = vld [vmem:[#allocation8 + $0x5f0] sm:$0xff]
    %v762 = vld [vmem:[#allocation8 + $0x5f8] sm:$0xff]
    %v763 = vld [vmem:[#allocation9] sm:$0xff]
    %v764 = vld [vmem:[#allocation9 + $0x8] sm:$0xff]
    %v765 = vld [vmem:[#allocation9 + $0x10] sm:$0xff]
    %v766 = vld [vmem:[#allocation9 + $0x18] sm:$0xff]
    %v767 = vld [vmem:[#allocation9 + $0x20] sm:$0xff]
    %v768 = vld [vmem:[#allocation9 + $0x28] sm:$0xff]
    %v769 = vld [vmem:[#allocation9 + $0x30] sm:$0xff]
    %v770 = vld [vmem:[#allocation9 + $0x38] sm:$0xff]
    %v771 = vld [vmem:[#allocation9 + $0x40] sm:$0xff]
    %v772 = vld [vmem:[#allocation9 + $0x48] sm:$0xff]
    %v773 = vld [vmem:[#allocation9 + $0x50] sm:$0xff]
    %v774 = vld [vmem:[#allocation9 + $0x58] sm:$0xff]
    %v775 = vld [vmem:[#allocation9 + $0x60] sm:$0xff]
    %v776 = vld [vmem:[#allocation9 + $0x68] sm:$0xff]
    %v777 = vld [vmem:[#allocation9 + $0x70] sm:$0xff]
    %v778 = vld [vmem:[#allocation9 + $0x78] sm:$0xff]
    %v779 = vld [vmem:[#allocation9 + $0x80] sm:$0xff]
    %v780 = vld [vmem:[#allocation9 + $0x88] sm:$0xff]
    %v781 = vld [vmem:[#allocation9 + $0x90] sm:$0xff]
    %v782 = vld [vmem:[#allocation9 + $0x98] sm:$0xff]
    %v783 = vld [vmem:[#allocation9 + $0xa0] sm:$0xff]
    %v784 = vld [vmem:[#allocation9 + $0xa8] sm:$0xff]
    %v785 = vld [vmem:[#allocation9 + $0xb0] sm:$0xff]
    %v786 = vld [vmem:[#allocation9 + $0xb8] sm:$0xff]
    %v787 = vld [vmem:[#allocation9 + $0xc0] sm:$0xff]
    %v788 = vld [vmem:[#allocation9 + $0xc8] sm:$0xff]
    %v789 = vld [vmem:[#allocation9 + $0xd0] sm:$0xff]
    %v790 = vld [vmem:[#allocation9 + $0xd8] sm:$0xff]
    %v791 = vld [vmem:[#allocation9 + $0xe0] sm:$0xff]
    %v792 = vld [vmem:[#allocation9 + $0xe8] sm:$0xff]
    %v793 = vld [vmem:[#allocation9 + $0xf0] sm:$0xff]
    %v794 = vld [vmem:[#allocation9 + $0xf8] sm:$0xff]
    %v795 = vld [vmem:[#allocation9 + $0x100] sm:$0xff]
    %v796 = vld [vmem:[#allocation9 + $0x108] sm:$0xff]
    %v797 = vld [vmem:[#allocation9 + $0x110] sm:$0xff]
    %v798 = vld [vmem:[#allocation9 + $0x118] sm:$0xff]
    %v799 = vld [vmem:[#allocation9 + $0x120] sm:$0xff]
    %v800 = vld [vmem:[#allocation9 + $0x128] sm:$0xff]
    %v801 = vld [vmem:[#allocation9 + $0x130] sm:$0xff]
    %v802 = vld [vmem:[#allocation9 + $0x138] sm:$0xff]
    %v803 = vld [vmem:[#allocation9 + $0x140] sm:$0xff]
    %v804 = vld [vmem:[#allocation9 + $0x148] sm:$0xff]
    %v805 = vld [vmem:[#allocation9 + $0x150] sm:$0xff]
    %v806 = vld [vmem:[#allocation9 + $0x158] sm:$0xff]
    %v807 = vld [vmem:[#allocation9 + $0x160] sm:$0xff]
    %v808 = vld [vmem:[#allocation9 + $0x168] sm:$0xff]
    %v809 = vld [vmem:[#allocation9 + $0x170] sm:$0xff]
    %v810 = vld [vmem:[#allocation9 + $0x178] sm:$0xff]
    %v811 = vld [vmem:[#allocation9 + $0x180] sm:$0xff]
    %v812 = vld [vmem:[#allocation9 + $0x188] sm:$0xff]
    %v813 = vld [vmem:[#allocation9 + $0x190] sm:$0xff]
    %v814 = vld [vmem:[#allocation9 + $0x198] sm:$0xff]
    %v815 = vld [vmem:[#allocation9 + $0x1a0] sm:$0xff]
    %v816 = vld [vmem:[#allocation9 + $0x1a8] sm:$0xff]
    %v817 = vld [vmem:[#allocation9 + $0x1b0] sm:$0xff]
    %v818 = vld [vmem:[#allocation9 + $0x1b8] sm:$0xff]
    %v819 = vld [vmem:[#allocation9 + $0x1c0] sm:$0xff]
    %v820 = vld [vmem:[#allocation9 + $0x1c8] sm:$0xff]
    %v821 = vld [vmem:[#allocation9 + $0x1d0] sm:$0xff]
    %v822 = vld [vmem:[#allocation9 + $0x1d8] sm:$0xff]
    %v823 = vld [vmem:[#allocation9 + $0x1e0] sm:$0xff]
    %v824 = vld [vmem:[#allocation9 + $0x1e8] sm:$0xff]
    %v825 = vld [vmem:[#allocation9 + $0x1f0] sm:$0xff]
    %v826 = vld [vmem:[#allocation9 + $0x1f8] sm:$0xff]
    %v827 = vld [vmem:[#allocation9 + $0x200] sm:$0xff]
    %v828 = vld [vmem:[#allocation9 + $0x208] sm:$0xff]
    %v829 = vld [vmem:[#allocation9 + $0x210] sm:$0xff]
    %v830 = vld [vmem:[#allocation9 + $0x218] sm:$0xff]
    %v831 = vld [vmem:[#allocation9 + $0x220] sm:$0xff]
    %v832 = vld [vmem:[#allocation9 + $0x228] sm:$0xff]
    %v833 = vld [vmem:[#allocation9 + $0x230] sm:$0xff]
    %v834 = vld [vmem:[#allocation9 + $0x238] sm:$0xff]
    %v835 = vld [vmem:[#allocation9 + $0x240] sm:$0xff]
    %v836 = vld [vmem:[#allocation9 + $0x248] sm:$0xff]
    %v837 = vld [vmem:[#allocation9 + $0x250] sm:$0xff]
    %v838 = vld [vmem:[#allocation9 + $0x258] sm:$0xff]
    %v839 = vld [vmem:[#allocation9 + $0x260] sm:$0xff]
    %v840 = vld [vmem:[#allocation9 + $0x268] sm:$0xff]
    %v841 = vld [vmem:[#allocation9 + $0x270] sm:$0xff]
    %v842 = vld [vmem:[#allocation9 + $0x278] sm:$0xff]
    %v843 = vld [vmem:[#allocation9 + $0x280] sm:$0xff]
    %v844 = vld [vmem:[#allocation9 + $0x288] sm:$0xff]
    %v845 = vld [vmem:[#allocation9 + $0x290] sm:$0xff]
    %v846 = vld [vmem:[#allocation9 + $0x298] sm:$0xff]
    %v847 = vld [vmem:[#allocation9 + $0x2a0] sm:$0xff]
    %v848 = vld [vmem:[#allocation9 + $0x2a8] sm:$0xff]
    %v849 = vld [vmem:[#allocation9 + $0x2b0] sm:$0xff]
    %v850 = vld [vmem:[#allocation9 + $0x2b8] sm:$0xff]
    %v851 = vld [vmem:[#allocation9 + $0x2c0] sm:$0xff]
    %v852 = vld [vmem:[#allocation9 + $0x2c8] sm:$0xff]
    %v853 = vld [vmem:[#allocation9 + $0x2d0] sm:$0xff]
    %v854 = vld [vmem:[#allocation9 + $0x2d8] sm:$0xff]
    %v855 = vld [vmem:[#allocation9 + $0x2e0] sm:$0xff]
    %v856 = vld [vmem:[#allocation9 + $0x2e8] sm:$0xff]
    %v857 = vld [vmem:[#allocation9 + $0x2f0] sm:$0xff]
    %v858 = vld [vmem:[#allocation9 + $0x2f8] sm:$0xff]
    %v859 = vld [vmem:[#allocation9 + $0x300] sm:$0xff]
    %v860 = vld [vmem:[#allocation9 + $0x308] sm:$0xff]
    %v861 = vld [vmem:[#allocation9 + $0x310] sm:$0xff]
    %v862 = vld [vmem:[#allocation9 + $0x318] sm:$0xff]
    %v863 = vld [vmem:[#allocation9 + $0x320] sm:$0xff]
    %v864 = vld [vmem:[#allocation9 + $0x328] sm:$0xff]
    %v865 = vld [vmem:[#allocation9 + $0x330] sm:$0xff]
    %v866 = vld [vmem:[#allocation9 + $0x338] sm:$0xff]
    %v867 = vld [vmem:[#allocation9 + $0x340] sm:$0xff]
    %v868 = vld [vmem:[#allocation9 + $0x348] sm:$0xff]
    %v869 = vld [vmem:[#allocation9 + $0x350] sm:$0xff]
    %v870 = vld [vmem:[#allocation9 + $0x358] sm:$0xff]
    %v871 = vld [vmem:[#allocation9 + $0x360] sm:$0xff]
    %v872 = vld [vmem:[#allocation9 + $0x368] sm:$0xff]
    %v873 = vld [vmem:[#allocation9 + $0x370] sm:$0xff]
    %v874 = vld [vmem:[#allocation9 + $0x378] sm:$0xff]
    %v875 = vld [vmem:[#allocation9 + $0x380] sm:$0xff]
    %v876 = vld [vmem:[#allocation9 + $0x388] sm:$0xff]
    %v877 = vld [vmem:[#allocation9 + $0x390] sm:$0xff]
    %v878 = vld [vmem:[#allocation9 + $0x398] sm:$0xff]
    %v879 = vld [vmem:[#allocation9 + $0x3a0] sm:$0xff]
    %v880 = vld [vmem:[#allocation9 + $0x3a8] sm:$0xff]
    %v881 = vld [vmem:[#allocation9 + $0x3b0] sm:$0xff]
    %v882 = vld [vmem:[#allocation9 + $0x3b8] sm:$0xff]
    %v883 = vld [vmem:[#allocation9 + $0x3c0] sm:$0xff]
    %v884 = vld [vmem:[#allocation9 + $0x3c8] sm:$0xff]
    %v885 = vld [vmem:[#allocation9 + $0x3d0] sm:$0xff]
    %v886 = vld [vmem:[#allocation9 + $0x3d8] sm:$0xff]
    %v887 = vld [vmem:[#allocation9 + $0x3e0] sm:$0xff]
    %v888 = vld [vmem:[#allocation9 + $0x3e8] sm:$0xff]
    %v889 = vld [vmem:[#allocation9 + $0x3f0] sm:$0xff]
    %v890 = vld [vmem:[#allocation9 + $0x3f8] sm:$0xff]
    %v891 = vld [vmem:[#allocation9 + $0x400] sm:$0xff]
    %v892 = vld [vmem:[#allocation9 + $0x408] sm:$0xff]
    %v893 = vld [vmem:[#allocation9 + $0x410] sm:$0xff]
    %v894 = vld [vmem:[#allocation9 + $0x418] sm:$0xff]
    %v895 = vld [vmem:[#allocation9 + $0x420] sm:$0xff]
    %v896 = vld [vmem:[#allocation9 + $0x428] sm:$0xff]
    %v897 = vld [vmem:[#allocation9 + $0x430] sm:$0xff]
    %v898 = vld [vmem:[#allocation9 + $0x438] sm:$0xff]
    %v899 = vld [vmem:[#allocation9 + $0x440] sm:$0xff]
    %v900 = vld [vmem:[#allocation9 + $0x448] sm:$0xff]
    %v901 = vld [vmem:[#allocation9 + $0x450] sm:$0xff]
    %v902 = vld [vmem:[#allocation9 + $0x458] sm:$0xff]
    %v903 = vld [vmem:[#allocation9 + $0x460] sm:$0xff]
    %v904 = vld [vmem:[#allocation9 + $0x468] sm:$0xff]
    %v905 = vld [vmem:[#allocation9 + $0x470] sm:$0xff]
    %v906 = vld [vmem:[#allocation9 + $0x478] sm:$0xff]
    %v907 = vld [vmem:[#allocation9 + $0x480] sm:$0xff]
    %v908 = vld [vmem:[#allocation9 + $0x488] sm:$0xff]
    %v909 = vld [vmem:[#allocation9 + $0x490] sm:$0xff]
    %v910 = vld [vmem:[#allocation9 + $0x498] sm:$0xff]
    %v911 = vld [vmem:[#allocation9 + $0x4a0] sm:$0xff]
    %v912 = vld [vmem:[#allocation9 + $0x4a8] sm:$0xff]
    %v913 = vld [vmem:[#allocation9 + $0x4b0] sm:$0xff]
    %v914 = vld [vmem:[#allocation9 + $0x4b8] sm:$0xff]
    %v915 = vld [vmem:[#allocation9 + $0x4c0] sm:$0xff]
    %v916 = vld [vmem:[#allocation9 + $0x4c8] sm:$0xff]
    %v917 = vld [vmem:[#allocation9 + $0x4d0] sm:$0xff]
    %v918 = vld [vmem:[#allocation9 + $0x4d8] sm:$0xff]
    %v919 = vld [vmem:[#allocation9 + $0x4e0] sm:$0xff]
    %v920 = vld [vmem:[#allocation9 + $0x4e8] sm:$0xff]
    %v921 = vld [vmem:[#allocation9 + $0x4f0] sm:$0xff]
    %v922 = vld [vmem:[#allocation9 + $0x4f8] sm:$0xff]
    %v923 = vld [vmem:[#allocation9 + $0x500] sm:$0xff]
    %v924 = vld [vmem:[#allocation9 + $0x508] sm:$0xff]
    %v925 = vld [vmem:[#allocation9 + $0x510] sm:$0xff]
    %v926 = vld [vmem:[#allocation9 + $0x518] sm:$0xff]
    %v927 = vld [vmem:[#allocation9 + $0x520] sm:$0xff]
    %v928 = vld [vmem:[#allocation9 + $0x528] sm:$0xff]
    %v929 = vld [vmem:[#allocation9 + $0x530] sm:$0xff]
    %v930 = vld [vmem:[#allocation9 + $0x538] sm:$0xff]
    %v931 = vld [vmem:[#allocation9 + $0x540] sm:$0xff]
    %v932 = vld [vmem:[#allocation9 + $0x548] sm:$0xff]
    %v933 = vld [vmem:[#allocation9 + $0x550] sm:$0xff]
    %v934 = vld [vmem:[#allocation9 + $0x558] sm:$0xff]
    %v935 = vld [vmem:[#allocation9 + $0x560] sm:$0xff]
    %v936 = vld [vmem:[#allocation9 + $0x568] sm:$0xff]
    %v937 = vld [vmem:[#allocation9 + $0x570] sm:$0xff]
    %v938 = vld [vmem:[#allocation9 + $0x578] sm:$0xff]
    %v939 = vld [vmem:[#allocation9 + $0x580] sm:$0xff]
    %v940 = vld [vmem:[#allocation9 + $0x588] sm:$0xff]
    %v941 = vld [vmem:[#allocation9 + $0x590] sm:$0xff]
    %v942 = vld [vmem:[#allocation9 + $0x598] sm:$0xff]
    %v943 = vld [vmem:[#allocation9 + $0x5a0] sm:$0xff]
    %v944 = vld [vmem:[#allocation9 + $0x5a8] sm:$0xff]
    %v945 = vld [vmem:[#allocation9 + $0x5b0] sm:$0xff]
    %v946 = vld [vmem:[#allocation9 + $0x5b8] sm:$0xff]
    %v947 = vld [vmem:[#allocation9 + $0x5c0] sm:$0xff]
    %v948 = vld [vmem:[#allocation9 + $0x5c8] sm:$0xff]
    %v949 = vld [vmem:[#allocation9 + $0x5d0] sm:$0xff]
    %v950 = vld [vmem:[#allocation9 + $0x5d8] sm:$0xff]
    %v951 = vld [vmem:[#allocation9 + $0x5e0] sm:$0xff]
    %v952 = vld [vmem:[#allocation9 + $0x5e8] sm:$0xff]
    %v953 = vld [vmem:[#allocation9 + $0x5f0] sm:$0xff]
    %v954 = vld [vmem:[#allocation9 + $0x5f8] sm:$0xff]
    %v955 = vld [vmem:[%s3] sm:$0xf]
    %v956 = vld [vmem:[%s4] sm:$0x3]
    %v957 = vld [vmem:[%s5] sm:$0x3]
    %v958 = vld [vmem:[%s8] sm:$0xf]
    %v959 = vld [vmem:[%s9] sm:$0x3]
    %v960 = vld [vmem:[%s10] sm:$0x3]
    %961 = vmatprep.subr.mxu0 %v380
    %962 = vmatpush1.msra.mxu0 %v379
    %963 = vmatprep.subr.mxu0 %v386
    %964 = vmatpush1.msra.mxu0 %v385
    %965 = vmatprep.subr.mxu0 %v392
    %966 = vmatpush1.msra.mxu0 %v391
    %967 = vmatprep.subr.mxu0 %v398
    %968 = vmatpush1.msra.mxu0 %v397
    %969 = vmatprep.subr.mxu0 %v404
    %970 = vmatpush1.msra.mxu0 %v403
    %971 = vmatprep.subr.mxu0 %v410
    %972 = vmatpush1.msra.mxu0 %v409
    %973 = vmatprep.subr.mxu0 %v416
    %974 = vmatpush1.msra.mxu0 %v415
    %975 = vmatprep.subr.mxu0 %v422
    %976 = vmatpush1.msra.mxu0 %v421
    %977 = vmatprep.subr.mxu0 %v428
    %978 = vmatpush1.msra.mxu0 %v427
    %979 = vmatprep.subr.mxu0 %v434
    %980 = vmatpush1.msra.mxu0 %v433
    %981 = vmatprep.subr.mxu0 %v440
    %982 = vmatpush1.msra.mxu0 %v439
    %983 = vmatprep.subr.mxu0 %v446
    %984 = vmatpush1.msra.mxu0 %v445
    %985 = vmatprep.subr.mxu0 %v452
    %986 = vmatpush1.msra.mxu0 %v451
    %987 = vmatprep.subr.mxu0 %v458
    %988 = vmatpush1.msra.mxu0 %v457
    %989 = vmatprep.subr.mxu0 %v464
    %990 = vmatpush1.msra.mxu0 %v463
    %991 = vmatprep.subr.mxu0 %v470
    %992 = vmatpush1.msra.mxu0 %v469
    %993 = vmatprep.subr.mxu0 %v476
    %994 = vmatpush1.msra.mxu0 %v475
    %995 = vmatprep.subr.mxu0 %v482
    %996 = vmatpush1.msra.mxu0 %v481
    %997 = vmatprep.subr.mxu0 %v488
    %998 = vmatpush1.msra.mxu0 %v487
    %999 = vmatprep.subr.mxu0 %v494
    %1000 = vmatpush1.msra.mxu0 %v493
    %1001 = vmatprep.subr.mxu0 %v500
    %1002 = vmatpush1.msra.mxu0 %v499
    %1003 = vmatprep.subr.mxu0 %v506
    %1004 = vmatpush1.msra.mxu0 %v505
    %1005 = vmatprep.subr.mxu0 %v512
    %1006 = vmatpush1.msra.mxu0 %v511
    %1007 = vmatprep.subr.mxu0 %v518
    %1008 = vmatpush1.msra.mxu0 %v517
    %1009 = vmatprep.subr.mxu0 %v524
    %1010 = vmatpush1.msra.mxu0 %v523
    %1011 = vmatprep.subr.mxu0 %v530
    %1012 = vmatpush1.msra.mxu0 %v529
    %1013 = vmatprep.subr.mxu0 %v536
    %1014 = vmatpush1.msra.mxu0 %v535
    %1015 = vmatprep.subr.mxu0 %v542
    %1016 = vmatpush1.msra.mxu0 %v541
    %1017 = vmatprep.subr.mxu0 %v548
    %1018 = vmatpush1.msra.mxu0 %v547
    %1019 = vmatprep.subr.mxu0 %v554
    %1020 = vmatpush1.msra.mxu0 %v553
    %1021 = vmatprep.subr.mxu0 %v560
    %1022 = vmatpush1.msra.mxu0 %v559
    %1023 = vmatprep.subr.mxu0 %v566
    %1024 = vmatpush1.msra.mxu0 %v565
    %1025 = vmatprep.mubr.f32.mxu0 0.0
    %1026 = vmatmul.mubr.f32.gmra.mrb[0].mxu0 0.0
    %v1027 = vpop.f32.mrb[0].mxu0
    %v1028 = vadd.f32 0.0, %v1027
    %v1029 = vpop.f32.mrb[0].mxu0
    %v1030 = vadd.f32 0.0, %v1029
    %1031 = vdwg.mxu0
    %1032 = vmatprep.subr.mxu0 %v382
    %1033 = vmatpush1.msra.mxu0 %v381
    %1034 = vmatprep.subr.mxu0 %v388
    %1035 = vmatpush1.msra.mxu0 %v387
    %1036 = vmatprep.subr.mxu0 %v394
    %1037 = vmatpush1.msra.mxu0 %v393
    %1038 = vmatprep.subr.mxu0 %v400
    %1039 = vmatpush1.msra.mxu0 %v399
    %1040 = vmatprep.subr.mxu0 %v406
    %1041 = vmatpush1.msra.mxu0 %v405
    %1042 = vmatprep.subr.mxu0 %v412
    %1043 = vmatpush1.msra.mxu0 %v411
    %1044 = vmatprep.subr.mxu0 %v418
    %1045 = vmatpush1.msra.mxu0 %v417
    %1046 = vmatprep.subr.mxu0 %v424
    %1047 = vmatpush1.msra.mxu0 %v423
    %1048 = vmatprep.subr.mxu0 %v430
    %1049 = vmatpush1.msra.mxu0 %v429
    %1050 = vmatprep.subr.mxu0 %v436
    %1051 = vmatpush1.msra.mxu0 %v435
    %1052 = vmatprep.subr.mxu0 %v442
    %1053 = vmatpush1.msra.mxu0 %v441
    %1054 = vmatprep.subr.mxu0 %v448
    %1055 = vmatpush1.msra.mxu0 %v447
    %1056 = vmatprep.subr.mxu0 %v454
    %1057 = vmatpush1.msra.mxu0 %v453
    %1058 = vmatprep.subr.mxu0 %v460
    %1059 = vmatpush1.msra.mxu0 %v459
    %1060 = vmatprep.subr.mxu0 %v466
    %1061 = vmatpush1.msra.mxu0 %v465
    %1062 = vmatprep.subr.mxu0 %v472
    %1063 = vmatpush1.msra.mxu0 %v471
    %1064 = vmatprep.subr.mxu0 %v478
    %1065 = vmatpush1.msra.mxu0 %v477
    %1066 = vmatprep.subr.mxu0 %v484
    %1067 = vmatpush1.msra.mxu0 %v483
    %1068 = vmatprep.subr.mxu0 %v490
    %1069 = vmatpush1.msra.mxu0 %v489
    %1070 = vmatprep.subr.mxu0 %v496
    %1071 = vmatpush1.msra.mxu0 %v495
    %1072 = vmatprep.subr.mxu0 %v502
    %1073 = vmatpush1.msra.mxu0 %v501
    %1074 = vmatprep.subr.mxu0 %v508
    %1075 = vmatpush1.msra.mxu0 %v507
    %1076 = vmatprep.subr.mxu0 %v514
    %1077 = vmatpush1.msra.mxu0 %v513
    %1078 = vmatprep.subr.mxu0 %v520
    %1079 = vmatpush1.msra.mxu0 %v519
    %1080 = vmatprep.subr.mxu0 %v526
    %1081 = vmatpush1.msra.mxu0 %v525
    %1082 = vmatprep.subr.mxu0 %v532
    %1083 = vmatpush1.msra.mxu0 %v531
    %1084 = vmatprep.subr.mxu0 %v538
    %1085 = vmatpush1.msra.mxu0 %v537
    %1086 = vmatprep.subr.mxu0 %v544
    %1087 = vmatpush1.msra.mxu0 %v543
    %1088 = vmatprep.subr.mxu0 %v550
    %1089 = vmatpush1.msra.mxu0 %v549
    %1090 = vmatprep.subr.mxu0 %v556
    %1091 = vmatpush1.msra.mxu0 %v555
    %1092 = vmatprep.subr.mxu0 %v562
    %1093 = vmatpush1.msra.mxu0 %v561
    %1094 = vmatprep.subr.mxu0 %v568
    %1095 = vmatpush1.msra.mxu0 %v567
    %1096 = vmatprep.mubr.f32.mxu0 0.0
    %1097 = vmatmul.mubr.f32.gmra.mrb[0].mxu0 0.0
    %v1098 = vpop.f32.mrb[0].mxu0
    %v1099 = vadd.f32 0.0, %v1098
    %v1100 = vpop.f32.mrb[0].mxu0
    %v1101 = vadd.f32 0.0, %v1100
    %1102 = vdwg.mxu0
    %1103 = vmatprep.subr.mxu0 %v384
    %1104 = vmatpush1.msra.mxu0 %v383
    %1105 = vmatprep.subr.mxu0 %v390
    %1106 = vmatpush1.msra.mxu0 %v389
    %1107 = vmatprep.subr.mxu0 %v396
    %1108 = vmatpush1.msra.mxu0 %v395
    %1109 = vmatprep.subr.mxu0 %v402
    %1110 = vmatpush1.msra.mxu0 %v401
    %1111 = vmatprep.subr.mxu0 %v408
    %1112 = vmatpush1.msra.mxu0 %v407
    %1113 = vmatprep.subr.mxu0 %v414
    %1114 = vmatpush1.msra.mxu0 %v413
    %1115 = vmatprep.subr.mxu0 %v420
    %1116 = vmatpush1.msra.mxu0 %v419
    %1117 = vmatprep.subr.mxu0 %v426
    %1118 = vmatpush1.msra.mxu0 %v425
    %1119 = vmatprep.subr.mxu0 %v432
    %1120 = vmatpush1.msra.mxu0 %v431
    %1121 = vmatprep.subr.mxu0 %v438
    %1122 = vmatpush1.msra.mxu0 %v437
    %1123 = vmatprep.subr.mxu0 %v444
    %1124 = vmatpush1.msra.mxu0 %v443
    %1125 = vmatprep.subr.mxu0 %v450
    %1126 = vmatpush1.msra.mxu0 %v449
    %1127 = vmatprep.subr.mxu0 %v456
    %1128 = vmatpush1.msra.mxu0 %v455
    %1129 = vmatprep.subr.mxu0 %v462
    %1130 = vmatpush1.msra.mxu0 %v461
    %1131 = vmatprep.subr.mxu0 %v468
    %1132 = vmatpush1.msra.mxu0 %v467
    %1133 = vmatprep.subr.mxu0 %v474
    %1134 = vmatpush1.msra.mxu0 %v473
    %1135 = vmatprep.subr.mxu0 %v480
    %1136 = vmatpush1.msra.mxu0 %v479
    %1137 = vmatprep.subr.mxu0 %v486
    %1138 = vmatpush1.msra.mxu0 %v485
    %1139 = vmatprep.subr.mxu0 %v492
    %1140 = vmatpush1.msra.mxu0 %v491
    %1141 = vmatprep.subr.mxu0 %v498
    %1142 = vmatpush1.msra.mxu0 %v497
    %1143 = vmatprep.subr.mxu0 %v504
    %1144 = vmatpush1.msra.mxu0 %v503
    %1145 = vmatprep.subr.mxu0 %v510
    %1146 = vmatpush1.msra.mxu0 %v509
    %1147 = vmatprep.subr.mxu0 %v516
    %1148 = vmatpush1.msra.mxu0 %v515
    %1149 = vmatprep.subr.mxu0 %v522
    %1150 = vmatpush1.msra.mxu0 %v521
    %1151 = vmatprep.subr.mxu0 %v528
    %1152 = vmatpush1.msra.mxu0 %v527
    %1153 = vmatprep.subr.mxu0 %v534
    %1154 = vmatpush1.msra.mxu0 %v533
    %1155 = vmatprep.subr.mxu0 %v540
    %1156 = vmatpush1.msra.mxu0 %v539
    %1157 = vmatprep.subr.mxu0 %v546
    %1158 = vmatpush1.msra.mxu0 %v545
    %1159 = vmatprep.subr.mxu0 %v552
    %1160 = vmatpush1.msra.mxu0 %v551
    %1161 = vmatprep.subr.mxu0 %v558
    %1162 = vmatpush1.msra.mxu0 %v557
    %1163 = vmatprep.subr.mxu0 %v564
    %1164 = vmatpush1.msra.mxu0 %v563
    %1165 = vmatprep.subr.mxu0 %v570
    %1166 = vmatpush1.msra.mxu0 %v569
    %1167 = vmatprep.mubr.f32.mxu0 0.0
    %1168 = vmatmul.mubr.f32.gmra.mrb[0].mxu0 0.0
    %v1169 = vpop.f32.mrb[0].mxu0
    %v1170 = vadd.f32 0.0, %v1169
    %v1171 = vpop.f32.mrb[0].mxu0
    %v1172 = vadd.f32 0.0, %v1171
    %1173 = vdwg.mxu0
    %v1174 = vadd.f32 %v197, %v1028
    %v1175 = vadd.f32 %v199, %v1030
    %v1176 = vadd.f32 %v280, %v1099
    %v1177 = vadd.f32 %v282, %v1101
    %v1179 = vlaneseq
    %v1180 = vshrl.u32 %v1179, 7
    %v1181 = vsub.s32 0, %v1180
    %v1182 = vrot.slane %v955, %v1181
    %v1183 = vlaneseq
    %v1184 = vshrl.u32 %v1183, 7
    %v1185 = vsub.s32 1, %v1184
    %v1186 = vrot.slane %v955, %v1185
    %v1187 = vlaneseq
    %v1188 = vshrl.u32 %v1187, 7
    %v1189 = vsub.s32 2, %v1188
    %v1190 = vrot.slane %v955, %v1189
    %v1191 = vlaneseq
    %v1192 = vshrl.u32 %v1191, 7
    %v1193 = vsub.s32 3, %v1192
    %v1194 = vrot.slane %v955, %v1193
    %v1199 = vadd.f32 %v1174, %v1182
    %v1200 = vadd.f32 %v1175, %v1186
    %v1201 = vadd.f32 %v1176, %v1190
    %v1202 = vadd.f32 %v1177, %v1194
    %v1203 = vxor.u32 %v1199, 2147483648
    %v1204 = vxor.u32 %v1200, 2147483648
    %v1205 = vxor.u32 %v1201, 2147483648
    %v1206 = vxor.u32 %v1202, 2147483648
    %v1207 = vmul.f32 %v1203, 1.442695
    %v1208 = vpow.pop %v1207
    %v1209 = vmul.f32 %v1204, 1.442695
    %v1210 = vpow.pop %v1209
    %v1211 = vmul.f32 %v1205, 1.442695
    %v1212 = vpow.pop %v1211
    %v1213 = vmul.f32 %v1206, 1.442695
    %v1214 = vpow.pop %v1213
    %v1215 = vadd.f32 %v1208, 1.0
    %v1216 = vadd.f32 %v1210, 1.0
    %v1217 = vadd.f32 %v1212, 1.0
    %v1218 = vadd.f32 %v1214, 1.0
    %v1219 = vrcp.pop %v1215
    %v1220 = vmul.f32 1.0, %v1219
    %v1221 = vrcp.pop %v1216
    %v1222 = vmul.f32 1.0, %v1221
    %v1223 = vrcp.pop %v1217
    %v1224 = vmul.f32 1.0, %v1223
    %v1225 = vrcp.pop %v1218
    %v1226 = vmul.f32 1.0, %v1225
    %v1228 = vlaneseq
    %v1229 = vshrl.u32 %v1228, 7
    %v1230 = vsub.s32 0, %v1229
    %v1231 = vrot.slane %v956, %v1230
    %v1232 = vlaneseq
    %v1233 = vshrl.u32 %v1232, 7
    %v1234 = vsub.s32 1, %v1233
    %v1235 = vrot.slane %v956, %v1234
    %v1238 = vadd.f32 %v363, %v1231
    %v1239 = vadd.f32 %v365, %v1235
    %v1241 = vlaneseq
    %v1242 = vshrl.u32 %v1241, 7
    %v1243 = vsub.s32 0, %v1242
    %v1244 = vrot.slane %v957, %v1243
    %v1245 = vlaneseq
    %v1246 = vshrl.u32 %v1245, 7
    %v1247 = vsub.s32 1, %v1246
    %v1248 = vrot.slane %v957, %v1247
    %v1251 = vadd.f32 %v1170, %v1244
    %v1252 = vadd.f32 %v1172, %v1248
    %v1253 = vmul.f32 %v1220, %v1251
    %v1254 = vmul.f32 %v1222, %v1252
    %v1255 = vadd.f32 %v1238, %v1253
    %v1256 = vadd.f32 %v1239, %v1254
    %v1257 = vtanh.pop %v1255
    %v1258 = vtanh.pop %v1256
    %v1259 = vsub.f32 1.0, %v1224
    %v1260 = vsub.f32 1.0, %v1226
    %v1261 = vmul.f32 %v1259, %v1257
    %v1262 = vmul.f32 %v1260, %v1258
    %v1263 = vmul.f32 %v1224, 0.0
    %v1264 = vmul.f32 %v1226, 0.0
    %v1265 = vadd.f32 %v1261, %v1263
    %v1266 = vadd.f32 %v1262, %v1264
    %1267 = vmatprep.subr.mxu0 %v572
    %1268 = vmatpush1.msra.mxu0 %v571
    %1269 = vmatprep.subr.mxu0 %v578
    %1270 = vmatpush1.msra.mxu0 %v577
    %1271 = vmatprep.subr.mxu0 %v584
    %1272 = vmatpush1.msra.mxu0 %v583
    %1273 = vmatprep.subr.mxu0 %v590
    %1274 = vmatpush1.msra.mxu0 %v589
    %1275 = vmatprep.subr.mxu0 %v596
    %1276 = vmatpush1.msra.mxu0 %v595
    %1277 = vmatprep.subr.mxu0 %v602
    %1278 = vmatpush1.msra.mxu0 %v601
    %1279 = vmatprep.subr.mxu0 %v608
    %1280 = vmatpush1.msra.mxu0 %v607
    %1281 = vmatprep.subr.mxu0 %v614
    %1282 = vmatpush1.msra.mxu0 %v613
    %1283 = vmatprep.subr.mxu0 %v620
    %1284 = vmatpush1.msra.mxu0 %v619
    %1285 = vmatprep.subr.mxu0 %v626
    %1286 = vmatpush1.msra.mxu0 %v625
    %1287 = vmatprep.subr.mxu0 %v632
    %1288 = vmatpush1.msra.mxu0 %v631
    %1289 = vmatprep.subr.mxu0 %v638
    %1290 = vmatpush1.msra.mxu0 %v637
    %1291 = vmatprep.subr.mxu0 %v644
    %1292 = vmatpush1.msra.mxu0 %v643
    %1293 = vmatprep.subr.mxu0 %v650
    %1294 = vmatpush1.msra.mxu0 %v649
    %1295 = vmatprep.subr.mxu0 %v656
    %1296 = vmatpush1.msra.mxu0 %v655
    %1297 = vmatprep.subr.mxu0 %v662
    %1298 = vmatpush1.msra.mxu0 %v661
    %1299 = vmatprep.subr.mxu0 %v668
    %1300 = vmatpush1.msra.mxu0 %v667
    %1301 = vmatprep.subr.mxu0 %v674
    %1302 = vmatpush1.msra.mxu0 %v673
    %1303 = vmatprep.subr.mxu0 %v680
    %1304 = vmatpush1.msra.mxu0 %v679
    %1305 = vmatprep.subr.mxu0 %v686
    %1306 = vmatpush1.msra.mxu0 %v685
    %1307 = vmatprep.subr.mxu0 %v692
    %1308 = vmatpush1.msra.mxu0 %v691
    %1309 = vmatprep.subr.mxu0 %v698
    %1310 = vmatpush1.msra.mxu0 %v697
    %1311 = vmatprep.subr.mxu0 %v704
    %1312 = vmatpush1.msra.mxu0 %v703
    %1313 = vmatprep.subr.mxu0 %v710
    %1314 = vmatpush1.msra.mxu0 %v709
    %1315 = vmatprep.subr.mxu0 %v716
    %1316 = vmatpush1.msra.mxu0 %v715
    %1317 = vmatprep.subr.mxu0 %v722
    %1318 = vmatpush1.msra.mxu0 %v721
    %1319 = vmatprep.subr.mxu0 %v728
    %1320 = vmatpush1.msra.mxu0 %v727
    %1321 = vmatprep.subr.mxu0 %v734
    %1322 = vmatpush1.msra.mxu0 %v733
    %1323 = vmatprep.subr.mxu0 %v740
    %1324 = vmatpush1.msra.mxu0 %v739
    %1325 = vmatprep.subr.mxu0 %v746
    %1326 = vmatpush1.msra.mxu0 %v745
    %1327 = vmatprep.subr.mxu0 %v752
    %1328 = vmatpush1.msra.mxu0 %v751
    %1329 = vmatprep.subr.mxu0 %v758
    %1330 = vmatpush1.msra.mxu0 %v757
    %1331 = vmatprep.mubr.f32.mxu0 %v1266
    %1332 = vmatmul.mubr.f32.gmra.mrb[0].mxu0 %v1265
    %v1333 = vpop.f32.mrb[0].mxu0
    %v1334 = vadd.f32 0.0, %v1333
    %v1335 = vpop.f32.mrb[0].mxu0
    %v1336 = vadd.f32 0.0, %v1335
    %1337 = vdwg.mxu0
    %1338 = vmatprep.subr.mxu0 %v574
    %1339 = vmatpush1.msra.mxu0 %v573
    %1340 = vmatprep.subr.mxu0 %v580
    %1341 = vmatpush1.msra.mxu0 %v579
    %1342 = vmatprep.subr.mxu0 %v586
    %1343 = vmatpush1.msra.mxu0 %v585
    %1344 = vmatprep.subr.mxu0 %v592
    %1345 = vmatpush1.msra.mxu0 %v591
    %1346 = vmatprep.subr.mxu0 %v598
    %1347 = vmatpush1.msra.mxu0 %v597
    %1348 = vmatprep.subr.mxu0 %v604
    %1349 = vmatpush1.msra.mxu0 %v603
    %1350 = vmatprep.subr.mxu0 %v610
    %1351 = vmatpush1.msra.mxu0 %v609
    %1352 = vmatprep.subr.mxu0 %v616
    %1353 = vmatpush1.msra.mxu0 %v615
    %1354 = vmatprep.subr.mxu0 %v622
    %1355 = vmatpush1.msra.mxu0 %v621
    %1356 = vmatprep.subr.mxu0 %v628
    %1357 = vmatpush1.msra.mxu0 %v627
    %1358 = vmatprep.subr.mxu0 %v634
    %1359 = vmatpush1.msra.mxu0 %v633
    %1360 = vmatprep.subr.mxu0 %v640
    %1361 = vmatpush1.msra.mxu0 %v639
    %1362 = vmatprep.subr.mxu0 %v646
    %1363 = vmatpush1.msra.mxu0 %v645
    %1364 = vmatprep.subr.mxu0 %v652
    %1365 = vmatpush1.msra.mxu0 %v651
    %1366 = vmatprep.subr.mxu0 %v658
    %1367 = vmatpush1.msra.mxu0 %v657
    %1368 = vmatprep.subr.mxu0 %v664
    %1369 = vmatpush1.msra.mxu0 %v663
    %1370 = vmatprep.subr.mxu0 %v670
    %1371 = vmatpush1.msra.mxu0 %v669
    %1372 = vmatprep.subr.mxu0 %v676
    %1373 = vmatpush1.msra.mxu0 %v675
    %1374 = vmatprep.subr.mxu0 %v682
    %1375 = vmatpush1.msra.mxu0 %v681
    %1376 = vmatprep.subr.mxu0 %v688
    %1377 = vmatpush1.msra.mxu0 %v687
    %1378 = vmatprep.subr.mxu0 %v694
    %1379 = vmatpush1.msra.mxu0 %v693
    %1380 = vmatprep.subr.mxu0 %v700
    %1381 = vmatpush1.msra.mxu0 %v699
    %1382 = vmatprep.subr.mxu0 %v706
    %1383 = vmatpush1.msra.mxu0 %v705
    %1384 = vmatprep.subr.mxu0 %v712
    %1385 = vmatpush1.msra.mxu0 %v711
    %1386 = vmatprep.subr.mxu0 %v718
    %1387 = vmatpush1.msra.mxu0 %v717
    %1388 = vmatprep.subr.mxu0 %v724
    %1389 = vmatpush1.msra.mxu0 %v723
    %1390 = vmatprep.subr.mxu0 %v730
    %1391 = vmatpush1.msra.mxu0 %v729
    %1392 = vmatprep.subr.mxu0 %v736
    %1393 = vmatpush1.msra.mxu0 %v735
    %1394 = vmatprep.subr.mxu0 %v742
    %1395 = vmatpush1.msra.mxu0 %v741
    %1396 = vmatprep.subr.mxu0 %v748
    %1397 = vmatpush1.msra.mxu0 %v747
    %1398 = vmatprep.subr.mxu0 %v754
    %1399 = vmatpush1.msra.mxu0 %v753
    %1400 = vmatprep.subr.mxu0 %v760
    %1401 = vmatpush1.msra.mxu0 %v759
    %1402 = vmatprep.mubr.f32.mxu0 %v1266
    %1403 = vmatmul.mubr.f32.gmra.mrb[0].mxu0 %v1265
    %v1404 = vpop.f32.mrb[0].mxu0
    %v1405 = vadd.f32 0.0, %v1404
    %v1406 = vpop.f32.mrb[0].mxu0
    %v1407 = vadd.f32 0.0, %v1406
    %1408 = vdwg.mxu0
    %1409 = vmatprep.subr.mxu0 %v576
    %1410 = vmatpush1.msra.mxu0 %v575
    %1411 = vmatprep.subr.mxu0 %v582
    %1412 = vmatpush1.msra.mxu0 %v581
    %1413 = vmatprep.subr.mxu0 %v588
    %1414 = vmatpush1.msra.mxu0 %v587
    %1415 = vmatprep.subr.mxu0 %v594
    %1416 = vmatpush1.msra.mxu0 %v593
    %1417 = vmatprep.subr.mxu0 %v600
    %1418 = vmatpush1.msra.mxu0 %v599
    %1419 = vmatprep.subr.mxu0 %v606
    %1420 = vmatpush1.msra.mxu0 %v605
    %1421 = vmatprep.subr.mxu0 %v612
    %1422 = vmatpush1.msra.mxu0 %v611
    %1423 = vmatprep.subr.mxu0 %v618
    %1424 = vmatpush1.msra.mxu0 %v617
    %1425 = vmatprep.subr.mxu0 %v624
    %1426 = vmatpush1.msra.mxu0 %v623
    %1427 = vmatprep.subr.mxu0 %v630
    %1428 = vmatpush1.msra.mxu0 %v629
    %1429 = vmatprep.subr.mxu0 %v636
    %1430 = vmatpush1.msra.mxu0 %v635
    %1431 = vmatprep.subr.mxu0 %v642
    %1432 = vmatpush1.msra.mxu0 %v641
    %1433 = vmatprep.subr.mxu0 %v648
    %1434 = vmatpush1.msra.mxu0 %v647
    %1435 = vmatprep.subr.mxu0 %v654
    %1436 = vmatpush1.msra.mxu0 %v653
    %1437 = vmatprep.subr.mxu0 %v660
    %1438 = vmatpush1.msra.mxu0 %v659
    %1439 = vmatprep.subr.mxu0 %v666
    %1440 = vmatpush1.msra.mxu0 %v665
    %1441 = vmatprep.subr.mxu0 %v672
    %1442 = vmatpush1.msra.mxu0 %v671
    %1443 = vmatprep.subr.mxu0 %v678
    %1444 = vmatpush1.msra.mxu0 %v677
    %1445 = vmatprep.subr.mxu0 %v684
    %1446 = vmatpush1.msra.mxu0 %v683
    %1447 = vmatprep.subr.mxu0 %v690
    %1448 = vmatpush1.msra.mxu0 %v689
    %1449 = vmatprep.subr.mxu0 %v696
    %1450 = vmatpush1.msra.mxu0 %v695
    %1451 = vmatprep.subr.mxu0 %v702
    %1452 = vmatpush1.msra.mxu0 %v701
    %1453 = vmatprep.subr.mxu0 %v708
    %1454 = vmatpush1.msra.mxu0 %v707
    %1455 = vmatprep.subr.mxu0 %v714
    %1456 = vmatpush1.msra.mxu0 %v713
    %1457 = vmatprep.subr.mxu0 %v720
    %1458 = vmatpush1.msra.mxu0 %v719
    %1459 = vmatprep.subr.mxu0 %v726
    %1460 = vmatpush1.msra.mxu0 %v725
    %1461 = vmatprep.subr.mxu0 %v732
    %1462 = vmatpush1.msra.mxu0 %v731
    %1463 = vmatprep.subr.mxu0 %v738
    %1464 = vmatpush1.msra.mxu0 %v737
    %1465 = vmatprep.subr.mxu0 %v744
    %1466 = vmatpush1.msra.mxu0 %v743
    %1467 = vmatprep.subr.mxu0 %v750
    %1468 = vmatpush1.msra.mxu0 %v749
    %1469 = vmatprep.subr.mxu0 %v756
    %1470 = vmatpush1.msra.mxu0 %v755
    %1471 = vmatprep.subr.mxu0 %v762
    %1472 = vmatpush1.msra.mxu0 %v761
    %1473 = vmatprep.mubr.f32.mxu0 %v1266
    %1474 = vmatmul.mubr.f32.gmra.mrb[0].mxu0 %v1265
    %v1475 = vpop.f32.mrb[0].mxu0
    %v1476 = vadd.f32 0.0, %v1475
    %v1477 = vpop.f32.mrb[0].mxu0
    %v1478 = vadd.f32 0.0, %v1477
    %1479 = vdwg.mxu0
    %1480 = vmatprep.subr.mxu0 %v764
    %1481 = vmatpush1.msra.mxu0 %v763
    %1482 = vmatprep.subr.mxu0 %v770
    %1483 = vmatpush1.msra.mxu0 %v769
    %1484 = vmatprep.subr.mxu0 %v776
    %1485 = vmatpush1.msra.mxu0 %v775
    %1486 = vmatprep.subr.mxu0 %v782
    %1487 = vmatpush1.msra.mxu0 %v781
    %1488 = vmatprep.subr.mxu0 %v788
    %1489 = vmatpush1.msra.mxu0 %v787
    %1490 = vmatprep.subr.mxu0 %v794
    %1491 = vmatpush1.msra.mxu0 %v793
    %1492 = vmatprep.subr.mxu0 %v800
    %1493 = vmatpush1.msra.mxu0 %v799
    %1494 = vmatprep.subr.mxu0 %v806
    %1495 = vmatpush1.msra.mxu0 %v805
    %1496 = vmatprep.subr.mxu0 %v812
    %1497 = vmatpush1.msra.mxu0 %v811
    %1498 = vmatprep.subr.mxu0 %v818
    %1499 = vmatpush1.msra.mxu0 %v817
    %1500 = vmatprep.subr.mxu0 %v824
    %1501 = vmatpush1.msra.mxu0 %v823
    %1502 = vmatprep.subr.mxu0 %v830
    %1503 = vmatpush1.msra.mxu0 %v829
    %1504 = vmatprep.subr.mxu0 %v836
    %1505 = vmatpush1.msra.mxu0 %v835
    %1506 = vmatprep.subr.mxu0 %v842
    %1507 = vmatpush1.msra.mxu0 %v841
    %1508 = vmatprep.subr.mxu0 %v848
    %1509 = vmatpush1.msra.mxu0 %v847
    %1510 = vmatprep.subr.mxu0 %v854
    %1511 = vmatpush1.msra.mxu0 %v853
    %1512 = vmatprep.subr.mxu0 %v860
    %1513 = vmatpush1.msra.mxu0 %v859
    %1514 = vmatprep.subr.mxu0 %v866
    %1515 = vmatpush1.msra.mxu0 %v865
    %1516 = vmatprep.subr.mxu0 %v872
    %1517 = vmatpush1.msra.mxu0 %v871
    %1518 = vmatprep.subr.mxu0 %v878
    %1519 = vmatpush1.msra.mxu0 %v877
    %1520 = vmatprep.subr.mxu0 %v884
    %1521 = vmatpush1.msra.mxu0 %v883
    %1522 = vmatprep.subr.mxu0 %v890
    %1523 = vmatpush1.msra.mxu0 %v889
    %1524 = vmatprep.subr.mxu0 %v896
    %1525 = vmatpush1.msra.mxu0 %v895
    %1526 = vmatprep.subr.mxu0 %v902
    %1527 = vmatpush1.msra.mxu0 %v901
    %1528 = vmatprep.subr.mxu0 %v908
    %1529 = vmatpush1.msra.mxu0 %v907
    %1530 = vmatprep.subr.mxu0 %v914
    %1531 = vmatpush1.msra.mxu0 %v913
    %1532 = vmatprep.subr.mxu0 %v920
    %1533 = vmatpush1.msra.mxu0 %v919
    %1534 = vmatprep.subr.mxu0 %v926
    %1535 = vmatpush1.msra.mxu0 %v925
    %1536 = vmatprep.subr.mxu0 %v932
    %1537 = vmatpush1.msra.mxu0 %v931
    %1538 = vmatprep.subr.mxu0 %v938
    %1539 = vmatpush1.msra.mxu0 %v937
    %1540 = vmatprep.subr.mxu0 %v944
    %1541 = vmatpush1.msra.mxu0 %v943
    %1542 = vmatprep.subr.mxu0 %v950
    %1543 = vmatpush1.msra.mxu0 %v949
    %1544 = vmatprep.mubr.f32.mxu0 0.0
    %1545 = vmatmul.mubr.f32.gmra.mrb[0].mxu0 0.0
    %v1546 = vpop.f32.mrb[0].mxu0
    %v1547 = vadd.f32 0.0, %v1546
    %v1548 = vpop.f32.mrb[0].mxu0
    %v1549 = vadd.f32 0.0, %v1548
    %1550 = vdwg.mxu0
    %1551 = vmatprep.subr.mxu0 %v766
    %1552 = vmatpush1.msra.mxu0 %v765
    %1553 = vmatprep.subr.mxu0 %v772
    %1554 = vmatpush1.msra.mxu0 %v771
    %1555 = vmatprep.subr.mxu0 %v778
    %1556 = vmatpush1.msra.mxu0 %v777
    %1557 = vmatprep.subr.mxu0 %v784
    %1558 = vmatpush1.msra.mxu0 %v783
    %1559 = vmatprep.subr.mxu0 %v790
    %1560 = vmatpush1.msra.mxu0 %v789
    %1561 = vmatprep.subr.mxu0 %v796
    %1562 = vmatpush1.msra.mxu0 %v795
    %1563 = vmatprep.subr.mxu0 %v802
    %1564 = vmatpush1.msra.mxu0 %v801
    %1565 = vmatprep.subr.mxu0 %v808
    %1566 = vmatpush1.msra.mxu0 %v807
    %1567 = vmatprep.subr.mxu0 %v814
    %1568 = vmatpush1.msra.mxu0 %v813
    %1569 = vmatprep.subr.mxu0 %v820
    %1570 = vmatpush1.msra.mxu0 %v819
    %1571 = vmatprep.subr.mxu0 %v826
    %1572 = vmatpush1.msra.mxu0 %v825
    %1573 = vmatprep.subr.mxu0 %v832
    %1574 = vmatpush1.msra.mxu0 %v831
    %1575 = vmatprep.subr.mxu0 %v838
    %1576 = vmatpush1.msra.mxu0 %v837
    %1577 = vmatprep.subr.mxu0 %v844
    %1578 = vmatpush1.msra.mxu0 %v843
    %1579 = vmatprep.subr.mxu0 %v850
    %1580 = vmatpush1.msra.mxu0 %v849
    %1581 = vmatprep.subr.mxu0 %v856
    %1582 = vmatpush1.msra.mxu0 %v855
    %1583 = vmatprep.subr.mxu0 %v862
    %1584 = vmatpush1.msra.mxu0 %v861
    %1585 = vmatprep.subr.mxu0 %v868
    %1586 = vmatpush1.msra.mxu0 %v867
    %1587 = vmatprep.subr.mxu0 %v874
    %1588 = vmatpush1.msra.mxu0 %v873
    %1589 = vmatprep.subr.mxu0 %v880
    %1590 = vmatpush1.msra.mxu0 %v879
    %1591 = vmatprep.subr.mxu0 %v886
    %1592 = vmatpush1.msra.mxu0 %v885
    %1593 = vmatprep.subr.mxu0 %v892
    %1594 = vmatpush1.msra.mxu0 %v891
    %1595 = vmatprep.subr.mxu0 %v898
    %1596 = vmatpush1.msra.mxu0 %v897
    %1597 = vmatprep.subr.mxu0 %v904
    %1598 = vmatpush1.msra.mxu0 %v903
    %1599 = vmatprep.subr.mxu0 %v910
    %1600 = vmatpush1.msra.mxu0 %v909
    %1601 = vmatprep.subr.mxu0 %v916
    %1602 = vmatpush1.msra.mxu0 %v915
    %1603 = vmatprep.subr.mxu0 %v922
    %1604 = vmatpush1.msra.mxu0 %v921
    %1605 = vmatprep.subr.mxu0 %v928
    %1606 = vmatpush1.msra.mxu0 %v927
    %1607 = vmatprep.subr.mxu0 %v934
    %1608 = vmatpush1.msra.mxu0 %v933
    %1609 = vmatprep.subr.mxu0 %v940
    %1610 = vmatpush1.msra.mxu0 %v939
    %1611 = vmatprep.subr.mxu0 %v946
    %1612 = vmatpush1.msra.mxu0 %v945
    %1613 = vmatprep.subr.mxu0 %v952
    %1614 = vmatpush1.msra.mxu0 %v951
    %1615 = vmatprep.mubr.f32.mxu0 0.0
    %1616 = vmatmul.mubr.f32.gmra.mrb[0].mxu0 0.0
    %v1617 = vpop.f32.mrb[0].mxu0
    %v1618 = vadd.f32 0.0, %v1617
    %v1619 = vpop.f32.mrb[0].mxu0
    %v1620 = vadd.f32 0.0, %v1619
    %1621 = vdwg.mxu0
    %1622 = vmatprep.subr.mxu0 %v768
    %1623 = vmatpush1.msra.mxu0 %v767
    %1624 = vmatprep.subr.mxu0 %v774
    %1625 = vmatpush1.msra.mxu0 %v773
    %1626 = vmatprep.subr.mxu0 %v780
    %1627 = vmatpush1.msra.mxu0 %v779
    %1628 = vmatprep.subr.mxu0 %v786
    %1629 = vmatpush1.msra.mxu0 %v785
    %1630 = vmatprep.subr.mxu0 %v792
    %1631 = vmatpush1.msra.mxu0 %v791
    %1632 = vmatprep.subr.mxu0 %v798
    %1633 = vmatpush1.msra.mxu0 %v797
    %1634 = vmatprep.subr.mxu0 %v804
    %1635 = vmatpush1.msra.mxu0 %v803
    %1636 = vmatprep.subr.mxu0 %v810
    %1637 = vmatpush1.msra.mxu0 %v809
    %1638 = vmatprep.subr.mxu0 %v816
    %1639 = vmatpush1.msra.mxu0 %v815
    %1640 = vmatprep.subr.mxu0 %v822
    %1641 = vmatpush1.msra.mxu0 %v821
    %1642 = vmatprep.subr.mxu0 %v828
    %1643 = vmatpush1.msra.mxu0 %v827
    %1644 = vmatprep.subr.mxu0 %v834
    %1645 = vmatpush1.msra.mxu0 %v833
    %1646 = vmatprep.subr.mxu0 %v840
    %1647 = vmatpush1.msra.mxu0 %v839
    %1648 = vmatprep.subr.mxu0 %v846
    %1649 = vmatpush1.msra.mxu0 %v845
    %1650 = vmatprep.subr.mxu0 %v852
    %1651 = vmatpush1.msra.mxu0 %v851
    %1652 = vmatprep.subr.mxu0 %v858
    %1653 = vmatpush1.msra.mxu0 %v857
    %1654 = vmatprep.subr.mxu0 %v864
    %1655 = vmatpush1.msra.mxu0 %v863
    %1656 = vmatprep.subr.mxu0 %v870
    %1657 = vmatpush1.msra.mxu0 %v869
    %1658 = vmatprep.subr.mxu0 %v876
    %1659 = vmatpush1.msra.mxu0 %v875
    %1660 = vmatprep.subr.mxu0 %v882
    %1661 = vmatpush1.msra.mxu0 %v881
    %1662 = vmatprep.subr.mxu0 %v888
    %1663 = vmatpush1.msra.mxu0 %v887
    %1664 = vmatprep.subr.mxu0 %v894
    %1665 = vmatpush1.msra.mxu0 %v893
    %1666 = vmatprep.subr.mxu0 %v900
    %1667 = vmatpush1.msra.mxu0 %v899
    %1668 = vmatprep.subr.mxu0 %v906
    %1669 = vmatpush1.msra.mxu0 %v905
    %1670 = vmatprep.subr.mxu0 %v912
    %1671 = vmatpush1.msra.mxu0 %v911
    %1672 = vmatprep.subr.mxu0 %v918
    %1673 = vmatpush1.msra.mxu0 %v917
    %1674 = vmatprep.subr.mxu0 %v924
    %1675 = vmatpush1.msra.mxu0 %v923
    %1676 = vmatprep.subr.mxu0 %v930
    %1677 = vmatpush1.msra.mxu0 %v929
    %1678 = vmatprep.subr.mxu0 %v936
    %1679 = vmatpush1.msra.mxu0 %v935
    %1680 = vmatprep.subr.mxu0 %v942
    %1681 = vmatpush1.msra.mxu0 %v941
    %1682 = vmatprep.subr.mxu0 %v948
    %1683 = vmatpush1.msra.mxu0 %v947
    %1684 = vmatprep.subr.mxu0 %v954
    %1685 = vmatpush1.msra.mxu0 %v953
    %1686 = vmatprep.mubr.f32.mxu0 0.0
    %1687 = vmatmul.mubr.f32.gmra.mrb[0].mxu0 0.0
    %v1688 = vpop.f32.mrb[0].mxu0
    %v1689 = vadd.f32 0.0, %v1688
    %v1690 = vpop.f32.mrb[0].mxu0
    %v1691 = vadd.f32 0.0, %v1690
    %1692 = vdwg.mxu0
    %v1693 = vadd.f32 %v1334, %v1547
    %v1694 = vadd.f32 %v1336, %v1549
    %v1695 = vadd.f32 %v1405, %v1618
    %v1696 = vadd.f32 %v1407, %v1620
    %v1698 = vlaneseq
    %v1699 = vshrl.u32 %v1698, 7
    %v1700 = vsub.s32 0, %v1699
    %v1701 = vrot.slane %v958, %v1700
    %v1702 = vlaneseq
    %v1703 = vshrl.u32 %v1702, 7
    %v1704 = vsub.s32 1, %v1703
    %v1705 = vrot.slane %v958, %v1704
    %v1706 = vlaneseq
    %v1707 = vshrl.u32 %v1706, 7
    %v1708 = vsub.s32 2, %v1707
    %v1709 = vrot.slane %v958, %v1708
    %v1710 = vlaneseq
    %v1711 = vshrl.u32 %v1710, 7
    %v1712 = vsub.s32 3, %v1711
    %v1713 = vrot.slane %v958, %v1712
    %v1718 = vadd.f32 %v1693, %v1701
    %v1719 = vadd.f32 %v1694, %v1705
    %v1720 = vadd.f32 %v1695, %v1709
    %v1721 = vadd.f32 %v1696, %v1713
    %v1722 = vxor.u32 %v1718, 2147483648
    %v1723 = vxor.u32 %v1719, 2147483648
    %v1724 = vxor.u32 %v1720, 2147483648
    %v1725 = vxor.u32 %v1721, 2147483648
    %v1726 = vmul.f32 %v1722, 1.442695
    %v1727 = vpow.pop %v1726
    %v1728 = vmul.f32 %v1723, 1.442695
    %v1729 = vpow.pop %v1728
    %v1730 = vmul.f32 %v1724, 1.442695
    %v1731 = vpow.pop %v1730
    %v1732 = vmul.f32 %v1725, 1.442695
    %v1733 = vpow.pop %v1732
    %v1734 = vadd.f32 %v1727, 1.0
    %v1735 = vadd.f32 %v1729, 1.0
    %v1736 = vadd.f32 %v1731, 1.0
    %v1737 = vadd.f32 %v1733, 1.0
    %v1738 = vrcp.pop %v1734
    %v1739 = vmul.f32 1.0, %v1738
    %v1740 = vrcp.pop %v1735
    %v1741 = vmul.f32 1.0, %v1740
    %v1742 = vrcp.pop %v1736
    %v1743 = vmul.f32 1.0, %v1742
    %v1744 = vrcp.pop %v1737
    %v1745 = vmul.f32 1.0, %v1744
    %v1747 = vlaneseq
    %v1748 = vshrl.u32 %v1747, 7
    %v1749 = vsub.s32 0, %v1748
    %v1750 = vrot.slane %v959, %v1749
    %v1751 = vlaneseq
    %v1752 = vshrl.u32 %v1751, 7
    %v1753 = vsub.s32 1, %v1752
    %v1754 = vrot.slane %v959, %v1753
    %v1757 = vadd.f32 %v1476, %v1750
    %v1758 = vadd.f32 %v1478, %v1754
    %v1760 = vlaneseq
    %v1761 = vshrl.u32 %v1760, 7
    %v1762 = vsub.s32 0, %v1761
    %v1763 = vrot.slane %v960, %v1762
    %v1764 = vlaneseq
    %v1765 = vshrl.u32 %v1764, 7
    %v1766 = vsub.s32 1, %v1765
    %v1767 = vrot.slane %v960, %v1766
    %v1770 = vadd.f32 %v1689, %v1763
    %v1771 = vadd.f32 %v1691, %v1767
    %v1772 = vmul.f32 %v1739, %v1770
    %v1773 = vmul.f32 %v1741, %v1771
    %v1774 = vadd.f32 %v1757, %v1772
    %v1775 = vadd.f32 %v1758, %v1773
    %v1776 = vtanh.pop %v1774
    %v1777 = vtanh.pop %v1775
    %v1778 = vsub.f32 1.0, %v1743
    %v1779 = vsub.f32 1.0, %v1745
    %v1780 = vmul.f32 %v1778, %v1776
    %v1781 = vmul.f32 %v1779, %v1777
    %v1782 = vmul.f32 %v1743, 0.0
    %v1783 = vmul.f32 %v1745, 0.0
    %v1784 = vadd.f32 %v1780, %v1782
    %v1785 = vadd.f32 %v1781, %v1783
    %v1788 = vcombine.low %v1784, %v1785
    %v1790 = vunpack.c.l.s4 1966171168
    %v1791 = vunpack.c.0.s8 %v1790
    %v1792 = vlaneseq
    %v1793 = vshrl.u32 %v1792, 7
    %v1794 = vsub.s32 %v1791, %v1793
    %v1795 = vrot.slane %v1788, %v1794
    %v1796 = vcombine.high %v1795, %v1795
    %v1798 = vunpack.c.l.s4 1966171168
    %v1799 = vunpack.c.0.s8 %v1798
    %v1800 = vlaneseq
    %v1801 = vshrl.u32 %v1800, 7
    %v1802 = vsub.s32 %v1799, %v1801
    %v1803 = vrot.slane %v1796, %v1802
    %v1804 = vcombine.high %v1803, %v1803
    %v1806 = vlaneseq
    %vm1807 = vcmp.ge.s32.totalorder %v1806, 0
    %vm1808 = vcmp.lt.s32.totalorder %v1806, 256
    %vm1809 = vmand %vm1807, %vm1808
    %1810 = vst.msk [vmem:[#allocation2] ss:$8 sm:$0x3] %vm1809, %v1804
    %1811 = vst.msk [vmem:[#allocation2] ss:$8 sm:$0x0] %vm1809, %v1804
    %1812 = vmatprep.subr.mxu0 %v380
    %1813 = vmatpush1.msra.mxu0 %v379
    %1814 = vmatprep.subr.mxu0 %v386
    %1815 = vmatpush1.msra.mxu0 %v385
    %1816 = vmatprep.subr.mxu0 %v392
    %1817 = vmatpush1.msra.mxu0 %v391
    %1818 = vmatprep.subr.mxu0 %v398
    %1819 = vmatpush1.msra.mxu0 %v397
    %1820 = vmatprep.subr.mxu0 %v404
    %1821 = vmatpush1.msra.mxu0 %v403
    %1822 = vmatprep.subr.mxu0 %v410
    %1823 = vmatpush1.msra.mxu0 %v409
    %1824 = vmatprep.subr.mxu0 %v416
    %1825 = vmatpush1.msra.mxu0 %v415
    %1826 = vmatprep.subr.mxu0 %v422
    %1827 = vmatpush1.msra.mxu0 %v421
    %1828 = vmatprep.subr.mxu0 %v428
    %1829 = vmatpush1.msra.mxu0 %v427
    %1830 = vmatprep.subr.mxu0 %v434
    %1831 = vmatpush1.msra.mxu0 %v433
    %1832 = vmatprep.subr.mxu0 %v440
    %1833 = vmatpush1.msra.mxu0 %v439
    %1834 = vmatprep.subr.mxu0 %v446
    %1835 = vmatpush1.msra.mxu0 %v445
    %1836 = vmatprep.subr.mxu0 %v452
    %1837 = vmatpush1.msra.mxu0 %v451
    %1838 = vmatprep.subr.mxu0 %v458
    %1839 = vmatpush1.msra.mxu0 %v457
    %1840 = vmatprep.subr.mxu0 %v464
    %1841 = vmatpush1.msra.mxu0 %v463
    %1842 = vmatprep.subr.mxu0 %v470
    %1843 = vmatpush1.msra.mxu0 %v469
    %1844 = vmatprep.subr.mxu0 %v476
    %1845 = vmatpush1.msra.mxu0 %v475
    %1846 = vmatprep.subr.mxu0 %v482
    %1847 = vmatpush1.msra.mxu0 %v481
    %1848 = vmatprep.subr.mxu0 %v488
    %1849 = vmatpush1.msra.mxu0 %v487
    %1850 = vmatprep.subr.mxu0 %v494
    %1851 = vmatpush1.msra.mxu0 %v493
    %1852 = vmatprep.subr.mxu0 %v500
    %1853 = vmatpush1.msra.mxu0 %v499
    %1854 = vmatprep.subr.mxu0 %v506
    %1855 = vmatpush1.msra.mxu0 %v505
    %1856 = vmatprep.subr.mxu0 %v512
    %1857 = vmatpush1.msra.mxu0 %v511
    %1858 = vmatprep.subr.mxu0 %v518
    %1859 = vmatpush1.msra.mxu0 %v517
    %1860 = vmatprep.subr.mxu0 %v524
    %1861 = vmatpush1.msra.mxu0 %v523
    %1862 = vmatprep.subr.mxu0 %v530
    %1863 = vmatpush1.msra.mxu0 %v529
    %1864 = vmatprep.subr.mxu0 %v536
    %1865 = vmatpush1.msra.mxu0 %v535
    %1866 = vmatprep.subr.mxu0 %v542
    %1867 = vmatpush1.msra.mxu0 %v541
    %1868 = vmatprep.subr.mxu0 %v548
    %1869 = vmatpush1.msra.mxu0 %v547
    %1870 = vmatprep.subr.mxu0 %v554
    %1871 = vmatpush1.msra.mxu0 %v553
    %1872 = vmatprep.subr.mxu0 %v560
    %1873 = vmatpush1.msra.mxu0 %v559
    %1874 = vmatprep.subr.mxu0 %v566
    %1875 = vmatpush1.msra.mxu0 %v565
    %1876 = vmatprep.mubr.f32.mxu0 %v1266
    %1877 = vmatmul.mubr.f32.gmra.mrb[0].mxu0 %v1265
    %v1878 = vpop.f32.mrb[0].mxu0
    %v1879 = vadd.f32 0.0, %v1878
    %v1880 = vpop.f32.mrb[0].mxu0
    %v1881 = vadd.f32 0.0, %v1880
    %1882 = vdwg.mxu0
    %1883 = vmatprep.subr.mxu0 %v382
    %1884 = vmatpush1.msra.mxu0 %v381
    %1885 = vmatprep.subr.mxu0 %v388
    %1886 = vmatpush1.msra.mxu0 %v387
    %1887 = vmatprep.subr.mxu0 %v394
    %1888 = vmatpush1.msra.mxu0 %v393
    %1889 = vmatprep.subr.mxu0 %v400
    %1890 = vmatpush1.msra.mxu0 %v399
    %1891 = vmatprep.subr.mxu0 %v406
    %1892 = vmatpush1.msra.mxu0 %v405
    %1893 = vmatprep.subr.mxu0 %v412
    %1894 = vmatpush1.msra.mxu0 %v411
    %1895 = vmatprep.subr.mxu0 %v418
    %1896 = vmatpush1.msra.mxu0 %v417
    %1897 = vmatprep.subr.mxu0 %v424
    %1898 = vmatpush1.msra.mxu0 %v423
    %1899 = vmatprep.subr.mxu0 %v430
    %1900 = vmatpush1.msra.mxu0 %v429
    %1901 = vmatprep.subr.mxu0 %v436
    %1902 = vmatpush1.msra.mxu0 %v435
    %1903 = vmatprep.subr.mxu0 %v442
    %1904 = vmatpush1.msra.mxu0 %v441
    %1905 = vmatprep.subr.mxu0 %v448
    %1906 = vmatpush1.msra.mxu0 %v447
    %1907 = vmatprep.subr.mxu0 %v454
    %1908 = vmatpush1.msra.mxu0 %v453
    %1909 = vmatprep.subr.mxu0 %v460
    %1910 = vmatpush1.msra.mxu0 %v459
    %1911 = vmatprep.subr.mxu0 %v466
    %1912 = vmatpush1.msra.mxu0 %v465
    %1913 = vmatprep.subr.mxu0 %v472
    %1914 = vmatpush1.msra.mxu0 %v471
    %1915 = vmatprep.subr.mxu0 %v478
    %1916 = vmatpush1.msra.mxu0 %v477
    %1917 = vmatprep.subr.mxu0 %v484
    %1918 = vmatpush1.msra.mxu0 %v483
    %1919 = vmatprep.subr.mxu0 %v490
    %1920 = vmatpush1.msra.mxu0 %v489
    %1921 = vmatprep.subr.mxu0 %v496
    %1922 = vmatpush1.msra.mxu0 %v495
    %1923 = vmatprep.subr.mxu0 %v502
    %1924 = vmatpush1.msra.mxu0 %v501
    %1925 = vmatprep.subr.mxu0 %v508
    %1926 = vmatpush1.msra.mxu0 %v507
    %1927 = vmatprep.subr.mxu0 %v514
    %1928 = vmatpush1.msra.mxu0 %v513
    %1929 = vmatprep.subr.mxu0 %v520
    %1930 = vmatpush1.msra.mxu0 %v519
    %1931 = vmatprep.subr.mxu0 %v526
    %1932 = vmatpush1.msra.mxu0 %v525
    %1933 = vmatprep.subr.mxu0 %v532
    %1934 = vmatpush1.msra.mxu0 %v531
    %1935 = vmatprep.subr.mxu0 %v538
    %1936 = vmatpush1.msra.mxu0 %v537
    %1937 = vmatprep.subr.mxu0 %v544
    %1938 = vmatpush1.msra.mxu0 %v543
    %1939 = vmatprep.subr.mxu0 %v550
    %1940 = vmatpush1.msra.mxu0 %v549
    %1941 = vmatprep.subr.mxu0 %v556
    %1942 = vmatpush1.msra.mxu0 %v555
    %1943 = vmatprep.subr.mxu0 %v562
    %1944 = vmatpush1.msra.mxu0 %v561
    %1945 = vmatprep.subr.mxu0 %v568
    %1946 = vmatpush1.msra.mxu0 %v567
    %1947 = vmatprep.mubr.f32.mxu0 %v1266
    %1948 = vmatmul.mubr.f32.gmra.mrb[0].mxu0 %v1265
    %v1949 = vpop.f32.mrb[0].mxu0
    %v1950 = vadd.f32 0.0, %v1949
    %v1951 = vpop.f32.mrb[0].mxu0
    %v1952 = vadd.f32 0.0, %v1951
    %1953 = vdwg.mxu0
    %1954 = vmatprep.subr.mxu0 %v384
    %1955 = vmatpush1.msra.mxu0 %v383
    %1956 = vmatprep.subr.mxu0 %v390
    %1957 = vmatpush1.msra.mxu0 %v389
    %1958 = vmatprep.subr.mxu0 %v396
    %1959 = vmatpush1.msra.mxu0 %v395
    %1960 = vmatprep.subr.mxu0 %v402
    %1961 = vmatpush1.msra.mxu0 %v401
    %1962 = vmatprep.subr.mxu0 %v408
    %1963 = vmatpush1.msra.mxu0 %v407
    %1964 = vmatprep.subr.mxu0 %v414
    %1965 = vmatpush1.msra.mxu0 %v413
    %1966 = vmatprep.subr.mxu0 %v420
    %1967 = vmatpush1.msra.mxu0 %v419
    %1968 = vmatprep.subr.mxu0 %v426
    %1969 = vmatpush1.msra.mxu0 %v425
    %1970 = vmatprep.subr.mxu0 %v432
    %1971 = vmatpush1.msra.mxu0 %v431
    %1972 = vmatprep.subr.mxu0 %v438
    %1973 = vmatpush1.msra.mxu0 %v437
    %1974 = vmatprep.subr.mxu0 %v444
    %1975 = vmatpush1.msra.mxu0 %v443
    %1976 = vmatprep.subr.mxu0 %v450
    %1977 = vmatpush1.msra.mxu0 %v449
    %1978 = vmatprep.subr.mxu0 %v456
    %1979 = vmatpush1.msra.mxu0 %v455
    %1980 = vmatprep.subr.mxu0 %v462
    %1981 = vmatpush1.msra.mxu0 %v461
    %1982 = vmatprep.subr.mxu0 %v468
    %1983 = vmatpush1.msra.mxu0 %v467
    %1984 = vmatprep.subr.mxu0 %v474
    %1985 = vmatpush1.msra.mxu0 %v473
    %1986 = vmatprep.subr.mxu0 %v480
    %1987 = vmatpush1.msra.mxu0 %v479
    %1988 = vmatprep.subr.mxu0 %v486
    %1989 = vmatpush1.msra.mxu0 %v485
    %1990 = vmatprep.subr.mxu0 %v492
    %1991 = vmatpush1.msra.mxu0 %v491
    %1992 = vmatprep.subr.mxu0 %v498
    %1993 = vmatpush1.msra.mxu0 %v497
    %1994 = vmatprep.subr.mxu0 %v504
    %1995 = vmatpush1.msra.mxu0 %v503
    %1996 = vmatprep.subr.mxu0 %v510
    %1997 = vmatpush1.msra.mxu0 %v509
    %1998 = vmatprep.subr.mxu0 %v516
    %1999 = vmatpush1.msra.mxu0 %v515
    %2000 = vmatprep.subr.mxu0 %v522
    %2001 = vmatpush1.msra.mxu0 %v521
    %2002 = vmatprep.subr.mxu0 %v528
    %2003 = vmatpush1.msra.mxu0 %v527
    %2004 = vmatprep.subr.mxu0 %v534
    %2005 = vmatpush1.msra.mxu0 %v533
    %2006 = vmatprep.subr.mxu0 %v540
    %2007 = vmatpush1.msra.mxu0 %v539
    %2008 = vmatprep.subr.mxu0 %v546
    %2009 = vmatpush1.msra.mxu0 %v545
    %2010 = vmatprep.subr.mxu0 %v552
    %2011 = vmatpush1.msra.mxu0 %v551
    %2012 = vmatprep.subr.mxu0 %v558
    %2013 = vmatpush1.msra.mxu0 %v557
    %2014 = vmatprep.subr.mxu0 %v564
    %2015 = vmatpush1.msra.mxu0 %v563
    %2016 = vmatprep.subr.mxu0 %v570
    %2017 = vmatpush1.msra.mxu0 %v569
    %2018 = vmatprep.mubr.f32.mxu0 %v1266
    %2019 = vmatmul.mubr.f32.gmra.mrb[0].mxu0 %v1265
    %v2020 = vpop.f32.mrb[0].mxu0
    %v2021 = vadd.f32 0.0, %v2020
    %v2022 = vpop.f32.mrb[0].mxu0
    %v2023 = vadd.f32 0.0, %v2022
    %2024 = vdwg.mxu0
    %v2029 = vrot.slane %v1879, 4
    %v2030 = vrot.slane %v1881, 4
    %v2031 = vrot.slane %v1950, 4
    %v2032 = vrot.slane %v1952, 4
    %v2037 = vadd.f32 %v197, %v2029
    %v2038 = vadd.f32 %v199, %v2030
    %v2039 = vadd.f32 %v280, %v2031
    %v2040 = vadd.f32 %v282, %v2032
    %v2041 = vadd.f32 %v2037, %v1182
    %v2042 = vadd.f32 %v2038, %v1186
    %v2043 = vadd.f32 %v2039, %v1190
    %v2044 = vadd.f32 %v2040, %v1194
    %v2045 = vxor.u32 %v2041, 2147483648
    %v2046 = vxor.u32 %v2042, 2147483648
    %v2047 = vxor.u32 %v2043, 2147483648
    %v2048 = vxor.u32 %v2044, 2147483648
    %v2049 = vmul.f32 %v2045, 1.442695
    %v2050 = vpow.pop %v2049
    %v2051 = vmul.f32 %v2046, 1.442695
    %v2052 = vpow.pop %v2051
    %v2053 = vmul.f32 %v2047, 1.442695
    %v2054 = vpow.pop %v2053
    %v2055 = vmul.f32 %v2048, 1.442695
    %v2056 = vpow.pop %v2055
    %v2057 = vadd.f32 %v2050, 1.0
    %v2058 = vadd.f32 %v2052, 1.0
    %v2059 = vadd.f32 %v2054, 1.0
    %v2060 = vadd.f32 %v2056, 1.0
    %v2061 = vrcp.pop %v2057
    %v2062 = vmul.f32 1.0, %v2061
    %v2063 = vrcp.pop %v2058
    %v2064 = vmul.f32 1.0, %v2063
    %v2065 = vrcp.pop %v2059
    %v2066 = vmul.f32 1.0, %v2065
    %v2067 = vrcp.pop %v2060
    %v2068 = vmul.f32 1.0, %v2067
    %v2069 = vadd.f32 %v2021, %v1244
    %v2070 = vadd.f32 %v2023, %v1248
    %v2073 = vrot.slane %v2069, 4
    %v2074 = vrot.slane %v2070, 4
    %v2077 = vmul.f32 %v2062, %v2073
    %v2078 = vmul.f32 %v2064, %v2074
    %v2079 = vadd.f32 %v1238, %v2077
    %v2080 = vadd.f32 %v1239, %v2078
    %v2081 = vtanh.pop %v2079
    %v2082 = vtanh.pop %v2080
    %v2083 = vsub.f32 1.0, %v2066
    %v2084 = vsub.f32 1.0, %v2068
    %v2085 = vmul.f32 %v2083, %v2081
    %v2086 = vmul.f32 %v2084, %v2082
    %v2089 = vrot.slane %v1265, 4
    %v2090 = vrot.slane %v1266, 4
    %v2093 = vmul.f32 %v2066, %v2089
    %v2094 = vmul.f32 %v2068, %v2090
    %v2095 = vadd.f32 %v2085, %v2093
    %v2096 = vadd.f32 %v2086, %v2094
    %v2099 = vrot.slane %v2095, 4
    %v2100 = vrot.slane %v2096, 4
    %2103 = vmatprep.subr.mxu0 %v572
    %2104 = vmatpush1.msra.mxu0 %v571
    %2105 = vmatprep.subr.mxu0 %v578
    %2106 = vmatpush1.msra.mxu0 %v577
    %2107 = vmatprep.subr.mxu0 %v584
    %2108 = vmatpush1.msra.mxu0 %v583
    %2109 = vmatprep.subr.mxu0 %v590
    %2110 = vmatpush1.msra.mxu0 %v589
    %2111 = vmatprep.subr.mxu0 %v596
    %2112 = vmatpush1.msra.mxu0 %v595
    %2113 = vmatprep.subr.mxu0 %v602
    %2114 = vmatpush1.msra.mxu0 %v601
    %2115 = vmatprep.subr.mxu0 %v608
    %2116 = vmatpush1.msra.mxu0 %v607
    %2117 = vmatprep.subr.mxu0 %v614
    %2118 = vmatpush1.msra.mxu0 %v613
    %2119 = vmatprep.subr.mxu0 %v620
    %2120 = vmatpush1.msra.mxu0 %v619
    %2121 = vmatprep.subr.mxu0 %v626
    %2122 = vmatpush1.msra.mxu0 %v625
    %2123 = vmatprep.subr.mxu0 %v632
    %2124 = vmatpush1.msra.mxu0 %v631
    %2125 = vmatprep.subr.mxu0 %v638
    %2126 = vmatpush1.msra.mxu0 %v637
    %2127 = vmatprep.subr.mxu0 %v644
    %2128 = vmatpush1.msra.mxu0 %v643
    %2129 = vmatprep.subr.mxu0 %v650
    %2130 = vmatpush1.msra.mxu0 %v649
    %2131 = vmatprep.subr.mxu0 %v656
    %2132 = vmatpush1.msra.mxu0 %v655
    %2133 = vmatprep.subr.mxu0 %v662
    %2134 = vmatpush1.msra.mxu0 %v661
    %2135 = vmatprep.subr.mxu0 %v668
    %2136 = vmatpush1.msra.mxu0 %v667
    %2137 = vmatprep.subr.mxu0 %v674
    %2138 = vmatpush1.msra.mxu0 %v673
    %2139 = vmatprep.subr.mxu0 %v680
    %2140 = vmatpush1.msra.mxu0 %v679
    %2141 = vmatprep.subr.mxu0 %v686
    %2142 = vmatpush1.msra.mxu0 %v685
    %2143 = vmatprep.subr.mxu0 %v692
    %2144 = vmatpush1.msra.mxu0 %v691
    %2145 = vmatprep.subr.mxu0 %v698
    %2146 = vmatpush1.msra.mxu0 %v697
    %2147 = vmatprep.subr.mxu0 %v704
    %2148 = vmatpush1.msra.mxu0 %v703
    %2149 = vmatprep.subr.mxu0 %v710
    %2150 = vmatpush1.msra.mxu0 %v709
    %2151 = vmatprep.subr.mxu0 %v716
    %2152 = vmatpush1.msra.mxu0 %v715
    %2153 = vmatprep.subr.mxu0 %v722
    %2154 = vmatpush1.msra.mxu0 %v721
    %2155 = vmatprep.subr.mxu0 %v728
    %2156 = vmatpush1.msra.mxu0 %v727
    %2157 = vmatprep.subr.mxu0 %v734
    %2158 = vmatpush1.msra.mxu0 %v733
    %2159 = vmatprep.subr.mxu0 %v740
    %2160 = vmatpush1.msra.mxu0 %v739
    %2161 = vmatprep.subr.mxu0 %v746
    %2162 = vmatpush1.msra.mxu0 %v745
    %2163 = vmatprep.subr.mxu0 %v752
    %2164 = vmatpush1.msra.mxu0 %v751
    %2165 = vmatprep.subr.mxu0 %v758
    %2166 = vmatpush1.msra.mxu0 %v757
    %2167 = vmatprep.mubr.f32.mxu0 %v2100
    %2168 = vmatmul.mubr.f32.gmra.mrb[0].mxu0 %v2099
    %v2169 = vpop.f32.mrb[0].mxu0
    %v2170 = vadd.f32 0.0, %v2169
    %v2171 = vpop.f32.mrb[0].mxu0
    %v2172 = vadd.f32 0.0, %v2171
    %2173 = vdwg.mxu0
    %2174 = vmatprep.subr.mxu0 %v574
    %2175 = vmatpush1.msra.mxu0 %v573
    %2176 = vmatprep.subr.mxu0 %v580
    %2177 = vmatpush1.msra.mxu0 %v579
    %2178 = vmatprep.subr.mxu0 %v586
    %2179 = vmatpush1.msra.mxu0 %v585
    %2180 = vmatprep.subr.mxu0 %v592
    %2181 = vmatpush1.msra.mxu0 %v591
    %2182 = vmatprep.subr.mxu0 %v598
    %2183 = vmatpush1.msra.mxu0 %v597
    %2184 = vmatprep.subr.mxu0 %v604
    %2185 = vmatpush1.msra.mxu0 %v603
    %2186 = vmatprep.subr.mxu0 %v610
    %2187 = vmatpush1.msra.mxu0 %v609
    %2188 = vmatprep.subr.mxu0 %v616
    %2189 = vmatpush1.msra.mxu0 %v615
    %2190 = vmatprep.subr.mxu0 %v622
    %2191 = vmatpush1.msra.mxu0 %v621
    %2192 = vmatprep.subr.mxu0 %v628
    %2193 = vmatpush1.msra.mxu0 %v627
    %2194 = vmatprep.subr.mxu0 %v634
    %2195 = vmatpush1.msra.mxu0 %v633
    %2196 = vmatprep.subr.mxu0 %v640
    %2197 = vmatpush1.msra.mxu0 %v639
    %2198 = vmatprep.subr.mxu0 %v646
    %2199 = vmatpush1.msra.mxu0 %v645
    %2200 = vmatprep.subr.mxu0 %v652
    %2201 = vmatpush1.msra.mxu0 %v651
    %2202 = vmatprep.subr.mxu0 %v658
    %2203 = vmatpush1.msra.mxu0 %v657
    %2204 = vmatprep.subr.mxu0 %v664
    %2205 = vmatpush1.msra.mxu0 %v663
    %2206 = vmatprep.subr.mxu0 %v670
    %2207 = vmatpush1.msra.mxu0 %v669
    %2208 = vmatprep.subr.mxu0 %v676
    %2209 = vmatpush1.msra.mxu0 %v675
    %2210 = vmatprep.subr.mxu0 %v682
    %2211 = vmatpush1.msra.mxu0 %v681
    %2212 = vmatprep.subr.mxu0 %v688
    %2213 = vmatpush1.msra.mxu0 %v687
    %2214 = vmatprep.subr.mxu0 %v694
    %2215 = vmatpush1.msra.mxu0 %v693
    %2216 = vmatprep.subr.mxu0 %v700
    %2217 = vmatpush1.msra.mxu0 %v699
    %2218 = vmatprep.subr.mxu0 %v706
    %2219 = vmatpush1.msra.mxu0 %v705
    %2220 = vmatprep.subr.mxu0 %v712
    %2221 = vmatpush1.msra.mxu0 %v711
    %2222 = vmatprep.subr.mxu0 %v718
    %2223 = vmatpush1.msra.mxu0 %v717
    %2224 = vmatprep.subr.mxu0 %v724
    %2225 = vmatpush1.msra.mxu0 %v723
    %2226 = vmatprep.subr.mxu0 %v730
    %2227 = vmatpush1.msra.mxu0 %v729
    %2228 = vmatprep.subr.mxu0 %v736
    %2229 = vmatpush1.msra.mxu0 %v735
    %2230 = vmatprep.subr.mxu0 %v742
    %2231 = vmatpush1.msra.mxu0 %v741
    %2232 = vmatprep.subr.mxu0 %v748
    %2233 = vmatpush1.msra.mxu0 %v747
    %2234 = vmatprep.subr.mxu0 %v754
    %2235 = vmatpush1.msra.mxu0 %v753
    %2236 = vmatprep.subr.mxu0 %v760
    %2237 = vmatpush1.msra.mxu0 %v759
    %2238 = vmatprep.mubr.f32.mxu0 %v2100
    %2239 = vmatmul.mubr.f32.gmra.mrb[0].mxu0 %v2099
    %v2240 = vpop.f32.mrb[0].mxu0
    %v2241 = vadd.f32 0.0, %v2240
    %v2242 = vpop.f32.mrb[0].mxu0
    %v2243 = vadd.f32 0.0, %v2242
    %2244 = vdwg.mxu0
    %2245 = vmatprep.subr.mxu0 %v576
    %2246 = vmatpush1.msra.mxu0 %v575
    %2247 = vmatprep.subr.mxu0 %v582
    %2248 = vmatpush1.msra.mxu0 %v581
    %2249 = vmatprep.subr.mxu0 %v588
    %2250 = vmatpush1.msra.mxu0 %v587
    %2251 = vmatprep.subr.mxu0 %v594
    %2252 = vmatpush1.msra.mxu0 %v593
    %2253 = vmatprep.subr.mxu0 %v600
    %2254 = vmatpush1.msra.mxu0 %v599
    %2255 = vmatprep.subr.mxu0 %v606
    %2256 = vmatpush1.msra.mxu0 %v605
    %2257 = vmatprep.subr.mxu0 %v612
    %2258 = vmatpush1.msra.mxu0 %v611
    %2259 = vmatprep.subr.mxu0 %v618
    %2260 = vmatpush1.msra.mxu0 %v617
    %2261 = vmatprep.subr.mxu0 %v624
    %2262 = vmatpush1.msra.mxu0 %v623
    %2263 = vmatprep.subr.mxu0 %v630
    %2264 = vmatpush1.msra.mxu0 %v629
    %2265 = vmatprep.subr.mxu0 %v636
    %2266 = vmatpush1.msra.mxu0 %v635
    %2267 = vmatprep.subr.mxu0 %v642
    %2268 = vmatpush1.msra.mxu0 %v641
    %2269 = vmatprep.subr.mxu0 %v648
    %2270 = vmatpush1.msra.mxu0 %v647
    %2271 = vmatprep.subr.mxu0 %v654
    %2272 = vmatpush1.msra.mxu0 %v653
    %2273 = vmatprep.subr.mxu0 %v660
    %2274 = vmatpush1.msra.mxu0 %v659
    %2275 = vmatprep.subr.mxu0 %v666
    %2276 = vmatpush1.msra.mxu0 %v665
    %2277 = vmatprep.subr.mxu0 %v672
    %2278 = vmatpush1.msra.mxu0 %v671
    %2279 = vmatprep.subr.mxu0 %v678
    %2280 = vmatpush1.msra.mxu0 %v677
    %2281 = vmatprep.subr.mxu0 %v684
    %2282 = vmatpush1.msra.mxu0 %v683
    %2283 = vmatprep.subr.mxu0 %v690
    %2284 = vmatpush1.msra.mxu0 %v689
    %2285 = vmatprep.subr.mxu0 %v696
    %2286 = vmatpush1.msra.mxu0 %v695
    %2287 = vmatprep.subr.mxu0 %v702
    %2288 = vmatpush1.msra.mxu0 %v701
    %2289 = vmatprep.subr.mxu0 %v708
    %2290 = vmatpush1.msra.mxu0 %v707
    %2291 = vmatprep.subr.mxu0 %v714
    %2292 = vmatpush1.msra.mxu0 %v713
    %2293 = vmatprep.subr.mxu0 %v720
    %2294 = vmatpush1.msra.mxu0 %v719
    %2295 = vmatprep.subr.mxu0 %v726
    %2296 = vmatpush1.msra.mxu0 %v725
    %2297 = vmatprep.subr.mxu0 %v732
    %2298 = vmatpush1.msra.mxu0 %v731
    %2299 = vmatprep.subr.mxu0 %v738
    %2300 = vmatpush1.msra.mxu0 %v737
    %2301 = vmatprep.subr.mxu0 %v744
    %2302 = vmatpush1.msra.mxu0 %v743
    %2303 = vmatprep.subr.mxu0 %v750
    %2304 = vmatpush1.msra.mxu0 %v749
    %2305 = vmatprep.subr.mxu0 %v756
    %2306 = vmatpush1.msra.mxu0 %v755
    %2307 = vmatprep.subr.mxu0 %v762
    %2308 = vmatpush1.msra.mxu0 %v761
    %2309 = vmatprep.mubr.f32.mxu0 %v2100
    %2310 = vmatmul.mubr.f32.gmra.mrb[0].mxu0 %v2099
    %v2311 = vpop.f32.mrb[0].mxu0
    %v2312 = vadd.f32 0.0, %v2311
    %v2313 = vpop.f32.mrb[0].mxu0
    %v2314 = vadd.f32 0.0, %v2313
    %2315 = vdwg.mxu0
    %2316 = vmatprep.subr.mxu0 %v764
    %2317 = vmatpush1.msra.mxu0 %v763
    %2318 = vmatprep.subr.mxu0 %v770
    %2319 = vmatpush1.msra.mxu0 %v769
    %2320 = vmatprep.subr.mxu0 %v776
    %2321 = vmatpush1.msra.mxu0 %v775
    %2322 = vmatprep.subr.mxu0 %v782
    %2323 = vmatpush1.msra.mxu0 %v781
    %2324 = vmatprep.subr.mxu0 %v788
    %2325 = vmatpush1.msra.mxu0 %v787
    %2326 = vmatprep.subr.mxu0 %v794
    %2327 = vmatpush1.msra.mxu0 %v793
    %2328 = vmatprep.subr.mxu0 %v800
    %2329 = vmatpush1.msra.mxu0 %v799
    %2330 = vmatprep.subr.mxu0 %v806
    %2331 = vmatpush1.msra.mxu0 %v805
    %2332 = vmatprep.subr.mxu0 %v812
    %2333 = vmatpush1.msra.mxu0 %v811
    %2334 = vmatprep.subr.mxu0 %v818
    %2335 = vmatpush1.msra.mxu0 %v817
    %2336 = vmatprep.subr.mxu0 %v824
    %2337 = vmatpush1.msra.mxu0 %v823
    %2338 = vmatprep.subr.mxu0 %v830
    %2339 = vmatpush1.msra.mxu0 %v829
    %2340 = vmatprep.subr.mxu0 %v836
    %2341 = vmatpush1.msra.mxu0 %v835
    %2342 = vmatprep.subr.mxu0 %v842
    %2343 = vmatpush1.msra.mxu0 %v841
    %2344 = vmatprep.subr.mxu0 %v848
    %2345 = vmatpush1.msra.mxu0 %v847
    %2346 = vmatprep.subr.mxu0 %v854
    %2347 = vmatpush1.msra.mxu0 %v853
    %2348 = vmatprep.subr.mxu0 %v860
    %2349 = vmatpush1.msra.mxu0 %v859
    %2350 = vmatprep.subr.mxu0 %v866
    %2351 = vmatpush1.msra.mxu0 %v865
    %2352 = vmatprep.subr.mxu0 %v872
    %2353 = vmatpush1.msra.mxu0 %v871
    %2354 = vmatprep.subr.mxu0 %v878
    %2355 = vmatpush1.msra.mxu0 %v877
    %2356 = vmatprep.subr.mxu0 %v884
    %2357 = vmatpush1.msra.mxu0 %v883
    %2358 = vmatprep.subr.mxu0 %v890
    %2359 = vmatpush1.msra.mxu0 %v889
    %2360 = vmatprep.subr.mxu0 %v896
    %2361 = vmatpush1.msra.mxu0 %v895
    %2362 = vmatprep.subr.mxu0 %v902
    %2363 = vmatpush1.msra.mxu0 %v901
    %2364 = vmatprep.subr.mxu0 %v908
    %2365 = vmatpush1.msra.mxu0 %v907
    %2366 = vmatprep.subr.mxu0 %v914
    %2367 = vmatpush1.msra.mxu0 %v913
    %2368 = vmatprep.subr.mxu0 %v920
    %2369 = vmatpush1.msra.mxu0 %v919
    %2370 = vmatprep.subr.mxu0 %v926
    %2371 = vmatpush1.msra.mxu0 %v925
    %2372 = vmatprep.subr.mxu0 %v932
    %2373 = vmatpush1.msra.mxu0 %v931
    %2374 = vmatprep.subr.mxu0 %v938
    %2375 = vmatpush1.msra.mxu0 %v937
    %2376 = vmatprep.subr.mxu0 %v944
    %2377 = vmatpush1.msra.mxu0 %v943
    %2378 = vmatprep.subr.mxu0 %v950
    %2379 = vmatpush1.msra.mxu0 %v949
    %2380 = vmatprep.mubr.f32.mxu0 %v1785
    %2381 = vmatmul.mubr.f32.gmra.mrb[0].mxu0 %v1784
    %v2382 = vpop.f32.mrb[0].mxu0
    %v2383 = vadd.f32 0.0, %v2382
    %v2384 = vpop.f32.mrb[0].mxu0
    %v2385 = vadd.f32 0.0, %v2384
    %2386 = vdwg.mxu0
    %2387 = vmatprep.subr.mxu0 %v766
    %2388 = vmatpush1.msra.mxu0 %v765
    %2389 = vmatprep.subr.mxu0 %v772
    %2390 = vmatpush1.msra.mxu0 %v771
    %2391 = vmatprep.subr.mxu0 %v778
    %2392 = vmatpush1.msra.mxu0 %v777
    %2393 = vmatprep.subr.mxu0 %v784
    %2394 = vmatpush1.msra.mxu0 %v783
    %2395 = vmatprep.subr.mxu0 %v790
    %2396 = vmatpush1.msra.mxu0 %v789
    %2397 = vmatprep.subr.mxu0 %v796
    %2398 = vmatpush1.msra.mxu0 %v795
    %2399 = vmatprep.subr.mxu0 %v802
    %2400 = vmatpush1.msra.mxu0 %v801
    %2401 = vmatprep.subr.mxu0 %v808
    %2402 = vmatpush1.msra.mxu0 %v807
    %2403 = vmatprep.subr.mxu0 %v814
    %2404 = vmatpush1.msra.mxu0 %v813
    %2405 = vmatprep.subr.mxu0 %v820
    %2406 = vmatpush1.msra.mxu0 %v819
    %2407 = vmatprep.subr.mxu0 %v826
    %2408 = vmatpush1.msra.mxu0 %v825
    %2409 = vmatprep.subr.mxu0 %v832
    %2410 = vmatpush1.msra.mxu0 %v831
    %2411 = vmatprep.subr.mxu0 %v838
    %2412 = vmatpush1.msra.mxu0 %v837
    %2413 = vmatprep.subr.mxu0 %v844
    %2414 = vmatpush1.msra.mxu0 %v843
    %2415 = vmatprep.subr.mxu0 %v850
    %2416 = vmatpush1.msra.mxu0 %v849
    %2417 = vmatprep.subr.mxu0 %v856
    %2418 = vmatpush1.msra.mxu0 %v855
    %2419 = vmatprep.subr.mxu0 %v862
    %2420 = vmatpush1.msra.mxu0 %v861
    %2421 = vmatprep.subr.mxu0 %v868
    %2422 = vmatpush1.msra.mxu0 %v867
    %2423 = vmatprep.subr.mxu0 %v874
    %2424 = vmatpush1.msra.mxu0 %v873
    %2425 = vmatprep.subr.mxu0 %v880
    %2426 = vmatpush1.msra.mxu0 %v879
    %2427 = vmatprep.subr.mxu0 %v886
    %2428 = vmatpush1.msra.mxu0 %v885
    %2429 = vmatprep.subr.mxu0 %v892
    %2430 = vmatpush1.msra.mxu0 %v891
    %2431 = vmatprep.subr.mxu0 %v898
    %2432 = vmatpush1.msra.mxu0 %v897
    %2433 = vmatprep.subr.mxu0 %v904
    %2434 = vmatpush1.msra.mxu0 %v903
    %2435 = vmatprep.subr.mxu0 %v910
    %2436 = vmatpush1.msra.mxu0 %v909
    %2437 = vmatprep.subr.mxu0 %v916
    %2438 = vmatpush1.msra.mxu0 %v915
    %2439 = vmatprep.subr.mxu0 %v922
    %2440 = vmatpush1.msra.mxu0 %v921
    %2441 = vmatprep.subr.mxu0 %v928
    %2442 = vmatpush1.msra.mxu0 %v927
    %2443 = vmatprep.subr.mxu0 %v934
    %2444 = vmatpush1.msra.mxu0 %v933
    %2445 = vmatprep.subr.mxu0 %v940
    %2446 = vmatpush1.msra.mxu0 %v939
    %2447 = vmatprep.subr.mxu0 %v946
    %2448 = vmatpush1.msra.mxu0 %v945
    %2449 = vmatprep.subr.mxu0 %v952
    %2450 = vmatpush1.msra.mxu0 %v951
    %2451 = vmatprep.mubr.f32.mxu0 %v1785
    %2452 = vmatmul.mubr.f32.gmra.mrb[0].mxu0 %v1784
    %v2453 = vpop.f32.mrb[0].mxu0
    %v2454 = vadd.f32 0.0, %v2453
    %v2455 = vpop.f32.mrb[0].mxu0
    %v2456 = vadd.f32 0.0, %v2455
    %2457 = vdwg.mxu0
    %2458 = vmatprep.subr.mxu0 %v768
    %2459 = vmatpush1.msra.mxu0 %v767
    %2460 = vmatprep.subr.mxu0 %v774
    %2461 = vmatpush1.msra.mxu0 %v773
    %2462 = vmatprep.subr.mxu0 %v780
    %2463 = vmatpush1.msra.mxu0 %v779
    %2464 = vmatprep.subr.mxu0 %v786
    %2465 = vmatpush1.msra.mxu0 %v785
    %2466 = vmatprep.subr.mxu0 %v792
    %2467 = vmatpush1.msra.mxu0 %v791
    %2468 = vmatprep.subr.mxu0 %v798
    %2469 = vmatpush1.msra.mxu0 %v797
    %2470 = vmatprep.subr.mxu0 %v804
    %2471 = vmatpush1.msra.mxu0 %v803
    %2472 = vmatprep.subr.mxu0 %v810
    %2473 = vmatpush1.msra.mxu0 %v809
    %2474 = vmatprep.subr.mxu0 %v816
    %2475 = vmatpush1.msra.mxu0 %v815
    %2476 = vmatprep.subr.mxu0 %v822
    %2477 = vmatpush1.msra.mxu0 %v821
    %2478 = vmatprep.subr.mxu0 %v828
    %2479 = vmatpush1.msra.mxu0 %v827
    %2480 = vmatprep.subr.mxu0 %v834
    %2481 = vmatpush1.msra.mxu0 %v833
    %2482 = vmatprep.subr.mxu0 %v840
    %2483 = vmatpush1.msra.mxu0 %v839
    %2484 = vmatprep.subr.mxu0 %v846
    %2485 = vmatpush1.msra.mxu0 %v845
    %2486 = vmatprep.subr.mxu0 %v852
    %2487 = vmatpush1.msra.mxu0 %v851
    %2488 = vmatprep.subr.mxu0 %v858
    %2489 = vmatpush1.msra.mxu0 %v857
    %2490 = vmatprep.subr.mxu0 %v864
    %2491 = vmatpush1.msra.mxu0 %v863
    %2492 = vmatprep.subr.mxu0 %v870
    %2493 = vmatpush1.msra.mxu0 %v869
    %2494 = vmatprep.subr.mxu0 %v876
    %2495 = vmatpush1.msra.mxu0 %v875
    %2496 = vmatprep.subr.mxu0 %v882
    %2497 = vmatpush1.msra.mxu0 %v881
    %2498 = vmatprep.subr.mxu0 %v888
    %2499 = vmatpush1.msra.mxu0 %v887
    %2500 = vmatprep.subr.mxu0 %v894
    %2501 = vmatpush1.msra.mxu0 %v893
    %2502 = vmatprep.subr.mxu0 %v900
    %2503 = vmatpush1.msra.mxu0 %v899
    %2504 = vmatprep.subr.mxu0 %v906
    %2505 = vmatpush1.msra.mxu0 %v905
    %2506 = vmatprep.subr.mxu0 %v912
    %2507 = vmatpush1.msra.mxu0 %v911
    %2508 = vmatprep.subr.mxu0 %v918
    %2509 = vmatpush1.msra.mxu0 %v917
    %2510 = vmatprep.subr.mxu0 %v924
    %2511 = vmatpush1.msra.mxu0 %v923
    %2512 = vmatprep.subr.mxu0 %v930
    %2513 = vmatpush1.msra.mxu0 %v929
    %2514 = vmatprep.subr.mxu0 %v936
    %2515 = vmatpush1.msra.mxu0 %v935
    %2516 = vmatprep.subr.mxu0 %v942
    %2517 = vmatpush1.msra.mxu0 %v941
    %2518 = vmatprep.subr.mxu0 %v948
    %2519 = vmatpush1.msra.mxu0 %v947
    %2520 = vmatprep.subr.mxu0 %v954
    %2521 = vmatpush1.msra.mxu0 %v953
    %2522 = vmatprep.mubr.f32.mxu0 %v1785
    %2523 = vmatmul.mubr.f32.gmra.mrb[0].mxu0 %v1784
    %v2524 = vpop.f32.mrb[0].mxu0
    %v2525 = vadd.f32 0.0, %v2524
    %v2526 = vpop.f32.mrb[0].mxu0
    %v2527 = vadd.f32 0.0, %v2526
    %2528 = vdwg.mxu0
    %v2529 = vadd.f32 %v2170, %v2383
    %v2530 = vadd.f32 %v2172, %v2385
    %v2531 = vadd.f32 %v2241, %v2454
    %v2532 = vadd.f32 %v2243, %v2456
    %v2533 = vadd.f32 %v2529, %v1701
    %v2534 = vadd.f32 %v2530, %v1705
    %v2535 = vadd.f32 %v2531, %v1709
    %v2536 = vadd.f32 %v2532, %v1713
    %v2537 = vxor.u32 %v2533, 2147483648
    %v2538 = vxor.u32 %v2534, 2147483648
    %v2539 = vxor.u32 %v2535, 2147483648
    %v2540 = vxor.u32 %v2536, 2147483648
    %v2541 = vmul.f32 %v2537, 1.442695
    %v2542 = vpow.pop %v2541
    %v2543 = vmul.f32 %v2538, 1.442695
    %v2544 = vpow.pop %v2543
    %v2545 = vmul.f32 %v2539, 1.442695
    %v2546 = vpow.pop %v2545
    %v2547 = vmul.f32 %v2540, 1.442695
    %v2548 = vpow.pop %v2547
    %v2549 = vadd.f32 %v2542, 1.0
    %v2550 = vadd.f32 %v2544, 1.0
    %v2551 = vadd.f32 %v2546, 1.0
    %v2552 = vadd.f32 %v2548, 1.0
    %v2553 = vrcp.pop %v2549
    %v2554 = vmul.f32 1.0, %v2553
    %v2555 = vrcp.pop %v2550
    %v2556 = vmul.f32 1.0, %v2555
    %v2557 = vrcp.pop %v2551
    %v2558 = vmul.f32 1.0, %v2557
    %v2559 = vrcp.pop %v2552
    %v2560 = vmul.f32 1.0, %v2559
    %v2561 = vadd.f32 %v2312, %v1750
    %v2562 = vadd.f32 %v2314, %v1754
    %v2563 = vadd.f32 %v2525, %v1763
    %v2564 = vadd.f32 %v2527, %v1767
    %v2565 = vmul.f32 %v2554, %v2563
    %v2566 = vmul.f32 %v2556, %v2564
    %v2567 = vadd.f32 %v2561, %v2565
    %v2568 = vadd.f32 %v2562, %v2566
    %v2569 = vtanh.pop %v2567
    %v2570 = vtanh.pop %v2568
    %v2571 = vsub.f32 1.0, %v2558
    %v2572 = vsub.f32 1.0, %v2560
    %v2573 = vmul.f32 %v2571, %v2569
    %v2574 = vmul.f32 %v2572, %v2570
    %v2575 = vmul.f32 %v2558, %v1784
    %v2576 = vmul.f32 %v2560, %v1785
    %v2577 = vadd.f32 %v2573, %v2575
    %v2578 = vadd.f32 %v2574, %v2576
    %v2581 = vcombine.low %v2577, %v2578
    %v2583 = vunpack.c.l.s4 1966171168
    %v2584 = vunpack.c.0.s8 %v2583
    %v2585 = vlaneseq
    %v2586 = vshrl.u32 %v2585, 7
    %v2587 = vsub.s32 %v2584, %v2586
    %v2588 = vrot.slane %v2581, %v2587
    %v2589 = vcombine.high %v2588, %v2588
    %v2591 = vunpack.c.l.s4 1966171168
    %v2592 = vunpack.c.0.s8 %v2591
    %v2593 = vlaneseq
    %v2594 = vshrl.u32 %v2593, 7
    %v2595 = vsub.s32 %v2592, %v2594
    %v2596 = vrot.slane %v2589, %v2595
    %v2597 = vcombine.high %v2596, %v2596
    %s2599 = scalar_lea.vmem [#allocation2], 1
    %2600 = vst.msk [vmem:[%s2599] ss:$8 sm:$0x3] %vm1809, %v2597
    %2601 = vst.msk [vmem:[%s2599] ss:$8 sm:$0x0] %vm1809, %v2597
    %2602 = vmatprep.subr.mxu0 %v380
    %2603 = vmatpush1.msra.mxu0 %v379
    %2604 = vmatprep.subr.mxu0 %v386
    %2605 = vmatpush1.msra.mxu0 %v385
    %2606 = vmatprep.subr.mxu0 %v392
    %2607 = vmatpush1.msra.mxu0 %v391
    %2608 = vmatprep.subr.mxu0 %v398
    %2609 = vmatpush1.msra.mxu0 %v397
    %2610 = vmatprep.subr.mxu0 %v404
    %2611 = vmatpush1.msra.mxu0 %v403
    %2612 = vmatprep.subr.mxu0 %v410
    %2613 = vmatpush1.msra.mxu0 %v409
    %2614 = vmatprep.subr.mxu0 %v416
    %2615 = vmatpush1.msra.mxu0 %v415
    %2616 = vmatprep.subr.mxu0 %v422
    %2617 = vmatpush1.msra.mxu0 %v421
    %2618 = vmatprep.subr.mxu0 %v428
    %2619 = vmatpush1.msra.mxu0 %v427
    %2620 = vmatprep.subr.mxu0 %v434
    %2621 = vmatpush1.msra.mxu0 %v433
    %2622 = vmatprep.subr.mxu0 %v440
    %2623 = vmatpush1.msra.mxu0 %v439
    %2624 = vmatprep.subr.mxu0 %v446
    %2625 = vmatpush1.msra.mxu0 %v445
    %2626 = vmatprep.subr.mxu0 %v452
    %2627 = vmatpush1.msra.mxu0 %v451
    %2628 = vmatprep.subr.mxu0 %v458
    %2629 = vmatpush1.msra.mxu0 %v457
    %2630 = vmatprep.subr.mxu0 %v464
    %2631 = vmatpush1.msra.mxu0 %v463
    %2632 = vmatprep.subr.mxu0 %v470
    %2633 = vmatpush1.msra.mxu0 %v469
    %2634 = vmatprep.subr.mxu0 %v476
    %2635 = vmatpush1.msra.mxu0 %v475
    %2636 = vmatprep.subr.mxu0 %v482
    %2637 = vmatpush1.msra.mxu0 %v481
    %2638 = vmatprep.subr.mxu0 %v488
    %2639 = vmatpush1.msra.mxu0 %v487
    %2640 = vmatprep.subr.mxu0 %v494
    %2641 = vmatpush1.msra.mxu0 %v493
    %2642 = vmatprep.subr.mxu0 %v500
    %2643 = vmatpush1.msra.mxu0 %v499
    %2644 = vmatprep.subr.mxu0 %v506
    %2645 = vmatpush1.msra.mxu0 %v505
    %2646 = vmatprep.subr.mxu0 %v512
    %2647 = vmatpush1.msra.mxu0 %v511
    %2648 = vmatprep.subr.mxu0 %v518
    %2649 = vmatpush1.msra.mxu0 %v517
    %2650 = vmatprep.subr.mxu0 %v524
    %2651 = vmatpush1.msra.mxu0 %v523
    %2652 = vmatprep.subr.mxu0 %v530
    %2653 = vmatpush1.msra.mxu0 %v529
    %2654 = vmatprep.subr.mxu0 %v536
    %2655 = vmatpush1.msra.mxu0 %v535
    %2656 = vmatprep.subr.mxu0 %v542
    %2657 = vmatpush1.msra.mxu0 %v541
    %2658 = vmatprep.subr.mxu0 %v548
    %2659 = vmatpush1.msra.mxu0 %v547
    %2660 = vmatprep.subr.mxu0 %v554
    %2661 = vmatpush1.msra.mxu0 %v553
    %2662 = vmatprep.subr.mxu0 %v560
    %2663 = vmatpush1.msra.mxu0 %v559
    %2664 = vmatprep.subr.mxu0 %v566
    %2665 = vmatpush1.msra.mxu0 %v565
    %2666 = vmatprep.mubr.f32.mxu0 %v2100
    %2667 = vmatmul.mubr.f32.gmra.mrb[0].mxu0 %v2099
    %v2668 = vpop.f32.mrb[0].mxu0
    %v2669 = vadd.f32 0.0, %v2668
    %v2670 = vpop.f32.mrb[0].mxu0
    %v2671 = vadd.f32 0.0, %v2670
    %2672 = vdwg.mxu0
    %2673 = vmatprep.subr.mxu0 %v382
    %2674 = vmatpush1.msra.mxu0 %v381
    %2675 = vmatprep.subr.mxu0 %v388
    %2676 = vmatpush1.msra.mxu0 %v387
    %2677 = vmatprep.subr.mxu0 %v394
    %2678 = vmatpush1.msra.mxu0 %v393
    %2679 = vmatprep.subr.mxu0 %v400
    %2680 = vmatpush1.msra.mxu0 %v399
    %2681 = vmatprep.subr.mxu0 %v406
    %2682 = vmatpush1.msra.mxu0 %v405
    %2683 = vmatprep.subr.mxu0 %v412
    %2684 = vmatpush1.msra.mxu0 %v411
    %2685 = vmatprep.subr.mxu0 %v418
    %2686 = vmatpush1.msra.mxu0 %v417
    %2687 = vmatprep.subr.mxu0 %v424
    %2688 = vmatpush1.msra.mxu0 %v423
    %2689 = vmatprep.subr.mxu0 %v430
    %2690 = vmatpush1.msra.mxu0 %v429
    %2691 = vmatprep.subr.mxu0 %v436
    %2692 = vmatpush1.msra.mxu0 %v435
    %2693 = vmatprep.subr.mxu0 %v442
    %2694 = vmatpush1.msra.mxu0 %v441
    %2695 = vmatprep.subr.mxu0 %v448
    %2696 = vmatpush1.msra.mxu0 %v447
    %2697 = vmatprep.subr.mxu0 %v454
    %2698 = vmatpush1.msra.mxu0 %v453
    %2699 = vmatprep.subr.mxu0 %v460
    %2700 = vmatpush1.msra.mxu0 %v459
    %2701 = vmatprep.subr.mxu0 %v466
    %2702 = vmatpush1.msra.mxu0 %v465
    %2703 = vmatprep.subr.mxu0 %v472
    %2704 = vmatpush1.msra.mxu0 %v471
    %2705 = vmatprep.subr.mxu0 %v478
    %2706 = vmatpush1.msra.mxu0 %v477
    %2707 = vmatprep.subr.mxu0 %v484
    %2708 = vmatpush1.msra.mxu0 %v483
    %2709 = vmatprep.subr.mxu0 %v490
    %2710 = vmatpush1.msra.mxu0 %v489
    %2711 = vmatprep.subr.mxu0 %v496
    %2712 = vmatpush1.msra.mxu0 %v495
    %2713 = vmatprep.subr.mxu0 %v502
    %2714 = vmatpush1.msra.mxu0 %v501
    %2715 = vmatprep.subr.mxu0 %v508
    %2716 = vmatpush1.msra.mxu0 %v507
    %2717 = vmatprep.subr.mxu0 %v514
    %2718 = vmatpush1.msra.mxu0 %v513
    %2719 = vmatprep.subr.mxu0 %v520
    %2720 = vmatpush1.msra.mxu0 %v519
    %2721 = vmatprep.subr.mxu0 %v526
    %2722 = vmatpush1.msra.mxu0 %v525
    %2723 = vmatprep.subr.mxu0 %v532
    %2724 = vmatpush1.msra.mxu0 %v531
    %2725 = vmatprep.subr.mxu0 %v538
    %2726 = vmatpush1.msra.mxu0 %v537
    %2727 = vmatprep.subr.mxu0 %v544
    %2728 = vmatpush1.msra.mxu0 %v543
    %2729 = vmatprep.subr.mxu0 %v550
    %2730 = vmatpush1.msra.mxu0 %v549
    %2731 = vmatprep.subr.mxu0 %v556
    %2732 = vmatpush1.msra.mxu0 %v555
    %2733 = vmatprep.subr.mxu0 %v562
    %2734 = vmatpush1.msra.mxu0 %v561
    %2735 = vmatprep.subr.mxu0 %v568
    %2736 = vmatpush1.msra.mxu0 %v567
    %2737 = vmatprep.mubr.f32.mxu0 %v2100
    %2738 = vmatmul.mubr.f32.gmra.mrb[0].mxu0 %v2099
    %v2739 = vpop.f32.mrb[0].mxu0
    %v2740 = vadd.f32 0.0, %v2739
    %v2741 = vpop.f32.mrb[0].mxu0
    %v2742 = vadd.f32 0.0, %v2741
    %2743 = vdwg.mxu0
    %2744 = vmatprep.subr.mxu0 %v384
    %2745 = vmatpush1.msra.mxu0 %v383
    %2746 = vmatprep.subr.mxu0 %v390
    %2747 = vmatpush1.msra.mxu0 %v389
    %2748 = vmatprep.subr.mxu0 %v396
    %2749 = vmatpush1.msra.mxu0 %v395
    %2750 = vmatprep.subr.mxu0 %v402
    %2751 = vmatpush1.msra.mxu0 %v401
    %2752 = vmatprep.subr.mxu0 %v408
    %2753 = vmatpush1.msra.mxu0 %v407
    %2754 = vmatprep.subr.mxu0 %v414
    %2755 = vmatpush1.msra.mxu0 %v413
    %2756 = vmatprep.subr.mxu0 %v420
    %2757 = vmatpush1.msra.mxu0 %v419
    %2758 = vmatprep.subr.mxu0 %v426
    %2759 = vmatpush1.msra.mxu0 %v425
    %2760 = vmatprep.subr.mxu0 %v432
    %2761 = vmatpush1.msra.mxu0 %v431
    %2762 = vmatprep.subr.mxu0 %v438
    %2763 = vmatpush1.msra.mxu0 %v437
    %2764 = vmatprep.subr.mxu0 %v444
    %2765 = vmatpush1.msra.mxu0 %v443
    %2766 = vmatprep.subr.mxu0 %v450
    %2767 = vmatpush1.msra.mxu0 %v449
    %2768 = vmatprep.subr.mxu0 %v456
    %2769 = vmatpush1.msra.mxu0 %v455
    %2770 = vmatprep.subr.mxu0 %v462
    %2771 = vmatpush1.msra.mxu0 %v461
    %2772 = vmatprep.subr.mxu0 %v468
    %2773 = vmatpush1.msra.mxu0 %v467
    %2774 = vmatprep.subr.mxu0 %v474
    %2775 = vmatpush1.msra.mxu0 %v473
    %2776 = vmatprep.subr.mxu0 %v480
    %2777 = vmatpush1.msra.mxu0 %v479
    %2778 = vmatprep.subr.mxu0 %v486
    %2779 = vmatpush1.msra.mxu0 %v485
    %2780 = vmatprep.subr.mxu0 %v492
    %2781 = vmatpush1.msra.mxu0 %v491
    %2782 = vmatprep.subr.mxu0 %v498
    %2783 = vmatpush1.msra.mxu0 %v497
    %2784 = vmatprep.subr.mxu0 %v504
    %2785 = vmatpush1.msra.mxu0 %v503
    %2786 = vmatprep.subr.mxu0 %v510
    %2787 = vmatpush1.msra.mxu0 %v509
    %2788 = vmatprep.subr.mxu0 %v516
    %2789 = vmatpush1.msra.mxu0 %v515
    %2790 = vmatprep.subr.mxu0 %v522
    %2791 = vmatpush1.msra.mxu0 %v521
    %2792 = vmatprep.subr.mxu0 %v528
    %2793 = vmatpush1.msra.mxu0 %v527
    %2794 = vmatprep.subr.mxu0 %v534
    %2795 = vmatpush1.msra.mxu0 %v533
    %2796 = vmatprep.subr.mxu0 %v540
    %2797 = vmatpush1.msra.mxu0 %v539
    %2798 = vmatprep.subr.mxu0 %v546
    %2799 = vmatpush1.msra.mxu0 %v545
    %2800 = vmatprep.subr.mxu0 %v552
    %2801 = vmatpush1.msra.mxu0 %v551
    %2802 = vmatprep.subr.mxu0 %v558
    %2803 = vmatpush1.msra.mxu0 %v557
    %2804 = vmatprep.subr.mxu0 %v564
    %2805 = vmatpush1.msra.mxu0 %v563
    %2806 = vmatprep.subr.mxu0 %v570
    %2807 = vmatpush1.msra.mxu0 %v569
    %2808 = vmatprep.mubr.f32.mxu0 %v2100
    %2809 = vmatmul.mubr.f32.gmra.mrb[0].mxu0 %v2099
    %v2810 = vpop.f32.mrb[0].mxu0
    %v2811 = vadd.f32 0.0, %v2810
    %v2812 = vpop.f32.mrb[0].mxu0
    %v2813 = vadd.f32 0.0, %v2812
    %2814 = vdwg.mxu0
    %v2815 = vadd.f32 %v203, %v2669
    %v2816 = vadd.f32 %v205, %v2671
    %v2817 = vadd.f32 %v286, %v2740
    %v2818 = vadd.f32 %v288, %v2742
    %v2819 = vadd.f32 %v2815, %v1182
    %v2820 = vadd.f32 %v2816, %v1186
    %v2821 = vadd.f32 %v2817, %v1190
    %v2822 = vadd.f32 %v2818, %v1194
    %v2823 = vxor.u32 %v2819, 2147483648
    %v2824 = vxor.u32 %v2820, 2147483648
    %v2825 = vxor.u32 %v2821, 2147483648
    %v2826 = vxor.u32 %v2822, 2147483648
    %v2827 = vmul.f32 %v2823, 1.442695
    %v2828 = vpow.pop %v2827
    %v2829 = vmul.f32 %v2824, 1.442695
    %v2830 = vpow.pop %v2829
    %v2831 = vmul.f32 %v2825, 1.442695
    %v2832 = vpow.pop %v2831
    %v2833 = vmul.f32 %v2826, 1.442695
    %v2834 = vpow.pop %v2833
    %v2835 = vadd.f32 %v2828, 1.0
    %v2836 = vadd.f32 %v2830, 1.0
    %v2837 = vadd.f32 %v2832, 1.0
    %v2838 = vadd.f32 %v2834, 1.0
    %v2839 = vrcp.pop %v2835
    %v2840 = vmul.f32 1.0, %v2839
    %v2841 = vrcp.pop %v2836
    %v2842 = vmul.f32 1.0, %v2841
    %v2843 = vrcp.pop %v2837
    %v2844 = vmul.f32 1.0, %v2843
    %v2845 = vrcp.pop %v2838
    %v2846 = vmul.f32 1.0, %v2845
    %v2847 = vadd.f32 %v369, %v1231
    %v2848 = vadd.f32 %v371, %v1235
    %v2849 = vadd.f32 %v2811, %v1244
    %v2850 = vadd.f32 %v2813, %v1248
    %v2851 = vmul.f32 %v2840, %v2849
    %v2852 = vmul.f32 %v2842, %v2850
    %v2853 = vadd.f32 %v2847, %v2851
    %v2854 = vadd.f32 %v2848, %v2852
    %v2855 = vtanh.pop %v2853
    %v2856 = vtanh.pop %v2854
    %v2857 = vsub.f32 1.0, %v2844
    %v2858 = vsub.f32 1.0, %v2846
    %v2859 = vmul.f32 %v2857, %v2855
    %v2860 = vmul.f32 %v2858, %v2856
    %v2861 = vmul.f32 %v2844, %v2099
    %v2862 = vmul.f32 %v2846, %v2100
    %v2863 = vadd.f32 %v2859, %v2861
    %v2864 = vadd.f32 %v2860, %v2862
    %2865 = vmatprep.subr.mxu0 %v572
    %2866 = vmatpush1.msra.mxu0 %v571
    %2867 = vmatprep.subr.mxu0 %v578
    %2868 = vmatpush1.msra.mxu0 %v577
    %2869 = vmatprep.subr.mxu0 %v584
    %2870 = vmatpush1.msra.mxu0 %v583
    %2871 = vmatprep.subr.mxu0 %v590
    %2872 = vmatpush1.msra.mxu0 %v589
    %2873 = vmatprep.subr.mxu0 %v596
    %2874 = vmatpush1.msra.mxu0 %v595
    %2875 = vmatprep.subr.mxu0 %v602
    %2876 = vmatpush1.msra.mxu0 %v601
    %2877 = vmatprep.subr.mxu0 %v608
    %2878 = vmatpush1.msra.mxu0 %v607
    %2879 = vmatprep.subr.mxu0 %v614
    %2880 = vmatpush1.msra.mxu0 %v613
    %2881 = vmatprep.subr.mxu0 %v620
    %2882 = vmatpush1.msra.mxu0 %v619
    %2883 = vmatprep.subr.mxu0 %v626
    %2884 = vmatpush1.msra.mxu0 %v625
    %2885 = vmatprep.subr.mxu0 %v632
    %2886 = vmatpush1.msra.mxu0 %v631
    %2887 = vmatprep.subr.mxu0 %v638
    %2888 = vmatpush1.msra.mxu0 %v637
    %2889 = vmatprep.subr.mxu0 %v644
    %2890 = vmatpush1.msra.mxu0 %v643
    %2891 = vmatprep.subr.mxu0 %v650
    %2892 = vmatpush1.msra.mxu0 %v649
    %2893 = vmatprep.subr.mxu0 %v656
    %2894 = vmatpush1.msra.mxu0 %v655
    %2895 = vmatprep.subr.mxu0 %v662
    %2896 = vmatpush1.msra.mxu0 %v661
    %2897 = vmatprep.subr.mxu0 %v668
    %2898 = vmatpush1.msra.mxu0 %v667
    %2899 = vmatprep.subr.mxu0 %v674
    %2900 = vmatpush1.msra.mxu0 %v673
    %2901 = vmatprep.subr.mxu0 %v680
    %2902 = vmatpush1.msra.mxu0 %v679
    %2903 = vmatprep.subr.mxu0 %v686
    %2904 = vmatpush1.msra.mxu0 %v685
    %2905 = vmatprep.subr.mxu0 %v692
    %2906 = vmatpush1.msra.mxu0 %v691
    %2907 = vmatprep.subr.mxu0 %v698
    %2908 = vmatpush1.msra.mxu0 %v697
    %2909 = vmatprep.subr.mxu0 %v704
    %2910 = vmatpush1.msra.mxu0 %v703
    %2911 = vmatprep.subr.mxu0 %v710
    %2912 = vmatpush1.msra.mxu0 %v709
    %2913 = vmatprep.subr.mxu0 %v716
    %2914 = vmatpush1.msra.mxu0 %v715
    %2915 = vmatprep.subr.mxu0 %v722
    %2916 = vmatpush1.msra.mxu0 %v721
    %2917 = vmatprep.subr.mxu0 %v728
    %2918 = vmatpush1.msra.mxu0 %v727
    %2919 = vmatprep.subr.mxu0 %v734
    %2920 = vmatpush1.msra.mxu0 %v733
    %2921 = vmatprep.subr.mxu0 %v740
    %2922 = vmatpush1.msra.mxu0 %v739
    %2923 = vmatprep.subr.mxu0 %v746
    %2924 = vmatpush1.msra.mxu0 %v745
    %2925 = vmatprep.subr.mxu0 %v752
    %2926 = vmatpush1.msra.mxu0 %v751
    %2927 = vmatprep.subr.mxu0 %v758
    %2928 = vmatpush1.msra.mxu0 %v757
    %2929 = vmatprep.mubr.f32.mxu0 %v2864
    %2930 = vmatmul.mubr.f32.gmra.mrb[0].mxu0 %v2863
    %v2931 = vpop.f32.mrb[0].mxu0
    %v2932 = vadd.f32 0.0, %v2931
    %v2933 = vpop.f32.mrb[0].mxu0
    %v2934 = vadd.f32 0.0, %v2933
    %2935 = vdwg.mxu0
    %2936 = vmatprep.subr.mxu0 %v574
    %2937 = vmatpush1.msra.mxu0 %v573
    %2938 = vmatprep.subr.mxu0 %v580
    %2939 = vmatpush1.msra.mxu0 %v579
    %2940 = vmatprep.subr.mxu0 %v586
    %2941 = vmatpush1.msra.mxu0 %v585
    %2942 = vmatprep.subr.mxu0 %v592
    %2943 = vmatpush1.msra.mxu0 %v591
    %2944 = vmatprep.subr.mxu0 %v598
    %2945 = vmatpush1.msra.mxu0 %v597
    %2946 = vmatprep.subr.mxu0 %v604
    %2947 = vmatpush1.msra.mxu0 %v603
    %2948 = vmatprep.subr.mxu0 %v610
    %2949 = vmatpush1.msra.mxu0 %v609
    %2950 = vmatprep.subr.mxu0 %v616
    %2951 = vmatpush1.msra.mxu0 %v615
    %2952 = vmatprep.subr.mxu0 %v622
    %2953 = vmatpush1.msra.mxu0 %v621
    %2954 = vmatprep.subr.mxu0 %v628
    %2955 = vmatpush1.msra.mxu0 %v627
    %2956 = vmatprep.subr.mxu0 %v634
    %2957 = vmatpush1.msra.mxu0 %v633
    %2958 = vmatprep.subr.mxu0 %v640
    %2959 = vmatpush1.msra.mxu0 %v639
    %2960 = vmatprep.subr.mxu0 %v646
    %2961 = vmatpush1.msra.mxu0 %v645
    %2962 = vmatprep.subr.mxu0 %v652
    %2963 = vmatpush1.msra.mxu0 %v651
    %2964 = vmatprep.subr.mxu0 %v658
    %2965 = vmatpush1.msra.mxu0 %v657
    %2966 = vmatprep.subr.mxu0 %v664
    %2967 = vmatpush1.msra.mxu0 %v663
    %2968 = vmatprep.subr.mxu0 %v670
    %2969 = vmatpush1.msra.mxu0 %v669
    %2970 = vmatprep.subr.mxu0 %v676
    %2971 = vmatpush1.msra.mxu0 %v675
    %2972 = vmatprep.subr.mxu0 %v682
    %2973 = vmatpush1.msra.mxu0 %v681
    %2974 = vmatprep.subr.mxu0 %v688
    %2975 = vmatpush1.msra.mxu0 %v687
    %2976 = vmatprep.subr.mxu0 %v694
    %2977 = vmatpush1.msra.mxu0 %v693
    %2978 = vmatprep.subr.mxu0 %v700
    %2979 = vmatpush1.msra.mxu0 %v699
    %2980 = vmatprep.subr.mxu0 %v706
    %2981 = vmatpush1.msra.mxu0 %v705
    %2982 = vmatprep.subr.mxu0 %v712
    %2983 = vmatpush1.msra.mxu0 %v711
    %2984 = vmatprep.subr.mxu0 %v718
    %2985 = vmatpush1.msra.mxu0 %v717
    %2986 = vmatprep.subr.mxu0 %v724
    %2987 = vmatpush1.msra.mxu0 %v723
    %2988 = vmatprep.subr.mxu0 %v730
    %2989 = vmatpush1.msra.mxu0 %v729
    %2990 = vmatprep.subr.mxu0 %v736
    %2991 = vmatpush1.msra.mxu0 %v735
    %2992 = vmatprep.subr.mxu0 %v742
    %2993 = vmatpush1.msra.mxu0 %v741
    %2994 = vmatprep.subr.mxu0 %v748
    %2995 = vmatpush1.msra.mxu0 %v747
    %2996 = vmatprep.subr.mxu0 %v754
    %2997 = vmatpush1.msra.mxu0 %v753
    %2998 = vmatprep.subr.mxu0 %v760
    %2999 = vmatpush1.msra.mxu0 %v759
    %3000 = vmatprep.mubr.f32.mxu0 %v2864
    %3001 = vmatmul.mubr.f32.gmra.mrb[0].mxu0 %v2863
    %v3002 = vpop.f32.mrb[0].mxu0
    %v3003 = vadd.f32 0.0, %v3002
    %v3004 = vpop.f32.mrb[0].mxu0
    %v3005 = vadd.f32 0.0, %v3004
    %3006 = vdwg.mxu0
    %3007 = vmatprep.subr.mxu0 %v576
    %3008 = vmatpush1.msra.mxu0 %v575
    %3009 = vmatprep.subr.mxu0 %v582
    %3010 = vmatpush1.msra.mxu0 %v581
    %3011 = vmatprep.subr.mxu0 %v588
    %3012 = vmatpush1.msra.mxu0 %v587
    %3013 = vmatprep.subr.mxu0 %v594
    %3014 = vmatpush1.msra.mxu0 %v593
    %3015 = vmatprep.subr.mxu0 %v600
    %3016 = vmatpush1.msra.mxu0 %v599
    %3017 = vmatprep.subr.mxu0 %v606
    %3018 = vmatpush1.msra.mxu0 %v605
    %3019 = vmatprep.subr.mxu0 %v612
    %3020 = vmatpush1.msra.mxu0 %v611
    %3021 = vmatprep.subr.mxu0 %v618
    %3022 = vmatpush1.msra.mxu0 %v617
    %3023 = vmatprep.subr.mxu0 %v624
    %3024 = vmatpush1.msra.mxu0 %v623
    %3025 = vmatprep.subr.mxu0 %v630
    %3026 = vmatpush1.msra.mxu0 %v629
    %3027 = vmatprep.subr.mxu0 %v636
    %3028 = vmatpush1.msra.mxu0 %v635
    %3029 = vmatprep.subr.mxu0 %v642
    %3030 = vmatpush1.msra.mxu0 %v641
    %3031 = vmatprep.subr.mxu0 %v648
    %3032 = vmatpush1.msra.mxu0 %v647
    %3033 = vmatprep.subr.mxu0 %v654
    %3034 = vmatpush1.msra.mxu0 %v653
    %3035 = vmatprep.subr.mxu0 %v660
    %3036 = vmatpush1.msra.mxu0 %v659
    %3037 = vmatprep.subr.mxu0 %v666
    %3038 = vmatpush1.msra.mxu0 %v665
    %3039 = vmatprep.subr.mxu0 %v672
    %3040 = vmatpush1.msra.mxu0 %v671
    %3041 = vmatprep.subr.mxu0 %v678
    %3042 = vmatpush1.msra.mxu0 %v677
    %3043 = vmatprep.subr.mxu0 %v684
    %3044 = vmatpush1.msra.mxu0 %v683
    %3045 = vmatprep.subr.mxu0 %v690
    %3046 = vmatpush1.msra.mxu0 %v689
    %3047 = vmatprep.subr.mxu0 %v696
    %3048 = vmatpush1.msra.mxu0 %v695
    %3049 = vmatprep.subr.mxu0 %v702
    %3050 = vmatpush1.msra.mxu0 %v701
    %3051 = vmatprep.subr.mxu0 %v708
    %3052 = vmatpush1.msra.mxu0 %v707
    %3053 = vmatprep.subr.mxu0 %v714
    %3054 = vmatpush1.msra.mxu0 %v713
    %3055 = vmatprep.subr.mxu0 %v720
    %3056 = vmatpush1.msra.mxu0 %v719
    %3057 = vmatprep.subr.mxu0 %v726
    %3058 = vmatpush1.msra.mxu0 %v725
    %3059 = vmatprep.subr.mxu0 %v732
    %3060 = vmatpush1.msra.mxu0 %v731
    %3061 = vmatprep.subr.mxu0 %v738
    %3062 = vmatpush1.msra.mxu0 %v737
    %3063 = vmatprep.subr.mxu0 %v744
    %3064 = vmatpush1.msra.mxu0 %v743
    %3065 = vmatprep.subr.mxu0 %v750
    %3066 = vmatpush1.msra.mxu0 %v749
    %3067 = vmatprep.subr.mxu0 %v756
    %3068 = vmatpush1.msra.mxu0 %v755
    %3069 = vmatprep.subr.mxu0 %v762
    %3070 = vmatpush1.msra.mxu0 %v761
    %3071 = vmatprep.mubr.f32.mxu0 %v2864
    %3072 = vmatmul.mubr.f32.gmra.mrb[0].mxu0 %v2863
    %v3073 = vpop.f32.mrb[0].mxu0
    %v3074 = vadd.f32 0.0, %v3073
    %v3075 = vpop.f32.mrb[0].mxu0
    %v3076 = vadd.f32 0.0, %v3075
    %3077 = vdwg.mxu0
    %3078 = vmatprep.subr.mxu0 %v764
    %3079 = vmatpush1.msra.mxu0 %v763
    %3080 = vmatprep.subr.mxu0 %v770
    %3081 = vmatpush1.msra.mxu0 %v769
    %3082 = vmatprep.subr.mxu0 %v776
    %3083 = vmatpush1.msra.mxu0 %v775
    %3084 = vmatprep.subr.mxu0 %v782
    %3085 = vmatpush1.msra.mxu0 %v781
    %3086 = vmatprep.subr.mxu0 %v788
    %3087 = vmatpush1.msra.mxu0 %v787
    %3088 = vmatprep.subr.mxu0 %v794
    %3089 = vmatpush1.msra.mxu0 %v793
    %3090 = vmatprep.subr.mxu0 %v800
    %3091 = vmatpush1.msra.mxu0 %v799
    %3092 = vmatprep.subr.mxu0 %v806
    %3093 = vmatpush1.msra.mxu0 %v805
    %3094 = vmatprep.subr.mxu0 %v812
    %3095 = vmatpush1.msra.mxu0 %v811
    %3096 = vmatprep.subr.mxu0 %v818
    %3097 = vmatpush1.msra.mxu0 %v817
    %3098 = vmatprep.subr.mxu0 %v824
    %3099 = vmatpush1.msra.mxu0 %v823
    %3100 = vmatprep.subr.mxu0 %v830
    %3101 = vmatpush1.msra.mxu0 %v829
    %3102 = vmatprep.subr.mxu0 %v836
    %3103 = vmatpush1.msra.mxu0 %v835
    %3104 = vmatprep.subr.mxu0 %v842
    %3105 = vmatpush1.msra.mxu0 %v841
    %3106 = vmatprep.subr.mxu0 %v848
    %3107 = vmatpush1.msra.mxu0 %v847
    %3108 = vmatprep.subr.mxu0 %v854
    %3109 = vmatpush1.msra.mxu0 %v853
    %3110 = vmatprep.subr.mxu0 %v860
    %3111 = vmatpush1.msra.mxu0 %v859
    %3112 = vmatprep.subr.mxu0 %v866
    %3113 = vmatpush1.msra.mxu0 %v865
    %3114 = vmatprep.subr.mxu0 %v872
    %3115 = vmatpush1.msra.mxu0 %v871
    %3116 = vmatprep.subr.mxu0 %v878
    %3117 = vmatpush1.msra.mxu0 %v877
    %3118 = vmatprep.subr.mxu0 %v884
    %3119 = vmatpush1.msra.mxu0 %v883
    %3120 = vmatprep.subr.mxu0 %v890
    %3121 = vmatpush1.msra.mxu0 %v889
    %3122 = vmatprep.subr.mxu0 %v896
    %3123 = vmatpush1.msra.mxu0 %v895
    %3124 = vmatprep.subr.mxu0 %v902
    %3125 = vmatpush1.msra.mxu0 %v901
    %3126 = vmatprep.subr.mxu0 %v908
    %3127 = vmatpush1.msra.mxu0 %v907
    %3128 = vmatprep.subr.mxu0 %v914
    %3129 = vmatpush1.msra.mxu0 %v913
    %3130 = vmatprep.subr.mxu0 %v920
    %3131 = vmatpush1.msra.mxu0 %v919
    %3132 = vmatprep.subr.mxu0 %v926
    %3133 = vmatpush1.msra.mxu0 %v925
    %3134 = vmatprep.subr.mxu0 %v932
    %3135 = vmatpush1.msra.mxu0 %v931
    %3136 = vmatprep.subr.mxu0 %v938
    %3137 = vmatpush1.msra.mxu0 %v937
    %3138 = vmatprep.subr.mxu0 %v944
    %3139 = vmatpush1.msra.mxu0 %v943
    %3140 = vmatprep.subr.mxu0 %v950
    %3141 = vmatpush1.msra.mxu0 %v949
    %3142 = vmatprep.mubr.f32.mxu0 %v2578
    %3143 = vmatmul.mubr.f32.gmra.mrb[0].mxu0 %v2577
    %v3144 = vpop.f32.mrb[0].mxu0
    %v3145 = vadd.f32 0.0, %v3144
    %v3146 = vpop.f32.mrb[0].mxu0
    %v3147 = vadd.f32 0.0, %v3146
    %3148 = vdwg.mxu0
    %3149 = vmatprep.subr.mxu0 %v766
    %3150 = vmatpush1.msra.mxu0 %v765
    %3151 = vmatprep.subr.mxu0 %v772
    %3152 = vmatpush1.msra.mxu0 %v771
    %3153 = vmatprep.subr.mxu0 %v778
    %3154 = vmatpush1.msra.mxu0 %v777
    %3155 = vmatprep.subr.mxu0 %v784
    %3156 = vmatpush1.msra.mxu0 %v783
    %3157 = vmatprep.subr.mxu0 %v790
    %3158 = vmatpush1.msra.mxu0 %v789
    %3159 = vmatprep.subr.mxu0 %v796
    %3160 = vmatpush1.msra.mxu0 %v795
    %3161 = vmatprep.subr.mxu0 %v802
    %3162 = vmatpush1.msra.mxu0 %v801
    %3163 = vmatprep.subr.mxu0 %v808
    %3164 = vmatpush1.msra.mxu0 %v807
    %3165 = vmatprep.subr.mxu0 %v814
    %3166 = vmatpush1.msra.mxu0 %v813
    %3167 = vmatprep.subr.mxu0 %v820
    %3168 = vmatpush1.msra.mxu0 %v819
    %3169 = vmatprep.subr.mxu0 %v826
    %3170 = vmatpush1.msra.mxu0 %v825
    %3171 = vmatprep.subr.mxu0 %v832
    %3172 = vmatpush1.msra.mxu0 %v831
    %3173 = vmatprep.subr.mxu0 %v838
    %3174 = vmatpush1.msra.mxu0 %v837
    %3175 = vmatprep.subr.mxu0 %v844
    %3176 = vmatpush1.msra.mxu0 %v843
    %3177 = vmatprep.subr.mxu0 %v850
    %3178 = vmatpush1.msra.mxu0 %v849
    %3179 = vmatprep.subr.mxu0 %v856
    %3180 = vmatpush1.msra.mxu0 %v855
    %3181 = vmatprep.subr.mxu0 %v862
    %3182 = vmatpush1.msra.mxu0 %v861
    %3183 = vmatprep.subr.mxu0 %v868
    %3184 = vmatpush1.msra.mxu0 %v867
    %3185 = vmatprep.subr.mxu0 %v874
    %3186 = vmatpush1.msra.mxu0 %v873
    %3187 = vmatprep.subr.mxu0 %v880
    %3188 = vmatpush1.msra.mxu0 %v879
    %3189 = vmatprep.subr.mxu0 %v886
    %3190 = vmatpush1.msra.mxu0 %v885
    %3191 = vmatprep.subr.mxu0 %v892
    %3192 = vmatpush1.msra.mxu0 %v891
    %3193 = vmatprep.subr.mxu0 %v898
    %3194 = vmatpush1.msra.mxu0 %v897
    %3195 = vmatprep.subr.mxu0 %v904
    %3196 = vmatpush1.msra.mxu0 %v903
    %3197 = vmatprep.subr.mxu0 %v910
    %3198 = vmatpush1.msra.mxu0 %v909
    %3199 = vmatprep.subr.mxu0 %v916
    %3200 = vmatpush1.msra.mxu0 %v915
    %3201 = vmatprep.subr.mxu0 %v922
    %3202 = vmatpush1.msra.mxu0 %v921
    %3203 = vmatprep.subr.mxu0 %v928
    %3204 = vmatpush1.msra.mxu0 %v927
    %3205 = vmatprep.subr.mxu0 %v934
    %3206 = vmatpush1.msra.mxu0 %v933
    %3207 = vmatprep.subr.mxu0 %v940
    %3208 = vmatpush1.msra.mxu0 %v939
    %3209 = vmatprep.subr.mxu0 %v946
    %3210 = vmatpush1.msra.mxu0 %v945
    %3211 = vmatprep.subr.mxu0 %v952
    %3212 = vmatpush1.msra.mxu0 %v951
    %3213 = vmatprep.mubr.f32.mxu0 %v2578
    %3214 = vmatmul.mubr.f32.gmra.mrb[0].mxu0 %v2577
    %v3215 = vpop.f32.mrb[0].mxu0
    %v3216 = vadd.f32 0.0, %v3215
    %v3217 = vpop.f32.mrb[0].mxu0
    %v3218 = vadd.f32 0.0, %v3217
    %3219 = vdwg.mxu0
    %3220 = vmatprep.subr.mxu0 %v768
    %3221 = vmatpush1.msra.mxu0 %v767
    %3222 = vmatprep.subr.mxu0 %v774
    %3223 = vmatpush1.msra.mxu0 %v773
    %3224 = vmatprep.subr.mxu0 %v780
    %3225 = vmatpush1.msra.mxu0 %v779
    %3226 = vmatprep.subr.mxu0 %v786
    %3227 = vmatpush1.msra.mxu0 %v785
    %3228 = vmatprep.subr.mxu0 %v792
    %3229 = vmatpush1.msra.mxu0 %v791
    %3230 = vmatprep.subr.mxu0 %v798
    %3231 = vmatpush1.msra.mxu0 %v797
    %3232 = vmatprep.subr.mxu0 %v804
    %3233 = vmatpush1.msra.mxu0 %v803
    %3234 = vmatprep.subr.mxu0 %v810
    %3235 = vmatpush1.msra.mxu0 %v809
    %3236 = vmatprep.subr.mxu0 %v816
    %3237 = vmatpush1.msra.mxu0 %v815
    %3238 = vmatprep.subr.mxu0 %v822
    %3239 = vmatpush1.msra.mxu0 %v821
    %3240 = vmatprep.subr.mxu0 %v828
    %3241 = vmatpush1.msra.mxu0 %v827
    %3242 = vmatprep.subr.mxu0 %v834
    %3243 = vmatpush1.msra.mxu0 %v833
    %3244 = vmatprep.subr.mxu0 %v840
    %3245 = vmatpush1.msra.mxu0 %v839
    %3246 = vmatprep.subr.mxu0 %v846
    %3247 = vmatpush1.msra.mxu0 %v845
    %3248 = vmatprep.subr.mxu0 %v852
    %3249 = vmatpush1.msra.mxu0 %v851
    %3250 = vmatprep.subr.mxu0 %v858
    %3251 = vmatpush1.msra.mxu0 %v857
    %3252 = vmatprep.subr.mxu0 %v864
    %3253 = vmatpush1.msra.mxu0 %v863
    %3254 = vmatprep.subr.mxu0 %v870
    %3255 = vmatpush1.msra.mxu0 %v869
    %3256 = vmatprep.subr.mxu0 %v876
    %3257 = vmatpush1.msra.mxu0 %v875
    %3258 = vmatprep.subr.mxu0 %v882
    %3259 = vmatpush1.msra.mxu0 %v881
    %3260 = vmatprep.subr.mxu0 %v888
    %3261 = vmatpush1.msra.mxu0 %v887
    %3262 = vmatprep.subr.mxu0 %v894
    %3263 = vmatpush1.msra.mxu0 %v893
    %3264 = vmatprep.subr.mxu0 %v900
    %3265 = vmatpush1.msra.mxu0 %v899
    %3266 = vmatprep.subr.mxu0 %v906
    %3267 = vmatpush1.msra.mxu0 %v905
    %3268 = vmatprep.subr.mxu0 %v912
    %3269 = vmatpush1.msra.mxu0 %v911
    %3270 = vmatprep.subr.mxu0 %v918
    %3271 = vmatpush1.msra.mxu0 %v917
    %3272 = vmatprep.subr.mxu0 %v924
    %3273 = vmatpush1.msra.mxu0 %v923
    %3274 = vmatprep.subr.mxu0 %v930
    %3275 = vmatpush1.msra.mxu0 %v929
    %3276 = vmatprep.subr.mxu0 %v936
    %3277 = vmatpush1.msra.mxu0 %v935
    %3278 = vmatprep.subr.mxu0 %v942
    %3279 = vmatpush1.msra.mxu0 %v941
    %3280 = vmatprep.subr.mxu0 %v948
    %3281 = vmatpush1.msra.mxu0 %v947
    %3282 = vmatprep.subr.mxu0 %v954
    %3283 = vmatpush1.msra.mxu0 %v953
    %3284 = vmatprep.mubr.f32.mxu0 %v2578
    %3285 = vmatmul.mubr.f32.gmra.mrb[0].mxu0 %v2577
    %v3286 = vpop.f32.mrb[0].mxu0
    %v3287 = vadd.f32 0.0, %v3286
    %v3288 = vpop.f32.mrb[0].mxu0
    %v3289 = vadd.f32 0.0, %v3288
    %3290 = vdwg.mxu0
    %v3291 = vadd.f32 %v2932, %v3145
    %v3292 = vadd.f32 %v2934, %v3147
    %v3293 = vadd.f32 %v3003, %v3216
    %v3294 = vadd.f32 %v3005, %v3218
    %v3295 = vadd.f32 %v3291, %v1701
    %v3296 = vadd.f32 %v3292, %v1705
    %v3297 = vadd.f32 %v3293, %v1709
    %v3298 = vadd.f32 %v3294, %v1713
    %v3299 = vxor.u32 %v3295, 2147483648
    %v3300 = vxor.u32 %v3296, 2147483648
    %v3301 = vxor.u32 %v3297, 2147483648
    %v3302 = vxor.u32 %v3298, 2147483648
    %v3303 = vmul.f32 %v3299, 1.442695
    %v3304 = vpow.pop %v3303
    %v3305 = vmul.f32 %v3300, 1.442695
    %v3306 = vpow.pop %v3305
    %v3307 = vmul.f32 %v3301, 1.442695
    %v3308 = vpow.pop %v3307
    %v3309 = vmul.f32 %v3302, 1.442695
    %v3310 = vpow.pop %v3309
    %v3311 = vadd.f32 %v3304, 1.0
    %v3312 = vadd.f32 %v3306, 1.0
    %v3313 = vadd.f32 %v3308, 1.0
    %v3314 = vadd.f32 %v3310, 1.0
    %v3315 = vrcp.pop %v3311
    %v3316 = vmul.f32 1.0, %v3315
    %v3317 = vrcp.pop %v3312
    %v3318 = vmul.f32 1.0, %v3317
    %v3319 = vrcp.pop %v3313
    %v3320 = vmul.f32 1.0, %v3319
    %v3321 = vrcp.pop %v3314
    %v3322 = vmul.f32 1.0, %v3321
    %v3323 = vadd.f32 %v3074, %v1750
    %v3324 = vadd.f32 %v3076, %v1754
    %v3325 = vadd.f32 %v3287, %v1763
    %v3326 = vadd.f32 %v3289, %v1767
    %v3327 = vmul.f32 %v3316, %v3325
    %v3328 = vmul.f32 %v3318, %v3326
    %v3329 = vadd.f32 %v3323, %v3327
    %v3330 = vadd.f32 %v3324, %v3328
    %v3331 = vtanh.pop %v3329
    %v3332 = vtanh.pop %v3330
    %v3333 = vsub.f32 1.0, %v3320
    %v3334 = vsub.f32 1.0, %v3322
    %v3335 = vmul.f32 %v3333, %v3331
    %v3336 = vmul.f32 %v3334, %v3332
    %v3337 = vmul.f32 %v3320, %v2577
    %v3338 = vmul.f32 %v3322, %v2578
    %v3339 = vadd.f32 %v3335, %v3337
    %v3340 = vadd.f32 %v3336, %v3338
    %v3343 = vcombine.low %v3339, %v3340
    %v3345 = vunpack.c.l.s4 1966171168
    %v3346 = vunpack.c.0.s8 %v3345
    %v3347 = vlaneseq
    %v3348 = vshrl.u32 %v3347, 7
    %v3349 = vsub.s32 %v3346, %v3348
    %v3350 = vrot.slane %v3343, %v3349
    %v3351 = vcombine.high %v3350, %v3350
    %v3353 = vunpack.c.l.s4 1966171168
    %v3354 = vunpack.c.0.s8 %v3353
    %v3355 = vlaneseq
    %v3356 = vshrl.u32 %v3355, 7
    %v3357 = vsub.s32 %v3354, %v3356
    %v3358 = vrot.slane %v3351, %v3357
    %v3359 = vcombine.high %v3358, %v3358
    %s3361 = scalar_lea.vmem [#allocation2], 2
    %3362 = vst.msk [vmem:[%s3361] ss:$8 sm:$0x3] %vm1809, %v3359
    %3363 = vst.msk [vmem:[%s3361] ss:$8 sm:$0x0] %vm1809, %v3359
    %3364 = vmatprep.subr.mxu0 %v380
    %3365 = vmatpush1.msra.mxu0 %v379
    %3366 = vmatprep.subr.mxu0 %v386
    %3367 = vmatpush1.msra.mxu0 %v385
    %3368 = vmatprep.subr.mxu0 %v392
    %3369 = vmatpush1.msra.mxu0 %v391
    %3370 = vmatprep.subr.mxu0 %v398
    %3371 = vmatpush1.msra.mxu0 %v397
    %3372 = vmatprep.subr.mxu0 %v404
    %3373 = vmatpush1.msra.mxu0 %v403
    %3374 = vmatprep.subr.mxu0 %v410
    %3375 = vmatpush1.msra.mxu0 %v409
    %3376 = vmatprep.subr.mxu0 %v416
    %3377 = vmatpush1.msra.mxu0 %v415
    %3378 = vmatprep.subr.mxu0 %v422
    %3379 = vmatpush1.msra.mxu0 %v421
    %3380 = vmatprep.subr.mxu0 %v428
    %3381 = vmatpush1.msra.mxu0 %v427
    %3382 = vmatprep.subr.mxu0 %v434
    %3383 = vmatpush1.msra.mxu0 %v433
    %3384 = vmatprep.subr.mxu0 %v440
    %3385 = vmatpush1.msra.mxu0 %v439
    %3386 = vmatprep.subr.mxu0 %v446
    %3387 = vmatpush1.msra.mxu0 %v445
    %3388 = vmatprep.subr.mxu0 %v452
    %3389 = vmatpush1.msra.mxu0 %v451
    %3390 = vmatprep.subr.mxu0 %v458
    %3391 = vmatpush1.msra.mxu0 %v457
    %3392 = vmatprep.subr.mxu0 %v464
    %3393 = vmatpush1.msra.mxu0 %v463
    %3394 = vmatprep.subr.mxu0 %v470
    %3395 = vmatpush1.msra.mxu0 %v469
    %3396 = vmatprep.subr.mxu0 %v476
    %3397 = vmatpush1.msra.mxu0 %v475
    %3398 = vmatprep.subr.mxu0 %v482
    %3399 = vmatpush1.msra.mxu0 %v481
    %3400 = vmatprep.subr.mxu0 %v488
    %3401 = vmatpush1.msra.mxu0 %v487
    %3402 = vmatprep.subr.mxu0 %v494
    %3403 = vmatpush1.msra.mxu0 %v493
    %3404 = vmatprep.subr.mxu0 %v500
    %3405 = vmatpush1.msra.mxu0 %v499
    %3406 = vmatprep.subr.mxu0 %v506
    %3407 = vmatpush1.msra.mxu0 %v505
    %3408 = vmatprep.subr.mxu0 %v512
    %3409 = vmatpush1.msra.mxu0 %v511
    %3410 = vmatprep.subr.mxu0 %v518
    %3411 = vmatpush1.msra.mxu0 %v517
    %3412 = vmatprep.subr.mxu0 %v524
    %3413 = vmatpush1.msra.mxu0 %v523
    %3414 = vmatprep.subr.mxu0 %v530
    %3415 = vmatpush1.msra.mxu0 %v529
    %3416 = vmatprep.subr.mxu0 %v536
    %3417 = vmatpush1.msra.mxu0 %v535
    %3418 = vmatprep.subr.mxu0 %v542
    %3419 = vmatpush1.msra.mxu0 %v541
    %3420 = vmatprep.subr.mxu0 %v548
    %3421 = vmatpush1.msra.mxu0 %v547
    %3422 = vmatprep.subr.mxu0 %v554
    %3423 = vmatpush1.msra.mxu0 %v553
    %3424 = vmatprep.subr.mxu0 %v560
    %3425 = vmatpush1.msra.mxu0 %v559
    %3426 = vmatprep.subr.mxu0 %v566
    %3427 = vmatpush1.msra.mxu0 %v565
    %3428 = vmatprep.mubr.f32.mxu0 %v2864
    %3429 = vmatmul.mubr.f32.gmra.mrb[0].mxu0 %v2863
    %v3430 = vpop.f32.mrb[0].mxu0
    %v3431 = vadd.f32 0.0, %v3430
    %v3432 = vpop.f32.mrb[0].mxu0
    %v3433 = vadd.f32 0.0, %v3432
    %3434 = vdwg.mxu0
    %3435 = vmatprep.subr.mxu0 %v382
    %3436 = vmatpush1.msra.mxu0 %v381
    %3437 = vmatprep.subr.mxu0 %v388
    %3438 = vmatpush1.msra.mxu0 %v387
    %3439 = vmatprep.subr.mxu0 %v394
    %3440 = vmatpush1.msra.mxu0 %v393
    %3441 = vmatprep.subr.mxu0 %v400
    %3442 = vmatpush1.msra.mxu0 %v399
    %3443 = vmatprep.subr.mxu0 %v406
    %3444 = vmatpush1.msra.mxu0 %v405
    %3445 = vmatprep.subr.mxu0 %v412
    %3446 = vmatpush1.msra.mxu0 %v411
    %3447 = vmatprep.subr.mxu0 %v418
    %3448 = vmatpush1.msra.mxu0 %v417
    %3449 = vmatprep.subr.mxu0 %v424
    %3450 = vmatpush1.msra.mxu0 %v423
    %3451 = vmatprep.subr.mxu0 %v430
    %3452 = vmatpush1.msra.mxu0 %v429
    %3453 = vmatprep.subr.mxu0 %v436
    %3454 = vmatpush1.msra.mxu0 %v435
    %3455 = vmatprep.subr.mxu0 %v442
    %3456 = vmatpush1.msra.mxu0 %v441
    %3457 = vmatprep.subr.mxu0 %v448
    %3458 = vmatpush1.msra.mxu0 %v447
    %3459 = vmatprep.subr.mxu0 %v454
    %3460 = vmatpush1.msra.mxu0 %v453
    %3461 = vmatprep.subr.mxu0 %v460
    %3462 = vmatpush1.msra.mxu0 %v459
    %3463 = vmatprep.subr.mxu0 %v466
    %3464 = vmatpush1.msra.mxu0 %v465
    %3465 = vmatprep.subr.mxu0 %v472
    %3466 = vmatpush1.msra.mxu0 %v471
    %3467 = vmatprep.subr.mxu0 %v478
    %3468 = vmatpush1.msra.mxu0 %v477
    %3469 = vmatprep.subr.mxu0 %v484
    %3470 = vmatpush1.msra.mxu0 %v483
    %3471 = vmatprep.subr.mxu0 %v490
    %3472 = vmatpush1.msra.mxu0 %v489
    %3473 = vmatprep.subr.mxu0 %v496
    %3474 = vmatpush1.msra.mxu0 %v495
    %3475 = vmatprep.subr.mxu0 %v502
    %3476 = vmatpush1.msra.mxu0 %v501
    %3477 = vmatprep.subr.mxu0 %v508
    %3478 = vmatpush1.msra.mxu0 %v507
    %3479 = vmatprep.subr.mxu0 %v514
    %3480 = vmatpush1.msra.mxu0 %v513
    %3481 = vmatprep.subr.mxu0 %v520
    %3482 = vmatpush1.msra.mxu0 %v519
    %3483 = vmatprep.subr.mxu0 %v526
    %3484 = vmatpush1.msra.mxu0 %v525
    %3485 = vmatprep.subr.mxu0 %v532
    %3486 = vmatpush1.msra.mxu0 %v531
    %3487 = vmatprep.subr.mxu0 %v538
    %3488 = vmatpush1.msra.mxu0 %v537
    %3489 = vmatprep.subr.mxu0 %v544
    %3490 = vmatpush1.msra.mxu0 %v543
    %3491 = vmatprep.subr.mxu0 %v550
    %3492 = vmatpush1.msra.mxu0 %v549
    %3493 = vmatprep.subr.mxu0 %v556
    %3494 = vmatpush1.msra.mxu0 %v555
    %3495 = vmatprep.subr.mxu0 %v562
    %3496 = vmatpush1.msra.mxu0 %v561
    %3497 = vmatprep.subr.mxu0 %v568
    %3498 = vmatpush1.msra.mxu0 %v567
    %3499 = vmatprep.mubr.f32.mxu0 %v2864
    %3500 = vmatmul.mubr.f32.gmra.mrb[0].mxu0 %v2863
    %v3501 = vpop.f32.mrb[0].mxu0
    %v3502 = vadd.f32 0.0, %v3501
    %v3503 = vpop.f32.mrb[0].mxu0
    %v3504 = vadd.f32 0.0, %v3503
    %3505 = vdwg.mxu0
    %3506 = vmatprep.subr.mxu0 %v384
    %3507 = vmatpush1.msra.mxu0 %v383
    %3508 = vmatprep.subr.mxu0 %v390
    %3509 = vmatpush1.msra.mxu0 %v389
    %3510 = vmatprep.subr.mxu0 %v396
    %3511 = vmatpush1.msra.mxu0 %v395
    %3512 = vmatprep.subr.mxu0 %v402
    %3513 = vmatpush1.msra.mxu0 %v401
    %3514 = vmatprep.subr.mxu0 %v408
    %3515 = vmatpush1.msra.mxu0 %v407
    %3516 = vmatprep.subr.mxu0 %v414
    %3517 = vmatpush1.msra.mxu0 %v413
    %3518 = vmatprep.subr.mxu0 %v420
    %3519 = vmatpush1.msra.mxu0 %v419
    %3520 = vmatprep.subr.mxu0 %v426
    %3521 = vmatpush1.msra.mxu0 %v425
    %3522 = vmatprep.subr.mxu0 %v432
    %3523 = vmatpush1.msra.mxu0 %v431
    %3524 = vmatprep.subr.mxu0 %v438
    %3525 = vmatpush1.msra.mxu0 %v437
    %3526 = vmatprep.subr.mxu0 %v444
    %3527 = vmatpush1.msra.mxu0 %v443
    %3528 = vmatprep.subr.mxu0 %v450
    %3529 = vmatpush1.msra.mxu0 %v449
    %3530 = vmatprep.subr.mxu0 %v456
    %3531 = vmatpush1.msra.mxu0 %v455
    %3532 = vmatprep.subr.mxu0 %v462
    %3533 = vmatpush1.msra.mxu0 %v461
    %3534 = vmatprep.subr.mxu0 %v468
    %3535 = vmatpush1.msra.mxu0 %v467
    %3536 = vmatprep.subr.mxu0 %v474
    %3537 = vmatpush1.msra.mxu0 %v473
    %3538 = vmatprep.subr.mxu0 %v480
    %3539 = vmatpush1.msra.mxu0 %v479
    %3540 = vmatprep.subr.mxu0 %v486
    %3541 = vmatpush1.msra.mxu0 %v485
    %3542 = vmatprep.subr.mxu0 %v492
    %3543 = vmatpush1.msra.mxu0 %v491
    %3544 = vmatprep.subr.mxu0 %v498
    %3545 = vmatpush1.msra.mxu0 %v497
    %3546 = vmatprep.subr.mxu0 %v504
    %3547 = vmatpush1.msra.mxu0 %v503
    %3548 = vmatprep.subr.mxu0 %v510
    %3549 = vmatpush1.msra.mxu0 %v509
    %3550 = vmatprep.subr.mxu0 %v516
    %3551 = vmatpush1.msra.mxu0 %v515
    %3552 = vmatprep.subr.mxu0 %v522
    %3553 = vmatpush1.msra.mxu0 %v521
    %3554 = vmatprep.subr.mxu0 %v528
    %3555 = vmatpush1.msra.mxu0 %v527
    %3556 = vmatprep.subr.mxu0 %v534
    %3557 = vmatpush1.msra.mxu0 %v533
    %3558 = vmatprep.subr.mxu0 %v540
    %3559 = vmatpush1.msra.mxu0 %v539
    %3560 = vmatprep.subr.mxu0 %v546
    %3561 = vmatpush1.msra.mxu0 %v545
    %3562 = vmatprep.subr.mxu0 %v552
    %3563 = vmatpush1.msra.mxu0 %v551
    %3564 = vmatprep.subr.mxu0 %v558
    %3565 = vmatpush1.msra.mxu0 %v557
    %3566 = vmatprep.subr.mxu0 %v564
    %3567 = vmatpush1.msra.mxu0 %v563
    %3568 = vmatprep.subr.mxu0 %v570
    %3569 = vmatpush1.msra.mxu0 %v569
    %3570 = vmatprep.mubr.f32.mxu0 %v2864
    %3571 = vmatmul.mubr.f32.gmra.mrb[0].mxu0 %v2863
    %v3572 = vpop.f32.mrb[0].mxu0
    %v3573 = vadd.f32 0.0, %v3572
    %v3574 = vpop.f32.mrb[0].mxu0
    %v3575 = vadd.f32 0.0, %v3574
    %3576 = vdwg.mxu0
    %v3581 = vrot.slane %v3431, 4
    %v3582 = vrot.slane %v3433, 4
    %v3583 = vrot.slane %v3502, 4
    %v3584 = vrot.slane %v3504, 4
    %v3589 = vadd.f32 %v203, %v3581
    %v3590 = vadd.f32 %v205, %v3582
    %v3591 = vadd.f32 %v286, %v3583
    %v3592 = vadd.f32 %v288, %v3584
    %v3593 = vadd.f32 %v3589, %v1182
    %v3594 = vadd.f32 %v3590, %v1186
    %v3595 = vadd.f32 %v3591, %v1190
    %v3596 = vadd.f32 %v3592, %v1194
    %v3597 = vxor.u32 %v3593, 2147483648
    %v3598 = vxor.u32 %v3594, 2147483648
    %v3599 = vxor.u32 %v3595, 2147483648
    %v3600 = vxor.u32 %v3596, 2147483648
    %v3601 = vmul.f32 %v3597, 1.442695
    %v3602 = vpow.pop %v3601
    %v3603 = vmul.f32 %v3598, 1.442695
    %v3604 = vpow.pop %v3603
    %v3605 = vmul.f32 %v3599, 1.442695
    %v3606 = vpow.pop %v3605
    %v3607 = vmul.f32 %v3600, 1.442695
    %v3608 = vpow.pop %v3607
    %v3609 = vadd.f32 %v3602, 1.0
    %v3610 = vadd.f32 %v3604, 1.0
    %v3611 = vadd.f32 %v3606, 1.0
    %v3612 = vadd.f32 %v3608, 1.0
    %v3613 = vrcp.pop %v3609
    %v3614 = vmul.f32 1.0, %v3613
    %v3615 = vrcp.pop %v3610
    %v3616 = vmul.f32 1.0, %v3615
    %v3617 = vrcp.pop %v3611
    %v3618 = vmul.f32 1.0, %v3617
    %v3619 = vrcp.pop %v3612
    %v3620 = vmul.f32 1.0, %v3619
    %v3621 = vadd.f32 %v3573, %v1244
    %v3622 = vadd.f32 %v3575, %v1248
    %v3625 = vrot.slane %v3621, 4
    %v3626 = vrot.slane %v3622, 4
    %v3629 = vmul.f32 %v3614, %v3625
    %v3630 = vmul.f32 %v3616, %v3626
    %v3631 = vadd.f32 %v2847, %v3629
    %v3632 = vadd.f32 %v2848, %v3630
    %v3633 = vtanh.pop %v3631
    %v3634 = vtanh.pop %v3632
    %v3635 = vsub.f32 1.0, %v3618
    %v3636 = vsub.f32 1.0, %v3620
    %v3637 = vmul.f32 %v3635, %v3633
    %v3638 = vmul.f32 %v3636, %v3634
    %v3641 = vrot.slane %v2863, 4
    %v3642 = vrot.slane %v2864, 4
    %v3645 = vmul.f32 %v3618, %v3641
    %v3646 = vmul.f32 %v3620, %v3642
    %v3647 = vadd.f32 %v3637, %v3645
    %v3648 = vadd.f32 %v3638, %v3646
    %v3651 = vrot.slane %v3647, 4
    %v3652 = vrot.slane %v3648, 4
    %3655 = vmatprep.subr.mxu0 %v572
    %3656 = vmatpush1.msra.mxu0 %v571
    %3657 = vmatprep.subr.mxu0 %v578
    %3658 = vmatpush1.msra.mxu0 %v577
    %3659 = vmatprep.subr.mxu0 %v584
    %3660 = vmatpush1.msra.mxu0 %v583
    %3661 = vmatprep.subr.mxu0 %v590
    %3662 = vmatpush1.msra.mxu0 %v589
    %3663 = vmatprep.subr.mxu0 %v596
    %3664 = vmatpush1.msra.mxu0 %v595
    %3665 = vmatprep.subr.mxu0 %v602
    %3666 = vmatpush1.msra.mxu0 %v601
    %3667 = vmatprep.subr.mxu0 %v608
    %3668 = vmatpush1.msra.mxu0 %v607
    %3669 = vmatprep.subr.mxu0 %v614
    %3670 = vmatpush1.msra.mxu0 %v613
    %3671 = vmatprep.subr.mxu0 %v620
    %3672 = vmatpush1.msra.mxu0 %v619
    %3673 = vmatprep.subr.mxu0 %v626
    %3674 = vmatpush1.msra.mxu0 %v625
    %3675 = vmatprep.subr.mxu0 %v632
    %3676 = vmatpush1.msra.mxu0 %v631
    %3677 = vmatprep.subr.mxu0 %v638
    %3678 = vmatpush1.msra.mxu0 %v637
    %3679 = vmatprep.subr.mxu0 %v644
    %3680 = vmatpush1.msra.mxu0 %v643
    %3681 = vmatprep.subr.mxu0 %v650
    %3682 = vmatpush1.msra.mxu0 %v649
    %3683 = vmatprep.subr.mxu0 %v656
    %3684 = vmatpush1.msra.mxu0 %v655
    %3685 = vmatprep.subr.mxu0 %v662
    %3686 = vmatpush1.msra.mxu0 %v661
    %3687 = vmatprep.subr.mxu0 %v668
    %3688 = vmatpush1.msra.mxu0 %v667
    %3689 = vmatprep.subr.mxu0 %v674
    %3690 = vmatpush1.msra.mxu0 %v673
    %3691 = vmatprep.subr.mxu0 %v680
    %3692 = vmatpush1.msra.mxu0 %v679
    %3693 = vmatprep.subr.mxu0 %v686
    %3694 = vmatpush1.msra.mxu0 %v685
    %3695 = vmatprep.subr.mxu0 %v692
    %3696 = vmatpush1.msra.mxu0 %v691
    %3697 = vmatprep.subr.mxu0 %v698
    %3698 = vmatpush1.msra.mxu0 %v697
    %3699 = vmatprep.subr.mxu0 %v704
    %3700 = vmatpush1.msra.mxu0 %v703
    %3701 = vmatprep.subr.mxu0 %v710
    %3702 = vmatpush1.msra.mxu0 %v709
    %3703 = vmatprep.subr.mxu0 %v716
    %3704 = vmatpush1.msra.mxu0 %v715
    %3705 = vmatprep.subr.mxu0 %v722
    %3706 = vmatpush1.msra.mxu0 %v721
    %3707 = vmatprep.subr.mxu0 %v728
    %3708 = vmatpush1.msra.mxu0 %v727
    %3709 = vmatprep.subr.mxu0 %v734
    %3710 = vmatpush1.msra.mxu0 %v733
    %3711 = vmatprep.subr.mxu0 %v740
    %3712 = vmatpush1.msra.mxu0 %v739
    %3713 = vmatprep.subr.mxu0 %v746
    %3714 = vmatpush1.msra.mxu0 %v745
    %3715 = vmatprep.subr.mxu0 %v752
    %3716 = vmatpush1.msra.mxu0 %v751
    %3717 = vmatprep.subr.mxu0 %v758
    %3718 = vmatpush1.msra.mxu0 %v757
    %3719 = vmatprep.mubr.f32.mxu0 %v3652
    %3720 = vmatmul.mubr.f32.gmra.mrb[0].mxu0 %v3651
    %v3721 = vpop.f32.mrb[0].mxu0
    %v3722 = vadd.f32 0.0, %v3721
    %v3723 = vpop.f32.mrb[0].mxu0
    %v3724 = vadd.f32 0.0, %v3723
    %3725 = vdwg.mxu0
    %3726 = vmatprep.subr.mxu0 %v574
    %3727 = vmatpush1.msra.mxu0 %v573
    %3728 = vmatprep.subr.mxu0 %v580
    %3729 = vmatpush1.msra.mxu0 %v579
    %3730 = vmatprep.subr.mxu0 %v586
    %3731 = vmatpush1.msra.mxu0 %v585
    %3732 = vmatprep.subr.mxu0 %v592
    %3733 = vmatpush1.msra.mxu0 %v591
    %3734 = vmatprep.subr.mxu0 %v598
    %3735 = vmatpush1.msra.mxu0 %v597
    %3736 = vmatprep.subr.mxu0 %v604
    %3737 = vmatpush1.msra.mxu0 %v603
    %3738 = vmatprep.subr.mxu0 %v610
    %3739 = vmatpush1.msra.mxu0 %v609
    %3740 = vmatprep.subr.mxu0 %v616
    %3741 = vmatpush1.msra.mxu0 %v615
    %3742 = vmatprep.subr.mxu0 %v622
    %3743 = vmatpush1.msra.mxu0 %v621
    %3744 = vmatprep.subr.mxu0 %v628
    %3745 = vmatpush1.msra.mxu0 %v627
    %3746 = vmatprep.subr.mxu0 %v634
    %3747 = vmatpush1.msra.mxu0 %v633
    %3748 = vmatprep.subr.mxu0 %v640
    %3749 = vmatpush1.msra.mxu0 %v639
    %3750 = vmatprep.subr.mxu0 %v646
    %3751 = vmatpush1.msra.mxu0 %v645
    %3752 = vmatprep.subr.mxu0 %v652
    %3753 = vmatpush1.msra.mxu0 %v651
    %3754 = vmatprep.subr.mxu0 %v658
    %3755 = vmatpush1.msra.mxu0 %v657
    %3756 = vmatprep.subr.mxu0 %v664
    %3757 = vmatpush1.msra.mxu0 %v663
    %3758 = vmatprep.subr.mxu0 %v670
    %3759 = vmatpush1.msra.mxu0 %v669
    %3760 = vmatprep.subr.mxu0 %v676
    %3761 = vmatpush1.msra.mxu0 %v675
    %3762 = vmatprep.subr.mxu0 %v682
    %3763 = vmatpush1.msra.mxu0 %v681
    %3764 = vmatprep.subr.mxu0 %v688
    %3765 = vmatpush1.msra.mxu0 %v687
    %3766 = vmatprep.subr.mxu0 %v694
    %3767 = vmatpush1.msra.mxu0 %v693
    %3768 = vmatprep.subr.mxu0 %v700
    %3769 = vmatpush1.msra.mxu0 %v699
    %3770 = vmatprep.subr.mxu0 %v706
    %3771 = vmatpush1.msra.mxu0 %v705
    %3772 = vmatprep.subr.mxu0 %v712
    %3773 = vmatpush1.msra.mxu0 %v711
    %3774 = vmatprep.subr.mxu0 %v718
    %3775 = vmatpush1.msra.mxu0 %v717
    %3776 = vmatprep.subr.mxu0 %v724
    %3777 = vmatpush1.msra.mxu0 %v723
    %3778 = vmatprep.subr.mxu0 %v730
    %3779 = vmatpush1.msra.mxu0 %v729
    %3780 = vmatprep.subr.mxu0 %v736
    %3781 = vmatpush1.msra.mxu0 %v735
    %3782 = vmatprep.subr.mxu0 %v742
    %3783 = vmatpush1.msra.mxu0 %v741
    %3784 = vmatprep.subr.mxu0 %v748
    %3785 = vmatpush1.msra.mxu0 %v747
    %3786 = vmatprep.subr.mxu0 %v754
    %3787 = vmatpush1.msra.mxu0 %v753
    %3788 = vmatprep.subr.mxu0 %v760
    %3789 = vmatpush1.msra.mxu0 %v759
    %3790 = vmatprep.mubr.f32.mxu0 %v3652
    %3791 = vmatmul.mubr.f32.gmra.mrb[0].mxu0 %v3651
    %v3792 = vpop.f32.mrb[0].mxu0
    %v3793 = vadd.f32 0.0, %v3792
    %v3794 = vpop.f32.mrb[0].mxu0
    %v3795 = vadd.f32 0.0, %v3794
    %3796 = vdwg.mxu0
    %3797 = vmatprep.subr.mxu0 %v576
    %3798 = vmatpush1.msra.mxu0 %v575
    %3799 = vmatprep.subr.mxu0 %v582
    %3800 = vmatpush1.msra.mxu0 %v581
    %3801 = vmatprep.subr.mxu0 %v588
    %3802 = vmatpush1.msra.mxu0 %v587
    %3803 = vmatprep.subr.mxu0 %v594
    %3804 = vmatpush1.msra.mxu0 %v593
    %3805 = vmatprep.subr.mxu0 %v600
    %3806 = vmatpush1.msra.mxu0 %v599
    %3807 = vmatprep.subr.mxu0 %v606
    %3808 = vmatpush1.msra.mxu0 %v605
    %3809 = vmatprep.subr.mxu0 %v612
    %3810 = vmatpush1.msra.mxu0 %v611
    %3811 = vmatprep.subr.mxu0 %v618
    %3812 = vmatpush1.msra.mxu0 %v617
    %3813 = vmatprep.subr.mxu0 %v624
    %3814 = vmatpush1.msra.mxu0 %v623
    %3815 = vmatprep.subr.mxu0 %v630
    %3816 = vmatpush1.msra.mxu0 %v629
    %3817 = vmatprep.subr.mxu0 %v636
    %3818 = vmatpush1.msra.mxu0 %v635
    %3819 = vmatprep.subr.mxu0 %v642
    %3820 = vmatpush1.msra.mxu0 %v641
    %3821 = vmatprep.subr.mxu0 %v648
    %3822 = vmatpush1.msra.mxu0 %v647
    %3823 = vmatprep.subr.mxu0 %v654
    %3824 = vmatpush1.msra.mxu0 %v653
    %3825 = vmatprep.subr.mxu0 %v660
    %3826 = vmatpush1.msra.mxu0 %v659
    %3827 = vmatprep.subr.mxu0 %v666
    %3828 = vmatpush1.msra.mxu0 %v665
    %3829 = vmatprep.subr.mxu0 %v672
    %3830 = vmatpush1.msra.mxu0 %v671
    %3831 = vmatprep.subr.mxu0 %v678
    %3832 = vmatpush1.msra.mxu0 %v677
    %3833 = vmatprep.subr.mxu0 %v684
    %3834 = vmatpush1.msra.mxu0 %v683
    %3835 = vmatprep.subr.mxu0 %v690
    %3836 = vmatpush1.msra.mxu0 %v689
    %3837 = vmatprep.subr.mxu0 %v696
    %3838 = vmatpush1.msra.mxu0 %v695
    %3839 = vmatprep.subr.mxu0 %v702
    %3840 = vmatpush1.msra.mxu0 %v701
    %3841 = vmatprep.subr.mxu0 %v708
    %3842 = vmatpush1.msra.mxu0 %v707
    %3843 = vmatprep.subr.mxu0 %v714
    %3844 = vmatpush1.msra.mxu0 %v713
    %3845 = vmatprep.subr.mxu0 %v720
    %3846 = vmatpush1.msra.mxu0 %v719
    %3847 = vmatprep.subr.mxu0 %v726
    %3848 = vmatpush1.msra.mxu0 %v725
    %3849 = vmatprep.subr.mxu0 %v732
    %3850 = vmatpush1.msra.mxu0 %v731
    %3851 = vmatprep.subr.mxu0 %v738
    %3852 = vmatpush1.msra.mxu0 %v737
    %3853 = vmatprep.subr.mxu0 %v744
    %3854 = vmatpush1.msra.mxu0 %v743
    %3855 = vmatprep.subr.mxu0 %v750
    %3856 = vmatpush1.msra.mxu0 %v749
    %3857 = vmatprep.subr.mxu0 %v756
    %3858 = vmatpush1.msra.mxu0 %v755
    %3859 = vmatprep.subr.mxu0 %v762
    %3860 = vmatpush1.msra.mxu0 %v761
    %3861 = vmatprep.mubr.f32.mxu0 %v3652
    %3862 = vmatmul.mubr.f32.gmra.mrb[0].mxu0 %v3651
    %v3863 = vpop.f32.mrb[0].mxu0
    %v3864 = vadd.f32 0.0, %v3863
    %v3865 = vpop.f32.mrb[0].mxu0
    %v3866 = vadd.f32 0.0, %v3865
    %3867 = vdwg.mxu0
    %3868 = vmatprep.subr.mxu0 %v764
    %3869 = vmatpush1.msra.mxu0 %v763
    %3870 = vmatprep.subr.mxu0 %v770
    %3871 = vmatpush1.msra.mxu0 %v769
    %3872 = vmatprep.subr.mxu0 %v776
    %3873 = vmatpush1.msra.mxu0 %v775
    %3874 = vmatprep.subr.mxu0 %v782
    %3875 = vmatpush1.msra.mxu0 %v781
    %3876 = vmatprep.subr.mxu0 %v788
    %3877 = vmatpush1.msra.mxu0 %v787
    %3878 = vmatprep.subr.mxu0 %v794
    %3879 = vmatpush1.msra.mxu0 %v793
    %3880 = vmatprep.subr.mxu0 %v800
    %3881 = vmatpush1.msra.mxu0 %v799
    %3882 = vmatprep.subr.mxu0 %v806
    %3883 = vmatpush1.msra.mxu0 %v805
    %3884 = vmatprep.subr.mxu0 %v812
    %3885 = vmatpush1.msra.mxu0 %v811
    %3886 = vmatprep.subr.mxu0 %v818
    %3887 = vmatpush1.msra.mxu0 %v817
    %3888 = vmatprep.subr.mxu0 %v824
    %3889 = vmatpush1.msra.mxu0 %v823
    %3890 = vmatprep.subr.mxu0 %v830
    %3891 = vmatpush1.msra.mxu0 %v829
    %3892 = vmatprep.subr.mxu0 %v836
    %3893 = vmatpush1.msra.mxu0 %v835
    %3894 = vmatprep.subr.mxu0 %v842
    %3895 = vmatpush1.msra.mxu0 %v841
    %3896 = vmatprep.subr.mxu0 %v848
    %3897 = vmatpush1.msra.mxu0 %v847
    %3898 = vmatprep.subr.mxu0 %v854
    %3899 = vmatpush1.msra.mxu0 %v853
    %3900 = vmatprep.subr.mxu0 %v860
    %3901 = vmatpush1.msra.mxu0 %v859
    %3902 = vmatprep.subr.mxu0 %v866
    %3903 = vmatpush1.msra.mxu0 %v865
    %3904 = vmatprep.subr.mxu0 %v872
    %3905 = vmatpush1.msra.mxu0 %v871
    %3906 = vmatprep.subr.mxu0 %v878
    %3907 = vmatpush1.msra.mxu0 %v877
    %3908 = vmatprep.subr.mxu0 %v884
    %3909 = vmatpush1.msra.mxu0 %v883
    %3910 = vmatprep.subr.mxu0 %v890
    %3911 = vmatpush1.msra.mxu0 %v889
    %3912 = vmatprep.subr.mxu0 %v896
    %3913 = vmatpush1.msra.mxu0 %v895
    %3914 = vmatprep.subr.mxu0 %v902
    %3915 = vmatpush1.msra.mxu0 %v901
    %3916 = vmatprep.subr.mxu0 %v908
    %3917 = vmatpush1.msra.mxu0 %v907
    %3918 = vmatprep.subr.mxu0 %v914
    %3919 = vmatpush1.msra.mxu0 %v913
    %3920 = vmatprep.subr.mxu0 %v920
    %3921 = vmatpush1.msra.mxu0 %v919
    %3922 = vmatprep.subr.mxu0 %v926
    %3923 = vmatpush1.msra.mxu0 %v925
    %3924 = vmatprep.subr.mxu0 %v932
    %3925 = vmatpush1.msra.mxu0 %v931
    %3926 = vmatprep.subr.mxu0 %v938
    %3927 = vmatpush1.msra.mxu0 %v937
    %3928 = vmatprep.subr.mxu0 %v944
    %3929 = vmatpush1.msra.mxu0 %v943
    %3930 = vmatprep.subr.mxu0 %v950
    %3931 = vmatpush1.msra.mxu0 %v949
    %3932 = vmatprep.mubr.f32.mxu0 %v3340
    %3933 = vmatmul.mubr.f32.gmra.mrb[0].mxu0 %v3339
    %v3934 = vpop.f32.mrb[0].mxu0
    %v3935 = vadd.f32 0.0, %v3934
    %v3936 = vpop.f32.mrb[0].mxu0
    %v3937 = vadd.f32 0.0, %v3936
    %3938 = vdwg.mxu0
    %3939 = vmatprep.subr.mxu0 %v766
    %3940 = vmatpush1.msra.mxu0 %v765
    %3941 = vmatprep.subr.mxu0 %v772
    %3942 = vmatpush1.msra.mxu0 %v771
    %3943 = vmatprep.subr.mxu0 %v778
    %3944 = vmatpush1.msra.mxu0 %v777
    %3945 = vmatprep.subr.mxu0 %v784
    %3946 = vmatpush1.msra.mxu0 %v783
    %3947 = vmatprep.subr.mxu0 %v790
    %3948 = vmatpush1.msra.mxu0 %v789
    %3949 = vmatprep.subr.mxu0 %v796
    %3950 = vmatpush1.msra.mxu0 %v795
    %3951 = vmatprep.subr.mxu0 %v802
    %3952 = vmatpush1.msra.mxu0 %v801
    %3953 = vmatprep.subr.mxu0 %v808
    %3954 = vmatpush1.msra.mxu0 %v807
    %3955 = vmatprep.subr.mxu0 %v814
    %3956 = vmatpush1.msra.mxu0 %v813
    %3957 = vmatprep.subr.mxu0 %v820
    %3958 = vmatpush1.msra.mxu0 %v819
    %3959 = vmatprep.subr.mxu0 %v826
    %3960 = vmatpush1.msra.mxu0 %v825
    %3961 = vmatprep.subr.mxu0 %v832
    %3962 = vmatpush1.msra.mxu0 %v831
    %3963 = vmatprep.subr.mxu0 %v838
    %3964 = vmatpush1.msra.mxu0 %v837
    %3965 = vmatprep.subr.mxu0 %v844
    %3966 = vmatpush1.msra.mxu0 %v843
    %3967 = vmatprep.subr.mxu0 %v850
    %3968 = vmatpush1.msra.mxu0 %v849
    %3969 = vmatprep.subr.mxu0 %v856
    %3970 = vmatpush1.msra.mxu0 %v855
    %3971 = vmatprep.subr.mxu0 %v862
    %3972 = vmatpush1.msra.mxu0 %v861
    %3973 = vmatprep.subr.mxu0 %v868
    %3974 = vmatpush1.msra.mxu0 %v867
    %3975 = vmatprep.subr.mxu0 %v874
    %3976 = vmatpush1.msra.mxu0 %v873
    %3977 = vmatprep.subr.mxu0 %v880
    %3978 = vmatpush1.msra.mxu0 %v879
    %3979 = vmatprep.subr.mxu0 %v886
    %3980 = vmatpush1.msra.mxu0 %v885
    %3981 = vmatprep.subr.mxu0 %v892
    %3982 = vmatpush1.msra.mxu0 %v891
    %3983 = vmatprep.subr.mxu0 %v898
    %3984 = vmatpush1.msra.mxu0 %v897
    %3985 = vmatprep.subr.mxu0 %v904
    %3986 = vmatpush1.msra.mxu0 %v903
    %3987 = vmatprep.subr.mxu0 %v910
    %3988 = vmatpush1.msra.mxu0 %v909
    %3989 = vmatprep.subr.mxu0 %v916
    %3990 = vmatpush1.msra.mxu0 %v915
    %3991 = vmatprep.subr.mxu0 %v922
    %3992 = vmatpush1.msra.mxu0 %v921
    %3993 = vmatprep.subr.mxu0 %v928
    %3994 = vmatpush1.msra.mxu0 %v927
    %3995 = vmatprep.subr.mxu0 %v934
    %3996 = vmatpush1.msra.mxu0 %v933
    %3997 = vmatprep.subr.mxu0 %v940
    %3998 = vmatpush1.msra.mxu0 %v939
    %3999 = vmatprep.subr.mxu0 %v946
    %4000 = vmatpush1.msra.mxu0 %v945
    %4001 = vmatprep.subr.mxu0 %v952
    %4002 = vmatpush1.msra.mxu0 %v951
    %4003 = vmatprep.mubr.f32.mxu0 %v3340
    %4004 = vmatmul.mubr.f32.gmra.mrb[0].mxu0 %v3339
    %v4005 = vpop.f32.mrb[0].mxu0
    %v4006 = vadd.f32 0.0, %v4005
    %v4007 = vpop.f32.mrb[0].mxu0
    %v4008 = vadd.f32 0.0, %v4007
    %4009 = vdwg.mxu0
    %4010 = vmatprep.subr.mxu0 %v768
    %4011 = vmatpush1.msra.mxu0 %v767
    %4012 = vmatprep.subr.mxu0 %v774
    %4013 = vmatpush1.msra.mxu0 %v773
    %4014 = vmatprep.subr.mxu0 %v780
    %4015 = vmatpush1.msra.mxu0 %v779
    %4016 = vmatprep.subr.mxu0 %v786
    %4017 = vmatpush1.msra.mxu0 %v785
    %4018 = vmatprep.subr.mxu0 %v792
    %4019 = vmatpush1.msra.mxu0 %v791
    %4020 = vmatprep.subr.mxu0 %v798
    %4021 = vmatpush1.msra.mxu0 %v797
    %4022 = vmatprep.subr.mxu0 %v804
    %4023 = vmatpush1.msra.mxu0 %v803
    %4024 = vmatprep.subr.mxu0 %v810
    %4025 = vmatpush1.msra.mxu0 %v809
    %4026 = vmatprep.subr.mxu0 %v816
    %4027 = vmatpush1.msra.mxu0 %v815
    %4028 = vmatprep.subr.mxu0 %v822
    %4029 = vmatpush1.msra.mxu0 %v821
    %4030 = vmatprep.subr.mxu0 %v828
    %4031 = vmatpush1.msra.mxu0 %v827
    %4032 = vmatprep.subr.mxu0 %v834
    %4033 = vmatpush1.msra.mxu0 %v833
    %4034 = vmatprep.subr.mxu0 %v840
    %4035 = vmatpush1.msra.mxu0 %v839
    %4036 = vmatprep.subr.mxu0 %v846
    %4037 = vmatpush1.msra.mxu0 %v845
    %4038 = vmatprep.subr.mxu0 %v852
    %4039 = vmatpush1.msra.mxu0 %v851
    %4040 = vmatprep.subr.mxu0 %v858
    %4041 = vmatpush1.msra.mxu0 %v857
    %4042 = vmatprep.subr.mxu0 %v864
    %4043 = vmatpush1.msra.mxu0 %v863
    %4044 = vmatprep.subr.mxu0 %v870
    %4045 = vmatpush1.msra.mxu0 %v869
    %4046 = vmatprep.subr.mxu0 %v876
    %4047 = vmatpush1.msra.mxu0 %v875
    %4048 = vmatprep.subr.mxu0 %v882
    %4049 = vmatpush1.msra.mxu0 %v881
    %4050 = vmatprep.subr.mxu0 %v888
    %4051 = vmatpush1.msra.mxu0 %v887
    %4052 = vmatprep.subr.mxu0 %v894
    %4053 = vmatpush1.msra.mxu0 %v893
    %4054 = vmatprep.subr.mxu0 %v900
    %4055 = vmatpush1.msra.mxu0 %v899
    %4056 = vmatprep.subr.mxu0 %v906
    %4057 = vmatpush1.msra.mxu0 %v905
    %4058 = vmatprep.subr.mxu0 %v912
    %4059 = vmatpush1.msra.mxu0 %v911
    %4060 = vmatprep.subr.mxu0 %v918
    %4061 = vmatpush1.msra.mxu0 %v917
    %4062 = vmatprep.subr.mxu0 %v924
    %4063 = vmatpush1.msra.mxu0 %v923
    %4064 = vmatprep.subr.mxu0 %v930
    %4065 = vmatpush1.msra.mxu0 %v929
    %4066 = vmatprep.subr.mxu0 %v936
    %4067 = vmatpush1.msra.mxu0 %v935
    %4068 = vmatprep.subr.mxu0 %v942
    %4069 = vmatpush1.msra.mxu0 %v941
    %4070 = vmatprep.subr.mxu0 %v948
    %4071 = vmatpush1.msra.mxu0 %v947
    %4072 = vmatprep.subr.mxu0 %v954
    %4073 = vmatpush1.msra.mxu0 %v953
    %4074 = vmatprep.mubr.f32.mxu0 %v3340
    %4075 = vmatmul.mubr.f32.gmra.mrb[0].mxu0 %v3339
    %v4076 = vpop.f32.mrb[0].mxu0
    %v4077 = vadd.f32 0.0, %v4076
    %v4078 = vpop.f32.mrb[0].mxu0
    %v4079 = vadd.f32 0.0, %v4078
    %4080 = vdwg.mxu0
    %v4081 = vadd.f32 %v3722, %v3935
    %v4082 = vadd.f32 %v3724, %v3937
    %v4083 = vadd.f32 %v3793, %v4006
    %v4084 = vadd.f32 %v3795, %v4008
    %v4085 = vadd.f32 %v4081, %v1701
    %v4086 = vadd.f32 %v4082, %v1705
    %v4087 = vadd.f32 %v4083, %v1709
    %v4088 = vadd.f32 %v4084, %v1713
    %v4089 = vxor.u32 %v4085, 2147483648
    %v4090 = vxor.u32 %v4086, 2147483648
    %v4091 = vxor.u32 %v4087, 2147483648
    %v4092 = vxor.u32 %v4088, 2147483648
    %v4093 = vmul.f32 %v4089, 1.442695
    %v4094 = vpow.pop %v4093
    %v4095 = vmul.f32 %v4090, 1.442695
    %v4096 = vpow.pop %v4095
    %v4097 = vmul.f32 %v4091, 1.442695
    %v4098 = vpow.pop %v4097
    %v4099 = vmul.f32 %v4092, 1.442695
    %v4100 = vpow.pop %v4099
    %v4101 = vadd.f32 %v4094, 1.0
    %v4102 = vadd.f32 %v4096, 1.0
    %v4103 = vadd.f32 %v4098, 1.0
    %v4104 = vadd.f32 %v4100, 1.0
    %v4105 = vrcp.pop %v4101
    %v4106 = vmul.f32 1.0, %v4105
    %v4107 = vrcp.pop %v4102
    %v4108 = vmul.f32 1.0, %v4107
    %v4109 = vrcp.pop %v4103
    %v4110 = vmul.f32 1.0, %v4109
    %v4111 = vrcp.pop %v4104
    %v4112 = vmul.f32 1.0, %v4111
    %v4113 = vadd.f32 %v3864, %v1750
    %v4114 = vadd.f32 %v3866, %v1754
    %v4115 = vadd.f32 %v4077, %v1763
    %v4116 = vadd.f32 %v4079, %v1767
    %v4117 = vmul.f32 %v4106, %v4115
    %v4118 = vmul.f32 %v4108, %v4116
    %v4119 = vadd.f32 %v4113, %v4117
    %v4120 = vadd.f32 %v4114, %v4118
    %v4121 = vtanh.pop %v4119
    %v4122 = vtanh.pop %v4120
    %v4123 = vsub.f32 1.0, %v4110
    %v4124 = vsub.f32 1.0, %v4112
    %v4125 = vmul.f32 %v4123, %v4121
    %v4126 = vmul.f32 %v4124, %v4122
    %v4127 = vmul.f32 %v4110, %v3339
    %v4128 = vmul.f32 %v4112, %v3340
    %v4129 = vadd.f32 %v4125, %v4127
    %v4130 = vadd.f32 %v4126, %v4128
    %v4133 = vcombine.low %v4129, %v4130
    %v4135 = vunpack.c.l.s4 1966171168
    %v4136 = vunpack.c.0.s8 %v4135
    %v4137 = vlaneseq
    %v4138 = vshrl.u32 %v4137, 7
    %v4139 = vsub.s32 %v4136, %v4138
    %v4140 = vrot.slane %v4133, %v4139
    %v4141 = vcombine.high %v4140, %v4140
    %v4143 = vunpack.c.l.s4 1966171168
    %v4144 = vunpack.c.0.s8 %v4143
    %v4145 = vlaneseq
    %v4146 = vshrl.u32 %v4145, 7
    %v4147 = vsub.s32 %v4144, %v4146
    %v4148 = vrot.slane %v4141, %v4147
    %v4149 = vcombine.high %v4148, %v4148
    %s4151 = scalar_lea.vmem [#allocation2], 3
    %4152 = vst.msk [vmem:[%s4151] ss:$8 sm:$0x3] %vm1809, %v4149
    %4153 = vst.msk [vmem:[%s4151] ss:$8 sm:$0x0] %vm1809, %v4149
    %4154 = vmatprep.subr.mxu0 %v380
    %4155 = vmatpush1.msra.mxu0 %v379
    %4156 = vmatprep.subr.mxu0 %v386
    %4157 = vmatpush1.msra.mxu0 %v385
    %4158 = vmatprep.subr.mxu0 %v392
    %4159 = vmatpush1.msra.mxu0 %v391
    %4160 = vmatprep.subr.mxu0 %v398
    %4161 = vmatpush1.msra.mxu0 %v397
    %4162 = vmatprep.subr.mxu0 %v404
    %4163 = vmatpush1.msra.mxu0 %v403
    %4164 = vmatprep.subr.mxu0 %v410
    %4165 = vmatpush1.msra.mxu0 %v409
    %4166 = vmatprep.subr.mxu0 %v416
    %4167 = vmatpush1.msra.mxu0 %v415
    %4168 = vmatprep.subr.mxu0 %v422
    %4169 = vmatpush1.msra.mxu0 %v421
    %4170 = vmatprep.subr.mxu0 %v428
    %4171 = vmatpush1.msra.mxu0 %v427
    %4172 = vmatprep.subr.mxu0 %v434
    %4173 = vmatpush1.msra.mxu0 %v433
    %4174 = vmatprep.subr.mxu0 %v440
    %4175 = vmatpush1.msra.mxu0 %v439
    %4176 = vmatprep.subr.mxu0 %v446
    %4177 = vmatpush1.msra.mxu0 %v445
    %4178 = vmatprep.subr.mxu0 %v452
    %4179 = vmatpush1.msra.mxu0 %v451
    %4180 = vmatprep.subr.mxu0 %v458
    %4181 = vmatpush1.msra.mxu0 %v457
    %4182 = vmatprep.subr.mxu0 %v464
    %4183 = vmatpush1.msra.mxu0 %v463
    %4184 = vmatprep.subr.mxu0 %v470
    %4185 = vmatpush1.msra.mxu0 %v469
    %4186 = vmatprep.subr.mxu0 %v476
    %4187 = vmatpush1.msra.mxu0 %v475
    %4188 = vmatprep.subr.mxu0 %v482
    %4189 = vmatpush1.msra.mxu0 %v481
    %4190 = vmatprep.subr.mxu0 %v488
    %4191 = vmatpush1.msra.mxu0 %v487
    %4192 = vmatprep.subr.mxu0 %v494
    %4193 = vmatpush1.msra.mxu0 %v493
    %4194 = vmatprep.subr.mxu0 %v500
    %4195 = vmatpush1.msra.mxu0 %v499
    %4196 = vmatprep.subr.mxu0 %v506
    %4197 = vmatpush1.msra.mxu0 %v505
    %4198 = vmatprep.subr.mxu0 %v512
    %4199 = vmatpush1.msra.mxu0 %v511
    %4200 = vmatprep.subr.mxu0 %v518
    %4201 = vmatpush1.msra.mxu0 %v517
    %4202 = vmatprep.subr.mxu0 %v524
    %4203 = vmatpush1.msra.mxu0 %v523
    %4204 = vmatprep.subr.mxu0 %v530
    %4205 = vmatpush1.msra.mxu0 %v529
    %4206 = vmatprep.subr.mxu0 %v536
    %4207 = vmatpush1.msra.mxu0 %v535
    %4208 = vmatprep.subr.mxu0 %v542
    %4209 = vmatpush1.msra.mxu0 %v541
    %4210 = vmatprep.subr.mxu0 %v548
    %4211 = vmatpush1.msra.mxu0 %v547
    %4212 = vmatprep.subr.mxu0 %v554
    %4213 = vmatpush1.msra.mxu0 %v553
    %4214 = vmatprep.subr.mxu0 %v560
    %4215 = vmatpush1.msra.mxu0 %v559
    %4216 = vmatprep.subr.mxu0 %v566
    %4217 = vmatpush1.msra.mxu0 %v565
    %4218 = vmatprep.mubr.f32.mxu0 %v3652
    %4219 = vmatmul.mubr.f32.gmra.mrb[0].mxu0 %v3651
    %v4220 = vpop.f32.mrb[0].mxu0
    %v4221 = vadd.f32 0.0, %v4220
    %v4222 = vpop.f32.mrb[0].mxu0
    %v4223 = vadd.f32 0.0, %v4222
    %4224 = vdwg.mxu0
    %4225 = vmatprep.subr.mxu0 %v382
    %4226 = vmatpush1.msra.mxu0 %v381
    %4227 = vmatprep.subr.mxu0 %v388
    %4228 = vmatpush1.msra.mxu0 %v387
    %4229 = vmatprep.subr.mxu0 %v394
    %4230 = vmatpush1.msra.mxu0 %v393
    %4231 = vmatprep.subr.mxu0 %v400
    %4232 = vmatpush1.msra.mxu0 %v399
    %4233 = vmatprep.subr.mxu0 %v406
    %4234 = vmatpush1.msra.mxu0 %v405
    %4235 = vmatprep.subr.mxu0 %v412
    %4236 = vmatpush1.msra.mxu0 %v411
    %4237 = vmatprep.subr.mxu0 %v418
    %4238 = vmatpush1.msra.mxu0 %v417
    %4239 = vmatprep.subr.mxu0 %v424
    %4240 = vmatpush1.msra.mxu0 %v423
    %4241 = vmatprep.subr.mxu0 %v430
    %4242 = vmatpush1.msra.mxu0 %v429
    %4243 = vmatprep.subr.mxu0 %v436
    %4244 = vmatpush1.msra.mxu0 %v435
    %4245 = vmatprep.subr.mxu0 %v442
    %4246 = vmatpush1.msra.mxu0 %v441
    %4247 = vmatprep.subr.mxu0 %v448
    %4248 = vmatpush1.msra.mxu0 %v447
    %4249 = vmatprep.subr.mxu0 %v454
    %4250 = vmatpush1.msra.mxu0 %v453
    %4251 = vmatprep.subr.mxu0 %v460
    %4252 = vmatpush1.msra.mxu0 %v459
    %4253 = vmatprep.subr.mxu0 %v466
    %4254 = vmatpush1.msra.mxu0 %v465
    %4255 = vmatprep.subr.mxu0 %v472
    %4256 = vmatpush1.msra.mxu0 %v471
    %4257 = vmatprep.subr.mxu0 %v478
    %4258 = vmatpush1.msra.mxu0 %v477
    %4259 = vmatprep.subr.mxu0 %v484
    %4260 = vmatpush1.msra.mxu0 %v483
    %4261 = vmatprep.subr.mxu0 %v490
    %4262 = vmatpush1.msra.mxu0 %v489
    %4263 = vmatprep.subr.mxu0 %v496
    %4264 = vmatpush1.msra.mxu0 %v495
    %4265 = vmatprep.subr.mxu0 %v502
    %4266 = vmatpush1.msra.mxu0 %v501
    %4267 = vmatprep.subr.mxu0 %v508
    %4268 = vmatpush1.msra.mxu0 %v507
    %4269 = vmatprep.subr.mxu0 %v514
    %4270 = vmatpush1.msra.mxu0 %v513
    %4271 = vmatprep.subr.mxu0 %v520
    %4272 = vmatpush1.msra.mxu0 %v519
    %4273 = vmatprep.subr.mxu0 %v526
    %4274 = vmatpush1.msra.mxu0 %v525
    %4275 = vmatprep.subr.mxu0 %v532
    %4276 = vmatpush1.msra.mxu0 %v531
    %4277 = vmatprep.subr.mxu0 %v538
    %4278 = vmatpush1.msra.mxu0 %v537
    %4279 = vmatprep.subr.mxu0 %v544
    %4280 = vmatpush1.msra.mxu0 %v543
    %4281 = vmatprep.subr.mxu0 %v550
    %4282 = vmatpush1.msra.mxu0 %v549
    %4283 = vmatprep.subr.mxu0 %v556
    %4284 = vmatpush1.msra.mxu0 %v555
    %4285 = vmatprep.subr.mxu0 %v562
    %4286 = vmatpush1.msra.mxu0 %v561
    %4287 = vmatprep.subr.mxu0 %v568
    %4288 = vmatpush1.msra.mxu0 %v567
    %4289 = vmatprep.mubr.f32.mxu0 %v3652
    %4290 = vmatmul.mubr.f32.gmra.mrb[0].mxu0 %v3651
    %v4291 = vpop.f32.mrb[0].mxu0
    %v4292 = vadd.f32 0.0, %v4291
    %v4293 = vpop.f32.mrb[0].mxu0
    %v4294 = vadd.f32 0.0, %v4293
    %4295 = vdwg.mxu0
    %4296 = vmatprep.subr.mxu0 %v384
    %4297 = vmatpush1.msra.mxu0 %v383
    %4298 = vmatprep.subr.mxu0 %v390
    %4299 = vmatpush1.msra.mxu0 %v389
    %4300 = vmatprep.subr.mxu0 %v396
    %4301 = vmatpush1.msra.mxu0 %v395
    %4302 = vmatprep.subr.mxu0 %v402
    %4303 = vmatpush1.msra.mxu0 %v401
    %4304 = vmatprep.subr.mxu0 %v408
    %4305 = vmatpush1.msra.mxu0 %v407
    %4306 = vmatprep.subr.mxu0 %v414
    %4307 = vmatpush1.msra.mxu0 %v413
    %4308 = vmatprep.subr.mxu0 %v420
    %4309 = vmatpush1.msra.mxu0 %v419
    %4310 = vmatprep.subr.mxu0 %v426
    %4311 = vmatpush1.msra.mxu0 %v425
    %4312 = vmatprep.subr.mxu0 %v432
    %4313 = vmatpush1.msra.mxu0 %v431
    %4314 = vmatprep.subr.mxu0 %v438
    %4315 = vmatpush1.msra.mxu0 %v437
    %4316 = vmatprep.subr.mxu0 %v444
    %4317 = vmatpush1.msra.mxu0 %v443
    %4318 = vmatprep.subr.mxu0 %v450
    %4319 = vmatpush1.msra.mxu0 %v449
    %4320 = vmatprep.subr.mxu0 %v456
    %4321 = vmatpush1.msra.mxu0 %v455
    %4322 = vmatprep.subr.mxu0 %v462
    %4323 = vmatpush1.msra.mxu0 %v461
    %4324 = vmatprep.subr.mxu0 %v468
    %4325 = vmatpush1.msra.mxu0 %v467
    %4326 = vmatprep.subr.mxu0 %v474
    %4327 = vmatpush1.msra.mxu0 %v473
    %4328 = vmatprep.subr.mxu0 %v480
    %4329 = vmatpush1.msra.mxu0 %v479
    %4330 = vmatprep.subr.mxu0 %v486
    %4331 = vmatpush1.msra.mxu0 %v485
    %4332 = vmatprep.subr.mxu0 %v492
    %4333 = vmatpush1.msra.mxu0 %v491
    %4334 = vmatprep.subr.mxu0 %v498
    %4335 = vmatpush1.msra.mxu0 %v497
    %4336 = vmatprep.subr.mxu0 %v504
    %4337 = vmatpush1.msra.mxu0 %v503
    %4338 = vmatprep.subr.mxu0 %v510
    %4339 = vmatpush1.msra.mxu0 %v509
    %4340 = vmatprep.subr.mxu0 %v516
    %4341 = vmatpush1.msra.mxu0 %v515
    %4342 = vmatprep.subr.mxu0 %v522
    %4343 = vmatpush1.msra.mxu0 %v521
    %4344 = vmatprep.subr.mxu0 %v528
    %4345 = vmatpush1.msra.mxu0 %v527
    %4346 = vmatprep.subr.mxu0 %v534
    %4347 = vmatpush1.msra.mxu0 %v533
    %4348 = vmatprep.subr.mxu0 %v540
    %4349 = vmatpush1.msra.mxu0 %v539
    %4350 = vmatprep.subr.mxu0 %v546
    %4351 = vmatpush1.msra.mxu0 %v545
    %4352 = vmatprep.subr.mxu0 %v552
    %4353 = vmatpush1.msra.mxu0 %v551
    %4354 = vmatprep.subr.mxu0 %v558
    %4355 = vmatpush1.msra.mxu0 %v557
    %4356 = vmatprep.subr.mxu0 %v564
    %4357 = vmatpush1.msra.mxu0 %v563
    %4358 = vmatprep.subr.mxu0 %v570
    %4359 = vmatpush1.msra.mxu0 %v569
    %4360 = vmatprep.mubr.f32.mxu0 %v3652
    %4361 = vmatmul.mubr.f32.gmra.mrb[0].mxu0 %v3651
    %v4362 = vpop.f32.mrb[0].mxu0
    %v4363 = vadd.f32 0.0, %v4362
    %v4364 = vpop.f32.mrb[0].mxu0
    %v4365 = vadd.f32 0.0, %v4364
    %4366 = vdwg.mxu0
    %v4367 = vadd.f32 %v209, %v4221
    %v4368 = vadd.f32 %v211, %v4223
    %v4369 = vadd.f32 %v292, %v4292
    %v4370 = vadd.f32 %v294, %v4294
    %v4371 = vadd.f32 %v4367, %v1182
    %v4372 = vadd.f32 %v4368, %v1186
    %v4373 = vadd.f32 %v4369, %v1190
    %v4374 = vadd.f32 %v4370, %v1194
    %v4375 = vxor.u32 %v4371, 2147483648
    %v4376 = vxor.u32 %v4372, 2147483648
    %v4377 = vxor.u32 %v4373, 2147483648
    %v4378 = vxor.u32 %v4374, 2147483648
    %v4379 = vmul.f32 %v4375, 1.442695
    %v4380 = vpow.pop %v4379
    %v4381 = vmul.f32 %v4376, 1.442695
    %v4382 = vpow.pop %v4381
    %v4383 = vmul.f32 %v4377, 1.442695
    %v4384 = vpow.pop %v4383
    %v4385 = vmul.f32 %v4378, 1.442695
    %v4386 = vpow.pop %v4385
    %v4387 = vadd.f32 %v4380, 1.0
    %v4388 = vadd.f32 %v4382, 1.0
    %v4389 = vadd.f32 %v4384, 1.0
    %v4390 = vadd.f32 %v4386, 1.0
    %v4391 = vrcp.pop %v4387
    %v4392 = vmul.f32 1.0, %v4391
    %v4393 = vrcp.pop %v4388
    %v4394 = vmul.f32 1.0, %v4393
    %v4395 = vrcp.pop %v4389
    %v4396 = vmul.f32 1.0, %v4395
    %v4397 = vrcp.pop %v4390
    %v4398 = vmul.f32 1.0, %v4397
    %v4399 = vadd.f32 %v375, %v1231
    %v4400 = vadd.f32 %v377, %v1235
    %v4401 = vadd.f32 %v4363, %v1244
    %v4402 = vadd.f32 %v4365, %v1248
    %v4403 = vmul.f32 %v4392, %v4401
    %v4404 = vmul.f32 %v4394, %v4402
    %v4405 = vadd.f32 %v4399, %v4403
    %v4406 = vadd.f32 %v4400, %v4404
    %v4407 = vtanh.pop %v4405
    %v4408 = vtanh.pop %v4406
    %v4409 = vsub.f32 1.0, %v4396
    %v4410 = vsub.f32 1.0, %v4398
    %v4411 = vmul.f32 %v4409, %v4407
    %v4412 = vmul.f32 %v4410, %v4408
    %v4413 = vmul.f32 %v4396, %v3651
    %v4414 = vmul.f32 %v4398, %v3652
    %v4415 = vadd.f32 %v4411, %v4413
    %v4416 = vadd.f32 %v4412, %v4414
    %4417 = vmatprep.subr.mxu0 %v572
    %4418 = vmatpush1.msra.mxu0 %v571
    %4419 = vmatprep.subr.mxu0 %v578
    %4420 = vmatpush1.msra.mxu0 %v577
    %4421 = vmatprep.subr.mxu0 %v584
    %4422 = vmatpush1.msra.mxu0 %v583
    %4423 = vmatprep.subr.mxu0 %v590
    %4424 = vmatpush1.msra.mxu0 %v589
    %4425 = vmatprep.subr.mxu0 %v596
    %4426 = vmatpush1.msra.mxu0 %v595
    %4427 = vmatprep.subr.mxu0 %v602
    %4428 = vmatpush1.msra.mxu0 %v601
    %4429 = vmatprep.subr.mxu0 %v608
    %4430 = vmatpush1.msra.mxu0 %v607
    %4431 = vmatprep.subr.mxu0 %v614
    %4432 = vmatpush1.msra.mxu0 %v613
    %4433 = vmatprep.subr.mxu0 %v620
    %4434 = vmatpush1.msra.mxu0 %v619
    %4435 = vmatprep.subr.mxu0 %v626
    %4436 = vmatpush1.msra.mxu0 %v625
    %4437 = vmatprep.subr.mxu0 %v632
    %4438 = vmatpush1.msra.mxu0 %v631
    %4439 = vmatprep.subr.mxu0 %v638
    %4440 = vmatpush1.msra.mxu0 %v637
    %4441 = vmatprep.subr.mxu0 %v644
    %4442 = vmatpush1.msra.mxu0 %v643
    %4443 = vmatprep.subr.mxu0 %v650
    %4444 = vmatpush1.msra.mxu0 %v649
    %4445 = vmatprep.subr.mxu0 %v656
    %4446 = vmatpush1.msra.mxu0 %v655
    %4447 = vmatprep.subr.mxu0 %v662
    %4448 = vmatpush1.msra.mxu0 %v661
    %4449 = vmatprep.subr.mxu0 %v668
    %4450 = vmatpush1.msra.mxu0 %v667
    %4451 = vmatprep.subr.mxu0 %v674
    %4452 = vmatpush1.msra.mxu0 %v673
    %4453 = vmatprep.subr.mxu0 %v680
    %4454 = vmatpush1.msra.mxu0 %v679
    %4455 = vmatprep.subr.mxu0 %v686
    %4456 = vmatpush1.msra.mxu0 %v685
    %4457 = vmatprep.subr.mxu0 %v692
    %4458 = vmatpush1.msra.mxu0 %v691
    %4459 = vmatprep.subr.mxu0 %v698
    %4460 = vmatpush1.msra.mxu0 %v697
    %4461 = vmatprep.subr.mxu0 %v704
    %4462 = vmatpush1.msra.mxu0 %v703
    %4463 = vmatprep.subr.mxu0 %v710
    %4464 = vmatpush1.msra.mxu0 %v709
    %4465 = vmatprep.subr.mxu0 %v716
    %4466 = vmatpush1.msra.mxu0 %v715
    %4467 = vmatprep.subr.mxu0 %v722
    %4468 = vmatpush1.msra.mxu0 %v721
    %4469 = vmatprep.subr.mxu0 %v728
    %4470 = vmatpush1.msra.mxu0 %v727
    %4471 = vmatprep.subr.mxu0 %v734
    %4472 = vmatpush1.msra.mxu0 %v733
    %4473 = vmatprep.subr.mxu0 %v740
    %4474 = vmatpush1.msra.mxu0 %v739
    %4475 = vmatprep.subr.mxu0 %v746
    %4476 = vmatpush1.msra.mxu0 %v745
    %4477 = vmatprep.subr.mxu0 %v752
    %4478 = vmatpush1.msra.mxu0 %v751
    %4479 = vmatprep.subr.mxu0 %v758
    %4480 = vmatpush1.msra.mxu0 %v757
    %4481 = vmatprep.mubr.f32.mxu0 %v4416
    %4482 = vmatmul.mubr.f32.gmra.mrb[0].mxu0 %v4415
    %v4483 = vpop.f32.mrb[0].mxu0
    %v4484 = vadd.f32 0.0, %v4483
    %v4485 = vpop.f32.mrb[0].mxu0
    %v4486 = vadd.f32 0.0, %v4485
    %4487 = vdwg.mxu0
    %4488 = vmatprep.subr.mxu0 %v574
    %4489 = vmatpush1.msra.mxu0 %v573
    %4490 = vmatprep.subr.mxu0 %v580
    %4491 = vmatpush1.msra.mxu0 %v579
    %4492 = vmatprep.subr.mxu0 %v586
    %4493 = vmatpush1.msra.mxu0 %v585
    %4494 = vmatprep.subr.mxu0 %v592
    %4495 = vmatpush1.msra.mxu0 %v591
    %4496 = vmatprep.subr.mxu0 %v598
    %4497 = vmatpush1.msra.mxu0 %v597
    %4498 = vmatprep.subr.mxu0 %v604
    %4499 = vmatpush1.msra.mxu0 %v603
    %4500 = vmatprep.subr.mxu0 %v610
    %4501 = vmatpush1.msra.mxu0 %v609
    %4502 = vmatprep.subr.mxu0 %v616
    %4503 = vmatpush1.msra.mxu0 %v615
    %4504 = vmatprep.subr.mxu0 %v622
    %4505 = vmatpush1.msra.mxu0 %v621
    %4506 = vmatprep.subr.mxu0 %v628
    %4507 = vmatpush1.msra.mxu0 %v627
    %4508 = vmatprep.subr.mxu0 %v634
    %4509 = vmatpush1.msra.mxu0 %v633
    %4510 = vmatprep.subr.mxu0 %v640
    %4511 = vmatpush1.msra.mxu0 %v639
    %4512 = vmatprep.subr.mxu0 %v646
    %4513 = vmatpush1.msra.mxu0 %v645
    %4514 = vmatprep.subr.mxu0 %v652
    %4515 = vmatpush1.msra.mxu0 %v651
    %4516 = vmatprep.subr.mxu0 %v658
    %4517 = vmatpush1.msra.mxu0 %v657
    %4518 = vmatprep.subr.mxu0 %v664
    %4519 = vmatpush1.msra.mxu0 %v663
    %4520 = vmatprep.subr.mxu0 %v670
    %4521 = vmatpush1.msra.mxu0 %v669
    %4522 = vmatprep.subr.mxu0 %v676
    %4523 = vmatpush1.msra.mxu0 %v675
    %4524 = vmatprep.subr.mxu0 %v682
    %4525 = vmatpush1.msra.mxu0 %v681
    %4526 = vmatprep.subr.mxu0 %v688
    %4527 = vmatpush1.msra.mxu0 %v687
    %4528 = vmatprep.subr.mxu0 %v694
    %4529 = vmatpush1.msra.mxu0 %v693
    %4530 = vmatprep.subr.mxu0 %v700
    %4531 = vmatpush1.msra.mxu0 %v699
    %4532 = vmatprep.subr.mxu0 %v706
    %4533 = vmatpush1.msra.mxu0 %v705
    %4534 = vmatprep.subr.mxu0 %v712
    %4535 = vmatpush1.msra.mxu0 %v711
    %4536 = vmatprep.subr.mxu0 %v718
    %4537 = vmatpush1.msra.mxu0 %v717
    %4538 = vmatprep.subr.mxu0 %v724
    %4539 = vmatpush1.msra.mxu0 %v723
    %4540 = vmatprep.subr.mxu0 %v730
    %4541 = vmatpush1.msra.mxu0 %v729
    %4542 = vmatprep.subr.mxu0 %v736
    %4543 = vmatpush1.msra.mxu0 %v735
    %4544 = vmatprep.subr.mxu0 %v742
    %4545 = vmatpush1.msra.mxu0 %v741
    %4546 = vmatprep.subr.mxu0 %v748
    %4547 = vmatpush1.msra.mxu0 %v747
    %4548 = vmatprep.subr.mxu0 %v754
    %4549 = vmatpush1.msra.mxu0 %v753
    %4550 = vmatprep.subr.mxu0 %v760
    %4551 = vmatpush1.msra.mxu0 %v759
    %4552 = vmatprep.mubr.f32.mxu0 %v4416
    %4553 = vmatmul.mubr.f32.gmra.mrb[0].mxu0 %v4415
    %v4554 = vpop.f32.mrb[0].mxu0
    %v4555 = vadd.f32 0.0, %v4554
    %v4556 = vpop.f32.mrb[0].mxu0
    %v4557 = vadd.f32 0.0, %v4556
    %4558 = vdwg.mxu0
    %4559 = vmatprep.subr.mxu0 %v576
    %4560 = vmatpush1.msra.mxu0 %v575
    %4561 = vmatprep.subr.mxu0 %v582
    %4562 = vmatpush1.msra.mxu0 %v581
    %4563 = vmatprep.subr.mxu0 %v588
    %4564 = vmatpush1.msra.mxu0 %v587
    %4565 = vmatprep.subr.mxu0 %v594
    %4566 = vmatpush1.msra.mxu0 %v593
    %4567 = vmatprep.subr.mxu0 %v600
    %4568 = vmatpush1.msra.mxu0 %v599
    %4569 = vmatprep.subr.mxu0 %v606
    %4570 = vmatpush1.msra.mxu0 %v605
    %4571 = vmatprep.subr.mxu0 %v612
    %4572 = vmatpush1.msra.mxu0 %v611
    %4573 = vmatprep.subr.mxu0 %v618
    %4574 = vmatpush1.msra.mxu0 %v617
    %4575 = vmatprep.subr.mxu0 %v624
    %4576 = vmatpush1.msra.mxu0 %v623
    %4577 = vmatprep.subr.mxu0 %v630
    %4578 = vmatpush1.msra.mxu0 %v629
    %4579 = vmatprep.subr.mxu0 %v636
    %4580 = vmatpush1.msra.mxu0 %v635
    %4581 = vmatprep.subr.mxu0 %v642
    %4582 = vmatpush1.msra.mxu0 %v641
    %4583 = vmatprep.subr.mxu0 %v648
    %4584 = vmatpush1.msra.mxu0 %v647
    %4585 = vmatprep.subr.mxu0 %v654
    %4586 = vmatpush1.msra.mxu0 %v653
    %4587 = vmatprep.subr.mxu0 %v660
    %4588 = vmatpush1.msra.mxu0 %v659
    %4589 = vmatprep.subr.mxu0 %v666
    %4590 = vmatpush1.msra.mxu0 %v665
    %4591 = vmatprep.subr.mxu0 %v672
    %4592 = vmatpush1.msra.mxu0 %v671
    %4593 = vmatprep.subr.mxu0 %v678
    %4594 = vmatpush1.msra.mxu0 %v677
    %4595 = vmatprep.subr.mxu0 %v684
    %4596 = vmatpush1.msra.mxu0 %v683
    %4597 = vmatprep.subr.mxu0 %v690
    %4598 = vmatpush1.msra.mxu0 %v689
    %4599 = vmatprep.subr.mxu0 %v696
    %4600 = vmatpush1.msra.mxu0 %v695
    %4601 = vmatprep.subr.mxu0 %v702
    %4602 = vmatpush1.msra.mxu0 %v701
    %4603 = vmatprep.subr.mxu0 %v708
    %4604 = vmatpush1.msra.mxu0 %v707
    %4605 = vmatprep.subr.mxu0 %v714
    %4606 = vmatpush1.msra.mxu0 %v713
    %4607 = vmatprep.subr.mxu0 %v720
    %4608 = vmatpush1.msra.mxu0 %v719
    %4609 = vmatprep.subr.mxu0 %v726
    %4610 = vmatpush1.msra.mxu0 %v725
    %4611 = vmatprep.subr.mxu0 %v732
    %4612 = vmatpush1.msra.mxu0 %v731
    %4613 = vmatprep.subr.mxu0 %v738
    %4614 = vmatpush1.msra.mxu0 %v737
    %4615 = vmatprep.subr.mxu0 %v744
    %4616 = vmatpush1.msra.mxu0 %v743
    %4617 = vmatprep.subr.mxu0 %v750
    %4618 = vmatpush1.msra.mxu0 %v749
    %4619 = vmatprep.subr.mxu0 %v756
    %4620 = vmatpush1.msra.mxu0 %v755
    %4621 = vmatprep.subr.mxu0 %v762
    %4622 = vmatpush1.msra.mxu0 %v761
    %4623 = vmatprep.mubr.f32.mxu0 %v4416
    %4624 = vmatmul.mubr.f32.gmra.mrb[0].mxu0 %v4415
    %v4625 = vpop.f32.mrb[0].mxu0
    %v4626 = vadd.f32 0.0, %v4625
    %v4627 = vpop.f32.mrb[0].mxu0
    %v4628 = vadd.f32 0.0, %v4627
    %4629 = vdwg.mxu0
    %4630 = vmatprep.subr.mxu0 %v764
    %4631 = vmatpush1.msra.mxu0 %v763
    %4632 = vmatprep.subr.mxu0 %v770
    %4633 = vmatpush1.msra.mxu0 %v769
    %4634 = vmatprep.subr.mxu0 %v776
    %4635 = vmatpush1.msra.mxu0 %v775
    %4636 = vmatprep.subr.mxu0 %v782
    %4637 = vmatpush1.msra.mxu0 %v781
    %4638 = vmatprep.subr.mxu0 %v788
    %4639 = vmatpush1.msra.mxu0 %v787
    %4640 = vmatprep.subr.mxu0 %v794
    %4641 = vmatpush1.msra.mxu0 %v793
    %4642 = vmatprep.subr.mxu0 %v800
    %4643 = vmatpush1.msra.mxu0 %v799
    %4644 = vmatprep.subr.mxu0 %v806
    %4645 = vmatpush1.msra.mxu0 %v805
    %4646 = vmatprep.subr.mxu0 %v812
    %4647 = vmatpush1.msra.mxu0 %v811
    %4648 = vmatprep.subr.mxu0 %v818
    %4649 = vmatpush1.msra.mxu0 %v817
    %4650 = vmatprep.subr.mxu0 %v824
    %4651 = vmatpush1.msra.mxu0 %v823
    %4652 = vmatprep.subr.mxu0 %v830
    %4653 = vmatpush1.msra.mxu0 %v829
    %4654 = vmatprep.subr.mxu0 %v836
    %4655 = vmatpush1.msra.mxu0 %v835
    %4656 = vmatprep.subr.mxu0 %v842
    %4657 = vmatpush1.msra.mxu0 %v841
    %4658 = vmatprep.subr.mxu0 %v848
    %4659 = vmatpush1.msra.mxu0 %v847
    %4660 = vmatprep.subr.mxu0 %v854
    %4661 = vmatpush1.msra.mxu0 %v853
    %4662 = vmatprep.subr.mxu0 %v860
    %4663 = vmatpush1.msra.mxu0 %v859
    %4664 = vmatprep.subr.mxu0 %v866
    %4665 = vmatpush1.msra.mxu0 %v865
    %4666 = vmatprep.subr.mxu0 %v872
    %4667 = vmatpush1.msra.mxu0 %v871
    %4668 = vmatprep.subr.mxu0 %v878
    %4669 = vmatpush1.msra.mxu0 %v877
    %4670 = vmatprep.subr.mxu0 %v884
    %4671 = vmatpush1.msra.mxu0 %v883
    %4672 = vmatprep.subr.mxu0 %v890
    %4673 = vmatpush1.msra.mxu0 %v889
    %4674 = vmatprep.subr.mxu0 %v896
    %4675 = vmatpush1.msra.mxu0 %v895
    %4676 = vmatprep.subr.mxu0 %v902
    %4677 = vmatpush1.msra.mxu0 %v901
    %4678 = vmatprep.subr.mxu0 %v908
    %4679 = vmatpush1.msra.mxu0 %v907
    %4680 = vmatprep.subr.mxu0 %v914
    %4681 = vmatpush1.msra.mxu0 %v913
    %4682 = vmatprep.subr.mxu0 %v920
    %4683 = vmatpush1.msra.mxu0 %v919
    %4684 = vmatprep.subr.mxu0 %v926
    %4685 = vmatpush1.msra.mxu0 %v925
    %4686 = vmatprep.subr.mxu0 %v932
    %4687 = vmatpush1.msra.mxu0 %v931
    %4688 = vmatprep.subr.mxu0 %v938
    %4689 = vmatpush1.msra.mxu0 %v937
    %4690 = vmatprep.subr.mxu0 %v944
    %4691 = vmatpush1.msra.mxu0 %v943
    %4692 = vmatprep.subr.mxu0 %v950
    %4693 = vmatpush1.msra.mxu0 %v949
    %4694 = vmatprep.mubr.f32.mxu0 %v4130
    %4695 = vmatmul.mubr.f32.gmra.mrb[0].mxu0 %v4129
    %v4696 = vpop.f32.mrb[0].mxu0
    %v4697 = vadd.f32 0.0, %v4696
    %v4698 = vpop.f32.mrb[0].mxu0
    %v4699 = vadd.f32 0.0, %v4698
    %4700 = vdwg.mxu0
    %4701 = vmatprep.subr.mxu0 %v766
    %4702 = vmatpush1.msra.mxu0 %v765
    %4703 = vmatprep.subr.mxu0 %v772
    %4704 = vmatpush1.msra.mxu0 %v771
    %4705 = vmatprep.subr.mxu0 %v778
    %4706 = vmatpush1.msra.mxu0 %v777
    %4707 = vmatprep.subr.mxu0 %v784
    %4708 = vmatpush1.msra.mxu0 %v783
    %4709 = vmatprep.subr.mxu0 %v790
    %4710 = vmatpush1.msra.mxu0 %v789
    %4711 = vmatprep.subr.mxu0 %v796
    %4712 = vmatpush1.msra.mxu0 %v795
    %4713 = vmatprep.subr.mxu0 %v802
    %4714 = vmatpush1.msra.mxu0 %v801
    %4715 = vmatprep.subr.mxu0 %v808
    %4716 = vmatpush1.msra.mxu0 %v807
    %4717 = vmatprep.subr.mxu0 %v814
    %4718 = vmatpush1.msra.mxu0 %v813
    %4719 = vmatprep.subr.mxu0 %v820
    %4720 = vmatpush1.msra.mxu0 %v819
    %4721 = vmatprep.subr.mxu0 %v826
    %4722 = vmatpush1.msra.mxu0 %v825
    %4723 = vmatprep.subr.mxu0 %v832
    %4724 = vmatpush1.msra.mxu0 %v831
    %4725 = vmatprep.subr.mxu0 %v838
    %4726 = vmatpush1.msra.mxu0 %v837
    %4727 = vmatprep.subr.mxu0 %v844
    %4728 = vmatpush1.msra.mxu0 %v843
    %4729 = vmatprep.subr.mxu0 %v850
    %4730 = vmatpush1.msra.mxu0 %v849
    %4731 = vmatprep.subr.mxu0 %v856
    %4732 = vmatpush1.msra.mxu0 %v855
    %4733 = vmatprep.subr.mxu0 %v862
    %4734 = vmatpush1.msra.mxu0 %v861
    %4735 = vmatprep.subr.mxu0 %v868
    %4736 = vmatpush1.msra.mxu0 %v867
    %4737 = vmatprep.subr.mxu0 %v874
    %4738 = vmatpush1.msra.mxu0 %v873
    %4739 = vmatprep.subr.mxu0 %v880
    %4740 = vmatpush1.msra.mxu0 %v879
    %4741 = vmatprep.subr.mxu0 %v886
    %4742 = vmatpush1.msra.mxu0 %v885
    %4743 = vmatprep.subr.mxu0 %v892
    %4744 = vmatpush1.msra.mxu0 %v891
    %4745 = vmatprep.subr.mxu0 %v898
    %4746 = vmatpush1.msra.mxu0 %v897
    %4747 = vmatprep.subr.mxu0 %v904
    %4748 = vmatpush1.msra.mxu0 %v903
    %4749 = vmatprep.subr.mxu0 %v910
    %4750 = vmatpush1.msra.mxu0 %v909
    %4751 = vmatprep.subr.mxu0 %v916
    %4752 = vmatpush1.msra.mxu0 %v915
    %4753 = vmatprep.subr.mxu0 %v922
    %4754 = vmatpush1.msra.mxu0 %v921
    %4755 = vmatprep.subr.mxu0 %v928
    %4756 = vmatpush1.msra.mxu0 %v927
    %4757 = vmatprep.subr.mxu0 %v934
    %4758 = vmatpush1.msra.mxu0 %v933
    %4759 = vmatprep.subr.mxu0 %v940
    %4760 = vmatpush1.msra.mxu0 %v939
    %4761 = vmatprep.subr.mxu0 %v946
    %4762 = vmatpush1.msra.mxu0 %v945
    %4763 = vmatprep.subr.mxu0 %v952
    %4764 = vmatpush1.msra.mxu0 %v951
    %4765 = vmatprep.mubr.f32.mxu0 %v4130
    %4766 = vmatmul.mubr.f32.gmra.mrb[0].mxu0 %v4129
    %v4767 = vpop.f32.mrb[0].mxu0
    %v4768 = vadd.f32 0.0, %v4767
    %v4769 = vpop.f32.mrb[0].mxu0
    %v4770 = vadd.f32 0.0, %v4769
    %4771 = vdwg.mxu0
    %4772 = vmatprep.subr.mxu0 %v768
    %4773 = vmatpush1.msra.mxu0 %v767
    %4774 = vmatprep.subr.mxu0 %v774
    %4775 = vmatpush1.msra.mxu0 %v773
    %4776 = vmatprep.subr.mxu0 %v780
    %4777 = vmatpush1.msra.mxu0 %v779
    %4778 = vmatprep.subr.mxu0 %v786
    %4779 = vmatpush1.msra.mxu0 %v785
    %4780 = vmatprep.subr.mxu0 %v792
    %4781 = vmatpush1.msra.mxu0 %v791
    %4782 = vmatprep.subr.mxu0 %v798
    %4783 = vmatpush1.msra.mxu0 %v797
    %4784 = vmatprep.subr.mxu0 %v804
    %4785 = vmatpush1.msra.mxu0 %v803
    %4786 = vmatprep.subr.mxu0 %v810
    %4787 = vmatpush1.msra.mxu0 %v809
    %4788 = vmatprep.subr.mxu0 %v816
    %4789 = vmatpush1.msra.mxu0 %v815
    %4790 = vmatprep.subr.mxu0 %v822
    %4791 = vmatpush1.msra.mxu0 %v821
    %4792 = vmatprep.subr.mxu0 %v828
    %4793 = vmatpush1.msra.mxu0 %v827
    %4794 = vmatprep.subr.mxu0 %v834
    %4795 = vmatpush1.msra.mxu0 %v833
    %4796 = vmatprep.subr.mxu0 %v840
    %4797 = vmatpush1.msra.mxu0 %v839
    %4798 = vmatprep.subr.mxu0 %v846
    %4799 = vmatpush1.msra.mxu0 %v845
    %4800 = vmatprep.subr.mxu0 %v852
    %4801 = vmatpush1.msra.mxu0 %v851
    %4802 = vmatprep.subr.mxu0 %v858
    %4803 = vmatpush1.msra.mxu0 %v857
    %4804 = vmatprep.subr.mxu0 %v864
    %4805 = vmatpush1.msra.mxu0 %v863
    %4806 = vmatprep.subr.mxu0 %v870
    %4807 = vmatpush1.msra.mxu0 %v869
    %4808 = vmatprep.subr.mxu0 %v876
    %4809 = vmatpush1.msra.mxu0 %v875
    %4810 = vmatprep.subr.mxu0 %v882
    %4811 = vmatpush1.msra.mxu0 %v881
    %4812 = vmatprep.subr.mxu0 %v888
    %4813 = vmatpush1.msra.mxu0 %v887
    %4814 = vmatprep.subr.mxu0 %v894
    %4815 = vmatpush1.msra.mxu0 %v893
    %4816 = vmatprep.subr.mxu0 %v900
    %4817 = vmatpush1.msra.mxu0 %v899
    %4818 = vmatprep.subr.mxu0 %v906
    %4819 = vmatpush1.msra.mxu0 %v905
    %4820 = vmatprep.subr.mxu0 %v912
    %4821 = vmatpush1.msra.mxu0 %v911
    %4822 = vmatprep.subr.mxu0 %v918
    %4823 = vmatpush1.msra.mxu0 %v917
    %4824 = vmatprep.subr.mxu0 %v924
    %4825 = vmatpush1.msra.mxu0 %v923
    %4826 = vmatprep.subr.mxu0 %v930
    %4827 = vmatpush1.msra.mxu0 %v929
    %4828 = vmatprep.subr.mxu0 %v936
    %4829 = vmatpush1.msra.mxu0 %v935
    %4830 = vmatprep.subr.mxu0 %v942
    %4831 = vmatpush1.msra.mxu0 %v941
    %4832 = vmatprep.subr.mxu0 %v948
    %4833 = vmatpush1.msra.mxu0 %v947
    %4834 = vmatprep.subr.mxu0 %v954
    %4835 = vmatpush1.msra.mxu0 %v953
    %4836 = vmatprep.mubr.f32.mxu0 %v4130
    %4837 = vmatmul.mubr.f32.gmra.mrb[0].mxu0 %v4129
    %v4838 = vpop.f32.mrb[0].mxu0
    %v4839 = vadd.f32 0.0, %v4838
    %v4840 = vpop.f32.mrb[0].mxu0
    %v4841 = vadd.f32 0.0, %v4840
    %4842 = vdwg.mxu0
    %v4843 = vadd.f32 %v4484, %v4697
    %v4844 = vadd.f32 %v4486, %v4699
    %v4845 = vadd.f32 %v4555, %v4768
    %v4846 = vadd.f32 %v4557, %v4770
    %v4847 = vadd.f32 %v4843, %v1701
    %v4848 = vadd.f32 %v4844, %v1705
    %v4849 = vadd.f32 %v4845, %v1709
    %v4850 = vadd.f32 %v4846, %v1713
    %v4851 = vxor.u32 %v4847, 2147483648
    %v4852 = vxor.u32 %v4848, 2147483648
    %v4853 = vxor.u32 %v4849, 2147483648
    %v4854 = vxor.u32 %v4850, 2147483648
    %v4855 = vmul.f32 %v4851, 1.442695
    %v4856 = vpow.pop %v4855
    %v4857 = vmul.f32 %v4852, 1.442695
    %v4858 = vpow.pop %v4857
    %v4859 = vmul.f32 %v4853, 1.442695
    %v4860 = vpow.pop %v4859
    %v4861 = vmul.f32 %v4854, 1.442695
    %v4862 = vpow.pop %v4861
    %v4863 = vadd.f32 %v4856, 1.0
    %v4864 = vadd.f32 %v4858, 1.0
    %v4865 = vadd.f32 %v4860, 1.0
    %v4866 = vadd.f32 %v4862, 1.0
    %v4867 = vrcp.pop %v4863
    %v4868 = vmul.f32 1.0, %v4867
    %v4869 = vrcp.pop %v4864
    %v4870 = vmul.f32 1.0, %v4869
    %v4871 = vrcp.pop %v4865
    %v4872 = vmul.f32 1.0, %v4871
    %v4873 = vrcp.pop %v4866
    %v4874 = vmul.f32 1.0, %v4873
    %v4875 = vadd.f32 %v4626, %v1750
    %v4876 = vadd.f32 %v4628, %v1754
    %v4877 = vadd.f32 %v4839, %v1763
    %v4878 = vadd.f32 %v4841, %v1767
    %v4879 = vmul.f32 %v4868, %v4877
    %v4880 = vmul.f32 %v4870, %v4878
    %v4881 = vadd.f32 %v4875, %v4879
    %v4882 = vadd.f32 %v4876, %v4880
    %v4883 = vtanh.pop %v4881
    %v4884 = vtanh.pop %v4882
    %v4885 = vsub.f32 1.0, %v4872
    %v4886 = vsub.f32 1.0, %v4874
    %v4887 = vmul.f32 %v4885, %v4883
    %v4888 = vmul.f32 %v4886, %v4884
    %v4889 = vmul.f32 %v4872, %v4129
    %v4890 = vmul.f32 %v4874, %v4130
    %v4891 = vadd.f32 %v4887, %v4889
    %v4892 = vadd.f32 %v4888, %v4890
    %v4895 = vcombine.low %v4891, %v4892
    %v4897 = vunpack.c.l.s4 1966171168
    %v4898 = vunpack.c.0.s8 %v4897
    %v4899 = vlaneseq
    %v4900 = vshrl.u32 %v4899, 7
    %v4901 = vsub.s32 %v4898, %v4900
    %v4902 = vrot.slane %v4895, %v4901
    %v4903 = vcombine.high %v4902, %v4902
    %v4905 = vunpack.c.l.s4 1966171168
    %v4906 = vunpack.c.0.s8 %v4905
    %v4907 = vlaneseq
    %v4908 = vshrl.u32 %v4907, 7
    %v4909 = vsub.s32 %v4906, %v4908
    %v4910 = vrot.slane %v4903, %v4909
    %v4911 = vcombine.high %v4910, %v4910
    %s4913 = scalar_lea.vmem [#allocation2], 4
    %4914 = vst.msk [vmem:[%s4913] ss:$8 sm:$0x3] %vm1809, %v4911
    %4915 = vst.msk [vmem:[%s4913] ss:$8 sm:$0x0] %vm1809, %v4911
    %4916 = vmatprep.subr.mxu0 %v380
    %4917 = vmatpush1.msra.mxu0 %v379
    %4918 = vmatprep.subr.mxu0 %v386
    %4919 = vmatpush1.msra.mxu0 %v385
    %4920 = vmatprep.subr.mxu0 %v392
    %4921 = vmatpush1.msra.mxu0 %v391
    %4922 = vmatprep.subr.mxu0 %v398
    %4923 = vmatpush1.msra.mxu0 %v397
    %4924 = vmatprep.subr.mxu0 %v404
    %4925 = vmatpush1.msra.mxu0 %v403
    %4926 = vmatprep.subr.mxu0 %v410
    %4927 = vmatpush1.msra.mxu0 %v409
    %4928 = vmatprep.subr.mxu0 %v416
    %4929 = vmatpush1.msra.mxu0 %v415
    %4930 = vmatprep.subr.mxu0 %v422
    %4931 = vmatpush1.msra.mxu0 %v421
    %4932 = vmatprep.subr.mxu0 %v428
    %4933 = vmatpush1.msra.mxu0 %v427
    %4934 = vmatprep.subr.mxu0 %v434
    %4935 = vmatpush1.msra.mxu0 %v433
    %4936 = vmatprep.subr.mxu0 %v440
    %4937 = vmatpush1.msra.mxu0 %v439
    %4938 = vmatprep.subr.mxu0 %v446
    %4939 = vmatpush1.msra.mxu0 %v445
    %4940 = vmatprep.subr.mxu0 %v452
    %4941 = vmatpush1.msra.mxu0 %v451
    %4942 = vmatprep.subr.mxu0 %v458
    %4943 = vmatpush1.msra.mxu0 %v457
    %4944 = vmatprep.subr.mxu0 %v464
    %4945 = vmatpush1.msra.mxu0 %v463
    %4946 = vmatprep.subr.mxu0 %v470
    %4947 = vmatpush1.msra.mxu0 %v469
    %4948 = vmatprep.subr.mxu0 %v476
    %4949 = vmatpush1.msra.mxu0 %v475
    %4950 = vmatprep.subr.mxu0 %v482
    %4951 = vmatpush1.msra.mxu0 %v481
    %4952 = vmatprep.subr.mxu0 %v488
    %4953 = vmatpush1.msra.mxu0 %v487
    %4954 = vmatprep.subr.mxu0 %v494
    %4955 = vmatpush1.msra.mxu0 %v493
    %4956 = vmatprep.subr.mxu0 %v500
    %4957 = vmatpush1.msra.mxu0 %v499
    %4958 = vmatprep.subr.mxu0 %v506
    %4959 = vmatpush1.msra.mxu0 %v505
    %4960 = vmatprep.subr.mxu0 %v512
    %4961 = vmatpush1.msra.mxu0 %v511
    %4962 = vmatprep.subr.mxu0 %v518
    %4963 = vmatpush1.msra.mxu0 %v517
    %4964 = vmatprep.subr.mxu0 %v524
    %4965 = vmatpush1.msra.mxu0 %v523
    %4966 = vmatprep.subr.mxu0 %v530
    %4967 = vmatpush1.msra.mxu0 %v529
    %4968 = vmatprep.subr.mxu0 %v536
    %4969 = vmatpush1.msra.mxu0 %v535
    %4970 = vmatprep.subr.mxu0 %v542
    %4971 = vmatpush1.msra.mxu0 %v541
    %4972 = vmatprep.subr.mxu0 %v548
    %4973 = vmatpush1.msra.mxu0 %v547
    %4974 = vmatprep.subr.mxu0 %v554
    %4975 = vmatpush1.msra.mxu0 %v553
    %4976 = vmatprep.subr.mxu0 %v560
    %4977 = vmatpush1.msra.mxu0 %v559
    %4978 = vmatprep.subr.mxu0 %v566
    %4979 = vmatpush1.msra.mxu0 %v565
    %4980 = vmatprep.mubr.f32.mxu0 %v4416
    %4981 = vmatmul.mubr.f32.gmra.mrb[0].mxu0 %v4415
    %v4982 = vpop.f32.mrb[0].mxu0
    %v4983 = vadd.f32 0.0, %v4982
    %v4984 = vpop.f32.mrb[0].mxu0
    %v4985 = vadd.f32 0.0, %v4984
    %4986 = vdwg.mxu0
    %4987 = vmatprep.subr.mxu0 %v382
    %4988 = vmatpush1.msra.mxu0 %v381
    %4989 = vmatprep.subr.mxu0 %v388
    %4990 = vmatpush1.msra.mxu0 %v387
    %4991 = vmatprep.subr.mxu0 %v394
    %4992 = vmatpush1.msra.mxu0 %v393
    %4993 = vmatprep.subr.mxu0 %v400
    %4994 = vmatpush1.msra.mxu0 %v399
    %4995 = vmatprep.subr.mxu0 %v406
    %4996 = vmatpush1.msra.mxu0 %v405
    %4997 = vmatprep.subr.mxu0 %v412
    %4998 = vmatpush1.msra.mxu0 %v411
    %4999 = vmatprep.subr.mxu0 %v418
    %5000 = vmatpush1.msra.mxu0 %v417
    %5001 = vmatprep.subr.mxu0 %v424
    %5002 = vmatpush1.msra.mxu0 %v423
    %5003 = vmatprep.subr.mxu0 %v430
    %5004 = vmatpush1.msra.mxu0 %v429
    %5005 = vmatprep.subr.mxu0 %v436
    %5006 = vmatpush1.msra.mxu0 %v435
    %5007 = vmatprep.subr.mxu0 %v442
    %5008 = vmatpush1.msra.mxu0 %v441
    %5009 = vmatprep.subr.mxu0 %v448
    %5010 = vmatpush1.msra.mxu0 %v447
    %5011 = vmatprep.subr.mxu0 %v454
    %5012 = vmatpush1.msra.mxu0 %v453
    %5013 = vmatprep.subr.mxu0 %v460
    %5014 = vmatpush1.msra.mxu0 %v459
    %5015 = vmatprep.subr.mxu0 %v466
    %5016 = vmatpush1.msra.mxu0 %v465
    %5017 = vmatprep.subr.mxu0 %v472
    %5018 = vmatpush1.msra.mxu0 %v471
    %5019 = vmatprep.subr.mxu0 %v478
    %5020 = vmatpush1.msra.mxu0 %v477
    %5021 = vmatprep.subr.mxu0 %v484
    %5022 = vmatpush1.msra.mxu0 %v483
    %5023 = vmatprep.subr.mxu0 %v490
    %5024 = vmatpush1.msra.mxu0 %v489
    %5025 = vmatprep.subr.mxu0 %v496
    %5026 = vmatpush1.msra.mxu0 %v495
    %5027 = vmatprep.subr.mxu0 %v502
    %5028 = vmatpush1.msra.mxu0 %v501
    %5029 = vmatprep.subr.mxu0 %v508
    %5030 = vmatpush1.msra.mxu0 %v507
    %5031 = vmatprep.subr.mxu0 %v514
    %5032 = vmatpush1.msra.mxu0 %v513
    %5033 = vmatprep.subr.mxu0 %v520
    %5034 = vmatpush1.msra.mxu0 %v519
    %5035 = vmatprep.subr.mxu0 %v526
    %5036 = vmatpush1.msra.mxu0 %v525
    %5037 = vmatprep.subr.mxu0 %v532
    %5038 = vmatpush1.msra.mxu0 %v531
    %5039 = vmatprep.subr.mxu0 %v538
    %5040 = vmatpush1.msra.mxu0 %v537
    %5041 = vmatprep.subr.mxu0 %v544
    %5042 = vmatpush1.msra.mxu0 %v543
    %5043 = vmatprep.subr.mxu0 %v550
    %5044 = vmatpush1.msra.mxu0 %v549
    %5045 = vmatprep.subr.mxu0 %v556
    %5046 = vmatpush1.msra.mxu0 %v555
    %5047 = vmatprep.subr.mxu0 %v562
    %5048 = vmatpush1.msra.mxu0 %v561
    %5049 = vmatprep.subr.mxu0 %v568
    %5050 = vmatpush1.msra.mxu0 %v567
    %5051 = vmatprep.mubr.f32.mxu0 %v4416
    %5052 = vmatmul.mubr.f32.gmra.mrb[0].mxu0 %v4415
    %v5053 = vpop.f32.mrb[0].mxu0
    %v5054 = vadd.f32 0.0, %v5053
    %v5055 = vpop.f32.mrb[0].mxu0
    %v5056 = vadd.f32 0.0, %v5055
    %5057 = vdwg.mxu0
    %5058 = vmatprep.subr.mxu0 %v384
    %5059 = vmatpush1.msra.mxu0 %v383
    %5060 = vmatprep.subr.mxu0 %v390
    %5061 = vmatpush1.msra.mxu0 %v389
    %5062 = vmatprep.subr.mxu0 %v396
    %5063 = vmatpush1.msra.mxu0 %v395
    %5064 = vmatprep.subr.mxu0 %v402
    %5065 = vmatpush1.msra.mxu0 %v401
    %5066 = vmatprep.subr.mxu0 %v408
    %5067 = vmatpush1.msra.mxu0 %v407
    %5068 = vmatprep.subr.mxu0 %v414
    %5069 = vmatpush1.msra.mxu0 %v413
    %5070 = vmatprep.subr.mxu0 %v420
    %5071 = vmatpush1.msra.mxu0 %v419
    %5072 = vmatprep.subr.mxu0 %v426
    %5073 = vmatpush1.msra.mxu0 %v425
    %5074 = vmatprep.subr.mxu0 %v432
    %5075 = vmatpush1.msra.mxu0 %v431
    %5076 = vmatprep.subr.mxu0 %v438
    %5077 = vmatpush1.msra.mxu0 %v437
    %5078 = vmatprep.subr.mxu0 %v444
    %5079 = vmatpush1.msra.mxu0 %v443
    %5080 = vmatprep.subr.mxu0 %v450
    %5081 = vmatpush1.msra.mxu0 %v449
    %5082 = vmatprep.subr.mxu0 %v456
    %5083 = vmatpush1.msra.mxu0 %v455
    %5084 = vmatprep.subr.mxu0 %v462
    %5085 = vmatpush1.msra.mxu0 %v461
    %5086 = vmatprep.subr.mxu0 %v468
    %5087 = vmatpush1.msra.mxu0 %v467
    %5088 = vmatprep.subr.mxu0 %v474
    %5089 = vmatpush1.msra.mxu0 %v473
    %5090 = vmatprep.subr.mxu0 %v480
    %5091 = vmatpush1.msra.mxu0 %v479
    %5092 = vmatprep.subr.mxu0 %v486
    %5093 = vmatpush1.msra.mxu0 %v485
    %5094 = vmatprep.subr.mxu0 %v492
    %5095 = vmatpush1.msra.mxu0 %v491
    %5096 = vmatprep.subr.mxu0 %v498
    %5097 = vmatpush1.msra.mxu0 %v497
    %5098 = vmatprep.subr.mxu0 %v504
    %5099 = vmatpush1.msra.mxu0 %v503
    %5100 = vmatprep.subr.mxu0 %v510
    %5101 = vmatpush1.msra.mxu0 %v509
    %5102 = vmatprep.subr.mxu0 %v516
    %5103 = vmatpush1.msra.mxu0 %v515
    %5104 = vmatprep.subr.mxu0 %v522
    %5105 = vmatpush1.msra.mxu0 %v521
    %5106 = vmatprep.subr.mxu0 %v528
    %5107 = vmatpush1.msra.mxu0 %v527
    %5108 = vmatprep.subr.mxu0 %v534
    %5109 = vmatpush1.msra.mxu0 %v533
    %5110 = vmatprep.subr.mxu0 %v540
    %5111 = vmatpush1.msra.mxu0 %v539
    %5112 = vmatprep.subr.mxu0 %v546
    %5113 = vmatpush1.msra.mxu0 %v545
    %5114 = vmatprep.subr.mxu0 %v552
    %5115 = vmatpush1.msra.mxu0 %v551
    %5116 = vmatprep.subr.mxu0 %v558
    %5117 = vmatpush1.msra.mxu0 %v557
    %5118 = vmatprep.subr.mxu0 %v564
    %5119 = vmatpush1.msra.mxu0 %v563
    %5120 = vmatprep.subr.mxu0 %v570
    %5121 = vmatpush1.msra.mxu0 %v569
    %5122 = vmatprep.mubr.f32.mxu0 %v4416
    %5123 = vmatmul.mubr.f32.gmra.mrb[0].mxu0 %v4415
    %v5124 = vpop.f32.mrb[0].mxu0
    %v5125 = vadd.f32 0.0, %v5124
    %v5126 = vpop.f32.mrb[0].mxu0
    %v5127 = vadd.f32 0.0, %v5126
    %5128 = vdwg.mxu0
    %v5133 = vrot.slane %v4983, 4
    %v5134 = vrot.slane %v4985, 4
    %v5135 = vrot.slane %v5054, 4
    %v5136 = vrot.slane %v5056, 4
    %v5141 = vadd.f32 %v209, %v5133
    %v5142 = vadd.f32 %v211, %v5134
    %v5143 = vadd.f32 %v292, %v5135
    %v5144 = vadd.f32 %v294, %v5136
    %v5145 = vadd.f32 %v5141, %v1182
    %v5146 = vadd.f32 %v5142, %v1186
    %v5147 = vadd.f32 %v5143, %v1190
    %v5148 = vadd.f32 %v5144, %v1194
    %v5149 = vxor.u32 %v5145, 2147483648
    %v5150 = vxor.u32 %v5146, 2147483648
    %v5151 = vxor.u32 %v5147, 2147483648
    %v5152 = vxor.u32 %v5148, 2147483648
    %v5153 = vmul.f32 %v5149, 1.442695
    %v5154 = vpow.pop %v5153
    %v5155 = vmul.f32 %v5150, 1.442695
    %v5156 = vpow.pop %v5155
    %v5157 = vmul.f32 %v5151, 1.442695
    %v5158 = vpow.pop %v5157
    %v5159 = vmul.f32 %v5152, 1.442695
    %v5160 = vpow.pop %v5159
    %v5161 = vadd.f32 %v5154, 1.0
    %v5162 = vadd.f32 %v5156, 1.0
    %v5163 = vadd.f32 %v5158, 1.0
    %v5164 = vadd.f32 %v5160, 1.0
    %v5165 = vrcp.pop %v5161
    %v5166 = vmul.f32 1.0, %v5165
    %v5167 = vrcp.pop %v5162
    %v5168 = vmul.f32 1.0, %v5167
    %v5169 = vrcp.pop %v5163
    %v5170 = vmul.f32 1.0, %v5169
    %v5171 = vrcp.pop %v5164
    %v5172 = vmul.f32 1.0, %v5171
    %v5173 = vadd.f32 %v5125, %v1244
    %v5174 = vadd.f32 %v5127, %v1248
    %v5177 = vrot.slane %v5173, 4
    %v5178 = vrot.slane %v5174, 4
    %v5181 = vmul.f32 %v5166, %v5177
    %v5182 = vmul.f32 %v5168, %v5178
    %v5183 = vadd.f32 %v4399, %v5181
    %v5184 = vadd.f32 %v4400, %v5182
    %v5185 = vtanh.pop %v5183
    %v5186 = vtanh.pop %v5184
    %v5187 = vsub.f32 1.0, %v5170
    %v5188 = vsub.f32 1.0, %v5172
    %v5189 = vmul.f32 %v5187, %v5185
    %v5190 = vmul.f32 %v5188, %v5186
    %v5193 = vrot.slane %v4415, 4
    %v5194 = vrot.slane %v4416, 4
    %v5197 = vmul.f32 %v5170, %v5193
    %v5198 = vmul.f32 %v5172, %v5194
    %v5199 = vadd.f32 %v5189, %v5197
    %v5200 = vadd.f32 %v5190, %v5198
    %v5203 = vrot.slane %v5199, 4
    %v5204 = vrot.slane %v5200, 4
    %5207 = vmatprep.subr.mxu0 %v572
    %5208 = vmatpush1.msra.mxu0 %v571
    %5209 = vmatprep.subr.mxu0 %v578
    %5210 = vmatpush1.msra.mxu0 %v577
    %5211 = vmatprep.subr.mxu0 %v584
    %5212 = vmatpush1.msra.mxu0 %v583
    %5213 = vmatprep.subr.mxu0 %v590
    %5214 = vmatpush1.msra.mxu0 %v589
    %5215 = vmatprep.subr.mxu0 %v596
    %5216 = vmatpush1.msra.mxu0 %v595
    %5217 = vmatprep.subr.mxu0 %v602
    %5218 = vmatpush1.msra.mxu0 %v601
    %5219 = vmatprep.subr.mxu0 %v608
    %5220 = vmatpush1.msra.mxu0 %v607
    %5221 = vmatprep.subr.mxu0 %v614
    %5222 = vmatpush1.msra.mxu0 %v613
    %5223 = vmatprep.subr.mxu0 %v620
    %5224 = vmatpush1.msra.mxu0 %v619
    %5225 = vmatprep.subr.mxu0 %v626
    %5226 = vmatpush1.msra.mxu0 %v625
    %5227 = vmatprep.subr.mxu0 %v632
    %5228 = vmatpush1.msra.mxu0 %v631
    %5229 = vmatprep.subr.mxu0 %v638
    %5230 = vmatpush1.msra.mxu0 %v637
    %5231 = vmatprep.subr.mxu0 %v644
    %5232 = vmatpush1.msra.mxu0 %v643
    %5233 = vmatprep.subr.mxu0 %v650
    %5234 = vmatpush1.msra.mxu0 %v649
    %5235 = vmatprep.subr.mxu0 %v656
    %5236 = vmatpush1.msra.mxu0 %v655
    %5237 = vmatprep.subr.mxu0 %v662
    %5238 = vmatpush1.msra.mxu0 %v661
    %5239 = vmatprep.subr.mxu0 %v668
    %5240 = vmatpush1.msra.mxu0 %v667
    %5241 = vmatprep.subr.mxu0 %v674
    %5242 = vmatpush1.msra.mxu0 %v673
    %5243 = vmatprep.subr.mxu0 %v680
    %5244 = vmatpush1.msra.mxu0 %v679
    %5245 = vmatprep.subr.mxu0 %v686
    %5246 = vmatpush1.msra.mxu0 %v685
    %5247 = vmatprep.subr.mxu0 %v692
    %5248 = vmatpush1.msra.mxu0 %v691
    %5249 = vmatprep.subr.mxu0 %v698
    %5250 = vmatpush1.msra.mxu0 %v697
    %5251 = vmatprep.subr.mxu0 %v704
    %5252 = vmatpush1.msra.mxu0 %v703
    %5253 = vmatprep.subr.mxu0 %v710
    %5254 = vmatpush1.msra.mxu0 %v709
    %5255 = vmatprep.subr.mxu0 %v716
    %5256 = vmatpush1.msra.mxu0 %v715
    %5257 = vmatprep.subr.mxu0 %v722
    %5258 = vmatpush1.msra.mxu0 %v721
    %5259 = vmatprep.subr.mxu0 %v728
    %5260 = vmatpush1.msra.mxu0 %v727
    %5261 = vmatprep.subr.mxu0 %v734
    %5262 = vmatpush1.msra.mxu0 %v733
    %5263 = vmatprep.subr.mxu0 %v740
    %5264 = vmatpush1.msra.mxu0 %v739
    %5265 = vmatprep.subr.mxu0 %v746
    %5266 = vmatpush1.msra.mxu0 %v745
    %5267 = vmatprep.subr.mxu0 %v752
    %5268 = vmatpush1.msra.mxu0 %v751
    %5269 = vmatprep.subr.mxu0 %v758
    %5270 = vmatpush1.msra.mxu0 %v757
    %5271 = vmatprep.mubr.f32.mxu0 %v5204
    %5272 = vmatmul.mubr.f32.gmra.mrb[0].mxu0 %v5203
    %v5273 = vpop.f32.mrb[0].mxu0
    %v5274 = vadd.f32 0.0, %v5273
    %v5275 = vpop.f32.mrb[0].mxu0
    %v5276 = vadd.f32 0.0, %v5275
    %5277 = vdwg.mxu0
    %5278 = vmatprep.subr.mxu0 %v574
    %5279 = vmatpush1.msra.mxu0 %v573
    %5280 = vmatprep.subr.mxu0 %v580
    %5281 = vmatpush1.msra.mxu0 %v579
    %5282 = vmatprep.subr.mxu0 %v586
    %5283 = vmatpush1.msra.mxu0 %v585
    %5284 = vmatprep.subr.mxu0 %v592
    %5285 = vmatpush1.msra.mxu0 %v591
    %5286 = vmatprep.subr.mxu0 %v598
    %5287 = vmatpush1.msra.mxu0 %v597
    %5288 = vmatprep.subr.mxu0 %v604
    %5289 = vmatpush1.msra.mxu0 %v603
    %5290 = vmatprep.subr.mxu0 %v610
    %5291 = vmatpush1.msra.mxu0 %v609
    %5292 = vmatprep.subr.mxu0 %v616
    %5293 = vmatpush1.msra.mxu0 %v615
    %5294 = vmatprep.subr.mxu0 %v622
    %5295 = vmatpush1.msra.mxu0 %v621
    %5296 = vmatprep.subr.mxu0 %v628
    %5297 = vmatpush1.msra.mxu0 %v627
    %5298 = vmatprep.subr.mxu0 %v634
    %5299 = vmatpush1.msra.mxu0 %v633
    %5300 = vmatprep.subr.mxu0 %v640
    %5301 = vmatpush1.msra.mxu0 %v639
    %5302 = vmatprep.subr.mxu0 %v646
    %5303 = vmatpush1.msra.mxu0 %v645
    %5304 = vmatprep.subr.mxu0 %v652
    %5305 = vmatpush1.msra.mxu0 %v651
    %5306 = vmatprep.subr.mxu0 %v658
    %5307 = vmatpush1.msra.mxu0 %v657
    %5308 = vmatprep.subr.mxu0 %v664
    %5309 = vmatpush1.msra.mxu0 %v663
    %5310 = vmatprep.subr.mxu0 %v670
    %5311 = vmatpush1.msra.mxu0 %v669
    %5312 = vmatprep.subr.mxu0 %v676
    %5313 = vmatpush1.msra.mxu0 %v675
    %5314 = vmatprep.subr.mxu0 %v682
    %5315 = vmatpush1.msra.mxu0 %v681
    %5316 = vmatprep.subr.mxu0 %v688
    %5317 = vmatpush1.msra.mxu0 %v687
    %5318 = vmatprep.subr.mxu0 %v694
    %5319 = vmatpush1.msra.mxu0 %v693
    %5320 = vmatprep.subr.mxu0 %v700
    %5321 = vmatpush1.msra.mxu0 %v699
    %5322 = vmatprep.subr.mxu0 %v706
    %5323 = vmatpush1.msra.mxu0 %v705
    %5324 = vmatprep.subr.mxu0 %v712
    %5325 = vmatpush1.msra.mxu0 %v711
    %5326 = vmatprep.subr.mxu0 %v718
    %5327 = vmatpush1.msra.mxu0 %v717
    %5328 = vmatprep.subr.mxu0 %v724
    %5329 = vmatpush1.msra.mxu0 %v723
    %5330 = vmatprep.subr.mxu0 %v730
    %5331 = vmatpush1.msra.mxu0 %v729
    %5332 = vmatprep.subr.mxu0 %v736
    %5333 = vmatpush1.msra.mxu0 %v735
    %5334 = vmatprep.subr.mxu0 %v742
    %5335 = vmatpush1.msra.mxu0 %v741
    %5336 = vmatprep.subr.mxu0 %v748
    %5337 = vmatpush1.msra.mxu0 %v747
    %5338 = vmatprep.subr.mxu0 %v754
    %5339 = vmatpush1.msra.mxu0 %v753
    %5340 = vmatprep.subr.mxu0 %v760
    %5341 = vmatpush1.msra.mxu0 %v759
    %5342 = vmatprep.mubr.f32.mxu0 %v5204
    %5343 = vmatmul.mubr.f32.gmra.mrb[0].mxu0 %v5203
    %v5344 = vpop.f32.mrb[0].mxu0
    %v5345 = vadd.f32 0.0, %v5344
    %v5346 = vpop.f32.mrb[0].mxu0
    %v5347 = vadd.f32 0.0, %v5346
    %5348 = vdwg.mxu0
    %5349 = vmatprep.subr.mxu0 %v576
    %5350 = vmatpush1.msra.mxu0 %v575
    %5351 = vmatprep.subr.mxu0 %v582
    %5352 = vmatpush1.msra.mxu0 %v581
    %5353 = vmatprep.subr.mxu0 %v588
    %5354 = vmatpush1.msra.mxu0 %v587
    %5355 = vmatprep.subr.mxu0 %v594
    %5356 = vmatpush1.msra.mxu0 %v593
    %5357 = vmatprep.subr.mxu0 %v600
    %5358 = vmatpush1.msra.mxu0 %v599
    %5359 = vmatprep.subr.mxu0 %v606
    %5360 = vmatpush1.msra.mxu0 %v605
    %5361 = vmatprep.subr.mxu0 %v612
    %5362 = vmatpush1.msra.mxu0 %v611
    %5363 = vmatprep.subr.mxu0 %v618
    %5364 = vmatpush1.msra.mxu0 %v617
    %5365 = vmatprep.subr.mxu0 %v624
    %5366 = vmatpush1.msra.mxu0 %v623
    %5367 = vmatprep.subr.mxu0 %v630
    %5368 = vmatpush1.msra.mxu0 %v629
    %5369 = vmatprep.subr.mxu0 %v636
    %5370 = vmatpush1.msra.mxu0 %v635
    %5371 = vmatprep.subr.mxu0 %v642
    %5372 = vmatpush1.msra.mxu0 %v641
    %5373 = vmatprep.subr.mxu0 %v648
    %5374 = vmatpush1.msra.mxu0 %v647
    %5375 = vmatprep.subr.mxu0 %v654
    %5376 = vmatpush1.msra.mxu0 %v653
    %5377 = vmatprep.subr.mxu0 %v660
    %5378 = vmatpush1.msra.mxu0 %v659
    %5379 = vmatprep.subr.mxu0 %v666
    %5380 = vmatpush1.msra.mxu0 %v665
    %5381 = vmatprep.subr.mxu0 %v672
    %5382 = vmatpush1.msra.mxu0 %v671
    %5383 = vmatprep.subr.mxu0 %v678
    %5384 = vmatpush1.msra.mxu0 %v677
    %5385 = vmatprep.subr.mxu0 %v684
    %5386 = vmatpush1.msra.mxu0 %v683
    %5387 = vmatprep.subr.mxu0 %v690
    %5388 = vmatpush1.msra.mxu0 %v689
    %5389 = vmatprep.subr.mxu0 %v696
    %5390 = vmatpush1.msra.mxu0 %v695
    %5391 = vmatprep.subr.mxu0 %v702
    %5392 = vmatpush1.msra.mxu0 %v701
    %5393 = vmatprep.subr.mxu0 %v708
    %5394 = vmatpush1.msra.mxu0 %v707
    %5395 = vmatprep.subr.mxu0 %v714
    %5396 = vmatpush1.msra.mxu0 %v713
    %5397 = vmatprep.subr.mxu0 %v720
    %5398 = vmatpush1.msra.mxu0 %v719
    %5399 = vmatprep.subr.mxu0 %v726
    %5400 = vmatpush1.msra.mxu0 %v725
    %5401 = vmatprep.subr.mxu0 %v732
    %5402 = vmatpush1.msra.mxu0 %v731
    %5403 = vmatprep.subr.mxu0 %v738
    %5404 = vmatpush1.msra.mxu0 %v737
    %5405 = vmatprep.subr.mxu0 %v744
    %5406 = vmatpush1.msra.mxu0 %v743
    %5407 = vmatprep.subr.mxu0 %v750
    %5408 = vmatpush1.msra.mxu0 %v749
    %5409 = vmatprep.subr.mxu0 %v756
    %5410 = vmatpush1.msra.mxu0 %v755
    %5411 = vmatprep.subr.mxu0 %v762
    %5412 = vmatpush1.msra.mxu0 %v761
    %5413 = vmatprep.mubr.f32.mxu0 %v5204
    %5414 = vmatmul.mubr.f32.gmra.mrb[0].mxu0 %v5203
    %v5415 = vpop.f32.mrb[0].mxu0
    %v5416 = vadd.f32 0.0, %v5415
    %v5417 = vpop.f32.mrb[0].mxu0
    %v5418 = vadd.f32 0.0, %v5417
    %5419 = vdwg.mxu0
    %5420 = vmatprep.subr.mxu0 %v764
    %5421 = vmatpush1.msra.mxu0 %v763
    %5422 = vmatprep.subr.mxu0 %v770
    %5423 = vmatpush1.msra.mxu0 %v769
    %5424 = vmatprep.subr.mxu0 %v776
    %5425 = vmatpush1.msra.mxu0 %v775
    %5426 = vmatprep.subr.mxu0 %v782
    %5427 = vmatpush1.msra.mxu0 %v781
    %5428 = vmatprep.subr.mxu0 %v788
    %5429 = vmatpush1.msra.mxu0 %v787
    %5430 = vmatprep.subr.mxu0 %v794
    %5431 = vmatpush1.msra.mxu0 %v793
    %5432 = vmatprep.subr.mxu0 %v800
    %5433 = vmatpush1.msra.mxu0 %v799
    %5434 = vmatprep.subr.mxu0 %v806
    %5435 = vmatpush1.msra.mxu0 %v805
    %5436 = vmatprep.subr.mxu0 %v812
    %5437 = vmatpush1.msra.mxu0 %v811
    %5438 = vmatprep.subr.mxu0 %v818
    %5439 = vmatpush1.msra.mxu0 %v817
    %5440 = vmatprep.subr.mxu0 %v824
    %5441 = vmatpush1.msra.mxu0 %v823
    %5442 = vmatprep.subr.mxu0 %v830
    %5443 = vmatpush1.msra.mxu0 %v829
    %5444 = vmatprep.subr.mxu0 %v836
    %5445 = vmatpush1.msra.mxu0 %v835
    %5446 = vmatprep.subr.mxu0 %v842
    %5447 = vmatpush1.msra.mxu0 %v841
    %5448 = vmatprep.subr.mxu0 %v848
    %5449 = vmatpush1.msra.mxu0 %v847
    %5450 = vmatprep.subr.mxu0 %v854
    %5451 = vmatpush1.msra.mxu0 %v853
    %5452 = vmatprep.subr.mxu0 %v860
    %5453 = vmatpush1.msra.mxu0 %v859
    %5454 = vmatprep.subr.mxu0 %v866
    %5455 = vmatpush1.msra.mxu0 %v865
    %5456 = vmatprep.subr.mxu0 %v872
    %5457 = vmatpush1.msra.mxu0 %v871
    %5458 = vmatprep.subr.mxu0 %v878
    %5459 = vmatpush1.msra.mxu0 %v877
    %5460 = vmatprep.subr.mxu0 %v884
    %5461 = vmatpush1.msra.mxu0 %v883
    %5462 = vmatprep.subr.mxu0 %v890
    %5463 = vmatpush1.msra.mxu0 %v889
    %5464 = vmatprep.subr.mxu0 %v896
    %5465 = vmatpush1.msra.mxu0 %v895
    %5466 = vmatprep.subr.mxu0 %v902
    %5467 = vmatpush1.msra.mxu0 %v901
    %5468 = vmatprep.subr.mxu0 %v908
    %5469 = vmatpush1.msra.mxu0 %v907
    %5470 = vmatprep.subr.mxu0 %v914
    %5471 = vmatpush1.msra.mxu0 %v913
    %5472 = vmatprep.subr.mxu0 %v920
    %5473 = vmatpush1.msra.mxu0 %v919
    %5474 = vmatprep.subr.mxu0 %v926
    %5475 = vmatpush1.msra.mxu0 %v925
    %5476 = vmatprep.subr.mxu0 %v932
    %5477 = vmatpush1.msra.mxu0 %v931
    %5478 = vmatprep.subr.mxu0 %v938
    %5479 = vmatpush1.msra.mxu0 %v937
    %5480 = vmatprep.subr.mxu0 %v944
    %5481 = vmatpush1.msra.mxu0 %v943
    %5482 = vmatprep.subr.mxu0 %v950
    %5483 = vmatpush1.msra.mxu0 %v949
    %5484 = vmatprep.mubr.f32.mxu0 %v4892
    %5485 = vmatmul.mubr.f32.gmra.mrb[0].mxu0 %v4891
    %v5486 = vpop.f32.mrb[0].mxu0
    %v5487 = vadd.f32 0.0, %v5486
    %v5488 = vpop.f32.mrb[0].mxu0
    %v5489 = vadd.f32 0.0, %v5488
    %5490 = vdwg.mxu0
    %5491 = vmatprep.subr.mxu0 %v766
    %5492 = vmatpush1.msra.mxu0 %v765
    %5493 = vmatprep.subr.mxu0 %v772
    %5494 = vmatpush1.msra.mxu0 %v771
    %5495 = vmatprep.subr.mxu0 %v778
    %5496 = vmatpush1.msra.mxu0 %v777
    %5497 = vmatprep.subr.mxu0 %v784
    %5498 = vmatpush1.msra.mxu0 %v783
    %5499 = vmatprep.subr.mxu0 %v790
    %5500 = vmatpush1.msra.mxu0 %v789
    %5501 = vmatprep.subr.mxu0 %v796
    %5502 = vmatpush1.msra.mxu0 %v795
    %5503 = vmatprep.subr.mxu0 %v802
    %5504 = vmatpush1.msra.mxu0 %v801
    %5505 = vmatprep.subr.mxu0 %v808
    %5506 = vmatpush1.msra.mxu0 %v807
    %5507 = vmatprep.subr.mxu0 %v814
    %5508 = vmatpush1.msra.mxu0 %v813
    %5509 = vmatprep.subr.mxu0 %v820
    %5510 = vmatpush1.msra.mxu0 %v819
    %5511 = vmatprep.subr.mxu0 %v826
    %5512 = vmatpush1.msra.mxu0 %v825
    %5513 = vmatprep.subr.mxu0 %v832
    %5514 = vmatpush1.msra.mxu0 %v831
    %5515 = vmatprep.subr.mxu0 %v838
    %5516 = vmatpush1.msra.mxu0 %v837
    %5517 = vmatprep.subr.mxu0 %v844
    %5518 = vmatpush1.msra.mxu0 %v843
    %5519 = vmatprep.subr.mxu0 %v850
    %5520 = vmatpush1.msra.mxu0 %v849
    %5521 = vmatprep.subr.mxu0 %v856
    %5522 = vmatpush1.msra.mxu0 %v855
    %5523 = vmatprep.subr.mxu0 %v862
    %5524 = vmatpush1.msra.mxu0 %v861
    %5525 = vmatprep.subr.mxu0 %v868
    %5526 = vmatpush1.msra.mxu0 %v867
    %5527 = vmatprep.subr.mxu0 %v874
    %5528 = vmatpush1.msra.mxu0 %v873
    %5529 = vmatprep.subr.mxu0 %v880
    %5530 = vmatpush1.msra.mxu0 %v879
    %5531 = vmatprep.subr.mxu0 %v886
    %5532 = vmatpush1.msra.mxu0 %v885
    %5533 = vmatprep.subr.mxu0 %v892
    %5534 = vmatpush1.msra.mxu0 %v891
    %5535 = vmatprep.subr.mxu0 %v898
    %5536 = vmatpush1.msra.mxu0 %v897
    %5537 = vmatprep.subr.mxu0 %v904
    %5538 = vmatpush1.msra.mxu0 %v903
    %5539 = vmatprep.subr.mxu0 %v910
    %5540 = vmatpush1.msra.mxu0 %v909
    %5541 = vmatprep.subr.mxu0 %v916
    %5542 = vmatpush1.msra.mxu0 %v915
    %5543 = vmatprep.subr.mxu0 %v922
    %5544 = vmatpush1.msra.mxu0 %v921
    %5545 = vmatprep.subr.mxu0 %v928
    %5546 = vmatpush1.msra.mxu0 %v927
    %5547 = vmatprep.subr.mxu0 %v934
    %5548 = vmatpush1.msra.mxu0 %v933
    %5549 = vmatprep.subr.mxu0 %v940
    %5550 = vmatpush1.msra.mxu0 %v939
    %5551 = vmatprep.subr.mxu0 %v946
    %5552 = vmatpush1.msra.mxu0 %v945
    %5553 = vmatprep.subr.mxu0 %v952
    %5554 = vmatpush1.msra.mxu0 %v951
    %5555 = vmatprep.mubr.f32.mxu0 %v4892
    %5556 = vmatmul.mubr.f32.gmra.mrb[0].mxu0 %v4891
    %v5557 = vpop.f32.mrb[0].mxu0
    %v5558 = vadd.f32 0.0, %v5557
    %v5559 = vpop.f32.mrb[0].mxu0
    %v5560 = vadd.f32 0.0, %v5559
    %5561 = vdwg.mxu0
    %5562 = vmatprep.subr.mxu0 %v768
    %5563 = vmatpush1.msra.mxu0 %v767
    %5564 = vmatprep.subr.mxu0 %v774
    %5565 = vmatpush1.msra.mxu0 %v773
    %5566 = vmatprep.subr.mxu0 %v780
    %5567 = vmatpush1.msra.mxu0 %v779
    %5568 = vmatprep.subr.mxu0 %v786
    %5569 = vmatpush1.msra.mxu0 %v785
    %5570 = vmatprep.subr.mxu0 %v792
    %5571 = vmatpush1.msra.mxu0 %v791
    %5572 = vmatprep.subr.mxu0 %v798
    %5573 = vmatpush1.msra.mxu0 %v797
    %5574 = vmatprep.subr.mxu0 %v804
    %5575 = vmatpush1.msra.mxu0 %v803
    %5576 = vmatprep.subr.mxu0 %v810
    %5577 = vmatpush1.msra.mxu0 %v809
    %5578 = vmatprep.subr.mxu0 %v816
    %5579 = vmatpush1.msra.mxu0 %v815
    %5580 = vmatprep.subr.mxu0 %v822
    %5581 = vmatpush1.msra.mxu0 %v821
    %5582 = vmatprep.subr.mxu0 %v828
    %5583 = vmatpush1.msra.mxu0 %v827
    %5584 = vmatprep.subr.mxu0 %v834
    %5585 = vmatpush1.msra.mxu0 %v833
    %5586 = vmatprep.subr.mxu0 %v840
    %5587 = vmatpush1.msra.mxu0 %v839
    %5588 = vmatprep.subr.mxu0 %v846
    %5589 = vmatpush1.msra.mxu0 %v845
    %5590 = vmatprep.subr.mxu0 %v852
    %5591 = vmatpush1.msra.mxu0 %v851
    %5592 = vmatprep.subr.mxu0 %v858
    %5593 = vmatpush1.msra.mxu0 %v857
    %5594 = vmatprep.subr.mxu0 %v864
    %5595 = vmatpush1.msra.mxu0 %v863
    %5596 = vmatprep.subr.mxu0 %v870
    %5597 = vmatpush1.msra.mxu0 %v869
    %5598 = vmatprep.subr.mxu0 %v876
    %5599 = vmatpush1.msra.mxu0 %v875
    %5600 = vmatprep.subr.mxu0 %v882
    %5601 = vmatpush1.msra.mxu0 %v881
    %5602 = vmatprep.subr.mxu0 %v888
    %5603 = vmatpush1.msra.mxu0 %v887
    %5604 = vmatprep.subr.mxu0 %v894
    %5605 = vmatpush1.msra.mxu0 %v893
    %5606 = vmatprep.subr.mxu0 %v900
    %5607 = vmatpush1.msra.mxu0 %v899
    %5608 = vmatprep.subr.mxu0 %v906
    %5609 = vmatpush1.msra.mxu0 %v905
    %5610 = vmatprep.subr.mxu0 %v912
    %5611 = vmatpush1.msra.mxu0 %v911
    %5612 = vmatprep.subr.mxu0 %v918
    %5613 = vmatpush1.msra.mxu0 %v917
    %5614 = vmatprep.subr.mxu0 %v924
    %5615 = vmatpush1.msra.mxu0 %v923
    %5616 = vmatprep.subr.mxu0 %v930
    %5617 = vmatpush1.msra.mxu0 %v929
    %5618 = vmatprep.subr.mxu0 %v936
    %5619 = vmatpush1.msra.mxu0 %v935
    %5620 = vmatprep.subr.mxu0 %v942
    %5621 = vmatpush1.msra.mxu0 %v941
    %5622 = vmatprep.subr.mxu0 %v948
    %5623 = vmatpush1.msra.mxu0 %v947
    %5624 = vmatprep.subr.mxu0 %v954
    %5625 = vmatpush1.msra.mxu0 %v953
    %5626 = vmatprep.mubr.f32.mxu0 %v4892
    %5627 = vmatmul.mubr.f32.gmra.mrb[0].mxu0 %v4891
    %v5628 = vpop.f32.mrb[0].mxu0
    %v5629 = vadd.f32 0.0, %v5628
    %v5630 = vpop.f32.mrb[0].mxu0
    %v5631 = vadd.f32 0.0, %v5630
    %5632 = vdwg.mxu0
    %v5633 = vadd.f32 %v5274, %v5487
    %v5634 = vadd.f32 %v5276, %v5489
    %v5635 = vadd.f32 %v5345, %v5558
    %v5636 = vadd.f32 %v5347, %v5560
    %v5637 = vadd.f32 %v5633, %v1701
    %v5638 = vadd.f32 %v5634, %v1705
    %v5639 = vadd.f32 %v5635, %v1709
    %v5640 = vadd.f32 %v5636, %v1713
    %v5641 = vxor.u32 %v5637, 2147483648
    %v5642 = vxor.u32 %v5638, 2147483648
    %v5643 = vxor.u32 %v5639, 2147483648
    %v5644 = vxor.u32 %v5640, 2147483648
    %v5645 = vmul.f32 %v5641, 1.442695
    %v5646 = vpow.pop %v5645
    %v5647 = vmul.f32 %v5642, 1.442695
    %v5648 = vpow.pop %v5647
    %v5649 = vmul.f32 %v5643, 1.442695
    %v5650 = vpow.pop %v5649
    %v5651 = vmul.f32 %v5644, 1.442695
    %v5652 = vpow.pop %v5651
    %v5653 = vadd.f32 %v5646, 1.0
    %v5654 = vadd.f32 %v5648, 1.0
    %v5655 = vadd.f32 %v5650, 1.0
    %v5656 = vadd.f32 %v5652, 1.0
    %v5657 = vrcp.pop %v5653
    %v5658 = vmul.f32 1.0, %v5657
    %v5659 = vrcp.pop %v5654
    %v5660 = vmul.f32 1.0, %v5659
    %v5661 = vrcp.pop %v5655
    %v5662 = vmul.f32 1.0, %v5661
    %v5663 = vrcp.pop %v5656
    %v5664 = vmul.f32 1.0, %v5663
    %v5665 = vadd.f32 %v5416, %v1750
    %v5666 = vadd.f32 %v5418, %v1754
    %v5667 = vadd.f32 %v5629, %v1763
    %v5668 = vadd.f32 %v5631, %v1767
    %v5669 = vmul.f32 %v5658, %v5667
    %v5670 = vmul.f32 %v5660, %v5668
    %v5671 = vadd.f32 %v5665, %v5669
    %v5672 = vadd.f32 %v5666, %v5670
    %v5673 = vtanh.pop %v5671
    %v5674 = vtanh.pop %v5672
    %v5675 = vsub.f32 1.0, %v5662
    %v5676 = vsub.f32 1.0, %v5664
    %v5677 = vmul.f32 %v5675, %v5673
    %v5678 = vmul.f32 %v5676, %v5674
    %v5679 = vmul.f32 %v5662, %v4891
    %v5680 = vmul.f32 %v5664, %v4892
    %v5681 = vadd.f32 %v5677, %v5679
    %v5682 = vadd.f32 %v5678, %v5680
    %v5685 = vcombine.low %v5681, %v5682
    %v5687 = vunpack.c.l.s4 1966171168
    %v5688 = vunpack.c.0.s8 %v5687
    %v5689 = vlaneseq
    %v5690 = vshrl.u32 %v5689, 7
    %v5691 = vsub.s32 %v5688, %v5690
    %v5692 = vrot.slane %v5685, %v5691
    %v5693 = vcombine.high %v5692, %v5692
    %v5695 = vunpack.c.l.s4 1966171168
    %v5696 = vunpack.c.0.s8 %v5695
    %v5697 = vlaneseq
    %v5698 = vshrl.u32 %v5697, 7
    %v5699 = vsub.s32 %v5696, %v5698
    %v5700 = vrot.slane %v5693, %v5699
    %v5701 = vcombine.high %v5700, %v5700
    %s5703 = scalar_lea.vmem [#allocation2], 5
    %5704 = vst.msk [vmem:[%s5703] ss:$8 sm:$0x3] %vm1809, %v5701
    %5705 = vst.msk [vmem:[%s5703] ss:$8 sm:$0x0] %vm1809, %v5701
    %v5706 = vld [vmem:[#allocation2] sm:$0x3f]
    %v5707 = vld [vmem:[#allocation2 + $0x8] sm:$0x3f]
    %v5708 = vld [vmem:[#allocation11] sm:$0xff]
    %v5709 = vld [vmem:[#allocation11 + $0x8] sm:$0xff]
    %v5710 = vld [vmem:[#allocation11 + $0x10] sm:$0xff]
    %v5711 = vld [vmem:[#allocation11 + $0x18] sm:$0xff]
    %v5712 = vld [vmem:[#allocation11 + $0x20] sm:$0xff]
    %v5713 = vld [vmem:[#allocation11 + $0x28] sm:$0xff]
    %v5714 = vld [vmem:[#allocation11 + $0x30] sm:$0xff]
    %v5715 = vld [vmem:[#allocation11 + $0x38] sm:$0xff]
    %v5716 = vld [vmem:[#allocation11 + $0x40] sm:$0xff]
    %v5717 = vld [vmem:[#allocation11 + $0x48] sm:$0xff]
    %v5718 = vld [vmem:[#allocation11 + $0x50] sm:$0xff]
    %v5719 = vld [vmem:[#allocation11 + $0x58] sm:$0xff]
    %v5720 = vld [vmem:[#allocation11 + $0x60] sm:$0xff]
    %v5721 = vld [vmem:[#allocation11 + $0x68] sm:$0xff]
    %v5722 = vld [vmem:[#allocation11 + $0x70] sm:$0xff]
    %v5723 = vld [vmem:[#allocation11 + $0x78] sm:$0xff]
    %v5724 = vld [vmem:[#allocation11 + $0x80] sm:$0xff]
    %v5725 = vld [vmem:[#allocation11 + $0x88] sm:$0xff]
    %v5726 = vld [vmem:[#allocation11 + $0x90] sm:$0xff]
    %v5727 = vld [vmem:[#allocation11 + $0x98] sm:$0xff]
    %v5728 = vld [vmem:[#allocation11 + $0xa0] sm:$0xff]
    %v5729 = vld [vmem:[#allocation11 + $0xa8] sm:$0xff]
    %v5730 = vld [vmem:[#allocation11 + $0xb0] sm:$0xff]
    %v5731 = vld [vmem:[#allocation11 + $0xb8] sm:$0xff]
    %v5732 = vld [vmem:[#allocation11 + $0xc0] sm:$0xff]
    %v5733 = vld [vmem:[#allocation11 + $0xc8] sm:$0xff]
    %v5734 = vld [vmem:[#allocation11 + $0xd0] sm:$0xff]
    %v5735 = vld [vmem:[#allocation11 + $0xd8] sm:$0xff]
    %v5736 = vld [vmem:[#allocation11 + $0xe0] sm:$0xff]
    %v5737 = vld [vmem:[#allocation11 + $0xe8] sm:$0xff]
    %v5738 = vld [vmem:[#allocation11 + $0xf0] sm:$0xff]
    %v5739 = vld [vmem:[#allocation11 + $0xf8] sm:$0xff]
    %v5740 = vld [vmem:[%s12] sm:$0x1]
    %v5742 = vlaneseq
    %v5743 = vshrl.u32 %v5742, 7
    %v5744 = vsub.s32 0, %v5743
    %v5745 = vrot.slane %v5740, %v5744
    %5747 = vmatprep.subr.mxu0 0.0
    %5748 = vmatpush1.msra.mxu0 %v5708
    %5749 = vmatprep.subr.mxu0 0.0
    %5750 = vmatpush1.msra.mxu0 %v5709
    %5751 = vmatprep.subr.mxu0 0.0
    %5752 = vmatpush1.msra.mxu0 %v5710
    %5753 = vmatprep.subr.mxu0 0.0
    %5754 = vmatpush1.msra.mxu0 %v5711
    %5755 = vmatprep.subr.mxu0 0.0
    %5756 = vmatpush1.msra.mxu0 %v5712
    %5757 = vmatprep.subr.mxu0 0.0
    %5758 = vmatpush1.msra.mxu0 %v5713
    %5759 = vmatprep.subr.mxu0 0.0
    %5760 = vmatpush1.msra.mxu0 %v5714
    %5761 = vmatprep.subr.mxu0 0.0
    %5762 = vmatpush1.msra.mxu0 %v5715
    %5763 = vmatprep.subr.mxu0 0.0
    %5764 = vmatpush1.msra.mxu0 %v5716
    %5765 = vmatprep.subr.mxu0 0.0
    %5766 = vmatpush1.msra.mxu0 %v5717
    %5767 = vmatprep.subr.mxu0 0.0
    %5768 = vmatpush1.msra.mxu0 %v5718
    %5769 = vmatprep.subr.mxu0 0.0
    %5770 = vmatpush1.msra.mxu0 %v5719
    %5771 = vmatprep.subr.mxu0 0.0
    %5772 = vmatpush1.msra.mxu0 %v5720
    %5773 = vmatprep.subr.mxu0 0.0
    %5774 = vmatpush1.msra.mxu0 %v5721
    %5775 = vmatprep.subr.mxu0 0.0
    %5776 = vmatpush1.msra.mxu0 %v5722
    %5777 = vmatprep.subr.mxu0 0.0
    %5778 = vmatpush1.msra.mxu0 %v5723
    %5779 = vmatprep.subr.mxu0 0.0
    %5780 = vmatpush1.msra.mxu0 %v5724
    %5781 = vmatprep.subr.mxu0 0.0
    %5782 = vmatpush1.msra.mxu0 %v5725
    %5783 = vmatprep.subr.mxu0 0.0
    %5784 = vmatpush1.msra.mxu0 %v5726
    %5785 = vmatprep.subr.mxu0 0.0
    %5786 = vmatpush1.msra.mxu0 %v5727
    %5787 = vmatprep.subr.mxu0 0.0
    %5788 = vmatpush1.msra.mxu0 %v5728
    %5789 = vmatprep.subr.mxu0 0.0
    %5790 = vmatpush1.msra.mxu0 %v5729
    %5791 = vmatprep.subr.mxu0 0.0
    %5792 = vmatpush1.msra.mxu0 %v5730
    %5793 = vmatprep.subr.mxu0 0.0
    %5794 = vmatpush1.msra.mxu0 %v5731
    %5795 = vmatprep.subr.mxu0 0.0
    %5796 = vmatpush1.msra.mxu0 %v5732
    %5797 = vmatprep.subr.mxu0 0.0
    %5798 = vmatpush1.msra.mxu0 %v5733
    %5799 = vmatprep.subr.mxu0 0.0
    %5800 = vmatpush1.msra.mxu0 %v5734
    %5801 = vmatprep.subr.mxu0 0.0
    %5802 = vmatpush1.msra.mxu0 %v5735
    %5803 = vmatprep.subr.mxu0 0.0
    %5804 = vmatpush1.msra.mxu0 %v5736
    %5805 = vmatprep.subr.mxu0 0.0
    %5806 = vmatpush1.msra.mxu0 %v5737
    %5807 = vmatprep.subr.mxu0 0.0
    %5808 = vmatpush1.msra.mxu0 %v5738
    %5809 = vmatprep.subr.mxu0 0.0
    %5810 = vmatpush1.msra.mxu0 %v5739
    %5811 = vmatprep.mubr.f32.mxu0 %v5707
    %5812 = vmatmul.mubr.f32.gmra.mrb[0].mxu0 %v5706
    %v5813 = vpop.f32.mrb[0].mxu0
    %v5814 = vadd.f32 %v5745, %v5813
    %v5815 = vpop.f32.mrb[0].mxu0
    %5816 = vdwg.mxu0
    %5817 = vst [vmem:[#allocation12] sm:$0x3f] %v5814
    // Predicated region
    $region74: #{tpu_custom_call.1} parent=1 // pred_check
      _
    $region75: #{tpu_custom_call.1} parent=1 // pred_check_branch
      %5819 = sbr.rel (0) target = $region77
    $region76: #{tpu_custom_call.1} parent=1 // pred_region
      %s5821 = ssub.s32 128, 128
      %5822 = vsyncadd [#allocation5], %s5821
      %s5824 = sshll.u32 [#allocation12], 4
      %s5825 = int_to_ptr.vmem [resolvable:$true] %s5824
      %5827 = dma.vmem_to_hbm [thread:$0]  %s5825, 128, %s13, [#allocation5]
    $region77: #{tpu_custom_call.1} parent=1 // pred_fallthru
      _
    // Predicated region
    $region78: #{tpu_custom_call.1} parent=1 // pred_check
      _
    $region79: #{tpu_custom_call.1} parent=1 // pred_check_branch
      %5829 = sbr.rel (0) target = $region81
    $region80: #{tpu_custom_call.1} parent=1 // pred_region
      %5830 = dma.done [#allocation5], 128
    $region81: #{tpu_custom_call.1} parent=1 // pred_fallthru
      _
    %5831 = vsyncpa [#allocation4], 1
    %5832 = vsyncpa [#allocation7], 1
    %5833 = vsyncpa [#allocation10], 1
    %5834 = vsyncpa [#allocation5], 1

</llo_original>
